<compile_context>
chip_gen: v7x
topology: tpu7x:2x2x1
jax: 0.10.0
libtpu: 0.0.40
codegen_flags: <defaults>
</compile_context>

<pallas_src>
import functools

import numpy as np

import jax
import jax.numpy as jnp
from jax.experimental import pallas as pl
from jax.experimental.pallas import tpu as pltpu


LANES = 128  # pad conv output channels / fc2 output to full lane width


# ----------------------------------------------------------------------------
# Kernel 1: single-block fused matmul + bias + ReLU (used for each conv layer,
# after im2col).  Whole operands fit in VMEM (<~1.2 MB), so no grid is needed.
#   out = relu(patches @ W + shift)        (BN scale already folded into W)
# ----------------------------------------------------------------------------
def _conv_mm_kernel(a_ref, w_ref, shift_ref, o_ref):
    acc = jnp.dot(a_ref[...], w_ref[...], preferred_element_type=jnp.float32)
    o_ref[...] = jnp.maximum(acc + shift_ref[...], 0.0).astype(o_ref.dtype)


def conv_matmul(patches, w_mat, shift):
    """patches:(M,K) bf16, w_mat:(K,N) bf16, shift:(1,N) f32 -> (M,N) bf16."""
    M = patches.shape[0]
    N = w_mat.shape[1]
    return pl.pallas_call(
        _conv_mm_kernel,
        out_shape=jax.ShapeDtypeStruct((M, N), jnp.bfloat16),
    )(patches, w_mat, shift)


# ----------------------------------------------------------------------------
# Kernel 2: fused FC head.  Streams fc1_w over a K grid (f32 accumulator in
# VMEM scratch); in the epilogue applies bias+ReLU and the tiny FC2 (+bias)
# directly on the VMEM-resident hidden vector.
#   out = relu(feat @ W1 + b1) @ W2 + b2
# ----------------------------------------------------------------------------
def _fc_head_kernel(feat_ref, w1_ref, b1_ref, w2_ref, b2_ref, o_ref, acc_ref):
    k = pl.program_id(0)

    @pl.when(k == 0)
    def _():
        acc_ref[...] = jnp.zeros_like(acc_ref)

    acc_ref[...] += jnp.dot(feat_ref[...], w1_ref[...],
                            preferred_element_type=jnp.float32)

    @pl.when(k == pl.num_programs(0) - 1)
    def _():
        h = jnp.maximum(acc_ref[...] + b1_ref[...], 0.0)
        # TODO(synk): Dropout(p=0.5) acts only in training mode; inference = identity.
        out = jnp.dot(h, w2_ref[...], preferred_element_type=jnp.float32)
        o_ref[...] = (out + b2_ref[...]).astype(o_ref.dtype)


def _pick_tk(K, target=2560):
    """Largest multiple of 128 that divides K and is <= target (fail loudly)."""
    assert K % LANES == 0, f"FC1 reduction dim {K} must be a multiple of 128"
    start = (min(target, K) // LANES) * LANES
    for cand in range(start, 0, -LANES):
        if K % cand == 0:
            return cand
    raise ValueError(f"no valid K tile for K={K}")


def fc_head(feat, w1, b1, w2, b2):
    """feat:(B,K) bf16, w1:(K,256) bf16, b1:(1,256) f32,
       w2:(256,NP) f32, b2:(1,NP) f32 -> (B,NP) f32."""
    M, K = feat.shape
    K2, N1 = w1.shape
    assert K == K2
    NP = w2.shape[1]
    tk = _pick_tk(K)
    nk = K // tk

    # TODO(synk): on v7x, add a "parallel" grid axis (split N1=256 into two
    # 128-lane blocks) to shard the weight stream across both TensorCores.
    return pl.pallas_call(
        _fc_head_kernel,
        out_shape=jax.ShapeDtypeStruct((M, NP), jnp.float32),
        grid_spec=pltpu.PrefetchScalarGridSpec(
            num_scalar_prefetch=0,
            grid=(nk,),
            in_specs=[
                pl.BlockSpec((M, tk), lambda k: (0, k)),
                pl.BlockSpec((tk, N1), lambda k: (k, 0)),
                pl.BlockSpec((1, N1), lambda k: (0, 0)),
                pl.BlockSpec((N1, NP), lambda k: (0, 0)),
                pl.BlockSpec((1, NP), lambda k: (0, 0)),
            ],
            out_specs=pl.BlockSpec((M, NP), lambda k: (0, 0)),
            scratch_shapes=[pltpu.VMEM((M, N1), jnp.float32)],
        ),
        compiler_params=pltpu.CompilerParams(
            dimension_semantics=("arbitrary",)),
    )(feat, w1, b1, w2, b2)


# ----------------------------------------------------------------------------
# im2col for 3x3 / stride 1 / VALID conv (NHWC, minor-channel patch order).
# TODO(synk): the patches are still materialized by XLA in HBM; fusing the
# 9-tap accumulation into the conv kernel would remove that roundtrip (small
# vs. the FC1 weight stream, so left as a follow-up).
# ----------------------------------------------------------------------------
def im2col_3x3(x_nhwc):
    B, H, W, C = x_nhwc.shape
    Ho, Wo = H - 2, W - 2
    taps = [x_nhwc[:, i:i + Ho, j:j + Wo, :] for i in range(3) for j in range(3)]
    p = jnp.stack(taps, axis=3)                    # (B, Ho, Wo, 9, C)
    return p.reshape(B * Ho * Wo, 9 * C), Ho, Wo


def conv_bn_relu(x_nhwc, w_mat, shift):
    """Conv3x3(stride1,VALID)+BN(eval)+ReLU via im2col + fused Pallas matmul."""
    B = x_nhwc.shape[0]
    patches, Ho, Wo = im2col_3x3(x_nhwc)
    out = conv_matmul(patches, w_mat, shift)
    return out.reshape(B, Ho, Wo, w_mat.shape[1])


# ----------------------------------------------------------------------------
# Parameters in PyTorch layout (deterministic, synthetic) — QNetwork.__init__.
# ----------------------------------------------------------------------------
def init_params(key, in_channels, n_actions, conv_out_size):
    ks = jax.random.split(key, 16)
    p = {}
    c_prev = in_channels
    for i, c_out in zip((1, 2, 3), (32, 64, 128)):
        k0, k1, k2, k3 = jax.random.split(ks[i], 4)
        p[f"conv{i}_w"] = 0.05 * jax.random.normal(k0, (c_out, c_prev, 3, 3),
                                                   jnp.float32)
        p[f"conv{i}_b"] = 0.05 * jax.random.normal(k1, (c_out,), jnp.float32)
        p[f"bn{i}_gamma"] = 1.0 + 0.1 * jax.random.normal(k2, (c_out,),
                                                          jnp.float32)
        p[f"bn{i}_beta"] = 0.1 * jax.random.normal(k3, (c_out,), jnp.float32)
        p[f"bn{i}_mean"] = jnp.zeros((c_out,), jnp.float32)   # running stats
        p[f"bn{i}_var"] = jnp.ones((c_out,), jnp.float32)
        c_prev = c_out
    p["fc1_w"] = 0.02 * jax.random.normal(ks[10], (256, conv_out_size),
                                          jnp.float32)
    p["fc1_b"] = 0.02 * jax.random.normal(ks[11], (256,), jnp.float32)
    p["fc2_w"] = 0.02 * jax.random.normal(ks[12], (n_actions, 256), jnp.float32)
    p["fc2_b"] = 0.02 * jax.random.normal(ks[13], (n_actions,), jnp.float32)
    return p


# ----------------------------------------------------------------------------
# One-time prep: PyTorch-layout params -> kernel-ready params.
#   * conv weights -> (9*Cin_pad, 128) bf16, BN scale folded, channels padded
#   * fc1_w -> (K, 256) bf16, columns permuted from NCHW-flatten to NHWC-flatten
#   * fc2_w -> (256, 128) f32 zero-padded output lanes
# ----------------------------------------------------------------------------
def prepare_params(p, H, W, n_actions, eps=1e-5):
    kp = {}
    cin_real = p["conv1_w"].shape[1]
    cin_pad = cin_real                               # conv1 input is not padded
    for i in (1, 2, 3):
        w = p[f"conv{i}_w"]                          # (Cout, Cin, 3, 3)
        cout = w.shape[0]
        cout_pad = LANES
        inv_std = 1.0 / jnp.sqrt(p[f"bn{i}_var"] + eps)
        scale = p[f"bn{i}_gamma"] * inv_std
        shift = (p[f"conv{i}_b"] - p[f"bn{i}_mean"]) * scale + p[f"bn{i}_beta"]
        # OIHW -> (kh, kw, Cin, Cout), fold BN scale into output columns.
        w_k = jnp.transpose(w, (2, 3, 1, 0)) * scale[None, None, None, :]
        w_full = jnp.zeros((3, 3, cin_pad, cout_pad), jnp.float32)
        w_full = w_full.at[:, :, :w.shape[1], :cout].set(w_k)
        kp[f"conv{i}_w"] = w_full.reshape(9 * cin_pad, cout_pad).astype(jnp.bfloat16)
        kp[f"conv{i}_shift"] = (jnp.zeros((1, cout_pad), jnp.float32)
                                .at[0, :cout].set(shift))
        cin_pad = cout_pad
        cin_real = cout

    # fc1: PyTorch flattens conv3 output in NCHW order; our kernels produce
    # NHWC.  Fold the re-ordering into a one-time column permutation and
    # pre-transpose to (K, 256).
    Ho, Wo, C3 = H - 6, W - 6, LANES
    assert p["fc1_w"].shape[1] == C3 * Ho * Wo
    q_of_p = np.transpose(np.arange(C3 * Ho * Wo).reshape(C3, Ho, Wo),
                          (1, 2, 0)).reshape(-1)     # NHWC idx -> NCHW idx
    kp["fc1_w"] = jnp.asarray(p["fc1_w"]).T[q_of_p, :].astype(jnp.bfloat16)
    kp["fc1_b"] = p["fc1_b"][None, :].astype(jnp.float32)

    # fc2: tiny; keep f32, pad output lanes to 128 (sliced back after kernel).
    kp["fc2_w"] = (jnp.zeros((256, LANES), jnp.float32)
                   .at[:, :n_actions].set(p["fc2_w"].T))
    kp["fc2_b"] = (jnp.zeros((1, LANES), jnp.float32)
                   .at[0, :n_actions].set(p["fc2_b"]))
    return kp


# ----------------------------------------------------------------------------
# Forward pass (inference semantics).
# ----------------------------------------------------------------------------
def qnetwork_forward(x, kp, *, n_actions):
    cin = kp["conv1_w"].shape[0] // 9
    # QNetwork.forward: permute NHWC -> NCHW if channels are not dim 1.
    if x.shape[1] != cin:
        x = jnp.transpose(x, (0, 3, 1, 2))
    B = x.shape[0]
    x = jnp.transpose(x, (0, 2, 3, 1)).astype(jnp.bfloat16)   # NCHW -> NHWC

    for i in (1, 2, 3):
        x = conv_bn_relu(x, kp[f"conv{i}_w"], kp[f"conv{i}_shift"])

    # Direct NHWC flatten (contiguous); fc1_w columns were pre-permuted to match
    # PyTorch's NCHW flatten order, so no runtime transpose is needed.
    feat = x.reshape(B, -1)

    out_pad = fc_head(feat, kp["fc1_w"], kp["fc1_b"], kp["fc2_w"], kp["fc2_b"])
    return out_pad[:, :n_actions]


# ----------------------------------------------------------------------------
# Pure-JAX f32 reference (PyTorch-layout params) for a correctness cross-check.
# ----------------------------------------------------------------------------
def reference_forward(x, p, eps=1e-5):
    if x.shape[1] != p["conv1_w"].shape[1]:
        x = jnp.transpose(x, (0, 3, 1, 2))
    for i in (1, 2, 3):
        w = p[f"conv{i}_w"]
        x = jax.lax.conv_general_dilated(
            x, w, (1, 1), "VALID",
            dimension_numbers=("NCHW", "OIHW", "NCHW"))
        x = x + p[f"conv{i}_b"][None, :, None, None]
        inv = 1.0 / jnp.sqrt(p[f"bn{i}_var"] + eps)
        x = (p[f"bn{i}_gamma"][None, :, None, None]
             * (x - p[f"bn{i}_mean"][None, :, None, None])
             * inv[None, :, None, None]
             + p[f"bn{i}_beta"][None, :, None, None])
        x = jnp.maximum(x, 0.0)
    x = x.reshape(x.shape[0], -1)
    x = jnp.maximum(x @ p["fc1_w"].T + p["fc1_b"], 0.0)
    return x @ p["fc2_w"].T + p["fc2_b"]


if __name__ == "__main__":
    # input_shape = (4, 16, 16), n_actions = 6, batch = 2
    B, C, H, W = 2, 4, 16, 16
    n_actions = 6
    conv_out_size = 128 * (H - 6) * (W - 6)        # 128 * 10 * 10 = 12800

    key = jax.random.PRNGKey(0)
    k_x, k_p = jax.random.split(key)
    x = jax.random.normal(k_x, (B, C, H, W), jnp.float32)      # NCHW
    params = init_params(k_p, C, n_actions, conv_out_size)     # PyTorch layout
    kparams = prepare_params(params, H, W, n_actions)          # one-time prep

    fwd = jax.jit(functools.partial(qnetwork_forward, n_actions=n_actions))
    out = jax.block_until_ready(fwd(x, kparams))
    assert out.shape == (B, n_actions), out.shape

    ref = reference_forward(x, params)
    max_err = float(jnp.max(jnp.abs(out - ref)))
    # bf16 weight/activation storage with f32 accumulation -> loose tolerance.
    assert jnp.allclose(out, ref, rtol=5e-2, atol=5e-2), max_err

    print("KERNEL_OK")
</pallas_src>

<mosaic_0001>
module attributes {stable_mosaic.version = 11 : i64} {
  func.func @_conv_mm_kernel(%arg0: memref<392x36xbf16, #tpu.memory_space<vmem>>, %arg1: memref<36x128xbf16, #tpu.memory_space<vmem>>, %arg2: memref<1x128xf32, #tpu.memory_space<vmem>>, %arg3: memref<392x128xbf16, #tpu.memory_space<vmem>>) attributes {dimension_semantics = [], scalar_prefetch = 0 : i64, scratch_operands = 0 : i64, tpu.core_type = #tpu.core_type<tc>} {
    %c0 = arith.constant 0 : index
    %c0_0 = arith.constant 0 : index
    %0 = vector.load %arg0[%c0, %c0_0] : memref<392x36xbf16, #tpu.memory_space<vmem>>, vector<392x36xbf16>
    %c0_1 = arith.constant 0 : index
    %c0_2 = arith.constant 0 : index
    %1 = vector.load %arg1[%c0_1, %c0_2] : memref<36x128xbf16, #tpu.memory_space<vmem>>, vector<36x128xbf16>
    %cst = arith.constant dense<0.000000e+00> : vector<392x128xf32>
    %2 = tpu.matmul %0, %1, %cst {dimension_numbers = #tpu.dot_dimension_numbers<[1], [0], [0], [1], [0, 0, 1, 1], [], []>} : vector<392x36xbf16>, vector<36x128xbf16>, vector<392x128xf32> -> vector<392x128xf32>
    %c0_3 = arith.constant 0 : index
    %c0_4 = arith.constant 0 : index
    %3 = vector.load %arg2[%c0_3, %c0_4] : memref<1x128xf32, #tpu.memory_space<vmem>>, vector<1x128xf32>
    %4 = vector.broadcast %3 : vector<1x128xf32> to vector<392x128xf32>
    %5 = arith.addf %2, %4 : vector<392x128xf32>
    %cst_5 = arith.constant 0.000000e+00 : f32
    %6 = vector.broadcast %cst_5 : f32 to vector<392x128xf32>
    %7 = arith.maximumf %5, %6 : vector<392x128xf32>
    %8 = arith.truncf %7 : vector<392x128xf32> to vector<392x128xbf16>
    %c0_6 = arith.constant 0 : index
    %c0_7 = arith.constant 0 : index
    %9 = vector.load %arg3[%c0_6, %c0_7] : memref<392x128xbf16, #tpu.memory_space<vmem>>, vector<392x128xbf16>
    tpu.vector_store %arg3[%c0_6, %c0_7], %8 {strides = array<i32>} : memref<392x128xbf16, #tpu.memory_space<vmem>>, vector<392x128xbf16>,
    return
  }
}

module attributes {stable_mosaic.version = 11 : i64} {
  func.func @_conv_mm_kernel(%arg0: memref<288x1152xbf16, #tpu.memory_space<vmem>>, %arg1: memref<1152x128xbf16, #tpu.memory_space<vmem>>, %arg2: memref<1x128xf32, #tpu.memory_space<vmem>>, %arg3: memref<288x128xbf16, #tpu.memory_space<vmem>>) attributes {dimension_semantics = [], scalar_prefetch = 0 : i64, scratch_operands = 0 : i64, tpu.core_type = #tpu.core_type<tc>} {
    %c0 = arith.constant 0 : index
    %c0_0 = arith.constant 0 : index
    %0 = vector.load %arg0[%c0, %c0_0] : memref<288x1152xbf16, #tpu.memory_space<vmem>>, vector<288x1152xbf16>
    %c0_1 = arith.constant 0 : index
    %c0_2 = arith.constant 0 : index
    %1 = vector.load %arg1[%c0_1, %c0_2] : memref<1152x128xbf16, #tpu.memory_space<vmem>>, vector<1152x128xbf16>
    %cst = arith.constant dense<0.000000e+00> : vector<288x128xf32>
    %2 = tpu.matmul %0, %1, %cst {dimension_numbers = #tpu.dot_dimension_numbers<[1], [0], [0], [1], [0, 0, 1, 1], [], []>} : vector<288x1152xbf16>, vector<1152x128xbf16>, vector<288x128xf32> -> vector<288x128xf32>
    %c0_3 = arith.constant 0 : index
    %c0_4 = arith.constant 0 : index
    %3 = vector.load %arg2[%c0_3, %c0_4] : memref<1x128xf32, #tpu.memory_space<vmem>>, vector<1x128xf32>
    %4 = vector.broadcast %3 : vector<1x128xf32> to vector<288x128xf32>
    %5 = arith.addf %2, %4 : vector<288x128xf32>
    %cst_5 = arith.constant 0.000000e+00 : f32
    %6 = vector.broadcast %cst_5 : f32 to vector<288x128xf32>
    %7 = arith.maximumf %5, %6 : vector<288x128xf32>
    %8 = arith.truncf %7 : vector<288x128xf32> to vector<288x128xbf16>
    %c0_6 = arith.constant 0 : index
    %c0_7 = arith.constant 0 : index
    %9 = vector.load %arg3[%c0_6, %c0_7] : memref<288x128xbf16, #tpu.memory_space<vmem>>, vector<288x128xbf16>
    tpu.vector_store %arg3[%c0_6, %c0_7], %8 {strides = array<i32>} : memref<288x128xbf16, #tpu.memory_space<vmem>>, vector<288x128xbf16>,
    return
  }
}

module attributes {stable_mosaic.version = 11 : i64} {
  func.func @_conv_mm_kernel(%arg0: memref<200x1152xbf16, #tpu.memory_space<vmem>>, %arg1: memref<1152x128xbf16, #tpu.memory_space<vmem>>, %arg2: memref<1x128xf32, #tpu.memory_space<vmem>>, %arg3: memref<200x128xbf16, #tpu.memory_space<vmem>>) attributes {dimension_semantics = [], scalar_prefetch = 0 : i64, scratch_operands = 0 : i64, tpu.core_type = #tpu.core_type<tc>} {
    %c0 = arith.constant 0 : index
    %c0_0 = arith.constant 0 : index
    %0 = vector.load %arg0[%c0, %c0_0] : memref<200x1152xbf16, #tpu.memory_space<vmem>>, vector<200x1152xbf16>
    %c0_1 = arith.constant 0 : index
    %c0_2 = arith.constant 0 : index
    %1 = vector.load %arg1[%c0_1, %c0_2] : memref<1152x128xbf16, #tpu.memory_space<vmem>>, vector<1152x128xbf16>
    %cst = arith.constant dense<0.000000e+00> : vector<200x128xf32>
    %2 = tpu.matmul %0, %1, %cst {dimension_numbers = #tpu.dot_dimension_numbers<[1], [0], [0], [1], [0, 0, 1, 1], [], []>} : vector<200x1152xbf16>, vector<1152x128xbf16>, vector<200x128xf32> -> vector<200x128xf32>
    %c0_3 = arith.constant 0 : index
    %c0_4 = arith.constant 0 : index
    %3 = vector.load %arg2[%c0_3, %c0_4] : memref<1x128xf32, #tpu.memory_space<vmem>>, vector<1x128xf32>
    %4 = vector.broadcast %3 : vector<1x128xf32> to vector<200x128xf32>
    %5 = arith.addf %2, %4 : vector<200x128xf32>
    %cst_5 = arith.constant 0.000000e+00 : f32
    %6 = vector.broadcast %cst_5 : f32 to vector<200x128xf32>
    %7 = arith.maximumf %5, %6 : vector<200x128xf32>
    %8 = arith.truncf %7 : vector<200x128xf32> to vector<200x128xbf16>
    %c0_6 = arith.constant 0 : index
    %c0_7 = arith.constant 0 : index
    %9 = vector.load %arg3[%c0_6, %c0_7] : memref<200x128xbf16, #tpu.memory_space<vmem>>, vector<200x128xbf16>
    tpu.vector_store %arg3[%c0_6, %c0_7], %8 {strides = array<i32>} : memref<200x128xbf16, #tpu.memory_space<vmem>>, vector<200x128xbf16>,
    return
  }
}

module attributes {stable_mosaic.version = 11 : i64} {
  func.func @_fc_head_kernel(%arg0: i32, %arg1: memref<2x2560xbf16, #tpu.memory_space<vmem>>, %arg2: memref<2560x256xbf16, #tpu.memory_space<vmem>>, %arg3: memref<1x256xf32, #tpu.memory_space<vmem>>, %arg4: memref<256x128xf32, #tpu.memory_space<vmem>>, %arg5: memref<1x128xf32, #tpu.memory_space<vmem>>, %arg6: memref<2x128xf32, #tpu.memory_space<vmem>>, %arg7: memref<2x256xf32, #tpu.memory_space<vmem>>) attributes {dimension_semantics = [#tpu.dimension_semantics<arbitrary>], iteration_bounds = array<i64: 5>, scalar_prefetch = 0 : i64, scratch_operands = 1 : i64, tpu.core_type = #tpu.core_type<tc>, window_params = [{transform_indices = @transform_0, window_bounds = array<i64: 2, 2560>}, {transform_indices = @transform_1, window_bounds = array<i64: 2560, 256>}, {pipeline_mode = #tpu.pipeline_mode<synchronous>, transform_indices = @transform_2, window_bounds = array<i64: 1, 256>}, {pipeline_mode = #tpu.pipeline_mode<synchronous>, transform_indices = @transform_3, window_bounds = array<i64: 256, 128>}, {pipeline_mode = #tpu.pipeline_mode<synchronous>, transform_indices = @transform_4, window_bounds = array<i64: 1, 128>}, {pipeline_mode = #tpu.pipeline_mode<synchronous>, transform_indices = @transform_5, window_bounds = array<i64: 2, 128>}]} {
    %c0_i32 = arith.constant 0 : i32
    %0 = arith.cmpi eq, %arg0, %c0_i32 : i32
    %1 = arith.extui %0 : i1 to i32
    %c0_i32_0 = arith.constant 0 : i32
    %2 = arith.cmpi ne, %1, %c0_i32_0 : i32
    scf.if %2 {
      %cst_9 = arith.constant 0.000000e+00 : f32
      %12 = vector.broadcast %cst_9 : f32 to vector<2x256xf32>
      %c0_10 = arith.constant 0 : index
      %c0_11 = arith.constant 0 : index
      %13 = vector.load %arg7[%c0_10, %c0_11] : memref<2x256xf32, #tpu.memory_space<vmem>>, vector<2x256xf32>
      tpu.vector_store %arg7[%c0_10, %c0_11], %12 {strides = array<i32>} : memref<2x256xf32, #tpu.memory_space<vmem>>, vector<2x256xf32>,
    } else {
    }
    %c0 = arith.constant 0 : index
    %c0_1 = arith.constant 0 : index
    %3 = vector.load %arg7[%c0, %c0_1] : memref<2x256xf32, #tpu.memory_space<vmem>>, vector<2x256xf32>
    %c0_2 = arith.constant 0 : index
    %c0_3 = arith.constant 0 : index
    %4 = vector.load %arg1[%c0_2, %c0_3] : memref<2x2560xbf16, #tpu.memory_space<vmem>>, vector<2x2560xbf16>
    %c0_4 = arith.constant 0 : index
    %c0_5 = arith.constant 0 : index
    %5 = vector.load %arg2[%c0_4, %c0_5] : memref<2560x256xbf16, #tpu.memory_space<vmem>>, vector<2560x256xbf16>
    %cst = arith.constant dense<0.000000e+00> : vector<2x256xf32>
    %6 = tpu.matmul %4, %5, %cst {dimension_numbers = #tpu.dot_dimension_numbers<[1], [0], [0], [1], [0, 0, 1, 1], [], []>} : vector<2x2560xbf16>, vector<2560x256xbf16>, vector<2x256xf32> -> vector<2x256xf32>
    %7 = arith.addf %3, %6 : vector<2x256xf32>
    %c0_6 = arith.constant 0 : index
    %c0_7 = arith.constant 0 : index
    %8 = vector.load %arg7[%c0_6, %c0_7] : memref<2x256xf32, #tpu.memory_space<vmem>>, vector<2x256xf32>
    tpu.vector_store %arg7[%c0_6, %c0_7], %7 {strides = array<i32>} : memref<2x256xf32, #tpu.memory_space<vmem>>, vector<2x256xf32>,
    %c4_i32 = arith.constant 4 : i32
    %9 = arith.cmpi eq, %arg0, %c4_i32 : i32
    %10 = arith.extui %9 : i1 to i32
    %c0_i32_8 = arith.constant 0 : i32
    %11 = arith.cmpi ne, %10, %c0_i32_8 : i32
    scf.if %11 {
      %c0_9 = arith.constant 0 : index
      %c0_10 = arith.constant 0 : index
      %12 = vector.load %arg7[%c0_9, %c0_10] : memref<2x256xf32, #tpu.memory_space<vmem>>, vector<2x256xf32>
      %c0_11 = arith.constant 0 : index
      %c0_12 = arith.constant 0 : index
      %13 = vector.load %arg3[%c0_11, %c0_12] : memref<1x256xf32, #tpu.memory_space<vmem>>, vector<1x256xf32>
      %14 = vector.broadcast %13 : vector<1x256xf32> to vector<2x256xf32>
      %15 = arith.addf %12, %14 : vector<2x256xf32>
      %cst_13 = arith.constant 0.000000e+00 : f32
      %16 = vector.broadcast %cst_13 : f32 to vector<2x256xf32>
      %17 = arith.maximumf %15, %16 : vector<2x256xf32>
      %c0_14 = arith.constant 0 : index
      %c0_15 = arith.constant 0 : index
      %18 = vector.load %arg4[%c0_14, %c0_15] : memref<256x128xf32, #tpu.memory_space<vmem>>, vector<256x128xf32>
      %cst_16 = arith.constant dense<0.000000e+00> : vector<2x128xf32>
      %19 = tpu.matmul %17, %18, %cst_16 {dimension_numbers = #tpu.dot_dimension_numbers<[1], [0], [0], [1], [0, 0, 1, 1], [], []>} : vector<2x256xf32>, vector<256x128xf32>, vector<2x128xf32> -> vector<2x128xf32>
      %c0_17 = arith.constant 0 : index
      %c0_18 = arith.constant 0 : index
      %20 = vector.load %arg5[%c0_17, %c0_18] : memref<1x128xf32, #tpu.memory_space<vmem>>, vector<1x128xf32>
      %21 = vector.broadcast %20 : vector<1x128xf32> to vector<2x128xf32>
      %22 = arith.addf %19, %21 : vector<2x128xf32>
      %c0_19 = arith.constant 0 : index
      %c0_20 = arith.constant 0 : index
      %23 = vector.load %arg6[%c0_19, %c0_20] : memref<2x128xf32, #tpu.memory_space<vmem>>, vector<2x128xf32>
      tpu.vector_store %arg6[%c0_19, %c0_20], %22 {strides = array<i32>} : memref<2x128xf32, #tpu.memory_space<vmem>>, vector<2x128xf32>,
    } else {
    }
    return
  }
  func.func @transform_0(%arg0: i32) -> (i32, i32) {
    %c0_i32 = arith.constant 0 : i32
    %c0_i32_0 = arith.constant 0 : i32
    return %c0_i32, %arg0 : i32, i32
  }
  func.func @transform_1(%arg0: i32) -> (i32, i32) {
    %c0_i32 = arith.constant 0 : i32
    %c0_i32_0 = arith.constant 0 : i32
    return %arg0, %c0_i32 : i32, i32
  }
  func.func @transform_2(%arg0: i32) -> (i32, i32) {
    %c0_i32 = arith.constant 0 : i32
    %c0_i32_0 = arith.constant 0 : i32
    %c0_i32_1 = arith.constant 0 : i32
    return %c0_i32, %c0_i32_0 : i32, i32
  }
  func.func @transform_3(%arg0: i32) -> (i32, i32) {
    %c0_i32 = arith.constant 0 : i32
    %c0_i32_0 = arith.constant 0 : i32
    %c0_i32_1 = arith.constant 0 : i32
    return %c0_i32, %c0_i32_0 : i32, i32
  }
  func.func @transform_4(%arg0: i32) -> (i32, i32) {
    %c0_i32 = arith.constant 0 : i32
    %c0_i32_0 = arith.constant 0 : i32
    %c0_i32_1 = arith.constant 0 : i32
    return %c0_i32, %c0_i32_0 : i32, i32
  }
  func.func @transform_5(%arg0: i32) -> (i32, i32) {
    %c0_i32 = arith.constant 0 : i32
    %c0_i32_0 = arith.constant 0 : i32
    %c0_i32_1 = arith.constant 0 : i32
    return %c0_i32, %c0_i32_0 : i32, i32
  }
}

</mosaic_0001>

<llo_original>
// kernel: qnetwork_forward.4
$region0: #{qnetwork_forward.4}
  #allocation0 [shape = 'u32[]', space=smem, size = 0x4, offset = 0x4, fixed_abs, tag = 'smem constant byte address 0x4 - core index']
  #allocation1 [shape = 'u32[144,128]{1,0:T(1,128)}', space=vmem, size = 0x12000, scoped, tag = 'internal scratch']
  %s0 = inlined_call_operand.vmem [shape: bf16[392,36], index: 0, kind: input, shape index: {}]
  %s1 = inlined_call_operand.vmem [shape: bf16[36,128], index: 1, kind: input, shape index: {}]
  %s2 = inlined_call_operand.vmem [shape: f32[1,128], index: 2, kind: input, shape index: {}]
  %s3 = inlined_call_operand.vmem [shape: bf16[392,128], index: 3, kind: output, shape index: {}]
  %s4 = sld [smem:[#allocation0]]
  $region22: #{qnetwork_forward.4} parent=0
    _
  %s6 = ssub.s32 1, %s4
  %s7 = scalar_select 0, %s6, %s4
  // Predicated region
  $region2: #{qnetwork_forward.4} parent=0 // pred_check
    _
  $region3: #{qnetwork_forward.4} parent=0 // pred_check_branch
    %9 = sbr.rel (0) target = $region5
  $region4: #{qnetwork_forward.4} parent=0 // pred_region
    _
  $region5: #{qnetwork_forward.4} parent=0 // pred_fallthru
    _
  // Predicated region
  $region6: #{qnetwork_forward.4} parent=0 // pred_check
    _
  $region7: #{qnetwork_forward.4} parent=0 // pred_check_branch
    %11 = sbr.rel (0) target = $region9
  $region8: #{qnetwork_forward.4} parent=0 // pred_region
    _
  $region9: #{qnetwork_forward.4} parent=0 // pred_fallthru
    _
  // Predicated region
  $region10: #{qnetwork_forward.4} parent=0 // pred_check
    _
  $region11: #{qnetwork_forward.4} parent=0 // pred_check_branch
    %13 = sbr.rel (0) target = $region13
  $region12: #{qnetwork_forward.4} parent=0 // pred_region
    _
  $region13: #{qnetwork_forward.4} parent=0 // pred_fallthru
    _
  %v15 = vld [vmem:[%s0] sm:$0xf]
  %v16 = vld [vmem:[%s0 + $0x4] sm:$0xf]
  %v17 = vld [vmem:[%s0 + $0x8] sm:$0xf]
  %v18 = vld [vmem:[%s0 + $0xc] sm:$0xf]
  %v19 = vld [vmem:[%s0 + $0x10] sm:$0xf]
  %v20 = vld [vmem:[%s0 + $0x14] sm:$0xf]
  %v21 = vld [vmem:[%s0 + $0x18] sm:$0xf]
  %v22 = vld [vmem:[%s0 + $0x1c] sm:$0xf]
  %v23 = vld [vmem:[%s0 + $0x20] sm:$0xf]
  %v24 = vld [vmem:[%s0 + $0x24] sm:$0xf]
  %v25 = vld [vmem:[%s0 + $0x28] sm:$0xf]
  %v26 = vld [vmem:[%s0 + $0x2c] sm:$0xf]
  %v27 = vld [vmem:[%s0 + $0x30] sm:$0xf]
  %v28 = vld [vmem:[%s0 + $0x34] sm:$0xf]
  %v29 = vld [vmem:[%s0 + $0x38] sm:$0xf]
  %v30 = vld [vmem:[%s0 + $0x3c] sm:$0xf]
  %v31 = vld [vmem:[%s0 + $0x40] sm:$0xf]
  %v32 = vld [vmem:[%s0 + $0x44] sm:$0xf]
  %v33 = vld [vmem:[%s0 + $0x48] sm:$0xf]
  %v34 = vld [vmem:[%s0 + $0x4c] sm:$0xf]
  %v35 = vld [vmem:[%s0 + $0x50] sm:$0xf]
  %v36 = vld [vmem:[%s0 + $0x54] sm:$0xf]
  %v37 = vld [vmem:[%s0 + $0x58] sm:$0xf]
  %v38 = vld [vmem:[%s0 + $0x5c] sm:$0xf]
  %v39 = vld [vmem:[%s0 + $0x60] sm:$0xf]
  %v40 = vld [vmem:[%s0 + $0x64] sm:$0xf]
  %v41 = vld [vmem:[%s0 + $0x68] sm:$0xf]
  %v42 = vld [vmem:[%s0 + $0x6c] sm:$0xf]
  %v43 = vld [vmem:[%s0 + $0x70] sm:$0xf]
  %v44 = vld [vmem:[%s0 + $0x74] sm:$0xf]
  %v45 = vld [vmem:[%s0 + $0x78] sm:$0xf]
  %v46 = vld [vmem:[%s0 + $0x7c] sm:$0xf]
  %v47 = vld [vmem:[%s0 + $0x80] sm:$0xf]
  %v48 = vld [vmem:[%s0 + $0x84] sm:$0xf]
  %v49 = vld [vmem:[%s0 + $0x88] sm:$0xf]
  %v50 = vld [vmem:[%s0 + $0x8c] sm:$0xf]
  %v51 = vld [vmem:[%s0 + $0x90] sm:$0xf]
  %v52 = vld [vmem:[%s0 + $0x94] sm:$0xf]
  %v53 = vld [vmem:[%s0 + $0x98] sm:$0xf]
  %v54 = vld [vmem:[%s0 + $0x9c] sm:$0xf]
  %v55 = vld [vmem:[%s0 + $0xa0] sm:$0xf]
  %v56 = vld [vmem:[%s0 + $0xa4] sm:$0xf]
  %v57 = vld [vmem:[%s0 + $0xa8] sm:$0xf]
  %v58 = vld [vmem:[%s0 + $0xac] sm:$0xf]
  %v59 = vld [vmem:[%s0 + $0xb0] sm:$0xf]
  %v60 = vld [vmem:[%s0 + $0xb4] sm:$0xf]
  %v61 = vld [vmem:[%s0 + $0xb8] sm:$0xf]
  %v62 = vld [vmem:[%s0 + $0xbc] sm:$0xf]
  %v63 = vld [vmem:[%s0 + $0xc0] sm:$0xf]
  %v64 = vld [vmem:[%s1] sm:$0xf]
  %v65 = vld [vmem:[%s1 + $0x4] sm:$0xf]
  %v66 = vld [vmem:[%s1 + $0x8] sm:$0xf]
  %v67 = vld [vmem:[%s1 + $0xc] sm:$0xf]
  %v68 = vld [vmem:[%s1 + $0x10] sm:$0x3]
  %v69 = vld [vmem:[%s2] sm:$0x1]
  %v71 = vlaneseq
  %v72 = vshrl.u32 %v71, 7
  %v73 = vsub.s32 0, %v72
  %v74 = vrot.slane %v69, %v73
  %v125 = vunpack.c.l.b16 %v15
  %v126 = vunpack.c.l.b16 %v16
  %v127 = vunpack.c.l.b16 %v17
  %v128 = vunpack.c.l.b16 %v18
  %v129 = vunpack.c.l.b16 %v19
  %v130 = vunpack.c.l.b16 %v20
  %v131 = vunpack.c.l.b16 %v21
  %v132 = vunpack.c.l.b16 %v22
  %v133 = vunpack.c.l.b16 %v23
  %v134 = vunpack.c.l.b16 %v24
  %v135 = vunpack.c.l.b16 %v25
  %v136 = vunpack.c.l.b16 %v26
  %v137 = vunpack.c.l.b16 %v27
  %v138 = vunpack.c.l.b16 %v28
  %v139 = vunpack.c.l.b16 %v29
  %v140 = vunpack.c.l.b16 %v30
  %v141 = vunpack.c.l.b16 %v31
  %v142 = vunpack.c.l.b16 %v32
  %v143 = vunpack.c.l.b16 %v33
  %v144 = vunpack.c.l.b16 %v34
  %v145 = vunpack.c.l.b16 %v35
  %v146 = vunpack.c.l.b16 %v36
  %v147 = vunpack.c.l.b16 %v37
  %v148 = vunpack.c.l.b16 %v38
  %v149 = vunpack.c.l.b16 %v39
  %v150 = vunpack.c.l.b16 %v40
  %v151 = vunpack.c.l.b16 %v41
  %v152 = vunpack.c.l.b16 %v42
  %v153 = vunpack.c.l.b16 %v43
  %v154 = vunpack.c.l.b16 %v44
  %v155 = vunpack.c.l.b16 %v45
  %v156 = vunpack.c.l.b16 %v46
  %v157 = vunpack.c.l.b16 %v47
  %v158 = vunpack.c.l.b16 %v48
  %v159 = vunpack.c.l.b16 %v49
  %v160 = vunpack.c.l.b16 %v50
  %v161 = vunpack.c.l.b16 %v51
  %v162 = vunpack.c.l.b16 %v52
  %v163 = vunpack.c.l.b16 %v53
  %v164 = vunpack.c.l.b16 %v54
  %v165 = vunpack.c.l.b16 %v55
  %v166 = vunpack.c.l.b16 %v56
  %v167 = vunpack.c.l.b16 %v57
  %v168 = vunpack.c.l.b16 %v58
  %v169 = vunpack.c.l.b16 %v59
  %v170 = vunpack.c.l.b16 %v60
  %v171 = vunpack.c.l.b16 %v61
  %v172 = vunpack.c.l.b16 %v62
  %v173 = vunpack.c.l.b16 %v63
  %v174 = vpack.c.b16 %v126, %v125
  %v175 = vpack.c.b16 %v128, %v127
  %v176 = vpack.c.b16 %v130, %v129
  %v177 = vpack.c.b16 %v132, %v131
  %v178 = vpack.c.b16 %v134, %v133
  %v179 = vpack.c.b16 %v136, %v135
  %v180 = vpack.c.b16 %v138, %v137
  %v181 = vpack.c.b16 %v140, %v139
  %v182 = vpack.c.b16 %v142, %v141
  %v183 = vpack.c.b16 %v144, %v143
  %v184 = vpack.c.b16 %v146, %v145
  %v185 = vpack.c.b16 %v148, %v147
  %v186 = vpack.c.b16 %v150, %v149
  %v187 = vpack.c.b16 %v152, %v151
  %v188 = vpack.c.b16 %v154, %v153
  %v189 = vpack.c.b16 %v156, %v155
  %v190 = vpack.c.b16 %v158, %v157
  %v191 = vpack.c.b16 %v160, %v159
  %v192 = vpack.c.b16 %v162, %v161
  %v193 = vpack.c.b16 %v164, %v163
  %v194 = vpack.c.b16 %v166, %v165
  %v195 = vpack.c.b16 %v168, %v167
  %v196 = vpack.c.b16 %v170, %v169
  %v197 = vpack.c.b16 %v172, %v171
  %v198 = vpack.c.b16 %v173, %v173
  %v204 = vunpack.c.l.b16 %v64
  %v205 = vunpack.c.l.b16 %v65
  %v206 = vunpack.c.l.b16 %v66
  %v207 = vunpack.c.l.b16 %v67
  %v208 = vunpack.c.l.b16 %v68
  %v209 = vpack.c.b16 %v205, %v204
  %v210 = vpack.c.b16 %v207, %v206
  %v211 = vpack.c.b16 %v208, %v208
  %vm214 = vcmask 293888
  %v216 = vsel %vm214, %v174, 0
  %v219 = vsel %vm214, %v175, 0
  %v222 = vsel %vm214, %v176, 0
  %v225 = vsel %vm214, %v177, 0
  %v228 = vsel %vm214, %v178, 0
  %v231 = vsel %vm214, %v179, 0
  %v234 = vsel %vm214, %v180, 0
  %v237 = vsel %vm214, %v181, 0
  %v240 = vsel %vm214, %v182, 0
  %v243 = vsel %vm214, %v183, 0
  %v246 = vsel %vm214, %v184, 0
  %v249 = vsel %vm214, %v185, 0
  %v252 = vsel %vm214, %v186, 0
  %v255 = vsel %vm214, %v187, 0
  %v258 = vsel %vm214, %v188, 0
  %v261 = vsel %vm214, %v189, 0
  %v264 = vsel %vm214, %v190, 0
  %v267 = vsel %vm214, %v191, 0
  %v270 = vsel %vm214, %v192, 0
  %v273 = vsel %vm214, %v193, 0
  %v276 = vsel %vm214, %v194, 0
  %v279 = vsel %vm214, %v195, 0
  %v282 = vsel %vm214, %v196, 0
  %v285 = vsel %vm214, %v197, 0
  %v288 = vsel %vm214, %v198, 0
  %vm290 = vcmask 1041408
  %v292 = vsel %vm290, %v211, 0
  %294 = vmatprep.subr.bf16.mxu0 0
  %295 = vmatpush1.bf16.msra.mxu0 %v209
  %296 = vmatprep.subr.bf16.mxu0 0
  %297 = vmatpush1.bf16.msra.mxu0 %v210
  %298 = vmatprep.subr.bf16.mxu0 0
  %299 = vmatpush1.bf16.msra.mxu0 %v292
  %300 = vmatprep.subr.bf16.mxu0 0
  %301 = vmatpush1.bf16.msra.mxu0 0
  %302 = vmatprep.subr.bf16.mxu0 0
  %303 = vmatpush1.bf16.msra.mxu0 0
  %304 = vmatprep.subr.bf16.mxu0 0
  %305 = vmatpush1.bf16.msra.mxu0 0
  %306 = vmatprep.subr.bf16.mxu0 0
  %307 = vmatpush1.bf16.msra.mxu0 0
  %308 = vmatprep.subr.bf16.mxu0 0
  %309 = vmatpush1.bf16.msra.mxu0 0
  %310 = vmatprep.subr.bf16.mxu0 0
  %311 = vmatpush1.bf16.msra.mxu0 0
  %312 = vmatprep.subr.bf16.mxu0 0
  %313 = vmatpush1.bf16.msra.mxu0 0
  %314 = vmatprep.subr.bf16.mxu0 0
  %315 = vmatpush1.bf16.msra.mxu0 0
  %316 = vmatprep.subr.bf16.mxu0 0
  %317 = vmatpush1.bf16.msra.mxu0 0
  %318 = vmatprep.subr.bf16.mxu0 0
  %319 = vmatpush1.bf16.msra.mxu0 0
  %320 = vmatprep.subr.bf16.mxu0 0
  %321 = vmatpush1.bf16.msra.mxu0 0
  %322 = vmatprep.subr.bf16.mxu0 0
  %323 = vmatpush1.bf16.msra.mxu0 0
  %324 = vmatprep.subr.bf16.mxu0 0
  %325 = vmatpush1.bf16.msra.mxu0 0
  %326 = vmatprep.mubr.bf16.mxu0 0
  %327 = vmatmul.mubr.bf16.gmra.mrb[0].mxu0 %v216
  %v328 = vpop.f32.mrb[0].mxu0
  %v329 = vadd.f32 %v74, %v328
  %v330 = vpop.f32.mrb[0].mxu0
  %v331 = vpop.f32.mrb[0].mxu0
  %v332 = vadd.f32 %v74, %v331
  %v333 = vpop.f32.mrb[0].mxu0
  %334 = vmatprep.mubr.bf16.mxu0 0
  %335 = vmatmul.mubr.bf16.gmra.mrb[0].mxu0 %v219
  %v336 = vpop.f32.mrb[0].mxu0
  %v337 = vadd.f32 %v74, %v336
  %v338 = vpop.f32.mrb[0].mxu0
  %v339 = vpop.f32.mrb[0].mxu0
  %v340 = vadd.f32 %v74, %v339
  %v341 = vpop.f32.mrb[0].mxu0
  %342 = vmatprep.mubr.bf16.mxu0 0
  %343 = vmatmul.mubr.bf16.gmra.mrb[0].mxu0 %v222
  %v344 = vpop.f32.mrb[0].mxu0
  %v345 = vadd.f32 %v74, %v344
  %v346 = vpop.f32.mrb[0].mxu0
  %v347 = vpop.f32.mrb[0].mxu0
  %v348 = vadd.f32 %v74, %v347
  %v349 = vpop.f32.mrb[0].mxu0
  %350 = vmatprep.mubr.bf16.mxu0 0
  %351 = vmatmul.mubr.bf16.gmra.mrb[0].mxu0 %v225
  %v352 = vpop.f32.mrb[0].mxu0
  %v353 = vadd.f32 %v74, %v352
  %v354 = vpop.f32.mrb[0].mxu0
  %v355 = vpop.f32.mrb[0].mxu0
  %v356 = vadd.f32 %v74, %v355
  %v357 = vpop.f32.mrb[0].mxu0
  %358 = vmatprep.mubr.bf16.mxu0 0
  %359 = vmatmul.mubr.bf16.gmra.mrb[0].mxu0 %v228
  %v360 = vpop.f32.mrb[0].mxu0
  %v361 = vadd.f32 %v74, %v360
  %v362 = vpop.f32.mrb[0].mxu0
  %v363 = vpop.f32.mrb[0].mxu0
  %v364 = vadd.f32 %v74, %v363
  %v365 = vpop.f32.mrb[0].mxu0
  %366 = vmatprep.mubr.bf16.mxu0 0
  %367 = vmatmul.mubr.bf16.gmra.mrb[0].mxu0 %v231
  %v368 = vpop.f32.mrb[0].mxu0
  %v369 = vadd.f32 %v74, %v368
  %v370 = vpop.f32.mrb[0].mxu0
  %v371 = vpop.f32.mrb[0].mxu0
  %v372 = vadd.f32 %v74, %v371
  %v373 = vpop.f32.mrb[0].mxu0
  %374 = vmatprep.mubr.bf16.mxu0 0
  %375 = vmatmul.mubr.bf16.gmra.mrb[0].mxu0 %v234
  %v376 = vpop.f32.mrb[0].mxu0
  %v377 = vadd.f32 %v74, %v376
  %v378 = vpop.f32.mrb[0].mxu0
  %v379 = vpop.f32.mrb[0].mxu0
  %v380 = vadd.f32 %v74, %v379
  %v381 = vpop.f32.mrb[0].mxu0
  %382 = vmatprep.mubr.bf16.mxu0 0
  %383 = vmatmul.mubr.bf16.gmra.mrb[0].mxu0 %v237
  %v384 = vpop.f32.mrb[0].mxu0
  %v385 = vadd.f32 %v74, %v384
  %v386 = vpop.f32.mrb[0].mxu0
  %v387 = vpop.f32.mrb[0].mxu0
  %v388 = vadd.f32 %v74, %v387
  %v389 = vpop.f32.mrb[0].mxu0
  %390 = vmatprep.mubr.bf16.mxu0 0
  %391 = vmatmul.mubr.bf16.gmra.mrb[0].mxu0 %v240
  %v392 = vpop.f32.mrb[0].mxu0
  %v393 = vadd.f32 %v74, %v392
  %v394 = vpop.f32.mrb[0].mxu0
  %v395 = vpop.f32.mrb[0].mxu0
  %v396 = vadd.f32 %v74, %v395
  %v397 = vpop.f32.mrb[0].mxu0
  %398 = vmatprep.mubr.bf16.mxu0 0
  %399 = vmatmul.mubr.bf16.gmra.mrb[0].mxu0 %v243
  %v400 = vpop.f32.mrb[0].mxu0
  %v401 = vadd.f32 %v74, %v400
  %v402 = vpop.f32.mrb[0].mxu0
  %v403 = vpop.f32.mrb[0].mxu0
  %v404 = vadd.f32 %v74, %v403
  %v405 = vpop.f32.mrb[0].mxu0
  %406 = vmatprep.mubr.bf16.mxu0 0
  %407 = vmatmul.mubr.bf16.gmra.mrb[0].mxu0 %v246
  %v408 = vpop.f32.mrb[0].mxu0
  %v409 = vadd.f32 %v74, %v408
  %v410 = vpop.f32.mrb[0].mxu0
  %v411 = vpop.f32.mrb[0].mxu0
  %v412 = vadd.f32 %v74, %v411
  %v413 = vpop.f32.mrb[0].mxu0
  %414 = vmatprep.mubr.bf16.mxu0 0
  %415 = vmatmul.mubr.bf16.gmra.mrb[0].mxu0 %v249
  %v416 = vpop.f32.mrb[0].mxu0
  %v417 = vadd.f32 %v74, %v416
  %v418 = vpop.f32.mrb[0].mxu0
  %v419 = vpop.f32.mrb[0].mxu0
  %v420 = vadd.f32 %v74, %v419
  %v421 = vpop.f32.mrb[0].mxu0
  %422 = vmatprep.mubr.bf16.mxu0 0
  %423 = vmatmul.mubr.bf16.gmra.mrb[0].mxu0 %v252
  %v424 = vpop.f32.mrb[0].mxu0
  %v425 = vadd.f32 %v74, %v424
  %v426 = vpop.f32.mrb[0].mxu0
  %v427 = vpop.f32.mrb[0].mxu0
  %v428 = vadd.f32 %v74, %v427
  %v429 = vpop.f32.mrb[0].mxu0
  %430 = vmatprep.mubr.bf16.mxu0 0
  %431 = vmatmul.mubr.bf16.gmra.mrb[0].mxu0 %v255
  %v432 = vpop.f32.mrb[0].mxu0
  %v433 = vadd.f32 %v74, %v432
  %v434 = vpop.f32.mrb[0].mxu0
  %v435 = vpop.f32.mrb[0].mxu0
  %v436 = vadd.f32 %v74, %v435
  %v437 = vpop.f32.mrb[0].mxu0
  %438 = vmatprep.mubr.bf16.mxu0 0
  %439 = vmatmul.mubr.bf16.gmra.mrb[0].mxu0 %v258
  %v440 = vpop.f32.mrb[0].mxu0
  %v441 = vadd.f32 %v74, %v440
  %v442 = vpop.f32.mrb[0].mxu0
  %v443 = vpop.f32.mrb[0].mxu0
  %v444 = vadd.f32 %v74, %v443
  %v445 = vpop.f32.mrb[0].mxu0
  %446 = vmatprep.mubr.bf16.mxu0 0
  %447 = vmatmul.mubr.bf16.gmra.mrb[0].mxu0 %v261
  %v448 = vpop.f32.mrb[0].mxu0
  %v449 = vadd.f32 %v74, %v448
  %v450 = vpop.f32.mrb[0].mxu0
  %v451 = vpop.f32.mrb[0].mxu0
  %v452 = vadd.f32 %v74, %v451
  %v453 = vpop.f32.mrb[0].mxu0
  %454 = vmatprep.mubr.bf16.mxu0 0
  %455 = vmatmul.mubr.bf16.gmra.mrb[0].mxu0 %v264
  %v456 = vpop.f32.mrb[0].mxu0
  %v457 = vadd.f32 %v74, %v456
  %v458 = vpop.f32.mrb[0].mxu0
  %v459 = vpop.f32.mrb[0].mxu0
  %v460 = vadd.f32 %v74, %v459
  %v461 = vpop.f32.mrb[0].mxu0
  %462 = vmatprep.mubr.bf16.mxu0 0
  %463 = vmatmul.mubr.bf16.gmra.mrb[0].mxu0 %v267
  %v464 = vpop.f32.mrb[0].mxu0
  %v465 = vadd.f32 %v74, %v464
  %v466 = vpop.f32.mrb[0].mxu0
  %v467 = vpop.f32.mrb[0].mxu0
  %v468 = vadd.f32 %v74, %v467
  %v469 = vpop.f32.mrb[0].mxu0
  %470 = vmatprep.mubr.bf16.mxu0 0
  %471 = vmatmul.mubr.bf16.gmra.mrb[0].mxu0 %v270
  %v472 = vpop.f32.mrb[0].mxu0
  %v473 = vadd.f32 %v74, %v472
  %v474 = vpop.f32.mrb[0].mxu0
  %v475 = vpop.f32.mrb[0].mxu0
  %v476 = vadd.f32 %v74, %v475
  %v477 = vpop.f32.mrb[0].mxu0
  %478 = vmatprep.mubr.bf16.mxu0 0
  %479 = vmatmul.mubr.bf16.gmra.mrb[0].mxu0 %v273
  %v480 = vpop.f32.mrb[0].mxu0
  %v481 = vadd.f32 %v74, %v480
  %v482 = vpop.f32.mrb[0].mxu0
  %v483 = vpop.f32.mrb[0].mxu0
  %v484 = vadd.f32 %v74, %v483
  %v485 = vpop.f32.mrb[0].mxu0
  %486 = vmatprep.mubr.bf16.mxu0 0
  %487 = vmatmul.mubr.bf16.gmra.mrb[0].mxu0 %v276
  %v488 = vpop.f32.mrb[0].mxu0
  %v489 = vadd.f32 %v74, %v488
  %v490 = vpop.f32.mrb[0].mxu0
  %v491 = vpop.f32.mrb[0].mxu0
  %v492 = vadd.f32 %v74, %v491
  %v493 = vpop.f32.mrb[0].mxu0
  %494 = vmatprep.mubr.bf16.mxu0 0
  %495 = vmatmul.mubr.bf16.gmra.mrb[0].mxu0 %v279
  %v496 = vpop.f32.mrb[0].mxu0
  %v497 = vadd.f32 %v74, %v496
  %v498 = vpop.f32.mrb[0].mxu0
  %v499 = vpop.f32.mrb[0].mxu0
  %v500 = vadd.f32 %v74, %v499
  %v501 = vpop.f32.mrb[0].mxu0
  %502 = vmatprep.mubr.bf16.mxu0 0
  %503 = vmatmul.mubr.bf16.gmra.mrb[0].mxu0 %v282
  %v504 = vpop.f32.mrb[0].mxu0
  %v505 = vadd.f32 %v74, %v504
  %v506 = vpop.f32.mrb[0].mxu0
  %v507 = vpop.f32.mrb[0].mxu0
  %v508 = vadd.f32 %v74, %v507
  %v509 = vpop.f32.mrb[0].mxu0
  %510 = vmatprep.mubr.bf16.mxu0 0
  %511 = vmatmul.mubr.bf16.gmra.mrb[0].mxu0 %v285
  %v512 = vpop.f32.mrb[0].mxu0
  %v513 = vadd.f32 %v74, %v512
  %v514 = vpop.f32.mrb[0].mxu0
  %v515 = vpop.f32.mrb[0].mxu0
  %v516 = vadd.f32 %v74, %v515
  %v517 = vpop.f32.mrb[0].mxu0
  %518 = vmatprep.mubr.bf16.mxu0 0
  %519 = vmatmul.mubr.bf16.gmra.mrb[0].mxu0 %v288
  %v520 = vpop.f32.mrb[0].mxu0
  %v521 = vadd.f32 %v74, %v520
  %v522 = vpop.f32.mrb[0].mxu0
  %v523 = vpop.f32.mrb[0].mxu0
  %v524 = vpop.f32.mrb[0].mxu0
  %525 = vdwg.mxu0
  %v526 = vmax.f32 %v329, 0.0
  %v527 = vmax.f32 %v332, 0.0
  %v528 = vmax.f32 %v337, 0.0
  %v529 = vmax.f32 %v340, 0.0
  %v530 = vmax.f32 %v345, 0.0
  %v531 = vmax.f32 %v348, 0.0
  %v532 = vmax.f32 %v353, 0.0
  %v533 = vmax.f32 %v356, 0.0
  %v534 = vmax.f32 %v361, 0.0
  %v535 = vmax.f32 %v364, 0.0
  %v536 = vmax.f32 %v369, 0.0
  %v537 = vmax.f32 %v372, 0.0
  %v538 = vmax.f32 %v377, 0.0
  %v539 = vmax.f32 %v380, 0.0
  %v540 = vmax.f32 %v385, 0.0
  %v541 = vmax.f32 %v388, 0.0
  %v542 = vmax.f32 %v393, 0.0
  %v543 = vmax.f32 %v396, 0.0
  %v544 = vmax.f32 %v401, 0.0
  %v545 = vmax.f32 %v404, 0.0
  %v546 = vmax.f32 %v409, 0.0
  %v547 = vmax.f32 %v412, 0.0
  %v548 = vmax.f32 %v417, 0.0
  %v549 = vmax.f32 %v420, 0.0
  %v550 = vmax.f32 %v425, 0.0
  %v551 = vmax.f32 %v428, 0.0
  %v552 = vmax.f32 %v433, 0.0
  %v553 = vmax.f32 %v436, 0.0
  %v554 = vmax.f32 %v441, 0.0
  %v555 = vmax.f32 %v444, 0.0
  %v556 = vmax.f32 %v449, 0.0
  %v557 = vmax.f32 %v452, 0.0
  %v558 = vmax.f32 %v457, 0.0
  %v559 = vmax.f32 %v460, 0.0
  %v560 = vmax.f32 %v465, 0.0
  %v561 = vmax.f32 %v468, 0.0
  %v562 = vmax.f32 %v473, 0.0
  %v563 = vmax.f32 %v476, 0.0
  %v564 = vmax.f32 %v481, 0.0
  %v565 = vmax.f32 %v484, 0.0
  %v566 = vmax.f32 %v489, 0.0
  %v567 = vmax.f32 %v492, 0.0
  %v568 = vmax.f32 %v497, 0.0
  %v569 = vmax.f32 %v500, 0.0
  %v570 = vmax.f32 %v505, 0.0
  %v571 = vmax.f32 %v508, 0.0
  %v572 = vmax.f32 %v513, 0.0
  %v573 = vmax.f32 %v516, 0.0
  %v574 = vmax.f32 %v521, 0.0
  %v575 = vpack.c.bf16 %v527, %v526
  %v576 = vpack.c.bf16 %v529, %v528
  %v577 = vpack.c.bf16 %v531, %v530
  %v578 = vpack.c.bf16 %v533, %v532
  %v579 = vpack.c.bf16 %v535, %v534
  %v580 = vpack.c.bf16 %v537, %v536
  %v581 = vpack.c.bf16 %v539, %v538
  %v582 = vpack.c.bf16 %v541, %v540
  %v583 = vpack.c.bf16 %v543, %v542
  %v584 = vpack.c.bf16 %v545, %v544
  %v585 = vpack.c.bf16 %v547, %v546
  %v586 = vpack.c.bf16 %v549, %v548
  %v587 = vpack.c.bf16 %v551, %v550
  %v588 = vpack.c.bf16 %v553, %v552
  %v589 = vpack.c.bf16 %v555, %v554
  %v590 = vpack.c.bf16 %v557, %v556
  %v591 = vpack.c.bf16 %v559, %v558
  %v592 = vpack.c.bf16 %v561, %v560
  %v593 = vpack.c.bf16 %v563, %v562
  %v594 = vpack.c.bf16 %v565, %v564
  %v595 = vpack.c.bf16 %v567, %v566
  %v596 = vpack.c.bf16 %v569, %v568
  %v597 = vpack.c.bf16 %v571, %v570
  %v598 = vpack.c.bf16 %v573, %v572
  %v599 = vpack.c.bf16 %v574, %v574
  %v625 = vunpack.c.l.b16 %v575
  %v626 = vunpack.c.h.b16 %v575
  %v627 = vunpack.c.l.b16 %v576
  %v628 = vunpack.c.h.b16 %v576
  %v629 = vunpack.c.l.b16 %v577
  %v630 = vunpack.c.h.b16 %v577
  %v631 = vunpack.c.l.b16 %v578
  %v632 = vunpack.c.h.b16 %v578
  %v633 = vunpack.c.l.b16 %v579
  %v634 = vunpack.c.h.b16 %v579
  %v635 = vunpack.c.l.b16 %v580
  %v636 = vunpack.c.h.b16 %v580
  %v637 = vunpack.c.l.b16 %v581
  %v638 = vunpack.c.h.b16 %v581
  %v639 = vunpack.c.l.b16 %v582
  %v640 = vunpack.c.h.b16 %v582
  %v641 = vunpack.c.l.b16 %v583
  %v642 = vunpack.c.h.b16 %v583
  %v643 = vunpack.c.l.b16 %v584
  %v644 = vunpack.c.h.b16 %v584
  %v645 = vunpack.c.l.b16 %v585
  %v646 = vunpack.c.h.b16 %v585
  %v647 = vunpack.c.l.b16 %v586
  %v648 = vunpack.c.h.b16 %v586
  %v649 = vunpack.c.l.b16 %v587
  %v650 = vunpack.c.h.b16 %v587
  %v651 = vunpack.c.l.b16 %v588
  %v652 = vunpack.c.h.b16 %v588
  %v653 = vunpack.c.l.b16 %v589
  %v654 = vunpack.c.h.b16 %v589
  %v655 = vunpack.c.l.b16 %v590
  %v656 = vunpack.c.h.b16 %v590
  %v657 = vunpack.c.l.b16 %v591
  %v658 = vunpack.c.h.b16 %v591
  %v659 = vunpack.c.l.b16 %v592
  %v660 = vunpack.c.h.b16 %v592
  %v661 = vunpack.c.l.b16 %v593
  %v662 = vunpack.c.h.b16 %v593
  %v663 = vunpack.c.l.b16 %v594
  %v664 = vunpack.c.h.b16 %v594
  %v665 = vunpack.c.l.b16 %v595
  %v666 = vunpack.c.h.b16 %v595
  %v667 = vunpack.c.l.b16 %v596
  %v668 = vunpack.c.h.b16 %v596
  %v669 = vunpack.c.l.b16 %v597
  %v670 = vunpack.c.h.b16 %v597
  %v671 = vunpack.c.l.b16 %v598
  %v672 = vunpack.c.h.b16 %v598
  %v673 = vunpack.c.l.b16 %v599
  %v674 = vpack.c.b16 %v625, %v625
  %v675 = vpack.c.b16 %v626, %v626
  %v676 = vpack.c.b16 %v627, %v627
  %v677 = vpack.c.b16 %v628, %v628
  %v678 = vpack.c.b16 %v629, %v629
  %v679 = vpack.c.b16 %v630, %v630
  %v680 = vpack.c.b16 %v631, %v631
  %v681 = vpack.c.b16 %v632, %v632
  %v682 = vpack.c.b16 %v633, %v633
  %v683 = vpack.c.b16 %v634, %v634
  %v684 = vpack.c.b16 %v635, %v635
  %v685 = vpack.c.b16 %v636, %v636
  %v686 = vpack.c.b16 %v637, %v637
  %v687 = vpack.c.b16 %v638, %v638
  %v688 = vpack.c.b16 %v639, %v639
  %v689 = vpack.c.b16 %v640, %v640
  %v690 = vpack.c.b16 %v641, %v641
  %v691 = vpack.c.b16 %v642, %v642
  %v692 = vpack.c.b16 %v643, %v643
  %v693 = vpack.c.b16 %v644, %v644
  %v694 = vpack.c.b16 %v645, %v645
  %v695 = vpack.c.b16 %v646, %v646
  %v696 = vpack.c.b16 %v647, %v647
  %v697 = vpack.c.b16 %v648, %v648
  %v698 = vpack.c.b16 %v649, %v649
  %v699 = vpack.c.b16 %v650, %v650
  %v700 = vpack.c.b16 %v651, %v651
  %v701 = vpack.c.b16 %v652, %v652
  %v702 = vpack.c.b16 %v653, %v653
  %v703 = vpack.c.b16 %v654, %v654
  %v704 = vpack.c.b16 %v655, %v655
  %v705 = vpack.c.b16 %v656, %v656
  %v706 = vpack.c.b16 %v657, %v657
  %v707 = vpack.c.b16 %v658, %v658
  %v708 = vpack.c.b16 %v659, %v659
  %v709 = vpack.c.b16 %v660, %v660
  %v710 = vpack.c.b16 %v661, %v661
  %v711 = vpack.c.b16 %v662, %v662
  %v712 = vpack.c.b16 %v663, %v663
  %v713 = vpack.c.b16 %v664, %v664
  %v714 = vpack.c.b16 %v665, %v665
  %v715 = vpack.c.b16 %v666, %v666
  %v716 = vpack.c.b16 %v667, %v667
  %v717 = vpack.c.b16 %v668, %v668
  %v718 = vpack.c.b16 %v669, %v669
  %v719 = vpack.c.b16 %v670, %v670
  %v720 = vpack.c.b16 %v671, %v671
  %v721 = vpack.c.b16 %v672, %v672
  %v722 = vpack.c.b16 %v673, %v673
  %772 = vst [vmem:[%s3] sm:$0xf] %v674
  %773 = vst [vmem:[%s3 + $0x4] sm:$0xf] %v675
  %774 = vst [vmem:[%s3 + $0x8] sm:$0xf] %v676
  %775 = vst [vmem:[%s3 + $0xc] sm:$0xf] %v677
  %776 = vst [vmem:[%s3 + $0x10] sm:$0xf] %v678
  %777 = vst [vmem:[%s3 + $0x14] sm:$0xf] %v679
  %778 = vst [vmem:[%s3 + $0x18] sm:$0xf] %v680
  %779 = vst [vmem:[%s3 + $0x1c] sm:$0xf] %v681
  %780 = vst [vmem:[%s3 + $0x20] sm:$0xf] %v682
  %781 = vst [vmem:[%s3 + $0x24] sm:$0xf] %v683
  %782 = vst [vmem:[%s3 + $0x28] sm:$0xf] %v684
  %783 = vst [vmem:[%s3 + $0x2c] sm:$0xf] %v685
  %784 = vst [vmem:[%s3 + $0x30] sm:$0xf] %v686
  %785 = vst [vmem:[%s3 + $0x34] sm:$0xf] %v687
  %786 = vst [vmem:[%s3 + $0x38] sm:$0xf] %v688
  %787 = vst [vmem:[%s3 + $0x3c] sm:$0xf] %v689
  %788 = vst [vmem:[%s3 + $0x40] sm:$0xf] %v690
  %789 = vst [vmem:[%s3 + $0x44] sm:$0xf] %v691
  %790 = vst [vmem:[%s3 + $0x48] sm:$0xf] %v692
  %791 = vst [vmem:[%s3 + $0x4c] sm:$0xf] %v693
  %792 = vst [vmem:[%s3 + $0x50] sm:$0xf] %v694
  %793 = vst [vmem:[%s3 + $0x54] sm:$0xf] %v695
  %794 = vst [vmem:[%s3 + $0x58] sm:$0xf] %v696
  %795 = vst [vmem:[%s3 + $0x5c] sm:$0xf] %v697
  %796 = vst [vmem:[%s3 + $0x60] sm:$0xf] %v698
  %797 = vst [vmem:[%s3 + $0x64] sm:$0xf] %v699
  %798 = vst [vmem:[%s3 + $0x68] sm:$0xf] %v700
  %799 = vst [vmem:[%s3 + $0x6c] sm:$0xf] %v701
  %800 = vst [vmem:[%s3 + $0x70] sm:$0xf] %v702
  %801 = vst [vmem:[%s3 + $0x74] sm:$0xf] %v703
  %802 = vst [vmem:[%s3 + $0x78] sm:$0xf] %v704
  %803 = vst [vmem:[%s3 + $0x7c] sm:$0xf] %v705
  %804 = vst [vmem:[%s3 + $0x80] sm:$0xf] %v706
  %805 = vst [vmem:[%s3 + $0x84] sm:$0xf] %v707
  %806 = vst [vmem:[%s3 + $0x88] sm:$0xf] %v708
  %807 = vst [vmem:[%s3 + $0x8c] sm:$0xf] %v709
  %808 = vst [vmem:[%s3 + $0x90] sm:$0xf] %v710
  %809 = vst [vmem:[%s3 + $0x94] sm:$0xf] %v711
  %810 = vst [vmem:[%s3 + $0x98] sm:$0xf] %v712
  %811 = vst [vmem:[%s3 + $0x9c] sm:$0xf] %v713
  %812 = vst [vmem:[%s3 + $0xa0] sm:$0xf] %v714
  %813 = vst [vmem:[%s3 + $0xa4] sm:$0xf] %v715
  %814 = vst [vmem:[%s3 + $0xa8] sm:$0xf] %v716
  %815 = vst [vmem:[%s3 + $0xac] sm:$0xf] %v717
  %816 = vst [vmem:[%s3 + $0xb0] sm:$0xf] %v718
  %817 = vst [vmem:[%s3 + $0xb4] sm:$0xf] %v719
  %818 = vst [vmem:[%s3 + $0xb8] sm:$0xf] %v720
  %819 = vst [vmem:[%s3 + $0xbc] sm:$0xf] %v721
  %820 = vst [vmem:[%s3 + $0xc0] sm:$0xf] %v722
  // Predicated region
  $region14: #{qnetwork_forward.4} parent=0 // pred_check
    _
  $region15: #{qnetwork_forward.4} parent=0 // pred_check_branch
    %822 = sbr.rel (0) target = $region17
  $region16: #{qnetwork_forward.4} parent=0 // pred_region
    _
  $region17: #{qnetwork_forward.4} parent=0 // pred_fallthru
    _
  // Predicated region
  $region18: #{qnetwork_forward.4} parent=0 // pred_check
    _
  $region19: #{qnetwork_forward.4} parent=0 // pred_check_branch
    %824 = sbr.rel (0) target = $region21
  $region20: #{qnetwork_forward.4} parent=0 // pred_region
    _
  $region21: #{qnetwork_forward.4} parent=0 // pred_fallthru
    _

// kernel: qnetwork_forward.5
$region0: #{qnetwork_forward.5}
  #allocation0 [shape = 'u32[]', space=smem, size = 0x4, offset = 0x4, fixed_abs, tag = 'smem constant byte address 0x4 - core index']
  #allocation1 [shape = 'u32[144,128]{1,0:T(1,128)}', space=vmem, size = 0x12000, scoped, tag = 'internal scratch']
  %s0 = inlined_call_operand.vmem [shape: bf16[288,1152], index: 0, kind: input, shape index: {}]
  %s1 = inlined_call_operand.vmem [shape: bf16[1152,128], index: 1, kind: input, shape index: {}]
  %s2 = inlined_call_operand.vmem [shape: f32[1,128], index: 2, kind: input, shape index: {}]
  %s3 = inlined_call_operand.vmem [shape: bf16[288,128], index: 3, kind: output, shape index: {}]
  %s4 = sld [smem:[#allocation0]]
  $region22: #{qnetwork_forward.5} parent=0
    _
  %s6 = ssub.s32 1, %s4
  %s7 = scalar_select 0, %s6, %s4
  // Predicated region
  $region2: #{qnetwork_forward.5} parent=0 // pred_check
    _
  $region3: #{qnetwork_forward.5} parent=0 // pred_check_branch
    %9 = sbr.rel (0) target = $region5
  $region4: #{qnetwork_forward.5} parent=0 // pred_region
    _
  $region5: #{qnetwork_forward.5} parent=0 // pred_fallthru
    _
  // Predicated region
  $region6: #{qnetwork_forward.5} parent=0 // pred_check
    _
  $region7: #{qnetwork_forward.5} parent=0 // pred_check_branch
    %11 = sbr.rel (0) target = $region9
  $region8: #{qnetwork_forward.5} parent=0 // pred_region
    _
  $region9: #{qnetwork_forward.5} parent=0 // pred_fallthru
    _
  // Predicated region
  $region10: #{qnetwork_forward.5} parent=0 // pred_check
    _
  $region11: #{qnetwork_forward.5} parent=0 // pred_check_branch
    %13 = sbr.rel (0) target = $region13
  $region12: #{qnetwork_forward.5} parent=0 // pred_region
    _
  $region13: #{qnetwork_forward.5} parent=0 // pred_fallthru
    _
  %v15 = vld [vmem:[%s0] sm:$0xff]
  %v16 = vld [vmem:[%s0 + $0x8] sm:$0xff]
  %v17 = vld [vmem:[%s0 + $0x10] sm:$0xff]
  %v18 = vld [vmem:[%s0 + $0x18] sm:$0xff]
  %v19 = vld [vmem:[%s0 + $0x20] sm:$0xf]
  %v20 = vld [vmem:[%s0 + $0x24] sm:$0xff]
  %v21 = vld [vmem:[%s0 + $0x2c] sm:$0xff]
  %v22 = vld [vmem:[%s0 + $0x34] sm:$0xff]
  %v23 = vld [vmem:[%s0 + $0x3c] sm:$0xff]
  %v24 = vld [vmem:[%s0 + $0x44] sm:$0xf]
  %v25 = vld [vmem:[%s0 + $0x48] sm:$0xff]
  %v26 = vld [vmem:[%s0 + $0x50] sm:$0xff]
  %v27 = vld [vmem:[%s0 + $0x58] sm:$0xff]
  %v28 = vld [vmem:[%s0 + $0x60] sm:$0xff]
  %v29 = vld [vmem:[%s0 + $0x68] sm:$0xf]
  %v30 = vld [vmem:[%s0 + $0x6c] sm:$0xff]
  %v31 = vld [vmem:[%s0 + $0x74] sm:$0xff]
  %v32 = vld [vmem:[%s0 + $0x7c] sm:$0xff]
  %v33 = vld [vmem:[%s0 + $0x84] sm:$0xff]
  %v34 = vld [vmem:[%s0 + $0x8c] sm:$0xf]
  %v35 = vld [vmem:[%s0 + $0x90] sm:$0xff]
  %v36 = vld [vmem:[%s0 + $0x98] sm:$0xff]
  %v37 = vld [vmem:[%s0 + $0xa0] sm:$0xff]
  %v38 = vld [vmem:[%s0 + $0xa8] sm:$0xff]
  %v39 = vld [vmem:[%s0 + $0xb0] sm:$0xf]
  %v40 = vld [vmem:[%s0 + $0xb4] sm:$0xff]
  %v41 = vld [vmem:[%s0 + $0xbc] sm:$0xff]
  %v42 = vld [vmem:[%s0 + $0xc4] sm:$0xff]
  %v43 = vld [vmem:[%s0 + $0xcc] sm:$0xff]
  %v44 = vld [vmem:[%s0 + $0xd4] sm:$0xf]
  %v45 = vld [vmem:[%s0 + $0xd8] sm:$0xff]
  %v46 = vld [vmem:[%s0 + $0xe0] sm:$0xff]
  %v47 = vld [vmem:[%s0 + $0xe8] sm:$0xff]
  %v48 = vld [vmem:[%s0 + $0xf0] sm:$0xff]
  %v49 = vld [vmem:[%s0 + $0xf8] sm:$0xf]
  %v50 = vld [vmem:[%s0 + $0xfc] sm:$0xff]
  %v51 = vld [vmem:[%s0 + $0x104] sm:$0xff]
  %v52 = vld [vmem:[%s0 + $0x10c] sm:$0xff]
  %v53 = vld [vmem:[%s0 + $0x114] sm:$0xff]
  %v54 = vld [vmem:[%s0 + $0x11c] sm:$0xf]
  %v55 = vld [vmem:[%s0 + $0x120] sm:$0xff]
  %v56 = vld [vmem:[%s0 + $0x128] sm:$0xff]
  %v57 = vld [vmem:[%s0 + $0x130] sm:$0xff]
  %v58 = vld [vmem:[%s0 + $0x138] sm:$0xff]
  %v59 = vld [vmem:[%s0 + $0x140] sm:$0xf]
  %v60 = vld [vmem:[%s0 + $0x144] sm:$0xff]
  %v61 = vld [vmem:[%s0 + $0x14c] sm:$0xff]
  %v62 = vld [vmem:[%s0 + $0x154] sm:$0xff]
  %v63 = vld [vmem:[%s0 + $0x15c] sm:$0xff]
  %v64 = vld [vmem:[%s0 + $0x164] sm:$0xf]
  %v65 = vld [vmem:[%s0 + $0x168] sm:$0xff]
  %v66 = vld [vmem:[%s0 + $0x170] sm:$0xff]
  %v67 = vld [vmem:[%s0 + $0x178] sm:$0xff]
  %v68 = vld [vmem:[%s0 + $0x180] sm:$0xff]
  %v69 = vld [vmem:[%s0 + $0x188] sm:$0xf]
  %v70 = vld [vmem:[%s0 + $0x18c] sm:$0xff]
  %v71 = vld [vmem:[%s0 + $0x194] sm:$0xff]
  %v72 = vld [vmem:[%s0 + $0x19c] sm:$0xff]
  %v73 = vld [vmem:[%s0 + $0x1a4] sm:$0xff]
  %v74 = vld [vmem:[%s0 + $0x1ac] sm:$0xf]
  %v75 = vld [vmem:[%s0 + $0x1b0] sm:$0xff]
  %v76 = vld [vmem:[%s0 + $0x1b8] sm:$0xff]
  %v77 = vld [vmem:[%s0 + $0x1c0] sm:$0xff]
  %v78 = vld [vmem:[%s0 + $0x1c8] sm:$0xff]
  %v79 = vld [vmem:[%s0 + $0x1d0] sm:$0xf]
  %v80 = vld [vmem:[%s0 + $0x1d4] sm:$0xff]
  %v81 = vld [vmem:[%s0 + $0x1dc] sm:$0xff]
  %v82 = vld [vmem:[%s0 + $0x1e4] sm:$0xff]
  %v83 = vld [vmem:[%s0 + $0x1ec] sm:$0xff]
  %v84 = vld [vmem:[%s0 + $0x1f4] sm:$0xf]
  %v85 = vld [vmem:[%s0 + $0x1f8] sm:$0xff]
  %v86 = vld [vmem:[%s0 + $0x200] sm:$0xff]
  %v87 = vld [vmem:[%s0 + $0x208] sm:$0xff]
  %v88 = vld [vmem:[%s0 + $0x210] sm:$0xff]
  %v89 = vld [vmem:[%s0 + $0x218] sm:$0xf]
  %v90 = vld [vmem:[%s0 + $0x21c] sm:$0xff]
  %v91 = vld [vmem:[%s0 + $0x224] sm:$0xff]
  %v92 = vld [vmem:[%s0 + $0x22c] sm:$0xff]
  %v93 = vld [vmem:[%s0 + $0x234] sm:$0xff]
  %v94 = vld [vmem:[%s0 + $0x23c] sm:$0xf]
  %v95 = vld [vmem:[%s0 + $0x240] sm:$0xff]
  %v96 = vld [vmem:[%s0 + $0x248] sm:$0xff]
  %v97 = vld [vmem:[%s0 + $0x250] sm:$0xff]
  %v98 = vld [vmem:[%s0 + $0x258] sm:$0xff]
  %v99 = vld [vmem:[%s0 + $0x260] sm:$0xf]
  %v100 = vld [vmem:[%s0 + $0x264] sm:$0xff]
  %v101 = vld [vmem:[%s0 + $0x26c] sm:$0xff]
  %v102 = vld [vmem:[%s0 + $0x274] sm:$0xff]
  %v103 = vld [vmem:[%s0 + $0x27c] sm:$0xff]
  %v104 = vld [vmem:[%s0 + $0x284] sm:$0xf]
  %v105 = vld [vmem:[%s0 + $0x288] sm:$0xff]
  %v106 = vld [vmem:[%s0 + $0x290] sm:$0xff]
  %v107 = vld [vmem:[%s0 + $0x298] sm:$0xff]
  %v108 = vld [vmem:[%s0 + $0x2a0] sm:$0xff]
  %v109 = vld [vmem:[%s0 + $0x2a8] sm:$0xf]
  %v110 = vld [vmem:[%s0 + $0x2ac] sm:$0xff]
  %v111 = vld [vmem:[%s0 + $0x2b4] sm:$0xff]
  %v112 = vld [vmem:[%s0 + $0x2bc] sm:$0xff]
  %v113 = vld [vmem:[%s0 + $0x2c4] sm:$0xff]
  %v114 = vld [vmem:[%s0 + $0x2cc] sm:$0xf]
  %v115 = vld [vmem:[%s0 + $0x2d0] sm:$0xff]
  %v116 = vld [vmem:[%s0 + $0x2d8] sm:$0xff]
  %v117 = vld [vmem:[%s0 + $0x2e0] sm:$0xff]
  %v118 = vld [vmem:[%s0 + $0x2e8] sm:$0xff]
  %v119 = vld [vmem:[%s0 + $0x2f0] sm:$0xf]
  %v120 = vld [vmem:[%s0 + $0x2f4] sm:$0xff]
  %v121 = vld [vmem:[%s0 + $0x2fc] sm:$0xff]
  %v122 = vld [vmem:[%s0 + $0x304] sm:$0xff]
  %v123 = vld [vmem:[%s0 + $0x30c] sm:$0xff]
  %v124 = vld [vmem:[%s0 + $0x314] sm:$0xf]
  %v125 = vld [vmem:[%s0 + $0x318] sm:$0xff]
  %v126 = vld [vmem:[%s0 + $0x320] sm:$0xff]
  %v127 = vld [vmem:[%s0 + $0x328] sm:$0xff]
  %v128 = vld [vmem:[%s0 + $0x330] sm:$0xff]
  %v129 = vld [vmem:[%s0 + $0x338] sm:$0xf]
  %v130 = vld [vmem:[%s0 + $0x33c] sm:$0xff]
  %v131 = vld [vmem:[%s0 + $0x344] sm:$0xff]
  %v132 = vld [vmem:[%s0 + $0x34c] sm:$0xff]
  %v133 = vld [vmem:[%s0 + $0x354] sm:$0xff]
  %v134 = vld [vmem:[%s0 + $0x35c] sm:$0xf]
  %v135 = vld [vmem:[%s0 + $0x360] sm:$0xff]
  %v136 = vld [vmem:[%s0 + $0x368] sm:$0xff]
  %v137 = vld [vmem:[%s0 + $0x370] sm:$0xff]
  %v138 = vld [vmem:[%s0 + $0x378] sm:$0xff]
  %v139 = vld [vmem:[%s0 + $0x380] sm:$0xf]
  %v140 = vld [vmem:[%s0 + $0x384] sm:$0xff]
  %v141 = vld [vmem:[%s0 + $0x38c] sm:$0xff]
  %v142 = vld [vmem:[%s0 + $0x394] sm:$0xff]
  %v143 = vld [vmem:[%s0 + $0x39c] sm:$0xff]
  %v144 = vld [vmem:[%s0 + $0x3a4] sm:$0xf]
  %v145 = vld [vmem:[%s0 + $0x3a8] sm:$0xff]
  %v146 = vld [vmem:[%s0 + $0x3b0] sm:$0xff]
  %v147 = vld [vmem:[%s0 + $0x3b8] sm:$0xff]
  %v148 = vld [vmem:[%s0 + $0x3c0] sm:$0xff]
  %v149 = vld [vmem:[%s0 + $0x3c8] sm:$0xf]
  %v150 = vld [vmem:[%s0 + $0x3cc] sm:$0xff]
  %v151 = vld [vmem:[%s0 + $0x3d4] sm:$0xff]
  %v152 = vld [vmem:[%s0 + $0x3dc] sm:$0xff]
  %v153 = vld [vmem:[%s0 + $0x3e4] sm:$0xff]
  %v154 = vld [vmem:[%s0 + $0x3ec] sm:$0xf]
  %v155 = vld [vmem:[%s0 + $0x3f0] sm:$0xff]
  %v156 = vld [vmem:[%s0 + $0x3f8] sm:$0xff]
  %v157 = vld [vmem:[%s0 + $0x400] sm:$0xff]
  %v158 = vld [vmem:[%s0 + $0x408] sm:$0xff]
  %v159 = vld [vmem:[%s0 + $0x410] sm:$0xf]
  %v160 = vld [vmem:[%s0 + $0x414] sm:$0xff]
  %v161 = vld [vmem:[%s0 + $0x41c] sm:$0xff]
  %v162 = vld [vmem:[%s0 + $0x424] sm:$0xff]
  %v163 = vld [vmem:[%s0 + $0x42c] sm:$0xff]
  %v164 = vld [vmem:[%s0 + $0x434] sm:$0xf]
  %v165 = vld [vmem:[%s0 + $0x438] sm:$0xff]
  %v166 = vld [vmem:[%s0 + $0x440] sm:$0xff]
  %v167 = vld [vmem:[%s0 + $0x448] sm:$0xff]
  %v168 = vld [vmem:[%s0 + $0x450] sm:$0xff]
  %v169 = vld [vmem:[%s0 + $0x458] sm:$0xf]
  %v170 = vld [vmem:[%s0 + $0x45c] sm:$0xff]
  %v171 = vld [vmem:[%s0 + $0x464] sm:$0xff]
  %v172 = vld [vmem:[%s0 + $0x46c] sm:$0xff]
  %v173 = vld [vmem:[%s0 + $0x474] sm:$0xff]
  %v174 = vld [vmem:[%s0 + $0x47c] sm:$0xf]
  %v175 = vld [vmem:[%s0 + $0x480] sm:$0xff]
  %v176 = vld [vmem:[%s0 + $0x488] sm:$0xff]
  %v177 = vld [vmem:[%s0 + $0x490] sm:$0xff]
  %v178 = vld [vmem:[%s0 + $0x498] sm:$0xff]
  %v179 = vld [vmem:[%s0 + $0x4a0] sm:$0xf]
  %v180 = vld [vmem:[%s0 + $0x4a4] sm:$0xff]
  %v181 = vld [vmem:[%s0 + $0x4ac] sm:$0xff]
  %v182 = vld [vmem:[%s0 + $0x4b4] sm:$0xff]
  %v183 = vld [vmem:[%s0 + $0x4bc] sm:$0xff]
  %v184 = vld [vmem:[%s0 + $0x4c4] sm:$0xf]
  %v185 = vld [vmem:[%s0 + $0x4c8] sm:$0xff]
  %v186 = vld [vmem:[%s0 + $0x4d0] sm:$0xff]
  %v187 = vld [vmem:[%s0 + $0x4d8] sm:$0xff]
  %v188 = vld [vmem:[%s0 + $0x4e0] sm:$0xff]
  %v189 = vld [vmem:[%s0 + $0x4e8] sm:$0xf]
  %v190 = vld [vmem:[%s0 + $0x4ec] sm:$0xff]
  %v191 = vld [vmem:[%s0 + $0x4f4] sm:$0xff]
  %v192 = vld [vmem:[%s0 + $0x4fc] sm:$0xff]
  %v193 = vld [vmem:[%s0 + $0x504] sm:$0xff]
  %v194 = vld [vmem:[%s0 + $0x50c] sm:$0xf]
  %v195 = vld [vmem:[%s1] sm:$0xf]
  %v196 = vld [vmem:[%s1 + $0x4] sm:$0xf]
  %v197 = vld [vmem:[%s1 + $0x8] sm:$0xf]
  %v198 = vld [vmem:[%s1 + $0xc] sm:$0xf]
  %v199 = vld [vmem:[%s1 + $0x10] sm:$0xf]
  %v200 = vld [vmem:[%s1 + $0x14] sm:$0xf]
  %v201 = vld [vmem:[%s1 + $0x18] sm:$0xf]
  %v202 = vld [vmem:[%s1 + $0x1c] sm:$0xf]
  %v203 = vld [vmem:[%s1 + $0x20] sm:$0xf]
  %v204 = vld [vmem:[%s1 + $0x24] sm:$0xf]
  %v205 = vld [vmem:[%s1 + $0x28] sm:$0xf]
  %v206 = vld [vmem:[%s1 + $0x2c] sm:$0xf]
  %v207 = vld [vmem:[%s1 + $0x30] sm:$0xf]
  %v208 = vld [vmem:[%s1 + $0x34] sm:$0xf]
  %v209 = vld [vmem:[%s1 + $0x38] sm:$0xf]
  %v210 = vld [vmem:[%s1 + $0x3c] sm:$0xf]
  %v211 = vld [vmem:[%s1 + $0x40] sm:$0xf]
  %v212 = vld [vmem:[%s1 + $0x44] sm:$0xf]
  %v213 = vld [vmem:[%s1 + $0x48] sm:$0xf]
  %v214 = vld [vmem:[%s1 + $0x4c] sm:$0xf]
  %v215 = vld [vmem:[%s1 + $0x50] sm:$0xf]
  %v216 = vld [vmem:[%s1 + $0x54] sm:$0xf]
  %v217 = vld [vmem:[%s1 + $0x58] sm:$0xf]
  %v218 = vld [vmem:[%s1 + $0x5c] sm:$0xf]
  %v219 = vld [vmem:[%s1 + $0x60] sm:$0xf]
  %v220 = vld [vmem:[%s1 + $0x64] sm:$0xf]
  %v221 = vld [vmem:[%s1 + $0x68] sm:$0xf]
  %v222 = vld [vmem:[%s1 + $0x6c] sm:$0xf]
  %v223 = vld [vmem:[%s1 + $0x70] sm:$0xf]
  %v224 = vld [vmem:[%s1 + $0x74] sm:$0xf]
  %v225 = vld [vmem:[%s1 + $0x78] sm:$0xf]
  %v226 = vld [vmem:[%s1 + $0x7c] sm:$0xf]
  %v227 = vld [vmem:[%s1 + $0x80] sm:$0xf]
  %v228 = vld [vmem:[%s1 + $0x84] sm:$0xf]
  %v229 = vld [vmem:[%s1 + $0x88] sm:$0xf]
  %v230 = vld [vmem:[%s1 + $0x8c] sm:$0xf]
  %v231 = vld [vmem:[%s1 + $0x90] sm:$0xf]
  %v232 = vld [vmem:[%s1 + $0x94] sm:$0xf]
  %v233 = vld [vmem:[%s1 + $0x98] sm:$0xf]
  %v234 = vld [vmem:[%s1 + $0x9c] sm:$0xf]
  %v235 = vld [vmem:[%s1 + $0xa0] sm:$0xf]
  %v236 = vld [vmem:[%s1 + $0xa4] sm:$0xf]
  %v237 = vld [vmem:[%s1 + $0xa8] sm:$0xf]
  %v238 = vld [vmem:[%s1 + $0xac] sm:$0xf]
  %v239 = vld [vmem:[%s1 + $0xb0] sm:$0xf]
  %v240 = vld [vmem:[%s1 + $0xb4] sm:$0xf]
  %v241 = vld [vmem:[%s1 + $0xb8] sm:$0xf]
  %v242 = vld [vmem:[%s1 + $0xbc] sm:$0xf]
  %v243 = vld [vmem:[%s1 + $0xc0] sm:$0xf]
  %v244 = vld [vmem:[%s1 + $0xc4] sm:$0xf]
  %v245 = vld [vmem:[%s1 + $0xc8] sm:$0xf]
  %v246 = vld [vmem:[%s1 + $0xcc] sm:$0xf]
  %v247 = vld [vmem:[%s1 + $0xd0] sm:$0xf]
  %v248 = vld [vmem:[%s1 + $0xd4] sm:$0xf]
  %v249 = vld [vmem:[%s1 + $0xd8] sm:$0xf]
  %v250 = vld [vmem:[%s1 + $0xdc] sm:$0xf]
  %v251 = vld [vmem:[%s1 + $0xe0] sm:$0xf]
  %v252 = vld [vmem:[%s1 + $0xe4] sm:$0xf]
  %v253 = vld [vmem:[%s1 + $0xe8] sm:$0xf]
  %v254 = vld [vmem:[%s1 + $0xec] sm:$0xf]
  %v255 = vld [vmem:[%s1 + $0xf0] sm:$0xf]
  %v256 = vld [vmem:[%s1 + $0xf4] sm:$0xf]
  %v257 = vld [vmem:[%s1 + $0xf8] sm:$0xf]
  %v258 = vld [vmem:[%s1 + $0xfc] sm:$0xf]
  %v259 = vld [vmem:[%s1 + $0x100] sm:$0xf]
  %v260 = vld [vmem:[%s1 + $0x104] sm:$0xf]
  %v261 = vld [vmem:[%s1 + $0x108] sm:$0xf]
  %v262 = vld [vmem:[%s1 + $0x10c] sm:$0xf]
  %v263 = vld [vmem:[%s1 + $0x110] sm:$0xf]
  %v264 = vld [vmem:[%s1 + $0x114] sm:$0xf]
  %v265 = vld [vmem:[%s1 + $0x118] sm:$0xf]
  %v266 = vld [vmem:[%s1 + $0x11c] sm:$0xf]
  %v267 = vld [vmem:[%s1 + $0x120] sm:$0xf]
  %v268 = vld [vmem:[%s1 + $0x124] sm:$0xf]
  %v269 = vld [vmem:[%s1 + $0x128] sm:$0xf]
  %v270 = vld [vmem:[%s1 + $0x12c] sm:$0xf]
  %v271 = vld [vmem:[%s1 + $0x130] sm:$0xf]
  %v272 = vld [vmem:[%s1 + $0x134] sm:$0xf]
  %v273 = vld [vmem:[%s1 + $0x138] sm:$0xf]
  %v274 = vld [vmem:[%s1 + $0x13c] sm:$0xf]
  %v275 = vld [vmem:[%s1 + $0x140] sm:$0xf]
  %v276 = vld [vmem:[%s1 + $0x144] sm:$0xf]
  %v277 = vld [vmem:[%s1 + $0x148] sm:$0xf]
  %v278 = vld [vmem:[%s1 + $0x14c] sm:$0xf]
  %v279 = vld [vmem:[%s1 + $0x150] sm:$0xf]
  %v280 = vld [vmem:[%s1 + $0x154] sm:$0xf]
  %v281 = vld [vmem:[%s1 + $0x158] sm:$0xf]
  %v282 = vld [vmem:[%s1 + $0x15c] sm:$0xf]
  %v283 = vld [vmem:[%s1 + $0x160] sm:$0xf]
  %v284 = vld [vmem:[%s1 + $0x164] sm:$0xf]
  %v285 = vld [vmem:[%s1 + $0x168] sm:$0xf]
  %v286 = vld [vmem:[%s1 + $0x16c] sm:$0xf]
  %v287 = vld [vmem:[%s1 + $0x170] sm:$0xf]
  %v288 = vld [vmem:[%s1 + $0x174] sm:$0xf]
  %v289 = vld [vmem:[%s1 + $0x178] sm:$0xf]
  %v290 = vld [vmem:[%s1 + $0x17c] sm:$0xf]
  %v291 = vld [vmem:[%s1 + $0x180] sm:$0xf]
  %v292 = vld [vmem:[%s1 + $0x184] sm:$0xf]
  %v293 = vld [vmem:[%s1 + $0x188] sm:$0xf]
  %v294 = vld [vmem:[%s1 + $0x18c] sm:$0xf]
  %v295 = vld [vmem:[%s1 + $0x190] sm:$0xf]
  %v296 = vld [vmem:[%s1 + $0x194] sm:$0xf]
  %v297 = vld [vmem:[%s1 + $0x198] sm:$0xf]
  %v298 = vld [vmem:[%s1 + $0x19c] sm:$0xf]
  %v299 = vld [vmem:[%s1 + $0x1a0] sm:$0xf]
  %v300 = vld [vmem:[%s1 + $0x1a4] sm:$0xf]
  %v301 = vld [vmem:[%s1 + $0x1a8] sm:$0xf]
  %v302 = vld [vmem:[%s1 + $0x1ac] sm:$0xf]
  %v303 = vld [vmem:[%s1 + $0x1b0] sm:$0xf]
  %v304 = vld [vmem:[%s1 + $0x1b4] sm:$0xf]
  %v305 = vld [vmem:[%s1 + $0x1b8] sm:$0xf]
  %v306 = vld [vmem:[%s1 + $0x1bc] sm:$0xf]
  %v307 = vld [vmem:[%s1 + $0x1c0] sm:$0xf]
  %v308 = vld [vmem:[%s1 + $0x1c4] sm:$0xf]
  %v309 = vld [vmem:[%s1 + $0x1c8] sm:$0xf]
  %v310 = vld [vmem:[%s1 + $0x1cc] sm:$0xf]
  %v311 = vld [vmem:[%s1 + $0x1d0] sm:$0xf]
  %v312 = vld [vmem:[%s1 + $0x1d4] sm:$0xf]
  %v313 = vld [vmem:[%s1 + $0x1d8] sm:$0xf]
  %v314 = vld [vmem:[%s1 + $0x1dc] sm:$0xf]
  %v315 = vld [vmem:[%s1 + $0x1e0] sm:$0xf]
  %v316 = vld [vmem:[%s1 + $0x1e4] sm:$0xf]
  %v317 = vld [vmem:[%s1 + $0x1e8] sm:$0xf]
  %v318 = vld [vmem:[%s1 + $0x1ec] sm:$0xf]
  %v319 = vld [vmem:[%s1 + $0x1f0] sm:$0xf]
  %v320 = vld [vmem:[%s1 + $0x1f4] sm:$0xf]
  %v321 = vld [vmem:[%s1 + $0x1f8] sm:$0xf]
  %v322 = vld [vmem:[%s1 + $0x1fc] sm:$0xf]
  %v323 = vld [vmem:[%s1 + $0x200] sm:$0xf]
  %v324 = vld [vmem:[%s1 + $0x204] sm:$0xf]
  %v325 = vld [vmem:[%s1 + $0x208] sm:$0xf]
  %v326 = vld [vmem:[%s1 + $0x20c] sm:$0xf]
  %v327 = vld [vmem:[%s1 + $0x210] sm:$0xf]
  %v328 = vld [vmem:[%s1 + $0x214] sm:$0xf]
  %v329 = vld [vmem:[%s1 + $0x218] sm:$0xf]
  %v330 = vld [vmem:[%s1 + $0x21c] sm:$0xf]
  %v331 = vld [vmem:[%s1 + $0x220] sm:$0xf]
  %v332 = vld [vmem:[%s1 + $0x224] sm:$0xf]
  %v333 = vld [vmem:[%s1 + $0x228] sm:$0xf]
  %v334 = vld [vmem:[%s1 + $0x22c] sm:$0xf]
  %v335 = vld [vmem:[%s1 + $0x230] sm:$0xf]
  %v336 = vld [vmem:[%s1 + $0x234] sm:$0xf]
  %v337 = vld [vmem:[%s1 + $0x238] sm:$0xf]
  %v338 = vld [vmem:[%s1 + $0x23c] sm:$0xf]
  %v339 = vld [vmem:[%s2] sm:$0x1]
  %v341 = vlaneseq
  %v342 = vshrl.u32 %v341, 7
  %v343 = vsub.s32 0, %v342
  %v344 = vrot.slane %v339, %v343
  %v526 = vunpack.c.l.b16 %v15
  %v527 = vunpack.c.h.b16 %v15
  %v528 = vunpack.c.l.b16 %v16
  %v529 = vunpack.c.h.b16 %v16
  %v530 = vunpack.c.l.b16 %v17
  %v531 = vunpack.c.h.b16 %v17
  %v532 = vunpack.c.l.b16 %v18
  %v533 = vunpack.c.h.b16 %v18
  %v534 = vunpack.c.l.b16 %v19
  %v535 = vunpack.c.l.b16 %v20
  %v536 = vunpack.c.h.b16 %v20
  %v537 = vunpack.c.l.b16 %v21
  %v538 = vunpack.c.h.b16 %v21
  %v539 = vunpack.c.l.b16 %v22
  %v540 = vunpack.c.h.b16 %v22
  %v541 = vunpack.c.l.b16 %v23
  %v542 = vunpack.c.h.b16 %v23
  %v543 = vunpack.c.l.b16 %v24
  %v544 = vunpack.c.l.b16 %v25
  %v545 = vunpack.c.h.b16 %v25
  %v546 = vunpack.c.l.b16 %v26
  %v547 = vunpack.c.h.b16 %v26
  %v548 = vunpack.c.l.b16 %v27
  %v549 = vunpack.c.h.b16 %v27
  %v550 = vunpack.c.l.b16 %v28
  %v551 = vunpack.c.h.b16 %v28
  %v552 = vunpack.c.l.b16 %v29
  %v553 = vunpack.c.l.b16 %v30
  %v554 = vunpack.c.h.b16 %v30
  %v555 = vunpack.c.l.b16 %v31
  %v556 = vunpack.c.h.b16 %v31
  %v557 = vunpack.c.l.b16 %v32
  %v558 = vunpack.c.h.b16 %v32
  %v559 = vunpack.c.l.b16 %v33
  %v560 = vunpack.c.h.b16 %v33
  %v561 = vunpack.c.l.b16 %v34
  %v562 = vunpack.c.l.b16 %v35
  %v563 = vunpack.c.h.b16 %v35
  %v564 = vunpack.c.l.b16 %v36
  %v565 = vunpack.c.h.b16 %v36
  %v566 = vunpack.c.l.b16 %v37
  %v567 = vunpack.c.h.b16 %v37
  %v568 = vunpack.c.l.b16 %v38
  %v569 = vunpack.c.h.b16 %v38
  %v570 = vunpack.c.l.b16 %v39
  %v571 = vunpack.c.l.b16 %v40
  %v572 = vunpack.c.h.b16 %v40
  %v573 = vunpack.c.l.b16 %v41
  %v574 = vunpack.c.h.b16 %v41
  %v575 = vunpack.c.l.b16 %v42
  %v576 = vunpack.c.h.b16 %v42
  %v577 = vunpack.c.l.b16 %v43
  %v578 = vunpack.c.h.b16 %v43
  %v579 = vunpack.c.l.b16 %v44
  %v580 = vunpack.c.l.b16 %v45
  %v581 = vunpack.c.h.b16 %v45
  %v582 = vunpack.c.l.b16 %v46
  %v583 = vunpack.c.h.b16 %v46
  %v584 = vunpack.c.l.b16 %v47
  %v585 = vunpack.c.h.b16 %v47
  %v586 = vunpack.c.l.b16 %v48
  %v587 = vunpack.c.h.b16 %v48
  %v588 = vunpack.c.l.b16 %v49
  %v589 = vunpack.c.l.b16 %v50
  %v590 = vunpack.c.h.b16 %v50
  %v591 = vunpack.c.l.b16 %v51
  %v592 = vunpack.c.h.b16 %v51
  %v593 = vunpack.c.l.b16 %v52
  %v594 = vunpack.c.h.b16 %v52
  %v595 = vunpack.c.l.b16 %v53
  %v596 = vunpack.c.h.b16 %v53
  %v597 = vunpack.c.l.b16 %v54
  %v598 = vunpack.c.l.b16 %v55
  %v599 = vunpack.c.h.b16 %v55
  %v600 = vunpack.c.l.b16 %v56
  %v601 = vunpack.c.h.b16 %v56
  %v602 = vunpack.c.l.b16 %v57
  %v603 = vunpack.c.h.b16 %v57
  %v604 = vunpack.c.l.b16 %v58
  %v605 = vunpack.c.h.b16 %v58
  %v606 = vunpack.c.l.b16 %v59
  %v607 = vunpack.c.l.b16 %v60
  %v608 = vunpack.c.h.b16 %v60
  %v609 = vunpack.c.l.b16 %v61
  %v610 = vunpack.c.h.b16 %v61
  %v611 = vunpack.c.l.b16 %v62
  %v612 = vunpack.c.h.b16 %v62
  %v613 = vunpack.c.l.b16 %v63
  %v614 = vunpack.c.h.b16 %v63
  %v615 = vunpack.c.l.b16 %v64
  %v616 = vunpack.c.l.b16 %v65
  %v617 = vunpack.c.h.b16 %v65
  %v618 = vunpack.c.l.b16 %v66
  %v619 = vunpack.c.h.b16 %v66
  %v620 = vunpack.c.l.b16 %v67
  %v621 = vunpack.c.h.b16 %v67
  %v622 = vunpack.c.l.b16 %v68
  %v623 = vunpack.c.h.b16 %v68
  %v624 = vunpack.c.l.b16 %v69
  %v625 = vunpack.c.l.b16 %v70
  %v626 = vunpack.c.h.b16 %v70
  %v627 = vunpack.c.l.b16 %v71
  %v628 = vunpack.c.h.b16 %v71
  %v629 = vunpack.c.l.b16 %v72
  %v630 = vunpack.c.h.b16 %v72
  %v631 = vunpack.c.l.b16 %v73
  %v632 = vunpack.c.h.b16 %v73
  %v633 = vunpack.c.l.b16 %v74
  %v634 = vunpack.c.l.b16 %v75
  %v635 = vunpack.c.h.b16 %v75
  %v636 = vunpack.c.l.b16 %v76
  %v637 = vunpack.c.h.b16 %v76
  %v638 = vunpack.c.l.b16 %v77
  %v639 = vunpack.c.h.b16 %v77
  %v640 = vunpack.c.l.b16 %v78
  %v641 = vunpack.c.h.b16 %v78
  %v642 = vunpack.c.l.b16 %v79
  %v643 = vunpack.c.l.b16 %v80
  %v644 = vunpack.c.h.b16 %v80
  %v645 = vunpack.c.l.b16 %v81
  %v646 = vunpack.c.h.b16 %v81
  %v647 = vunpack.c.l.b16 %v82
  %v648 = vunpack.c.h.b16 %v82
  %v649 = vunpack.c.l.b16 %v83
  %v650 = vunpack.c.h.b16 %v83
  %v651 = vunpack.c.l.b16 %v84
  %v652 = vunpack.c.l.b16 %v85
  %v653 = vunpack.c.h.b16 %v85
  %v654 = vunpack.c.l.b16 %v86
  %v655 = vunpack.c.h.b16 %v86
  %v656 = vunpack.c.l.b16 %v87
  %v657 = vunpack.c.h.b16 %v87
  %v658 = vunpack.c.l.b16 %v88
  %v659 = vunpack.c.h.b16 %v88
  %v660 = vunpack.c.l.b16 %v89
  %v661 = vunpack.c.l.b16 %v90
  %v662 = vunpack.c.h.b16 %v90
  %v663 = vunpack.c.l.b16 %v91
  %v664 = vunpack.c.h.b16 %v91
  %v665 = vunpack.c.l.b16 %v92
  %v666 = vunpack.c.h.b16 %v92
  %v667 = vunpack.c.l.b16 %v93
  %v668 = vunpack.c.h.b16 %v93
  %v669 = vunpack.c.l.b16 %v94
  %v670 = vunpack.c.l.b16 %v95
  %v671 = vunpack.c.h.b16 %v95
  %v672 = vunpack.c.l.b16 %v96
  %v673 = vunpack.c.h.b16 %v96
  %v674 = vunpack.c.l.b16 %v97
  %v675 = vunpack.c.h.b16 %v97
  %v676 = vunpack.c.l.b16 %v98
  %v677 = vunpack.c.h.b16 %v98
  %v678 = vunpack.c.l.b16 %v99
  %v679 = vunpack.c.l.b16 %v100
  %v680 = vunpack.c.h.b16 %v100
  %v681 = vunpack.c.l.b16 %v101
  %v682 = vunpack.c.h.b16 %v101
  %v683 = vunpack.c.l.b16 %v102
  %v684 = vunpack.c.h.b16 %v102
  %v685 = vunpack.c.l.b16 %v103
  %v686 = vunpack.c.h.b16 %v103
  %v687 = vunpack.c.l.b16 %v104
  %v688 = vunpack.c.l.b16 %v105
  %v689 = vunpack.c.h.b16 %v105
  %v690 = vunpack.c.l.b16 %v106
  %v691 = vunpack.c.h.b16 %v106
  %v692 = vunpack.c.l.b16 %v107
  %v693 = vunpack.c.h.b16 %v107
  %v694 = vunpack.c.l.b16 %v108
  %v695 = vunpack.c.h.b16 %v108
  %v696 = vunpack.c.l.b16 %v109
  %v697 = vunpack.c.l.b16 %v110
  %v698 = vunpack.c.h.b16 %v110
  %v699 = vunpack.c.l.b16 %v111
  %v700 = vunpack.c.h.b16 %v111
  %v701 = vunpack.c.l.b16 %v112
  %v702 = vunpack.c.h.b16 %v112
  %v703 = vunpack.c.l.b16 %v113
  %v704 = vunpack.c.h.b16 %v113
  %v705 = vunpack.c.l.b16 %v114
  %v706 = vunpack.c.l.b16 %v115
  %v707 = vunpack.c.h.b16 %v115
  %v708 = vunpack.c.l.b16 %v116
  %v709 = vunpack.c.h.b16 %v116
  %v710 = vunpack.c.l.b16 %v117
  %v711 = vunpack.c.h.b16 %v117
  %v712 = vunpack.c.l.b16 %v118
  %v713 = vunpack.c.h.b16 %v118
  %v714 = vunpack.c.l.b16 %v119
  %v715 = vunpack.c.l.b16 %v120
  %v716 = vunpack.c.h.b16 %v120
  %v717 = vunpack.c.l.b16 %v121
  %v718 = vunpack.c.h.b16 %v121
  %v719 = vunpack.c.l.b16 %v122
  %v720 = vunpack.c.h.b16 %v122
  %v721 = vunpack.c.l.b16 %v123
  %v722 = vunpack.c.h.b16 %v123
  %v723 = vunpack.c.l.b16 %v124
  %v724 = vunpack.c.l.b16 %v125
  %v725 = vunpack.c.h.b16 %v125
  %v726 = vunpack.c.l.b16 %v126
  %v727 = vunpack.c.h.b16 %v126
  %v728 = vunpack.c.l.b16 %v127
  %v729 = vunpack.c.h.b16 %v127
  %v730 = vunpack.c.l.b16 %v128
  %v731 = vunpack.c.h.b16 %v128
  %v732 = vunpack.c.l.b16 %v129
  %v733 = vunpack.c.l.b16 %v130
  %v734 = vunpack.c.h.b16 %v130
  %v735 = vunpack.c.l.b16 %v131
  %v736 = vunpack.c.h.b16 %v131
  %v737 = vunpack.c.l.b16 %v132
  %v738 = vunpack.c.h.b16 %v132
  %v739 = vunpack.c.l.b16 %v133
  %v740 = vunpack.c.h.b16 %v133
  %v741 = vunpack.c.l.b16 %v134
  %v742 = vunpack.c.l.b16 %v135
  %v743 = vunpack.c.h.b16 %v135
  %v744 = vunpack.c.l.b16 %v136
  %v745 = vunpack.c.h.b16 %v136
  %v746 = vunpack.c.l.b16 %v137
  %v747 = vunpack.c.h.b16 %v137
  %v748 = vunpack.c.l.b16 %v138
  %v749 = vunpack.c.h.b16 %v138
  %v750 = vunpack.c.l.b16 %v139
  %v751 = vunpack.c.l.b16 %v140
  %v752 = vunpack.c.h.b16 %v140
  %v753 = vunpack.c.l.b16 %v141
  %v754 = vunpack.c.h.b16 %v141
  %v755 = vunpack.c.l.b16 %v142
  %v756 = vunpack.c.h.b16 %v142
  %v757 = vunpack.c.l.b16 %v143
  %v758 = vunpack.c.h.b16 %v143
  %v759 = vunpack.c.l.b16 %v144
  %v760 = vunpack.c.l.b16 %v145
  %v761 = vunpack.c.h.b16 %v145
  %v762 = vunpack.c.l.b16 %v146
  %v763 = vunpack.c.h.b16 %v146
  %v764 = vunpack.c.l.b16 %v147
  %v765 = vunpack.c.h.b16 %v147
  %v766 = vunpack.c.l.b16 %v148
  %v767 = vunpack.c.h.b16 %v148
  %v768 = vunpack.c.l.b16 %v149
  %v769 = vunpack.c.l.b16 %v150
  %v770 = vunpack.c.h.b16 %v150
  %v771 = vunpack.c.l.b16 %v151
  %v772 = vunpack.c.h.b16 %v151
  %v773 = vunpack.c.l.b16 %v152
  %v774 = vunpack.c.h.b16 %v152
  %v775 = vunpack.c.l.b16 %v153
  %v776 = vunpack.c.h.b16 %v153
  %v777 = vunpack.c.l.b16 %v154
  %v778 = vunpack.c.l.b16 %v155
  %v779 = vunpack.c.h.b16 %v155
  %v780 = vunpack.c.l.b16 %v156
  %v781 = vunpack.c.h.b16 %v156
  %v782 = vunpack.c.l.b16 %v157
  %v783 = vunpack.c.h.b16 %v157
  %v784 = vunpack.c.l.b16 %v158
  %v785 = vunpack.c.h.b16 %v158
  %v786 = vunpack.c.l.b16 %v159
  %v787 = vunpack.c.l.b16 %v160
  %v788 = vunpack.c.h.b16 %v160
  %v789 = vunpack.c.l.b16 %v161
  %v790 = vunpack.c.h.b16 %v161
  %v791 = vunpack.c.l.b16 %v162
  %v792 = vunpack.c.h.b16 %v162
  %v793 = vunpack.c.l.b16 %v163
  %v794 = vunpack.c.h.b16 %v163
  %v795 = vunpack.c.l.b16 %v164
  %v796 = vunpack.c.l.b16 %v165
  %v797 = vunpack.c.h.b16 %v165
  %v798 = vunpack.c.l.b16 %v166
  %v799 = vunpack.c.h.b16 %v166
  %v800 = vunpack.c.l.b16 %v167
  %v801 = vunpack.c.h.b16 %v167
  %v802 = vunpack.c.l.b16 %v168
  %v803 = vunpack.c.h.b16 %v168
  %v804 = vunpack.c.l.b16 %v169
  %v805 = vunpack.c.l.b16 %v170
  %v806 = vunpack.c.h.b16 %v170
  %v807 = vunpack.c.l.b16 %v171
  %v808 = vunpack.c.h.b16 %v171
  %v809 = vunpack.c.l.b16 %v172
  %v810 = vunpack.c.h.b16 %v172
  %v811 = vunpack.c.l.b16 %v173
  %v812 = vunpack.c.h.b16 %v173
  %v813 = vunpack.c.l.b16 %v174
  %v814 = vunpack.c.l.b16 %v175
  %v815 = vunpack.c.h.b16 %v175
  %v816 = vunpack.c.l.b16 %v176
  %v817 = vunpack.c.h.b16 %v176
  %v818 = vunpack.c.l.b16 %v177
  %v819 = vunpack.c.h.b16 %v177
  %v820 = vunpack.c.l.b16 %v178
  %v821 = vunpack.c.h.b16 %v178
  %v822 = vunpack.c.l.b16 %v179
  %v823 = vunpack.c.l.b16 %v180
  %v824 = vunpack.c.h.b16 %v180
  %v825 = vunpack.c.l.b16 %v181
  %v826 = vunpack.c.h.b16 %v181
  %v827 = vunpack.c.l.b16 %v182
  %v828 = vunpack.c.h.b16 %v182
  %v829 = vunpack.c.l.b16 %v183
  %v830 = vunpack.c.h.b16 %v183
  %v831 = vunpack.c.l.b16 %v184
  %v832 = vunpack.c.l.b16 %v185
  %v833 = vunpack.c.h.b16 %v185
  %v834 = vunpack.c.l.b16 %v186
  %v835 = vunpack.c.h.b16 %v186
  %v836 = vunpack.c.l.b16 %v187
  %v837 = vunpack.c.h.b16 %v187
  %v838 = vunpack.c.l.b16 %v188
  %v839 = vunpack.c.h.b16 %v188
  %v840 = vunpack.c.l.b16 %v189
  %v841 = vunpack.c.l.b16 %v190
  %v842 = vunpack.c.h.b16 %v190
  %v843 = vunpack.c.l.b16 %v191
  %v844 = vunpack.c.h.b16 %v191
  %v845 = vunpack.c.l.b16 %v192
  %v846 = vunpack.c.h.b16 %v192
  %v847 = vunpack.c.l.b16 %v193
  %v848 = vunpack.c.h.b16 %v193
  %v849 = vunpack.c.l.b16 %v194
  %v850 = vpack.c.b16 %v535, %v526
  %v851 = vpack.c.b16 %v536, %v527
  %v852 = vpack.c.b16 %v537, %v528
  %v853 = vpack.c.b16 %v538, %v529
  %v854 = vpack.c.b16 %v539, %v530
  %v855 = vpack.c.b16 %v540, %v531
  %v856 = vpack.c.b16 %v541, %v532
  %v857 = vpack.c.b16 %v542, %v533
  %v858 = vpack.c.b16 %v543, %v534
  %v859 = vpack.c.b16 %v553, %v544
  %v860 = vpack.c.b16 %v554, %v545
  %v861 = vpack.c.b16 %v555, %v546
  %v862 = vpack.c.b16 %v556, %v547
  %v863 = vpack.c.b16 %v557, %v548
  %v864 = vpack.c.b16 %v558, %v549
  %v865 = vpack.c.b16 %v559, %v550
  %v866 = vpack.c.b16 %v560, %v551
  %v867 = vpack.c.b16 %v561, %v552
  %v868 = vpack.c.b16 %v571, %v562
  %v869 = vpack.c.b16 %v572, %v563
  %v870 = vpack.c.b16 %v573, %v564
  %v871 = vpack.c.b16 %v574, %v565
  %v872 = vpack.c.b16 %v575, %v566
  %v873 = vpack.c.b16 %v576, %v567
  %v874 = vpack.c.b16 %v577, %v568
  %v875 = vpack.c.b16 %v578, %v569
  %v876 = vpack.c.b16 %v579, %v570
  %v877 = vpack.c.b16 %v589, %v580
  %v878 = vpack.c.b16 %v590, %v581
  %v879 = vpack.c.b16 %v591, %v582
  %v880 = vpack.c.b16 %v592, %v583
  %v881 = vpack.c.b16 %v593, %v584
  %v882 = vpack.c.b16 %v594, %v585
  %v883 = vpack.c.b16 %v595, %v586
  %v884 = vpack.c.b16 %v596, %v587
  %v885 = vpack.c.b16 %v597, %v588
  %v886 = vpack.c.b16 %v607, %v598
  %v887 = vpack.c.b16 %v608, %v599
  %v888 = vpack.c.b16 %v609, %v600
  %v889 = vpack.c.b16 %v610, %v601
  %v890 = vpack.c.b16 %v611, %v602
  %v891 = vpack.c.b16 %v612, %v603
  %v892 = vpack.c.b16 %v613, %v604
  %v893 = vpack.c.b16 %v614, %v605
  %v894 = vpack.c.b16 %v615, %v606
  %v895 = vpack.c.b16 %v625, %v616
  %v896 = vpack.c.b16 %v626, %v617
  %v897 = vpack.c.b16 %v627, %v618
  %v898 = vpack.c.b16 %v628, %v619
  %v899 = vpack.c.b16 %v629, %v620
  %v900 = vpack.c.b16 %v630, %v621
  %v901 = vpack.c.b16 %v631, %v622
  %v902 = vpack.c.b16 %v632, %v623
  %v903 = vpack.c.b16 %v633, %v624
  %v904 = vpack.c.b16 %v643, %v634
  %v905 = vpack.c.b16 %v644, %v635
  %v906 = vpack.c.b16 %v645, %v636
  %v907 = vpack.c.b16 %v646, %v637
  %v908 = vpack.c.b16 %v647, %v638
  %v909 = vpack.c.b16 %v648, %v639
  %v910 = vpack.c.b16 %v649, %v640
  %v911 = vpack.c.b16 %v650, %v641
  %v912 = vpack.c.b16 %v651, %v642
  %v913 = vpack.c.b16 %v661, %v652
  %v914 = vpack.c.b16 %v662, %v653
  %v915 = vpack.c.b16 %v663, %v654
  %v916 = vpack.c.b16 %v664, %v655
  %v917 = vpack.c.b16 %v665, %v656
  %v918 = vpack.c.b16 %v666, %v657
  %v919 = vpack.c.b16 %v667, %v658
  %v920 = vpack.c.b16 %v668, %v659
  %v921 = vpack.c.b16 %v669, %v660
  %v922 = vpack.c.b16 %v679, %v670
  %v923 = vpack.c.b16 %v680, %v671
  %v924 = vpack.c.b16 %v681, %v672
  %v925 = vpack.c.b16 %v682, %v673
  %v926 = vpack.c.b16 %v683, %v674
  %v927 = vpack.c.b16 %v684, %v675
  %v928 = vpack.c.b16 %v685, %v676
  %v929 = vpack.c.b16 %v686, %v677
  %v930 = vpack.c.b16 %v687, %v678
  %v931 = vpack.c.b16 %v697, %v688
  %v932 = vpack.c.b16 %v698, %v689
  %v933 = vpack.c.b16 %v699, %v690
  %v934 = vpack.c.b16 %v700, %v691
  %v935 = vpack.c.b16 %v701, %v692
  %v936 = vpack.c.b16 %v702, %v693
  %v937 = vpack.c.b16 %v703, %v694
  %v938 = vpack.c.b16 %v704, %v695
  %v939 = vpack.c.b16 %v705, %v696
  %v940 = vpack.c.b16 %v715, %v706
  %v941 = vpack.c.b16 %v716, %v707
  %v942 = vpack.c.b16 %v717, %v708
  %v943 = vpack.c.b16 %v718, %v709
  %v944 = vpack.c.b16 %v719, %v710
  %v945 = vpack.c.b16 %v720, %v711
  %v946 = vpack.c.b16 %v721, %v712
  %v947 = vpack.c.b16 %v722, %v713
  %v948 = vpack.c.b16 %v723, %v714
  %v949 = vpack.c.b16 %v733, %v724
  %v950 = vpack.c.b16 %v734, %v725
  %v951 = vpack.c.b16 %v735, %v726
  %v952 = vpack.c.b16 %v736, %v727
  %v953 = vpack.c.b16 %v737, %v728
  %v954 = vpack.c.b16 %v738, %v729
  %v955 = vpack.c.b16 %v739, %v730
  %v956 = vpack.c.b16 %v740, %v731
  %v957 = vpack.c.b16 %v741, %v732
  %v958 = vpack.c.b16 %v751, %v742
  %v959 = vpack.c.b16 %v752, %v743
  %v960 = vpack.c.b16 %v753, %v744
  %v961 = vpack.c.b16 %v754, %v745
  %v962 = vpack.c.b16 %v755, %v746
  %v963 = vpack.c.b16 %v756, %v747
  %v964 = vpack.c.b16 %v757, %v748
  %v965 = vpack.c.b16 %v758, %v749
  %v966 = vpack.c.b16 %v759, %v750
  %v967 = vpack.c.b16 %v769, %v760
  %v968 = vpack.c.b16 %v770, %v761
  %v969 = vpack.c.b16 %v771, %v762
  %v970 = vpack.c.b16 %v772, %v763
  %v971 = vpack.c.b16 %v773, %v764
  %v972 = vpack.c.b16 %v774, %v765
  %v973 = vpack.c.b16 %v775, %v766
  %v974 = vpack.c.b16 %v776, %v767
  %v975 = vpack.c.b16 %v777, %v768
  %v976 = vpack.c.b16 %v787, %v778
  %v977 = vpack.c.b16 %v788, %v779
  %v978 = vpack.c.b16 %v789, %v780
  %v979 = vpack.c.b16 %v790, %v781
  %v980 = vpack.c.b16 %v791, %v782
  %v981 = vpack.c.b16 %v792, %v783
  %v982 = vpack.c.b16 %v793, %v784
  %v983 = vpack.c.b16 %v794, %v785
  %v984 = vpack.c.b16 %v795, %v786
  %v985 = vpack.c.b16 %v805, %v796
  %v986 = vpack.c.b16 %v806, %v797
  %v987 = vpack.c.b16 %v807, %v798
  %v988 = vpack.c.b16 %v808, %v799
  %v989 = vpack.c.b16 %v809, %v800
  %v990 = vpack.c.b16 %v810, %v801
  %v991 = vpack.c.b16 %v811, %v802
  %v992 = vpack.c.b16 %v812, %v803
  %v993 = vpack.c.b16 %v813, %v804
  %v994 = vpack.c.b16 %v823, %v814
  %v995 = vpack.c.b16 %v824, %v815
  %v996 = vpack.c.b16 %v825, %v816
  %v997 = vpack.c.b16 %v826, %v817
  %v998 = vpack.c.b16 %v827, %v818
  %v999 = vpack.c.b16 %v828, %v819
  %v1000 = vpack.c.b16 %v829, %v820
  %v1001 = vpack.c.b16 %v830, %v821
  %v1002 = vpack.c.b16 %v831, %v822
  %v1003 = vpack.c.b16 %v841, %v832
  %v1004 = vpack.c.b16 %v842, %v833
  %v1005 = vpack.c.b16 %v843, %v834
  %v1006 = vpack.c.b16 %v844, %v835
  %v1007 = vpack.c.b16 %v845, %v836
  %v1008 = vpack.c.b16 %v846, %v837
  %v1009 = vpack.c.b16 %v847, %v838
  %v1010 = vpack.c.b16 %v848, %v839
  %v1011 = vpack.c.b16 %v849, %v840
  %v1318 = vunpack.c.l.b16 %v195
  %v1319 = vunpack.c.l.b16 %v196
  %v1320 = vunpack.c.l.b16 %v197
  %v1321 = vunpack.c.l.b16 %v198
  %v1322 = vunpack.c.l.b16 %v199
  %v1323 = vunpack.c.l.b16 %v200
  %v1324 = vunpack.c.l.b16 %v201
  %v1325 = vunpack.c.l.b16 %v202
  %v1326 = vunpack.c.l.b16 %v203
  %v1327 = vunpack.c.l.b16 %v204
  %v1328 = vunpack.c.l.b16 %v205
  %v1329 = vunpack.c.l.b16 %v206
  %v1330 = vunpack.c.l.b16 %v207
  %v1331 = vunpack.c.l.b16 %v208
  %v1332 = vunpack.c.l.b16 %v209
  %v1333 = vunpack.c.l.b16 %v210
  %v1334 = vunpack.c.l.b16 %v211
  %v1335 = vunpack.c.l.b16 %v212
  %v1336 = vunpack.c.l.b16 %v213
  %v1337 = vunpack.c.l.b16 %v214
  %v1338 = vunpack.c.l.b16 %v215
  %v1339 = vunpack.c.l.b16 %v216
  %v1340 = vunpack.c.l.b16 %v217
  %v1341 = vunpack.c.l.b16 %v218
  %v1342 = vunpack.c.l.b16 %v219
  %v1343 = vunpack.c.l.b16 %v220
  %v1344 = vunpack.c.l.b16 %v221
  %v1345 = vunpack.c.l.b16 %v222
  %v1346 = vunpack.c.l.b16 %v223
  %v1347 = vunpack.c.l.b16 %v224
  %v1348 = vunpack.c.l.b16 %v225
  %v1349 = vunpack.c.l.b16 %v226
  %v1350 = vunpack.c.l.b16 %v227
  %v1351 = vunpack.c.l.b16 %v228
  %v1352 = vunpack.c.l.b16 %v229
  %v1353 = vunpack.c.l.b16 %v230
  %v1354 = vunpack.c.l.b16 %v231
  %v1355 = vunpack.c.l.b16 %v232
  %v1356 = vunpack.c.l.b16 %v233
  %v1357 = vunpack.c.l.b16 %v234
  %v1358 = vunpack.c.l.b16 %v235
  %v1359 = vunpack.c.l.b16 %v236
  %v1360 = vunpack.c.l.b16 %v237
  %v1361 = vunpack.c.l.b16 %v238
  %v1362 = vunpack.c.l.b16 %v239
  %v1363 = vunpack.c.l.b16 %v240
  %v1364 = vunpack.c.l.b16 %v241
  %v1365 = vunpack.c.l.b16 %v242
  %v1366 = vunpack.c.l.b16 %v243
  %v1367 = vunpack.c.l.b16 %v244
  %v1368 = vunpack.c.l.b16 %v245
  %v1369 = vunpack.c.l.b16 %v246
  %v1370 = vunpack.c.l.b16 %v247
  %v1371 = vunpack.c.l.b16 %v248
  %v1372 = vunpack.c.l.b16 %v249
  %v1373 = vunpack.c.l.b16 %v250
  %v1374 = vunpack.c.l.b16 %v251
  %v1375 = vunpack.c.l.b16 %v252
  %v1376 = vunpack.c.l.b16 %v253
  %v1377 = vunpack.c.l.b16 %v254
  %v1378 = vunpack.c.l.b16 %v255
  %v1379 = vunpack.c.l.b16 %v256
  %v1380 = vunpack.c.l.b16 %v257
  %v1381 = vunpack.c.l.b16 %v258
  %v1382 = vunpack.c.l.b16 %v259
  %v1383 = vunpack.c.l.b16 %v260
  %v1384 = vunpack.c.l.b16 %v261
  %v1385 = vunpack.c.l.b16 %v262
  %v1386 = vunpack.c.l.b16 %v263
  %v1387 = vunpack.c.l.b16 %v264
  %v1388 = vunpack.c.l.b16 %v265
  %v1389 = vunpack.c.l.b16 %v266
  %v1390 = vunpack.c.l.b16 %v267
  %v1391 = vunpack.c.l.b16 %v268
  %v1392 = vunpack.c.l.b16 %v269
  %v1393 = vunpack.c.l.b16 %v270
  %v1394 = vunpack.c.l.b16 %v271
  %v1395 = vunpack.c.l.b16 %v272
  %v1396 = vunpack.c.l.b16 %v273
  %v1397 = vunpack.c.l.b16 %v274
  %v1398 = vunpack.c.l.b16 %v275
  %v1399 = vunpack.c.l.b16 %v276
  %v1400 = vunpack.c.l.b16 %v277
  %v1401 = vunpack.c.l.b16 %v278
  %v1402 = vunpack.c.l.b16 %v279
  %v1403 = vunpack.c.l.b16 %v280
  %v1404 = vunpack.c.l.b16 %v281
  %v1405 = vunpack.c.l.b16 %v282
  %v1406 = vunpack.c.l.b16 %v283
  %v1407 = vunpack.c.l.b16 %v284
  %v1408 = vunpack.c.l.b16 %v285
  %v1409 = vunpack.c.l.b16 %v286
  %v1410 = vunpack.c.l.b16 %v287
  %v1411 = vunpack.c.l.b16 %v288
  %v1412 = vunpack.c.l.b16 %v289
  %v1413 = vunpack.c.l.b16 %v290
  %v1414 = vunpack.c.l.b16 %v291
  %v1415 = vunpack.c.l.b16 %v292
  %v1416 = vunpack.c.l.b16 %v293
  %v1417 = vunpack.c.l.b16 %v294
  %v1418 = vunpack.c.l.b16 %v295
  %v1419 = vunpack.c.l.b16 %v296
  %v1420 = vunpack.c.l.b16 %v297
  %v1421 = vunpack.c.l.b16 %v298
  %v1422 = vunpack.c.l.b16 %v299
  %v1423 = vunpack.c.l.b16 %v300
  %v1424 = vunpack.c.l.b16 %v301
  %v1425 = vunpack.c.l.b16 %v302
  %v1426 = vunpack.c.l.b16 %v303
  %v1427 = vunpack.c.l.b16 %v304
  %v1428 = vunpack.c.l.b16 %v305
  %v1429 = vunpack.c.l.b16 %v306
  %v1430 = vunpack.c.l.b16 %v307
  %v1431 = vunpack.c.l.b16 %v308
  %v1432 = vunpack.c.l.b16 %v309
  %v1433 = vunpack.c.l.b16 %v310
  %v1434 = vunpack.c.l.b16 %v311
  %v1435 = vunpack.c.l.b16 %v312
  %v1436 = vunpack.c.l.b16 %v313
  %v1437 = vunpack.c.l.b16 %v314
  %v1438 = vunpack.c.l.b16 %v315
  %v1439 = vunpack.c.l.b16 %v316
  %v1440 = vunpack.c.l.b16 %v317
  %v1441 = vunpack.c.l.b16 %v318
  %v1442 = vunpack.c.l.b16 %v319
  %v1443 = vunpack.c.l.b16 %v320
  %v1444 = vunpack.c.l.b16 %v321
  %v1445 = vunpack.c.l.b16 %v322
  %v1446 = vunpack.c.l.b16 %v323
  %v1447 = vunpack.c.l.b16 %v324
  %v1448 = vunpack.c.l.b16 %v325
  %v1449 = vunpack.c.l.b16 %v326
  %v1450 = vunpack.c.l.b16 %v327
  %v1451 = vunpack.c.l.b16 %v328
  %v1452 = vunpack.c.l.b16 %v329
  %v1453 = vunpack.c.l.b16 %v330
  %v1454 = vunpack.c.l.b16 %v331
  %v1455 = vunpack.c.l.b16 %v332
  %v1456 = vunpack.c.l.b16 %v333
  %v1457 = vunpack.c.l.b16 %v334
  %v1458 = vunpack.c.l.b16 %v335
  %v1459 = vunpack.c.l.b16 %v336
  %v1460 = vunpack.c.l.b16 %v337
  %v1461 = vunpack.c.l.b16 %v338
  %v1462 = vpack.c.b16 %v1319, %v1318
  %v1463 = vpack.c.b16 %v1321, %v1320
  %v1464 = vpack.c.b16 %v1323, %v1322
  %v1465 = vpack.c.b16 %v1325, %v1324
  %v1466 = vpack.c.b16 %v1327, %v1326
  %v1467 = vpack.c.b16 %v1329, %v1328
  %v1468 = vpack.c.b16 %v1331, %v1330
  %v1469 = vpack.c.b16 %v1333, %v1332
  %v1470 = vpack.c.b16 %v1335, %v1334
  %v1471 = vpack.c.b16 %v1337, %v1336
  %v1472 = vpack.c.b16 %v1339, %v1338
  %v1473 = vpack.c.b16 %v1341, %v1340
  %v1474 = vpack.c.b16 %v1343, %v1342
  %v1475 = vpack.c.b16 %v1345, %v1344
  %v1476 = vpack.c.b16 %v1347, %v1346
  %v1477 = vpack.c.b16 %v1349, %v1348
  %v1478 = vpack.c.b16 %v1351, %v1350
  %v1479 = vpack.c.b16 %v1353, %v1352
  %v1480 = vpack.c.b16 %v1355, %v1354
  %v1481 = vpack.c.b16 %v1357, %v1356
  %v1482 = vpack.c.b16 %v1359, %v1358
  %v1483 = vpack.c.b16 %v1361, %v1360
  %v1484 = vpack.c.b16 %v1363, %v1362
  %v1485 = vpack.c.b16 %v1365, %v1364
  %v1486 = vpack.c.b16 %v1367, %v1366
  %v1487 = vpack.c.b16 %v1369, %v1368
  %v1488 = vpack.c.b16 %v1371, %v1370
  %v1489 = vpack.c.b16 %v1373, %v1372
  %v1490 = vpack.c.b16 %v1375, %v1374
  %v1491 = vpack.c.b16 %v1377, %v1376
  %v1492 = vpack.c.b16 %v1379, %v1378
  %v1493 = vpack.c.b16 %v1381, %v1380
  %v1494 = vpack.c.b16 %v1383, %v1382
  %v1495 = vpack.c.b16 %v1385, %v1384
  %v1496 = vpack.c.b16 %v1387, %v1386
  %v1497 = vpack.c.b16 %v1389, %v1388
  %v1498 = vpack.c.b16 %v1391, %v1390
  %v1499 = vpack.c.b16 %v1393, %v1392
  %v1500 = vpack.c.b16 %v1395, %v1394
  %v1501 = vpack.c.b16 %v1397, %v1396
  %v1502 = vpack.c.b16 %v1399, %v1398
  %v1503 = vpack.c.b16 %v1401, %v1400
  %v1504 = vpack.c.b16 %v1403, %v1402
  %v1505 = vpack.c.b16 %v1405, %v1404
  %v1506 = vpack.c.b16 %v1407, %v1406
  %v1507 = vpack.c.b16 %v1409, %v1408
  %v1508 = vpack.c.b16 %v1411, %v1410
  %v1509 = vpack.c.b16 %v1413, %v1412
  %v1510 = vpack.c.b16 %v1415, %v1414
  %v1511 = vpack.c.b16 %v1417, %v1416
  %v1512 = vpack.c.b16 %v1419, %v1418
  %v1513 = vpack.c.b16 %v1421, %v1420
  %v1514 = vpack.c.b16 %v1423, %v1422
  %v1515 = vpack.c.b16 %v1425, %v1424
  %v1516 = vpack.c.b16 %v1427, %v1426
  %v1517 = vpack.c.b16 %v1429, %v1428
  %v1518 = vpack.c.b16 %v1431, %v1430
  %v1519 = vpack.c.b16 %v1433, %v1432
  %v1520 = vpack.c.b16 %v1435, %v1434
  %v1521 = vpack.c.b16 %v1437, %v1436
  %v1522 = vpack.c.b16 %v1439, %v1438
  %v1523 = vpack.c.b16 %v1441, %v1440
  %v1524 = vpack.c.b16 %v1443, %v1442
  %v1525 = vpack.c.b16 %v1445, %v1444
  %v1526 = vpack.c.b16 %v1447, %v1446
  %v1527 = vpack.c.b16 %v1449, %v1448
  %v1528 = vpack.c.b16 %v1451, %v1450
  %v1529 = vpack.c.b16 %v1453, %v1452
  %v1530 = vpack.c.b16 %v1455, %v1454
  %v1531 = vpack.c.b16 %v1457, %v1456
  %v1532 = vpack.c.b16 %v1459, %v1458
  %v1533 = vpack.c.b16 %v1461, %v1460
  %1606 = vmatprep.subr.bf16.mxu0 0
  %1607 = vmatpush1.bf16.msra.mxu0 %v1462
  %1608 = vmatprep.subr.bf16.mxu0 0
  %1609 = vmatpush1.bf16.msra.mxu0 %v1463
  %1610 = vmatprep.subr.bf16.mxu0 0
  %1611 = vmatpush1.bf16.msra.mxu0 %v1464
  %1612 = vmatprep.subr.bf16.mxu0 0
  %1613 = vmatpush1.bf16.msra.mxu0 %v1465
  %1614 = vmatprep.subr.bf16.mxu0 0
  %1615 = vmatpush1.bf16.msra.mxu0 %v1466
  %1616 = vmatprep.subr.bf16.mxu0 0
  %1617 = vmatpush1.bf16.msra.mxu0 %v1467
  %1618 = vmatprep.subr.bf16.mxu0 0
  %1619 = vmatpush1.bf16.msra.mxu0 %v1468
  %1620 = vmatprep.subr.bf16.mxu0 0
  %1621 = vmatpush1.bf16.msra.mxu0 %v1469
  %1622 = vmatprep.subr.bf16.mxu0 0
  %1623 = vmatpush1.bf16.msra.mxu0 %v1470
  %1624 = vmatprep.subr.bf16.mxu0 0
  %1625 = vmatpush1.bf16.msra.mxu0 %v1471
  %1626 = vmatprep.subr.bf16.mxu0 0
  %1627 = vmatpush1.bf16.msra.mxu0 %v1472
  %1628 = vmatprep.subr.bf16.mxu0 0
  %1629 = vmatpush1.bf16.msra.mxu0 %v1473
  %1630 = vmatprep.subr.bf16.mxu0 0
  %1631 = vmatpush1.bf16.msra.mxu0 %v1474
  %1632 = vmatprep.subr.bf16.mxu0 0
  %1633 = vmatpush1.bf16.msra.mxu0 %v1475
  %1634 = vmatprep.subr.bf16.mxu0 0
  %1635 = vmatpush1.bf16.msra.mxu0 %v1476
  %1636 = vmatprep.subr.bf16.mxu0 0
  %1637 = vmatpush1.bf16.msra.mxu0 %v1477
  %1638 = vmatprep.mubr.bf16.mxu0 %v851
  %1639 = vmatmul.mubr.bf16.gmra.mrb[0].mxu0 %v850
  %v1640 = vpop.f32.mrb[0].mxu0
  %v1641 = vadd.f32 %v344, %v1640
  %v1642 = vpop.f32.mrb[0].mxu0
  %v1643 = vpop.f32.mrb[0].mxu0
  %v1644 = vadd.f32 %v344, %v1643
  %v1645 = vpop.f32.mrb[0].mxu0
  %1646 = vmatprep.mubr.bf16.mxu0 %v860
  %1647 = vmatmul.mubr.bf16.gmra.mrb[0].mxu0 %v859
  %v1648 = vpop.f32.mrb[0].mxu0
  %v1649 = vadd.f32 %v344, %v1648
  %v1650 = vpop.f32.mrb[0].mxu0
  %v1651 = vpop.f32.mrb[0].mxu0
  %v1652 = vadd.f32 %v344, %v1651
  %v1653 = vpop.f32.mrb[0].mxu0
  %1654 = vmatprep.mubr.bf16.mxu0 %v869
  %1655 = vmatmul.mubr.bf16.gmra.mrb[0].mxu0 %v868
  %v1656 = vpop.f32.mrb[0].mxu0
  %v1657 = vadd.f32 %v344, %v1656
  %v1658 = vpop.f32.mrb[0].mxu0
  %v1659 = vpop.f32.mrb[0].mxu0
  %v1660 = vadd.f32 %v344, %v1659
  %v1661 = vpop.f32.mrb[0].mxu0
  %1662 = vmatprep.mubr.bf16.mxu0 %v878
  %1663 = vmatmul.mubr.bf16.gmra.mrb[0].mxu0 %v877
  %v1664 = vpop.f32.mrb[0].mxu0
  %v1665 = vadd.f32 %v344, %v1664
  %v1666 = vpop.f32.mrb[0].mxu0
  %v1667 = vpop.f32.mrb[0].mxu0
  %v1668 = vadd.f32 %v344, %v1667
  %v1669 = vpop.f32.mrb[0].mxu0
  %1670 = vmatprep.mubr.bf16.mxu0 %v887
  %1671 = vmatmul.mubr.bf16.gmra.mrb[0].mxu0 %v886
  %v1672 = vpop.f32.mrb[0].mxu0
  %v1673 = vadd.f32 %v344, %v1672
  %v1674 = vpop.f32.mrb[0].mxu0
  %v1675 = vpop.f32.mrb[0].mxu0
  %v1676 = vadd.f32 %v344, %v1675
  %v1677 = vpop.f32.mrb[0].mxu0
  %1678 = vmatprep.mubr.bf16.mxu0 %v896
  %1679 = vmatmul.mubr.bf16.gmra.mrb[0].mxu0 %v895
  %v1680 = vpop.f32.mrb[0].mxu0
  %v1681 = vadd.f32 %v344, %v1680
  %v1682 = vpop.f32.mrb[0].mxu0
  %v1683 = vpop.f32.mrb[0].mxu0
  %v1684 = vadd.f32 %v344, %v1683
  %v1685 = vpop.f32.mrb[0].mxu0
  %1686 = vmatprep.mubr.bf16.mxu0 %v905
  %1687 = vmatmul.mubr.bf16.gmra.mrb[0].mxu0 %v904
  %v1688 = vpop.f32.mrb[0].mxu0
  %v1689 = vadd.f32 %v344, %v1688
  %v1690 = vpop.f32.mrb[0].mxu0
  %v1691 = vpop.f32.mrb[0].mxu0
  %v1692 = vadd.f32 %v344, %v1691
  %v1693 = vpop.f32.mrb[0].mxu0
  %1694 = vmatprep.mubr.bf16.mxu0 %v914
  %1695 = vmatmul.mubr.bf16.gmra.mrb[0].mxu0 %v913
  %v1696 = vpop.f32.mrb[0].mxu0
  %v1697 = vadd.f32 %v344, %v1696
  %v1698 = vpop.f32.mrb[0].mxu0
  %v1699 = vpop.f32.mrb[0].mxu0
  %v1700 = vadd.f32 %v344, %v1699
  %v1701 = vpop.f32.mrb[0].mxu0
  %1702 = vmatprep.mubr.bf16.mxu0 %v923
  %1703 = vmatmul.mubr.bf16.gmra.mrb[0].mxu0 %v922
  %v1704 = vpop.f32.mrb[0].mxu0
  %v1705 = vadd.f32 %v344, %v1704
  %v1706 = vpop.f32.mrb[0].mxu0
  %v1707 = vpop.f32.mrb[0].mxu0
  %v1708 = vadd.f32 %v344, %v1707
  %v1709 = vpop.f32.mrb[0].mxu0
  %1710 = vmatprep.mubr.bf16.mxu0 %v932
  %1711 = vmatmul.mubr.bf16.gmra.mrb[0].mxu0 %v931
  %v1712 = vpop.f32.mrb[0].mxu0
  %v1713 = vadd.f32 %v344, %v1712
  %v1714 = vpop.f32.mrb[0].mxu0
  %v1715 = vpop.f32.mrb[0].mxu0
  %v1716 = vadd.f32 %v344, %v1715
  %v1717 = vpop.f32.mrb[0].mxu0
  %1718 = vmatprep.mubr.bf16.mxu0 %v941
  %1719 = vmatmul.mubr.bf16.gmra.mrb[0].mxu0 %v940
  %v1720 = vpop.f32.mrb[0].mxu0
  %v1721 = vadd.f32 %v344, %v1720
  %v1722 = vpop.f32.mrb[0].mxu0
  %v1723 = vpop.f32.mrb[0].mxu0
  %v1724 = vadd.f32 %v344, %v1723
  %v1725 = vpop.f32.mrb[0].mxu0
  %1726 = vmatprep.mubr.bf16.mxu0 %v950
  %1727 = vmatmul.mubr.bf16.gmra.mrb[0].mxu0 %v949
  %v1728 = vpop.f32.mrb[0].mxu0
  %v1729 = vadd.f32 %v344, %v1728
  %v1730 = vpop.f32.mrb[0].mxu0
  %v1731 = vpop.f32.mrb[0].mxu0
  %v1732 = vadd.f32 %v344, %v1731
  %v1733 = vpop.f32.mrb[0].mxu0
  %1734 = vmatprep.mubr.bf16.mxu0 %v959
  %1735 = vmatmul.mubr.bf16.gmra.mrb[0].mxu0 %v958
  %v1736 = vpop.f32.mrb[0].mxu0
  %v1737 = vadd.f32 %v344, %v1736
  %v1738 = vpop.f32.mrb[0].mxu0
  %v1739 = vpop.f32.mrb[0].mxu0
  %v1740 = vadd.f32 %v344, %v1739
  %v1741 = vpop.f32.mrb[0].mxu0
  %1742 = vmatprep.mubr.bf16.mxu0 %v968
  %1743 = vmatmul.mubr.bf16.gmra.mrb[0].mxu0 %v967
  %v1744 = vpop.f32.mrb[0].mxu0
  %v1745 = vadd.f32 %v344, %v1744
  %v1746 = vpop.f32.mrb[0].mxu0
  %v1747 = vpop.f32.mrb[0].mxu0
  %v1748 = vadd.f32 %v344, %v1747
  %v1749 = vpop.f32.mrb[0].mxu0
  %1750 = vmatprep.mubr.bf16.mxu0 %v977
  %1751 = vmatmul.mubr.bf16.gmra.mrb[0].mxu0 %v976
  %v1752 = vpop.f32.mrb[0].mxu0
  %v1753 = vadd.f32 %v344, %v1752
  %v1754 = vpop.f32.mrb[0].mxu0
  %v1755 = vpop.f32.mrb[0].mxu0
  %v1756 = vadd.f32 %v344, %v1755
  %v1757 = vpop.f32.mrb[0].mxu0
  %1758 = vmatprep.mubr.bf16.mxu0 %v986
  %1759 = vmatmul.mubr.bf16.gmra.mrb[0].mxu0 %v985
  %v1760 = vpop.f32.mrb[0].mxu0
  %v1761 = vadd.f32 %v344, %v1760
  %v1762 = vpop.f32.mrb[0].mxu0
  %v1763 = vpop.f32.mrb[0].mxu0
  %v1764 = vadd.f32 %v344, %v1763
  %v1765 = vpop.f32.mrb[0].mxu0
  %1766 = vmatprep.mubr.bf16.mxu0 %v995
  %1767 = vmatmul.mubr.bf16.gmra.mrb[0].mxu0 %v994
  %v1768 = vpop.f32.mrb[0].mxu0
  %v1769 = vadd.f32 %v344, %v1768
  %v1770 = vpop.f32.mrb[0].mxu0
  %v1771 = vpop.f32.mrb[0].mxu0
  %v1772 = vadd.f32 %v344, %v1771
  %v1773 = vpop.f32.mrb[0].mxu0
  %1774 = vmatprep.mubr.bf16.mxu0 %v1004
  %1775 = vmatmul.mubr.bf16.gmra.mrb[0].mxu0 %v1003
  %v1776 = vpop.f32.mrb[0].mxu0
  %v1777 = vadd.f32 %v344, %v1776
  %v1778 = vpop.f32.mrb[0].mxu0
  %v1779 = vpop.f32.mrb[0].mxu0
  %v1780 = vadd.f32 %v344, %v1779
  %v1781 = vpop.f32.mrb[0].mxu0
  %1782 = vdwg.mxu0
  %1783 = vmatprep.subr.bf16.mxu0 0
  %1784 = vmatpush1.bf16.msra.mxu0 %v1478
  %1785 = vmatprep.subr.bf16.mxu0 0
  %1786 = vmatpush1.bf16.msra.mxu0 %v1479
  %1787 = vmatprep.subr.bf16.mxu0 0
  %1788 = vmatpush1.bf16.msra.mxu0 %v1480
  %1789 = vmatprep.subr.bf16.mxu0 0
  %1790 = vmatpush1.bf16.msra.mxu0 %v1481
  %1791 = vmatprep.subr.bf16.mxu0 0
  %1792 = vmatpush1.bf16.msra.mxu0 %v1482
  %1793 = vmatprep.subr.bf16.mxu0 0
  %1794 = vmatpush1.bf16.msra.mxu0 %v1483
  %1795 = vmatprep.subr.bf16.mxu0 0
  %1796 = vmatpush1.bf16.msra.mxu0 %v1484
  %1797 = vmatprep.subr.bf16.mxu0 0
  %1798 = vmatpush1.bf16.msra.mxu0 %v1485
  %1799 = vmatprep.subr.bf16.mxu0 0
  %1800 = vmatpush1.bf16.msra.mxu0 %v1486
  %1801 = vmatprep.subr.bf16.mxu0 0
  %1802 = vmatpush1.bf16.msra.mxu0 %v1487
  %1803 = vmatprep.subr.bf16.mxu0 0
  %1804 = vmatpush1.bf16.msra.mxu0 %v1488
  %1805 = vmatprep.subr.bf16.mxu0 0
  %1806 = vmatpush1.bf16.msra.mxu0 %v1489
  %1807 = vmatprep.subr.bf16.mxu0 0
  %1808 = vmatpush1.bf16.msra.mxu0 %v1490
  %1809 = vmatprep.subr.bf16.mxu0 0
  %1810 = vmatpush1.bf16.msra.mxu0 %v1491
  %1811 = vmatprep.subr.bf16.mxu0 0
  %1812 = vmatpush1.bf16.msra.mxu0 %v1492
  %1813 = vmatprep.subr.bf16.mxu0 0
  %1814 = vmatpush1.bf16.msra.mxu0 %v1493
  %1815 = vmatprep.mubr.bf16.mxu0 %v853
  %1816 = vmatmul.mubr.bf16.gmra.mrb[0].mxu0 %v852
  %v1817 = vpop.f32.mrb[0].mxu0
  %v1818 = vadd.f32 %v1641, %v1817
  %v1819 = vpop.f32.mrb[0].mxu0
  %v1820 = vpop.f32.mrb[0].mxu0
  %v1821 = vadd.f32 %v1644, %v1820
  %v1822 = vpop.f32.mrb[0].mxu0
  %1823 = vmatprep.mubr.bf16.mxu0 %v862
  %1824 = vmatmul.mubr.bf16.gmra.mrb[0].mxu0 %v861
  %v1825 = vpop.f32.mrb[0].mxu0
  %v1826 = vadd.f32 %v1649, %v1825
  %v1827 = vpop.f32.mrb[0].mxu0
  %v1828 = vpop.f32.mrb[0].mxu0
  %v1829 = vadd.f32 %v1652, %v1828
  %v1830 = vpop.f32.mrb[0].mxu0
  %1831 = vmatprep.mubr.bf16.mxu0 %v871
  %1832 = vmatmul.mubr.bf16.gmra.mrb[0].mxu0 %v870
  %v1833 = vpop.f32.mrb[0].mxu0
  %v1834 = vadd.f32 %v1657, %v1833
  %v1835 = vpop.f32.mrb[0].mxu0
  %v1836 = vpop.f32.mrb[0].mxu0
  %v1837 = vadd.f32 %v1660, %v1836
  %v1838 = vpop.f32.mrb[0].mxu0
  %1839 = vmatprep.mubr.bf16.mxu0 %v880
  %1840 = vmatmul.mubr.bf16.gmra.mrb[0].mxu0 %v879
  %v1841 = vpop.f32.mrb[0].mxu0
  %v1842 = vadd.f32 %v1665, %v1841
  %v1843 = vpop.f32.mrb[0].mxu0
  %v1844 = vpop.f32.mrb[0].mxu0
  %v1845 = vadd.f32 %v1668, %v1844
  %v1846 = vpop.f32.mrb[0].mxu0
  %1847 = vmatprep.mubr.bf16.mxu0 %v889
  %1848 = vmatmul.mubr.bf16.gmra.mrb[0].mxu0 %v888
  %v1849 = vpop.f32.mrb[0].mxu0
  %v1850 = vadd.f32 %v1673, %v1849
  %v1851 = vpop.f32.mrb[0].mxu0
  %v1852 = vpop.f32.mrb[0].mxu0
  %v1853 = vadd.f32 %v1676, %v1852
  %v1854 = vpop.f32.mrb[0].mxu0
  %1855 = vmatprep.mubr.bf16.mxu0 %v898
  %1856 = vmatmul.mubr.bf16.gmra.mrb[0].mxu0 %v897
  %v1857 = vpop.f32.mrb[0].mxu0
  %v1858 = vadd.f32 %v1681, %v1857
  %v1859 = vpop.f32.mrb[0].mxu0
  %v1860 = vpop.f32.mrb[0].mxu0
  %v1861 = vadd.f32 %v1684, %v1860
  %v1862 = vpop.f32.mrb[0].mxu0
  %1863 = vmatprep.mubr.bf16.mxu0 %v907
  %1864 = vmatmul.mubr.bf16.gmra.mrb[0].mxu0 %v906
  %v1865 = vpop.f32.mrb[0].mxu0
  %v1866 = vadd.f32 %v1689, %v1865
  %v1867 = vpop.f32.mrb[0].mxu0
  %v1868 = vpop.f32.mrb[0].mxu0
  %v1869 = vadd.f32 %v1692, %v1868
  %v1870 = vpop.f32.mrb[0].mxu0
  %1871 = vmatprep.mubr.bf16.mxu0 %v916
  %1872 = vmatmul.mubr.bf16.gmra.mrb[0].mxu0 %v915
  %v1873 = vpop.f32.mrb[0].mxu0
  %v1874 = vadd.f32 %v1697, %v1873
  %v1875 = vpop.f32.mrb[0].mxu0
  %v1876 = vpop.f32.mrb[0].mxu0
  %v1877 = vadd.f32 %v1700, %v1876
  %v1878 = vpop.f32.mrb[0].mxu0
  %1879 = vmatprep.mubr.bf16.mxu0 %v925
  %1880 = vmatmul.mubr.bf16.gmra.mrb[0].mxu0 %v924
  %v1881 = vpop.f32.mrb[0].mxu0
  %v1882 = vadd.f32 %v1705, %v1881
  %v1883 = vpop.f32.mrb[0].mxu0
  %v1884 = vpop.f32.mrb[0].mxu0
  %v1885 = vadd.f32 %v1708, %v1884
  %v1886 = vpop.f32.mrb[0].mxu0
  %1887 = vmatprep.mubr.bf16.mxu0 %v934
  %1888 = vmatmul.mubr.bf16.gmra.mrb[0].mxu0 %v933
  %v1889 = vpop.f32.mrb[0].mxu0
  %v1890 = vadd.f32 %v1713, %v1889
  %v1891 = vpop.f32.mrb[0].mxu0
  %v1892 = vpop.f32.mrb[0].mxu0
  %v1893 = vadd.f32 %v1716, %v1892
  %v1894 = vpop.f32.mrb[0].mxu0
  %1895 = vmatprep.mubr.bf16.mxu0 %v943
  %1896 = vmatmul.mubr.bf16.gmra.mrb[0].mxu0 %v942
  %v1897 = vpop.f32.mrb[0].mxu0
  %v1898 = vadd.f32 %v1721, %v1897
  %v1899 = vpop.f32.mrb[0].mxu0
  %v1900 = vpop.f32.mrb[0].mxu0
  %v1901 = vadd.f32 %v1724, %v1900
  %v1902 = vpop.f32.mrb[0].mxu0
  %1903 = vmatprep.mubr.bf16.mxu0 %v952
  %1904 = vmatmul.mubr.bf16.gmra.mrb[0].mxu0 %v951
  %v1905 = vpop.f32.mrb[0].mxu0
  %v1906 = vadd.f32 %v1729, %v1905
  %v1907 = vpop.f32.mrb[0].mxu0
  %v1908 = vpop.f32.mrb[0].mxu0
  %v1909 = vadd.f32 %v1732, %v1908
  %v1910 = vpop.f32.mrb[0].mxu0
  %1911 = vmatprep.mubr.bf16.mxu0 %v961
  %1912 = vmatmul.mubr.bf16.gmra.mrb[0].mxu0 %v960
  %v1913 = vpop.f32.mrb[0].mxu0
  %v1914 = vadd.f32 %v1737, %v1913
  %v1915 = vpop.f32.mrb[0].mxu0
  %v1916 = vpop.f32.mrb[0].mxu0
  %v1917 = vadd.f32 %v1740, %v1916
  %v1918 = vpop.f32.mrb[0].mxu0
  %1919 = vmatprep.mubr.bf16.mxu0 %v970
  %1920 = vmatmul.mubr.bf16.gmra.mrb[0].mxu0 %v969
  %v1921 = vpop.f32.mrb[0].mxu0
  %v1922 = vadd.f32 %v1745, %v1921
  %v1923 = vpop.f32.mrb[0].mxu0
  %v1924 = vpop.f32.mrb[0].mxu0
  %v1925 = vadd.f32 %v1748, %v1924
  %v1926 = vpop.f32.mrb[0].mxu0
  %1927 = vmatprep.mubr.bf16.mxu0 %v979
  %1928 = vmatmul.mubr.bf16.gmra.mrb[0].mxu0 %v978
  %v1929 = vpop.f32.mrb[0].mxu0
  %v1930 = vadd.f32 %v1753, %v1929
  %v1931 = vpop.f32.mrb[0].mxu0
  %v1932 = vpop.f32.mrb[0].mxu0
  %v1933 = vadd.f32 %v1756, %v1932
  %v1934 = vpop.f32.mrb[0].mxu0
  %1935 = vmatprep.mubr.bf16.mxu0 %v988
  %1936 = vmatmul.mubr.bf16.gmra.mrb[0].mxu0 %v987
  %v1937 = vpop.f32.mrb[0].mxu0
  %v1938 = vadd.f32 %v1761, %v1937
  %v1939 = vpop.f32.mrb[0].mxu0
  %v1940 = vpop.f32.mrb[0].mxu0
  %v1941 = vadd.f32 %v1764, %v1940
  %v1942 = vpop.f32.mrb[0].mxu0
  %1943 = vmatprep.mubr.bf16.mxu0 %v997
  %1944 = vmatmul.mubr.bf16.gmra.mrb[0].mxu0 %v996
  %v1945 = vpop.f32.mrb[0].mxu0
  %v1946 = vadd.f32 %v1769, %v1945
  %v1947 = vpop.f32.mrb[0].mxu0
  %v1948 = vpop.f32.mrb[0].mxu0
  %v1949 = vadd.f32 %v1772, %v1948
  %v1950 = vpop.f32.mrb[0].mxu0
  %1951 = vmatprep.mubr.bf16.mxu0 %v1006
  %1952 = vmatmul.mubr.bf16.gmra.mrb[0].mxu0 %v1005
  %v1953 = vpop.f32.mrb[0].mxu0
  %v1954 = vadd.f32 %v1777, %v1953
  %v1955 = vpop.f32.mrb[0].mxu0
  %v1956 = vpop.f32.mrb[0].mxu0
  %v1957 = vadd.f32 %v1780, %v1956
  %v1958 = vpop.f32.mrb[0].mxu0
  %1959 = vdwg.mxu0
  %1960 = vmatprep.subr.bf16.mxu0 0
  %1961 = vmatpush1.bf16.msra.mxu0 %v1494
  %1962 = vmatprep.subr.bf16.mxu0 0
  %1963 = vmatpush1.bf16.msra.mxu0 %v1495
  %1964 = vmatprep.subr.bf16.mxu0 0
  %1965 = vmatpush1.bf16.msra.mxu0 %v1496
  %1966 = vmatprep.subr.bf16.mxu0 0
  %1967 = vmatpush1.bf16.msra.mxu0 %v1497
  %1968 = vmatprep.subr.bf16.mxu0 0
  %1969 = vmatpush1.bf16.msra.mxu0 %v1498
  %1970 = vmatprep.subr.bf16.mxu0 0
  %1971 = vmatpush1.bf16.msra.mxu0 %v1499
  %1972 = vmatprep.subr.bf16.mxu0 0
  %1973 = vmatpush1.bf16.msra.mxu0 %v1500
  %1974 = vmatprep.subr.bf16.mxu0 0
  %1975 = vmatpush1.bf16.msra.mxu0 %v1501
  %1976 = vmatprep.subr.bf16.mxu0 0
  %1977 = vmatpush1.bf16.msra.mxu0 %v1502
  %1978 = vmatprep.subr.bf16.mxu0 0
  %1979 = vmatpush1.bf16.msra.mxu0 %v1503
  %1980 = vmatprep.subr.bf16.mxu0 0
  %1981 = vmatpush1.bf16.msra.mxu0 %v1504
  %1982 = vmatprep.subr.bf16.mxu0 0
  %1983 = vmatpush1.bf16.msra.mxu0 %v1505
  %1984 = vmatprep.subr.bf16.mxu0 0
  %1985 = vmatpush1.bf16.msra.mxu0 %v1506
  %1986 = vmatprep.subr.bf16.mxu0 0
  %1987 = vmatpush1.bf16.msra.mxu0 %v1507
  %1988 = vmatprep.subr.bf16.mxu0 0
  %1989 = vmatpush1.bf16.msra.mxu0 %v1508
  %1990 = vmatprep.subr.bf16.mxu0 0
  %1991 = vmatpush1.bf16.msra.mxu0 %v1509
  %1992 = vmatprep.mubr.bf16.mxu0 %v855
  %1993 = vmatmul.mubr.bf16.gmra.mrb[0].mxu0 %v854
  %v1994 = vpop.f32.mrb[0].mxu0
  %v1995 = vadd.f32 %v1818, %v1994
  %v1996 = vpop.f32.mrb[0].mxu0
  %v1997 = vpop.f32.mrb[0].mxu0
  %v1998 = vadd.f32 %v1821, %v1997
  %v1999 = vpop.f32.mrb[0].mxu0
  %2000 = vmatprep.mubr.bf16.mxu0 %v864
  %2001 = vmatmul.mubr.bf16.gmra.mrb[0].mxu0 %v863
  %v2002 = vpop.f32.mrb[0].mxu0
  %v2003 = vadd.f32 %v1826, %v2002
  %v2004 = vpop.f32.mrb[0].mxu0
  %v2005 = vpop.f32.mrb[0].mxu0
  %v2006 = vadd.f32 %v1829, %v2005
  %v2007 = vpop.f32.mrb[0].mxu0
  %2008 = vmatprep.mubr.bf16.mxu0 %v873
  %2009 = vmatmul.mubr.bf16.gmra.mrb[0].mxu0 %v872
  %v2010 = vpop.f32.mrb[0].mxu0
  %v2011 = vadd.f32 %v1834, %v2010
  %v2012 = vpop.f32.mrb[0].mxu0
  %v2013 = vpop.f32.mrb[0].mxu0
  %v2014 = vadd.f32 %v1837, %v2013
  %v2015 = vpop.f32.mrb[0].mxu0
  %2016 = vmatprep.mubr.bf16.mxu0 %v882
  %2017 = vmatmul.mubr.bf16.gmra.mrb[0].mxu0 %v881
  %v2018 = vpop.f32.mrb[0].mxu0
  %v2019 = vadd.f32 %v1842, %v2018
  %v2020 = vpop.f32.mrb[0].mxu0
  %v2021 = vpop.f32.mrb[0].mxu0
  %v2022 = vadd.f32 %v1845, %v2021
  %v2023 = vpop.f32.mrb[0].mxu0
  %2024 = vmatprep.mubr.bf16.mxu0 %v891
  %2025 = vmatmul.mubr.bf16.gmra.mrb[0].mxu0 %v890
  %v2026 = vpop.f32.mrb[0].mxu0
  %v2027 = vadd.f32 %v1850, %v2026
  %v2028 = vpop.f32.mrb[0].mxu0
  %v2029 = vpop.f32.mrb[0].mxu0
  %v2030 = vadd.f32 %v1853, %v2029
  %v2031 = vpop.f32.mrb[0].mxu0
  %2032 = vmatprep.mubr.bf16.mxu0 %v900
  %2033 = vmatmul.mubr.bf16.gmra.mrb[0].mxu0 %v899
  %v2034 = vpop.f32.mrb[0].mxu0
  %v2035 = vadd.f32 %v1858, %v2034
  %v2036 = vpop.f32.mrb[0].mxu0
  %v2037 = vpop.f32.mrb[0].mxu0
  %v2038 = vadd.f32 %v1861, %v2037
  %v2039 = vpop.f32.mrb[0].mxu0
  %2040 = vmatprep.mubr.bf16.mxu0 %v909
  %2041 = vmatmul.mubr.bf16.gmra.mrb[0].mxu0 %v908
  %v2042 = vpop.f32.mrb[0].mxu0
  %v2043 = vadd.f32 %v1866, %v2042
  %v2044 = vpop.f32.mrb[0].mxu0
  %v2045 = vpop.f32.mrb[0].mxu0
  %v2046 = vadd.f32 %v1869, %v2045
  %v2047 = vpop.f32.mrb[0].mxu0
  %2048 = vmatprep.mubr.bf16.mxu0 %v918
  %2049 = vmatmul.mubr.bf16.gmra.mrb[0].mxu0 %v917
  %v2050 = vpop.f32.mrb[0].mxu0
  %v2051 = vadd.f32 %v1874, %v2050
  %v2052 = vpop.f32.mrb[0].mxu0
  %v2053 = vpop.f32.mrb[0].mxu0
  %v2054 = vadd.f32 %v1877, %v2053
  %v2055 = vpop.f32.mrb[0].mxu0
  %2056 = vmatprep.mubr.bf16.mxu0 %v927
  %2057 = vmatmul.mubr.bf16.gmra.mrb[0].mxu0 %v926
  %v2058 = vpop.f32.mrb[0].mxu0
  %v2059 = vadd.f32 %v1882, %v2058
  %v2060 = vpop.f32.mrb[0].mxu0
  %v2061 = vpop.f32.mrb[0].mxu0
  %v2062 = vadd.f32 %v1885, %v2061
  %v2063 = vpop.f32.mrb[0].mxu0
  %2064 = vmatprep.mubr.bf16.mxu0 %v936
  %2065 = vmatmul.mubr.bf16.gmra.mrb[0].mxu0 %v935
  %v2066 = vpop.f32.mrb[0].mxu0
  %v2067 = vadd.f32 %v1890, %v2066
  %v2068 = vpop.f32.mrb[0].mxu0
  %v2069 = vpop.f32.mrb[0].mxu0
  %v2070 = vadd.f32 %v1893, %v2069
  %v2071 = vpop.f32.mrb[0].mxu0
  %2072 = vmatprep.mubr.bf16.mxu0 %v945
  %2073 = vmatmul.mubr.bf16.gmra.mrb[0].mxu0 %v944
  %v2074 = vpop.f32.mrb[0].mxu0
  %v2075 = vadd.f32 %v1898, %v2074
  %v2076 = vpop.f32.mrb[0].mxu0
  %v2077 = vpop.f32.mrb[0].mxu0
  %v2078 = vadd.f32 %v1901, %v2077
  %v2079 = vpop.f32.mrb[0].mxu0
  %2080 = vmatprep.mubr.bf16.mxu0 %v954
  %2081 = vmatmul.mubr.bf16.gmra.mrb[0].mxu0 %v953
  %v2082 = vpop.f32.mrb[0].mxu0
  %v2083 = vadd.f32 %v1906, %v2082
  %v2084 = vpop.f32.mrb[0].mxu0
  %v2085 = vpop.f32.mrb[0].mxu0
  %v2086 = vadd.f32 %v1909, %v2085
  %v2087 = vpop.f32.mrb[0].mxu0
  %2088 = vmatprep.mubr.bf16.mxu0 %v963
  %2089 = vmatmul.mubr.bf16.gmra.mrb[0].mxu0 %v962
  %v2090 = vpop.f32.mrb[0].mxu0
  %v2091 = vadd.f32 %v1914, %v2090
  %v2092 = vpop.f32.mrb[0].mxu0
  %v2093 = vpop.f32.mrb[0].mxu0
  %v2094 = vadd.f32 %v1917, %v2093
  %v2095 = vpop.f32.mrb[0].mxu0
  %2096 = vmatprep.mubr.bf16.mxu0 %v972
  %2097 = vmatmul.mubr.bf16.gmra.mrb[0].mxu0 %v971
  %v2098 = vpop.f32.mrb[0].mxu0
  %v2099 = vadd.f32 %v1922, %v2098
  %v2100 = vpop.f32.mrb[0].mxu0
  %v2101 = vpop.f32.mrb[0].mxu0
  %v2102 = vadd.f32 %v1925, %v2101
  %v2103 = vpop.f32.mrb[0].mxu0
  %2104 = vmatprep.mubr.bf16.mxu0 %v981
  %2105 = vmatmul.mubr.bf16.gmra.mrb[0].mxu0 %v980
  %v2106 = vpop.f32.mrb[0].mxu0
  %v2107 = vadd.f32 %v1930, %v2106
  %v2108 = vpop.f32.mrb[0].mxu0
  %v2109 = vpop.f32.mrb[0].mxu0
  %v2110 = vadd.f32 %v1933, %v2109
  %v2111 = vpop.f32.mrb[0].mxu0
  %2112 = vmatprep.mubr.bf16.mxu0 %v990
  %2113 = vmatmul.mubr.bf16.gmra.mrb[0].mxu0 %v989
  %v2114 = vpop.f32.mrb[0].mxu0
  %v2115 = vadd.f32 %v1938, %v2114
  %v2116 = vpop.f32.mrb[0].mxu0
  %v2117 = vpop.f32.mrb[0].mxu0
  %v2118 = vadd.f32 %v1941, %v2117
  %v2119 = vpop.f32.mrb[0].mxu0
  %2120 = vmatprep.mubr.bf16.mxu0 %v999
  %2121 = vmatmul.mubr.bf16.gmra.mrb[0].mxu0 %v998
  %v2122 = vpop.f32.mrb[0].mxu0
  %v2123 = vadd.f32 %v1946, %v2122
  %v2124 = vpop.f32.mrb[0].mxu0
  %v2125 = vpop.f32.mrb[0].mxu0
  %v2126 = vadd.f32 %v1949, %v2125
  %v2127 = vpop.f32.mrb[0].mxu0
  %2128 = vmatprep.mubr.bf16.mxu0 %v1008
  %2129 = vmatmul.mubr.bf16.gmra.mrb[0].mxu0 %v1007
  %v2130 = vpop.f32.mrb[0].mxu0
  %v2131 = vadd.f32 %v1954, %v2130
  %v2132 = vpop.f32.mrb[0].mxu0
  %v2133 = vpop.f32.mrb[0].mxu0
  %v2134 = vadd.f32 %v1957, %v2133
  %v2135 = vpop.f32.mrb[0].mxu0
  %2136 = vdwg.mxu0
  %2137 = vmatprep.subr.bf16.mxu0 0
  %2138 = vmatpush1.bf16.msra.mxu0 %v1510
  %2139 = vmatprep.subr.bf16.mxu0 0
  %2140 = vmatpush1.bf16.msra.mxu0 %v1511
  %2141 = vmatprep.subr.bf16.mxu0 0
  %2142 = vmatpush1.bf16.msra.mxu0 %v1512
  %2143 = vmatprep.subr.bf16.mxu0 0
  %2144 = vmatpush1.bf16.msra.mxu0 %v1513
  %2145 = vmatprep.subr.bf16.mxu0 0
  %2146 = vmatpush1.bf16.msra.mxu0 %v1514
  %2147 = vmatprep.subr.bf16.mxu0 0
  %2148 = vmatpush1.bf16.msra.mxu0 %v1515
  %2149 = vmatprep.subr.bf16.mxu0 0
  %2150 = vmatpush1.bf16.msra.mxu0 %v1516
  %2151 = vmatprep.subr.bf16.mxu0 0
  %2152 = vmatpush1.bf16.msra.mxu0 %v1517
  %2153 = vmatprep.subr.bf16.mxu0 0
  %2154 = vmatpush1.bf16.msra.mxu0 %v1518
  %2155 = vmatprep.subr.bf16.mxu0 0
  %2156 = vmatpush1.bf16.msra.mxu0 %v1519
  %2157 = vmatprep.subr.bf16.mxu0 0
  %2158 = vmatpush1.bf16.msra.mxu0 %v1520
  %2159 = vmatprep.subr.bf16.mxu0 0
  %2160 = vmatpush1.bf16.msra.mxu0 %v1521
  %2161 = vmatprep.subr.bf16.mxu0 0
  %2162 = vmatpush1.bf16.msra.mxu0 %v1522
  %2163 = vmatprep.subr.bf16.mxu0 0
  %2164 = vmatpush1.bf16.msra.mxu0 %v1523
  %2165 = vmatprep.subr.bf16.mxu0 0
  %2166 = vmatpush1.bf16.msra.mxu0 %v1524
  %2167 = vmatprep.subr.bf16.mxu0 0
  %2168 = vmatpush1.bf16.msra.mxu0 %v1525
  %2169 = vmatprep.mubr.bf16.mxu0 %v857
  %2170 = vmatmul.mubr.bf16.gmra.mrb[0].mxu0 %v856
  %v2171 = vpop.f32.mrb[0].mxu0
  %v2172 = vadd.f32 %v1995, %v2171
  %v2173 = vpop.f32.mrb[0].mxu0
  %v2174 = vpop.f32.mrb[0].mxu0
  %v2175 = vadd.f32 %v1998, %v2174
  %v2176 = vpop.f32.mrb[0].mxu0
  %2177 = vmatprep.mubr.bf16.mxu0 %v866
  %2178 = vmatmul.mubr.bf16.gmra.mrb[0].mxu0 %v865
  %v2179 = vpop.f32.mrb[0].mxu0
  %v2180 = vadd.f32 %v2003, %v2179
  %v2181 = vpop.f32.mrb[0].mxu0
  %v2182 = vpop.f32.mrb[0].mxu0
  %v2183 = vadd.f32 %v2006, %v2182
  %v2184 = vpop.f32.mrb[0].mxu0
  %2185 = vmatprep.mubr.bf16.mxu0 %v875
  %2186 = vmatmul.mubr.bf16.gmra.mrb[0].mxu0 %v874
  %v2187 = vpop.f32.mrb[0].mxu0
  %v2188 = vadd.f32 %v2011, %v2187
  %v2189 = vpop.f32.mrb[0].mxu0
  %v2190 = vpop.f32.mrb[0].mxu0
  %v2191 = vadd.f32 %v2014, %v2190
  %v2192 = vpop.f32.mrb[0].mxu0
  %2193 = vmatprep.mubr.bf16.mxu0 %v884
  %2194 = vmatmul.mubr.bf16.gmra.mrb[0].mxu0 %v883
  %v2195 = vpop.f32.mrb[0].mxu0
  %v2196 = vadd.f32 %v2019, %v2195
  %v2197 = vpop.f32.mrb[0].mxu0
  %v2198 = vpop.f32.mrb[0].mxu0
  %v2199 = vadd.f32 %v2022, %v2198
  %v2200 = vpop.f32.mrb[0].mxu0
  %2201 = vmatprep.mubr.bf16.mxu0 %v893
  %2202 = vmatmul.mubr.bf16.gmra.mrb[0].mxu0 %v892
  %v2203 = vpop.f32.mrb[0].mxu0
  %v2204 = vadd.f32 %v2027, %v2203
  %v2205 = vpop.f32.mrb[0].mxu0
  %v2206 = vpop.f32.mrb[0].mxu0
  %v2207 = vadd.f32 %v2030, %v2206
  %v2208 = vpop.f32.mrb[0].mxu0
  %2209 = vmatprep.mubr.bf16.mxu0 %v902
  %2210 = vmatmul.mubr.bf16.gmra.mrb[0].mxu0 %v901
  %v2211 = vpop.f32.mrb[0].mxu0
  %v2212 = vadd.f32 %v2035, %v2211
  %v2213 = vpop.f32.mrb[0].mxu0
  %v2214 = vpop.f32.mrb[0].mxu0
  %v2215 = vadd.f32 %v2038, %v2214
  %v2216 = vpop.f32.mrb[0].mxu0
  %2217 = vmatprep.mubr.bf16.mxu0 %v911
  %2218 = vmatmul.mubr.bf16.gmra.mrb[0].mxu0 %v910
  %v2219 = vpop.f32.mrb[0].mxu0
  %v2220 = vadd.f32 %v2043, %v2219
  %v2221 = vpop.f32.mrb[0].mxu0
  %v2222 = vpop.f32.mrb[0].mxu0
  %v2223 = vadd.f32 %v2046, %v2222
  %v2224 = vpop.f32.mrb[0].mxu0
  %2225 = vmatprep.mubr.bf16.mxu0 %v920
  %2226 = vmatmul.mubr.bf16.gmra.mrb[0].mxu0 %v919
  %v2227 = vpop.f32.mrb[0].mxu0
  %v2228 = vadd.f32 %v2051, %v2227
  %v2229 = vpop.f32.mrb[0].mxu0
  %v2230 = vpop.f32.mrb[0].mxu0
  %v2231 = vadd.f32 %v2054, %v2230
  %v2232 = vpop.f32.mrb[0].mxu0
  %2233 = vmatprep.mubr.bf16.mxu0 %v929
  %2234 = vmatmul.mubr.bf16.gmra.mrb[0].mxu0 %v928
  %v2235 = vpop.f32.mrb[0].mxu0
  %v2236 = vadd.f32 %v2059, %v2235
  %v2237 = vpop.f32.mrb[0].mxu0
  %v2238 = vpop.f32.mrb[0].mxu0
  %v2239 = vadd.f32 %v2062, %v2238
  %v2240 = vpop.f32.mrb[0].mxu0
  %2241 = vmatprep.mubr.bf16.mxu0 %v938
  %2242 = vmatmul.mubr.bf16.gmra.mrb[0].mxu0 %v937
  %v2243 = vpop.f32.mrb[0].mxu0
  %v2244 = vadd.f32 %v2067, %v2243
  %v2245 = vpop.f32.mrb[0].mxu0
  %v2246 = vpop.f32.mrb[0].mxu0
  %v2247 = vadd.f32 %v2070, %v2246
  %v2248 = vpop.f32.mrb[0].mxu0
  %2249 = vmatprep.mubr.bf16.mxu0 %v947
  %2250 = vmatmul.mubr.bf16.gmra.mrb[0].mxu0 %v946
  %v2251 = vpop.f32.mrb[0].mxu0
  %v2252 = vadd.f32 %v2075, %v2251
  %v2253 = vpop.f32.mrb[0].mxu0
  %v2254 = vpop.f32.mrb[0].mxu0
  %v2255 = vadd.f32 %v2078, %v2254
  %v2256 = vpop.f32.mrb[0].mxu0
  %2257 = vmatprep.mubr.bf16.mxu0 %v956
  %2258 = vmatmul.mubr.bf16.gmra.mrb[0].mxu0 %v955
  %v2259 = vpop.f32.mrb[0].mxu0
  %v2260 = vadd.f32 %v2083, %v2259
  %v2261 = vpop.f32.mrb[0].mxu0
  %v2262 = vpop.f32.mrb[0].mxu0
  %v2263 = vadd.f32 %v2086, %v2262
  %v2264 = vpop.f32.mrb[0].mxu0
  %2265 = vmatprep.mubr.bf16.mxu0 %v965
  %2266 = vmatmul.mubr.bf16.gmra.mrb[0].mxu0 %v964
  %v2267 = vpop.f32.mrb[0].mxu0
  %v2268 = vadd.f32 %v2091, %v2267
  %v2269 = vpop.f32.mrb[0].mxu0
  %v2270 = vpop.f32.mrb[0].mxu0
  %v2271 = vadd.f32 %v2094, %v2270
  %v2272 = vpop.f32.mrb[0].mxu0
  %2273 = vmatprep.mubr.bf16.mxu0 %v974
  %2274 = vmatmul.mubr.bf16.gmra.mrb[0].mxu0 %v973
  %v2275 = vpop.f32.mrb[0].mxu0
  %v2276 = vadd.f32 %v2099, %v2275
  %v2277 = vpop.f32.mrb[0].mxu0
  %v2278 = vpop.f32.mrb[0].mxu0
  %v2279 = vadd.f32 %v2102, %v2278
  %v2280 = vpop.f32.mrb[0].mxu0
  %2281 = vmatprep.mubr.bf16.mxu0 %v983
  %2282 = vmatmul.mubr.bf16.gmra.mrb[0].mxu0 %v982
  %v2283 = vpop.f32.mrb[0].mxu0
  %v2284 = vadd.f32 %v2107, %v2283
  %v2285 = vpop.f32.mrb[0].mxu0
  %v2286 = vpop.f32.mrb[0].mxu0
  %v2287 = vadd.f32 %v2110, %v2286
  %v2288 = vpop.f32.mrb[0].mxu0
  %2289 = vmatprep.mubr.bf16.mxu0 %v992
  %2290 = vmatmul.mubr.bf16.gmra.mrb[0].mxu0 %v991
  %v2291 = vpop.f32.mrb[0].mxu0
  %v2292 = vadd.f32 %v2115, %v2291
  %v2293 = vpop.f32.mrb[0].mxu0
  %v2294 = vpop.f32.mrb[0].mxu0
  %v2295 = vadd.f32 %v2118, %v2294
  %v2296 = vpop.f32.mrb[0].mxu0
  %2297 = vmatprep.mubr.bf16.mxu0 %v1001
  %2298 = vmatmul.mubr.bf16.gmra.mrb[0].mxu0 %v1000
  %v2299 = vpop.f32.mrb[0].mxu0
  %v2300 = vadd.f32 %v2123, %v2299
  %v2301 = vpop.f32.mrb[0].mxu0
  %v2302 = vpop.f32.mrb[0].mxu0
  %v2303 = vadd.f32 %v2126, %v2302
  %v2304 = vpop.f32.mrb[0].mxu0
  %2305 = vmatprep.mubr.bf16.mxu0 %v1010
  %2306 = vmatmul.mubr.bf16.gmra.mrb[0].mxu0 %v1009
  %v2307 = vpop.f32.mrb[0].mxu0
  %v2308 = vadd.f32 %v2131, %v2307
  %v2309 = vpop.f32.mrb[0].mxu0
  %v2310 = vpop.f32.mrb[0].mxu0
  %v2311 = vadd.f32 %v2134, %v2310
  %v2312 = vpop.f32.mrb[0].mxu0
  %2313 = vdwg.mxu0
  %2314 = vmatprep.subr.bf16.mxu0 0
  %2315 = vmatpush1.bf16.msra.mxu0 %v1526
  %2316 = vmatprep.subr.bf16.mxu0 0
  %2317 = vmatpush1.bf16.msra.mxu0 %v1527
  %2318 = vmatprep.subr.bf16.mxu0 0
  %2319 = vmatpush1.bf16.msra.mxu0 %v1528
  %2320 = vmatprep.subr.bf16.mxu0 0
  %2321 = vmatpush1.bf16.msra.mxu0 %v1529
  %2322 = vmatprep.subr.bf16.mxu0 0
  %2323 = vmatpush1.bf16.msra.mxu0 %v1530
  %2324 = vmatprep.subr.bf16.mxu0 0
  %2325 = vmatpush1.bf16.msra.mxu0 %v1531
  %2326 = vmatprep.subr.bf16.mxu0 0
  %2327 = vmatpush1.bf16.msra.mxu0 %v1532
  %2328 = vmatprep.subr.bf16.mxu0 0
  %2329 = vmatpush1.bf16.msra.mxu0 %v1533
  %2330 = vmatprep.subr.bf16.mxu0 0
  %2331 = vmatpush1.bf16.msra.mxu0 0
  %2332 = vmatprep.subr.bf16.mxu0 0
  %2333 = vmatpush1.bf16.msra.mxu0 0
  %2334 = vmatprep.subr.bf16.mxu0 0
  %2335 = vmatpush1.bf16.msra.mxu0 0
  %2336 = vmatprep.subr.bf16.mxu0 0
  %2337 = vmatpush1.bf16.msra.mxu0 0
  %2338 = vmatprep.subr.bf16.mxu0 0
  %2339 = vmatpush1.bf16.msra.mxu0 0
  %2340 = vmatprep.subr.bf16.mxu0 0
  %2341 = vmatpush1.bf16.msra.mxu0 0
  %2342 = vmatprep.subr.bf16.mxu0 0
  %2343 = vmatpush1.bf16.msra.mxu0 0
  %2344 = vmatprep.subr.bf16.mxu0 0
  %2345 = vmatpush1.bf16.msra.mxu0 0
  %2346 = vmatprep.mubr.bf16.mxu0 0
  %2347 = vmatmul.mubr.bf16.gmra.mrb[0].mxu0 %v858
  %v2348 = vpop.f32.mrb[0].mxu0
  %v2349 = vadd.f32 %v2172, %v2348
  %v2350 = vpop.f32.mrb[0].mxu0
  %v2351 = vpop.f32.mrb[0].mxu0
  %v2352 = vadd.f32 %v2175, %v2351
  %v2353 = vpop.f32.mrb[0].mxu0
  %2354 = vmatprep.mubr.bf16.mxu0 0
  %2355 = vmatmul.mubr.bf16.gmra.mrb[0].mxu0 %v867
  %v2356 = vpop.f32.mrb[0].mxu0
  %v2357 = vadd.f32 %v2180, %v2356
  %v2358 = vpop.f32.mrb[0].mxu0
  %v2359 = vpop.f32.mrb[0].mxu0
  %v2360 = vadd.f32 %v2183, %v2359
  %v2361 = vpop.f32.mrb[0].mxu0
  %2362 = vmatprep.mubr.bf16.mxu0 0
  %2363 = vmatmul.mubr.bf16.gmra.mrb[0].mxu0 %v876
  %v2364 = vpop.f32.mrb[0].mxu0
  %v2365 = vadd.f32 %v2188, %v2364
  %v2366 = vpop.f32.mrb[0].mxu0
  %v2367 = vpop.f32.mrb[0].mxu0
  %v2368 = vadd.f32 %v2191, %v2367
  %v2369 = vpop.f32.mrb[0].mxu0
  %2370 = vmatprep.mubr.bf16.mxu0 0
  %2371 = vmatmul.mubr.bf16.gmra.mrb[0].mxu0 %v885
  %v2372 = vpop.f32.mrb[0].mxu0
  %v2373 = vadd.f32 %v2196, %v2372
  %v2374 = vpop.f32.mrb[0].mxu0
  %v2375 = vpop.f32.mrb[0].mxu0
  %v2376 = vadd.f32 %v2199, %v2375
  %v2377 = vpop.f32.mrb[0].mxu0
  %2378 = vmatprep.mubr.bf16.mxu0 0
  %2379 = vmatmul.mubr.bf16.gmra.mrb[0].mxu0 %v894
  %v2380 = vpop.f32.mrb[0].mxu0
  %v2381 = vadd.f32 %v2204, %v2380
  %v2382 = vpop.f32.mrb[0].mxu0
  %v2383 = vpop.f32.mrb[0].mxu0
  %v2384 = vadd.f32 %v2207, %v2383
  %v2385 = vpop.f32.mrb[0].mxu0
  %2386 = vmatprep.mubr.bf16.mxu0 0
  %2387 = vmatmul.mubr.bf16.gmra.mrb[0].mxu0 %v903
  %v2388 = vpop.f32.mrb[0].mxu0
  %v2389 = vadd.f32 %v2212, %v2388
  %v2390 = vpop.f32.mrb[0].mxu0
  %v2391 = vpop.f32.mrb[0].mxu0
  %v2392 = vadd.f32 %v2215, %v2391
  %v2393 = vpop.f32.mrb[0].mxu0
  %2394 = vmatprep.mubr.bf16.mxu0 0
  %2395 = vmatmul.mubr.bf16.gmra.mrb[0].mxu0 %v912
  %v2396 = vpop.f32.mrb[0].mxu0
  %v2397 = vadd.f32 %v2220, %v2396
  %v2398 = vpop.f32.mrb[0].mxu0
  %v2399 = vpop.f32.mrb[0].mxu0
  %v2400 = vadd.f32 %v2223, %v2399
  %v2401 = vpop.f32.mrb[0].mxu0
  %2402 = vmatprep.mubr.bf16.mxu0 0
  %2403 = vmatmul.mubr.bf16.gmra.mrb[0].mxu0 %v921
  %v2404 = vpop.f32.mrb[0].mxu0
  %v2405 = vadd.f32 %v2228, %v2404
  %v2406 = vpop.f32.mrb[0].mxu0
  %v2407 = vpop.f32.mrb[0].mxu0
  %v2408 = vadd.f32 %v2231, %v2407
  %v2409 = vpop.f32.mrb[0].mxu0
  %2410 = vmatprep.mubr.bf16.mxu0 0
  %2411 = vmatmul.mubr.bf16.gmra.mrb[0].mxu0 %v930
  %v2412 = vpop.f32.mrb[0].mxu0
  %v2413 = vadd.f32 %v2236, %v2412
  %v2414 = vpop.f32.mrb[0].mxu0
  %v2415 = vpop.f32.mrb[0].mxu0
  %v2416 = vadd.f32 %v2239, %v2415
  %v2417 = vpop.f32.mrb[0].mxu0
  %2418 = vmatprep.mubr.bf16.mxu0 0
  %2419 = vmatmul.mubr.bf16.gmra.mrb[0].mxu0 %v939
  %v2420 = vpop.f32.mrb[0].mxu0
  %v2421 = vadd.f32 %v2244, %v2420
  %v2422 = vpop.f32.mrb[0].mxu0
  %v2423 = vpop.f32.mrb[0].mxu0
  %v2424 = vadd.f32 %v2247, %v2423
  %v2425 = vpop.f32.mrb[0].mxu0
  %2426 = vmatprep.mubr.bf16.mxu0 0
  %2427 = vmatmul.mubr.bf16.gmra.mrb[0].mxu0 %v948
  %v2428 = vpop.f32.mrb[0].mxu0
  %v2429 = vadd.f32 %v2252, %v2428
  %v2430 = vpop.f32.mrb[0].mxu0
  %v2431 = vpop.f32.mrb[0].mxu0
  %v2432 = vadd.f32 %v2255, %v2431
  %v2433 = vpop.f32.mrb[0].mxu0
  %2434 = vmatprep.mubr.bf16.mxu0 0
  %2435 = vmatmul.mubr.bf16.gmra.mrb[0].mxu0 %v957
  %v2436 = vpop.f32.mrb[0].mxu0
  %v2437 = vadd.f32 %v2260, %v2436
  %v2438 = vpop.f32.mrb[0].mxu0
  %v2439 = vpop.f32.mrb[0].mxu0
  %v2440 = vadd.f32 %v2263, %v2439
  %v2441 = vpop.f32.mrb[0].mxu0
  %2442 = vmatprep.mubr.bf16.mxu0 0
  %2443 = vmatmul.mubr.bf16.gmra.mrb[0].mxu0 %v966
  %v2444 = vpop.f32.mrb[0].mxu0
  %v2445 = vadd.f32 %v2268, %v2444
  %v2446 = vpop.f32.mrb[0].mxu0
  %v2447 = vpop.f32.mrb[0].mxu0
  %v2448 = vadd.f32 %v2271, %v2447
  %v2449 = vpop.f32.mrb[0].mxu0
  %2450 = vmatprep.mubr.bf16.mxu0 0
  %2451 = vmatmul.mubr.bf16.gmra.mrb[0].mxu0 %v975
  %v2452 = vpop.f32.mrb[0].mxu0
  %v2453 = vadd.f32 %v2276, %v2452
  %v2454 = vpop.f32.mrb[0].mxu0
  %v2455 = vpop.f32.mrb[0].mxu0
  %v2456 = vadd.f32 %v2279, %v2455
  %v2457 = vpop.f32.mrb[0].mxu0
  %2458 = vmatprep.mubr.bf16.mxu0 0
  %2459 = vmatmul.mubr.bf16.gmra.mrb[0].mxu0 %v984
  %v2460 = vpop.f32.mrb[0].mxu0
  %v2461 = vadd.f32 %v2284, %v2460
  %v2462 = vpop.f32.mrb[0].mxu0
  %v2463 = vpop.f32.mrb[0].mxu0
  %v2464 = vadd.f32 %v2287, %v2463
  %v2465 = vpop.f32.mrb[0].mxu0
  %2466 = vmatprep.mubr.bf16.mxu0 0
  %2467 = vmatmul.mubr.bf16.gmra.mrb[0].mxu0 %v993
  %v2468 = vpop.f32.mrb[0].mxu0
  %v2469 = vadd.f32 %v2292, %v2468
  %v2470 = vpop.f32.mrb[0].mxu0
  %v2471 = vpop.f32.mrb[0].mxu0
  %v2472 = vadd.f32 %v2295, %v2471
  %v2473 = vpop.f32.mrb[0].mxu0
  %2474 = vmatprep.mubr.bf16.mxu0 0
  %2475 = vmatmul.mubr.bf16.gmra.mrb[0].mxu0 %v1002
  %v2476 = vpop.f32.mrb[0].mxu0
  %v2477 = vadd.f32 %v2300, %v2476
  %v2478 = vpop.f32.mrb[0].mxu0
  %v2479 = vpop.f32.mrb[0].mxu0
  %v2480 = vadd.f32 %v2303, %v2479
  %v2481 = vpop.f32.mrb[0].mxu0
  %2482 = vmatprep.mubr.bf16.mxu0 0
  %2483 = vmatmul.mubr.bf16.gmra.mrb[0].mxu0 %v1011
  %v2484 = vpop.f32.mrb[0].mxu0
  %v2485 = vadd.f32 %v2308, %v2484
  %v2486 = vpop.f32.mrb[0].mxu0
  %v2487 = vpop.f32.mrb[0].mxu0
  %v2488 = vadd.f32 %v2311, %v2487
  %v2489 = vpop.f32.mrb[0].mxu0
  %2490 = vdwg.mxu0
  %v2491 = vmax.f32 %v2349, 0.0
  %v2492 = vmax.f32 %v2352, 0.0
  %v2493 = vmax.f32 %v2357, 0.0
  %v2494 = vmax.f32 %v2360, 0.0
  %v2495 = vmax.f32 %v2365, 0.0
  %v2496 = vmax.f32 %v2368, 0.0
  %v2497 = vmax.f32 %v2373, 0.0
  %v2498 = vmax.f32 %v2376, 0.0
  %v2499 = vmax.f32 %v2381, 0.0
  %v2500 = vmax.f32 %v2384, 0.0
  %v2501 = vmax.f32 %v2389, 0.0
  %v2502 = vmax.f32 %v2392, 0.0
  %v2503 = vmax.f32 %v2397, 0.0
  %v2504 = vmax.f32 %v2400, 0.0
  %v2505 = vmax.f32 %v2405, 0.0
  %v2506 = vmax.f32 %v2408, 0.0
  %v2507 = vmax.f32 %v2413, 0.0
  %v2508 = vmax.f32 %v2416, 0.0
  %v2509 = vmax.f32 %v2421, 0.0
  %v2510 = vmax.f32 %v2424, 0.0
  %v2511 = vmax.f32 %v2429, 0.0
  %v2512 = vmax.f32 %v2432, 0.0
  %v2513 = vmax.f32 %v2437, 0.0
  %v2514 = vmax.f32 %v2440, 0.0
  %v2515 = vmax.f32 %v2445, 0.0
  %v2516 = vmax.f32 %v2448, 0.0
  %v2517 = vmax.f32 %v2453, 0.0
  %v2518 = vmax.f32 %v2456, 0.0
  %v2519 = vmax.f32 %v2461, 0.0
  %v2520 = vmax.f32 %v2464, 0.0
  %v2521 = vmax.f32 %v2469, 0.0
  %v2522 = vmax.f32 %v2472, 0.0
  %v2523 = vmax.f32 %v2477, 0.0
  %v2524 = vmax.f32 %v2480, 0.0
  %v2525 = vmax.f32 %v2485, 0.0
  %v2526 = vmax.f32 %v2488, 0.0
  %v2527 = vpack.c.bf16 %v2492, %v2491
  %v2528 = vpack.c.bf16 %v2494, %v2493
  %v2529 = vpack.c.bf16 %v2496, %v2495
  %v2530 = vpack.c.bf16 %v2498, %v2497
  %v2531 = vpack.c.bf16 %v2500, %v2499
  %v2532 = vpack.c.bf16 %v2502, %v2501
  %v2533 = vpack.c.bf16 %v2504, %v2503
  %v2534 = vpack.c.bf16 %v2506, %v2505
  %v2535 = vpack.c.bf16 %v2508, %v2507
  %v2536 = vpack.c.bf16 %v2510, %v2509
  %v2537 = vpack.c.bf16 %v2512, %v2511
  %v2538 = vpack.c.bf16 %v2514, %v2513
  %v2539 = vpack.c.bf16 %v2516, %v2515
  %v2540 = vpack.c.bf16 %v2518, %v2517
  %v2541 = vpack.c.bf16 %v2520, %v2519
  %v2542 = vpack.c.bf16 %v2522, %v2521
  %v2543 = vpack.c.bf16 %v2524, %v2523
  %v2544 = vpack.c.bf16 %v2526, %v2525
  %v2563 = vunpack.c.l.b16 %v2527
  %v2564 = vunpack.c.h.b16 %v2527
  %v2565 = vunpack.c.l.b16 %v2528
  %v2566 = vunpack.c.h.b16 %v2528
  %v2567 = vunpack.c.l.b16 %v2529
  %v2568 = vunpack.c.h.b16 %v2529
  %v2569 = vunpack.c.l.b16 %v2530
  %v2570 = vunpack.c.h.b16 %v2530
  %v2571 = vunpack.c.l.b16 %v2531
  %v2572 = vunpack.c.h.b16 %v2531
  %v2573 = vunpack.c.l.b16 %v2532
  %v2574 = vunpack.c.h.b16 %v2532
  %v2575 = vunpack.c.l.b16 %v2533
  %v2576 = vunpack.c.h.b16 %v2533
  %v2577 = vunpack.c.l.b16 %v2534
  %v2578 = vunpack.c.h.b16 %v2534
  %v2579 = vunpack.c.l.b16 %v2535
  %v2580 = vunpack.c.h.b16 %v2535
  %v2581 = vunpack.c.l.b16 %v2536
  %v2582 = vunpack.c.h.b16 %v2536
  %v2583 = vunpack.c.l.b16 %v2537
  %v2584 = vunpack.c.h.b16 %v2537
  %v2585 = vunpack.c.l.b16 %v2538
  %v2586 = vunpack.c.h.b16 %v2538
  %v2587 = vunpack.c.l.b16 %v2539
  %v2588 = vunpack.c.h.b16 %v2539
  %v2589 = vunpack.c.l.b16 %v2540
  %v2590 = vunpack.c.h.b16 %v2540
  %v2591 = vunpack.c.l.b16 %v2541
  %v2592 = vunpack.c.h.b16 %v2541
  %v2593 = vunpack.c.l.b16 %v2542
  %v2594 = vunpack.c.h.b16 %v2542
  %v2595 = vunpack.c.l.b16 %v2543
  %v2596 = vunpack.c.h.b16 %v2543
  %v2597 = vunpack.c.l.b16 %v2544
  %v2598 = vunpack.c.h.b16 %v2544
  %v2599 = vpack.c.b16 %v2563, %v2563
  %v2600 = vpack.c.b16 %v2564, %v2564
  %v2601 = vpack.c.b16 %v2565, %v2565
  %v2602 = vpack.c.b16 %v2566, %v2566
  %v2603 = vpack.c.b16 %v2567, %v2567
  %v2604 = vpack.c.b16 %v2568, %v2568
  %v2605 = vpack.c.b16 %v2569, %v2569
  %v2606 = vpack.c.b16 %v2570, %v2570
  %v2607 = vpack.c.b16 %v2571, %v2571
  %v2608 = vpack.c.b16 %v2572, %v2572
  %v2609 = vpack.c.b16 %v2573, %v2573
  %v2610 = vpack.c.b16 %v2574, %v2574
  %v2611 = vpack.c.b16 %v2575, %v2575
  %v2612 = vpack.c.b16 %v2576, %v2576
  %v2613 = vpack.c.b16 %v2577, %v2577
  %v2614 = vpack.c.b16 %v2578, %v2578
  %v2615 = vpack.c.b16 %v2579, %v2579
  %v2616 = vpack.c.b16 %v2580, %v2580
  %v2617 = vpack.c.b16 %v2581, %v2581
  %v2618 = vpack.c.b16 %v2582, %v2582
  %v2619 = vpack.c.b16 %v2583, %v2583
  %v2620 = vpack.c.b16 %v2584, %v2584
  %v2621 = vpack.c.b16 %v2585, %v2585
  %v2622 = vpack.c.b16 %v2586, %v2586
  %v2623 = vpack.c.b16 %v2587, %v2587
  %v2624 = vpack.c.b16 %v2588, %v2588
  %v2625 = vpack.c.b16 %v2589, %v2589
  %v2626 = vpack.c.b16 %v2590, %v2590
  %v2627 = vpack.c.b16 %v2591, %v2591
  %v2628 = vpack.c.b16 %v2592, %v2592
  %v2629 = vpack.c.b16 %v2593, %v2593
  %v2630 = vpack.c.b16 %v2594, %v2594
  %v2631 = vpack.c.b16 %v2595, %v2595
  %v2632 = vpack.c.b16 %v2596, %v2596
  %v2633 = vpack.c.b16 %v2597, %v2597
  %v2634 = vpack.c.b16 %v2598, %v2598
  %2671 = vst [vmem:[%s3] sm:$0xf] %v2599
  %2672 = vst [vmem:[%s3 + $0x4] sm:$0xf] %v2600
  %2673 = vst [vmem:[%s3 + $0x8] sm:$0xf] %v2601
  %2674 = vst [vmem:[%s3 + $0xc] sm:$0xf] %v2602
  %2675 = vst [vmem:[%s3 + $0x10] sm:$0xf] %v2603
  %2676 = vst [vmem:[%s3 + $0x14] sm:$0xf] %v2604
  %2677 = vst [vmem:[%s3 + $0x18] sm:$0xf] %v2605
  %2678 = vst [vmem:[%s3 + $0x1c] sm:$0xf] %v2606
  %2679 = vst [vmem:[%s3 + $0x20] sm:$0xf] %v2607
  %2680 = vst [vmem:[%s3 + $0x24] sm:$0xf] %v2608
  %2681 = vst [vmem:[%s3 + $0x28] sm:$0xf] %v2609
  %2682 = vst [vmem:[%s3 + $0x2c] sm:$0xf] %v2610
  %2683 = vst [vmem:[%s3 + $0x30] sm:$0xf] %v2611
  %2684 = vst [vmem:[%s3 + $0x34] sm:$0xf] %v2612
  %2685 = vst [vmem:[%s3 + $0x38] sm:$0xf] %v2613
  %2686 = vst [vmem:[%s3 + $0x3c] sm:$0xf] %v2614
  %2687 = vst [vmem:[%s3 + $0x40] sm:$0xf] %v2615
  %2688 = vst [vmem:[%s3 + $0x44] sm:$0xf] %v2616
  %2689 = vst [vmem:[%s3 + $0x48] sm:$0xf] %v2617
  %2690 = vst [vmem:[%s3 + $0x4c] sm:$0xf] %v2618
  %2691 = vst [vmem:[%s3 + $0x50] sm:$0xf] %v2619
  %2692 = vst [vmem:[%s3 + $0x54] sm:$0xf] %v2620
  %2693 = vst [vmem:[%s3 + $0x58] sm:$0xf] %v2621
  %2694 = vst [vmem:[%s3 + $0x5c] sm:$0xf] %v2622
  %2695 = vst [vmem:[%s3 + $0x60] sm:$0xf] %v2623
  %2696 = vst [vmem:[%s3 + $0x64] sm:$0xf] %v2624
  %2697 = vst [vmem:[%s3 + $0x68] sm:$0xf] %v2625
  %2698 = vst [vmem:[%s3 + $0x6c] sm:$0xf] %v2626
  %2699 = vst [vmem:[%s3 + $0x70] sm:$0xf] %v2627
  %2700 = vst [vmem:[%s3 + $0x74] sm:$0xf] %v2628
  %2701 = vst [vmem:[%s3 + $0x78] sm:$0xf] %v2629
  %2702 = vst [vmem:[%s3 + $0x7c] sm:$0xf] %v2630
  %2703 = vst [vmem:[%s3 + $0x80] sm:$0xf] %v2631
  %2704 = vst [vmem:[%s3 + $0x84] sm:$0xf] %v2632
  %2705 = vst [vmem:[%s3 + $0x88] sm:$0xf] %v2633
  %2706 = vst [vmem:[%s3 + $0x8c] sm:$0xf] %v2634
  // Predicated region
  $region14: #{qnetwork_forward.5} parent=0 // pred_check
    _
  $region15: #{qnetwork_forward.5} parent=0 // pred_check_branch
    %2708 = sbr.rel (0) target = $region17
  $region16: #{qnetwork_forward.5} parent=0 // pred_region
    _
  $region17: #{qnetwork_forward.5} parent=0 // pred_fallthru
    _
  // Predicated region
  $region18: #{qnetwork_forward.5} parent=0 // pred_check
    _
  $region19: #{qnetwork_forward.5} parent=0 // pred_check_branch
    %2710 = sbr.rel (0) target = $region21
  $region20: #{qnetwork_forward.5} parent=0 // pred_region
    _
  $region21: #{qnetwork_forward.5} parent=0 // pred_fallthru
    _

// kernel: qnetwork_forward.6
$region0: #{qnetwork_forward.6}
  #allocation0 [shape = 'u32[]', space=smem, size = 0x4, offset = 0x4, fixed_abs, tag = 'smem constant byte address 0x4 - core index']
  #allocation1 [shape = 'u32[144,128]{1,0:T(1,128)}', space=vmem, size = 0x12000, scoped, tag = 'internal scratch']
  %s0 = inlined_call_operand.vmem [shape: bf16[200,1152], index: 0, kind: input, shape index: {}]
  %s1 = inlined_call_operand.vmem [shape: bf16[1152,128], index: 1, kind: input, shape index: {}]
  %s2 = inlined_call_operand.vmem [shape: f32[1,128], index: 2, kind: input, shape index: {}]
  %s3 = inlined_call_operand.vmem [shape: bf16[200,128], index: 3, kind: output, shape index: {}]
  %s4 = sld [smem:[#allocation0]]
  $region22: #{qnetwork_forward.6} parent=0
    _
  %s6 = ssub.s32 1, %s4
  %s7 = scalar_select 0, %s6, %s4
  // Predicated region
  $region2: #{qnetwork_forward.6} parent=0 // pred_check
    _
  $region3: #{qnetwork_forward.6} parent=0 // pred_check_branch
    %9 = sbr.rel (0) target = $region5
  $region4: #{qnetwork_forward.6} parent=0 // pred_region
    _
  $region5: #{qnetwork_forward.6} parent=0 // pred_fallthru
    _
  // Predicated region
  $region6: #{qnetwork_forward.6} parent=0 // pred_check
    _
  $region7: #{qnetwork_forward.6} parent=0 // pred_check_branch
    %11 = sbr.rel (0) target = $region9
  $region8: #{qnetwork_forward.6} parent=0 // pred_region
    _
  $region9: #{qnetwork_forward.6} parent=0 // pred_fallthru
    _
  // Predicated region
  $region10: #{qnetwork_forward.6} parent=0 // pred_check
    _
  $region11: #{qnetwork_forward.6} parent=0 // pred_check_branch
    %13 = sbr.rel (0) target = $region13
  $region12: #{qnetwork_forward.6} parent=0 // pred_region
    _
  $region13: #{qnetwork_forward.6} parent=0 // pred_fallthru
    _
  %v15 = vld [vmem:[%s0] sm:$0xff]
  %v16 = vld [vmem:[%s0 + $0x8] sm:$0xff]
  %v17 = vld [vmem:[%s0 + $0x10] sm:$0xff]
  %v18 = vld [vmem:[%s0 + $0x18] sm:$0xff]
  %v19 = vld [vmem:[%s0 + $0x20] sm:$0xf]
  %v20 = vld [vmem:[%s0 + $0x24] sm:$0xff]
  %v21 = vld [vmem:[%s0 + $0x2c] sm:$0xff]
  %v22 = vld [vmem:[%s0 + $0x34] sm:$0xff]
  %v23 = vld [vmem:[%s0 + $0x3c] sm:$0xff]
  %v24 = vld [vmem:[%s0 + $0x44] sm:$0xf]
  %v25 = vld [vmem:[%s0 + $0x48] sm:$0xff]
  %v26 = vld [vmem:[%s0 + $0x50] sm:$0xff]
  %v27 = vld [vmem:[%s0 + $0x58] sm:$0xff]
  %v28 = vld [vmem:[%s0 + $0x60] sm:$0xff]
  %v29 = vld [vmem:[%s0 + $0x68] sm:$0xf]
  %v30 = vld [vmem:[%s0 + $0x6c] sm:$0xff]
  %v31 = vld [vmem:[%s0 + $0x74] sm:$0xff]
  %v32 = vld [vmem:[%s0 + $0x7c] sm:$0xff]
  %v33 = vld [vmem:[%s0 + $0x84] sm:$0xff]
  %v34 = vld [vmem:[%s0 + $0x8c] sm:$0xf]
  %v35 = vld [vmem:[%s0 + $0x90] sm:$0xff]
  %v36 = vld [vmem:[%s0 + $0x98] sm:$0xff]
  %v37 = vld [vmem:[%s0 + $0xa0] sm:$0xff]
  %v38 = vld [vmem:[%s0 + $0xa8] sm:$0xff]
  %v39 = vld [vmem:[%s0 + $0xb0] sm:$0xf]
  %v40 = vld [vmem:[%s0 + $0xb4] sm:$0xff]
  %v41 = vld [vmem:[%s0 + $0xbc] sm:$0xff]
  %v42 = vld [vmem:[%s0 + $0xc4] sm:$0xff]
  %v43 = vld [vmem:[%s0 + $0xcc] sm:$0xff]
  %v44 = vld [vmem:[%s0 + $0xd4] sm:$0xf]
  %v45 = vld [vmem:[%s0 + $0xd8] sm:$0xff]
  %v46 = vld [vmem:[%s0 + $0xe0] sm:$0xff]
  %v47 = vld [vmem:[%s0 + $0xe8] sm:$0xff]
  %v48 = vld [vmem:[%s0 + $0xf0] sm:$0xff]
  %v49 = vld [vmem:[%s0 + $0xf8] sm:$0xf]
  %v50 = vld [vmem:[%s0 + $0xfc] sm:$0xff]
  %v51 = vld [vmem:[%s0 + $0x104] sm:$0xff]
  %v52 = vld [vmem:[%s0 + $0x10c] sm:$0xff]
  %v53 = vld [vmem:[%s0 + $0x114] sm:$0xff]
  %v54 = vld [vmem:[%s0 + $0x11c] sm:$0xf]
  %v55 = vld [vmem:[%s0 + $0x120] sm:$0xff]
  %v56 = vld [vmem:[%s0 + $0x128] sm:$0xff]
  %v57 = vld [vmem:[%s0 + $0x130] sm:$0xff]
  %v58 = vld [vmem:[%s0 + $0x138] sm:$0xff]
  %v59 = vld [vmem:[%s0 + $0x140] sm:$0xf]
  %v60 = vld [vmem:[%s0 + $0x144] sm:$0xff]
  %v61 = vld [vmem:[%s0 + $0x14c] sm:$0xff]
  %v62 = vld [vmem:[%s0 + $0x154] sm:$0xff]
  %v63 = vld [vmem:[%s0 + $0x15c] sm:$0xff]
  %v64 = vld [vmem:[%s0 + $0x164] sm:$0xf]
  %v65 = vld [vmem:[%s0 + $0x168] sm:$0xff]
  %v66 = vld [vmem:[%s0 + $0x170] sm:$0xff]
  %v67 = vld [vmem:[%s0 + $0x178] sm:$0xff]
  %v68 = vld [vmem:[%s0 + $0x180] sm:$0xff]
  %v69 = vld [vmem:[%s0 + $0x188] sm:$0xf]
  %v70 = vld [vmem:[%s0 + $0x18c] sm:$0xff]
  %v71 = vld [vmem:[%s0 + $0x194] sm:$0xff]
  %v72 = vld [vmem:[%s0 + $0x19c] sm:$0xff]
  %v73 = vld [vmem:[%s0 + $0x1a4] sm:$0xff]
  %v74 = vld [vmem:[%s0 + $0x1ac] sm:$0xf]
  %v75 = vld [vmem:[%s0 + $0x1b0] sm:$0xff]
  %v76 = vld [vmem:[%s0 + $0x1b8] sm:$0xff]
  %v77 = vld [vmem:[%s0 + $0x1c0] sm:$0xff]
  %v78 = vld [vmem:[%s0 + $0x1c8] sm:$0xff]
  %v79 = vld [vmem:[%s0 + $0x1d0] sm:$0xf]
  %v80 = vld [vmem:[%s0 + $0x1d4] sm:$0xff]
  %v81 = vld [vmem:[%s0 + $0x1dc] sm:$0xff]
  %v82 = vld [vmem:[%s0 + $0x1e4] sm:$0xff]
  %v83 = vld [vmem:[%s0 + $0x1ec] sm:$0xff]
  %v84 = vld [vmem:[%s0 + $0x1f4] sm:$0xf]
  %v85 = vld [vmem:[%s0 + $0x1f8] sm:$0xff]
  %v86 = vld [vmem:[%s0 + $0x200] sm:$0xff]
  %v87 = vld [vmem:[%s0 + $0x208] sm:$0xff]
  %v88 = vld [vmem:[%s0 + $0x210] sm:$0xff]
  %v89 = vld [vmem:[%s0 + $0x218] sm:$0xf]
  %v90 = vld [vmem:[%s0 + $0x21c] sm:$0xff]
  %v91 = vld [vmem:[%s0 + $0x224] sm:$0xff]
  %v92 = vld [vmem:[%s0 + $0x22c] sm:$0xff]
  %v93 = vld [vmem:[%s0 + $0x234] sm:$0xff]
  %v94 = vld [vmem:[%s0 + $0x23c] sm:$0xf]
  %v95 = vld [vmem:[%s0 + $0x240] sm:$0xff]
  %v96 = vld [vmem:[%s0 + $0x248] sm:$0xff]
  %v97 = vld [vmem:[%s0 + $0x250] sm:$0xff]
  %v98 = vld [vmem:[%s0 + $0x258] sm:$0xff]
  %v99 = vld [vmem:[%s0 + $0x260] sm:$0xf]
  %v100 = vld [vmem:[%s0 + $0x264] sm:$0xff]
  %v101 = vld [vmem:[%s0 + $0x26c] sm:$0xff]
  %v102 = vld [vmem:[%s0 + $0x274] sm:$0xff]
  %v103 = vld [vmem:[%s0 + $0x27c] sm:$0xff]
  %v104 = vld [vmem:[%s0 + $0x284] sm:$0xf]
  %v105 = vld [vmem:[%s0 + $0x288] sm:$0xff]
  %v106 = vld [vmem:[%s0 + $0x290] sm:$0xff]
  %v107 = vld [vmem:[%s0 + $0x298] sm:$0xff]
  %v108 = vld [vmem:[%s0 + $0x2a0] sm:$0xff]
  %v109 = vld [vmem:[%s0 + $0x2a8] sm:$0xf]
  %v110 = vld [vmem:[%s0 + $0x2ac] sm:$0xff]
  %v111 = vld [vmem:[%s0 + $0x2b4] sm:$0xff]
  %v112 = vld [vmem:[%s0 + $0x2bc] sm:$0xff]
  %v113 = vld [vmem:[%s0 + $0x2c4] sm:$0xff]
  %v114 = vld [vmem:[%s0 + $0x2cc] sm:$0xf]
  %v115 = vld [vmem:[%s0 + $0x2d0] sm:$0xff]
  %v116 = vld [vmem:[%s0 + $0x2d8] sm:$0xff]
  %v117 = vld [vmem:[%s0 + $0x2e0] sm:$0xff]
  %v118 = vld [vmem:[%s0 + $0x2e8] sm:$0xff]
  %v119 = vld [vmem:[%s0 + $0x2f0] sm:$0xf]
  %v120 = vld [vmem:[%s0 + $0x2f4] sm:$0xff]
  %v121 = vld [vmem:[%s0 + $0x2fc] sm:$0xff]
  %v122 = vld [vmem:[%s0 + $0x304] sm:$0xff]
  %v123 = vld [vmem:[%s0 + $0x30c] sm:$0xff]
  %v124 = vld [vmem:[%s0 + $0x314] sm:$0xf]
  %v125 = vld [vmem:[%s0 + $0x318] sm:$0xff]
  %v126 = vld [vmem:[%s0 + $0x320] sm:$0xff]
  %v127 = vld [vmem:[%s0 + $0x328] sm:$0xff]
  %v128 = vld [vmem:[%s0 + $0x330] sm:$0xff]
  %v129 = vld [vmem:[%s0 + $0x338] sm:$0xf]
  %v130 = vld [vmem:[%s0 + $0x33c] sm:$0xff]
  %v131 = vld [vmem:[%s0 + $0x344] sm:$0xff]
  %v132 = vld [vmem:[%s0 + $0x34c] sm:$0xff]
  %v133 = vld [vmem:[%s0 + $0x354] sm:$0xff]
  %v134 = vld [vmem:[%s0 + $0x35c] sm:$0xf]
  %v135 = vld [vmem:[%s0 + $0x360] sm:$0xff]
  %v136 = vld [vmem:[%s0 + $0x368] sm:$0xff]
  %v137 = vld [vmem:[%s0 + $0x370] sm:$0xff]
  %v138 = vld [vmem:[%s0 + $0x378] sm:$0xff]
  %v139 = vld [vmem:[%s0 + $0x380] sm:$0xf]
  %v140 = vld [vmem:[%s1] sm:$0xf]
  %v141 = vld [vmem:[%s1 + $0x4] sm:$0xf]
  %v142 = vld [vmem:[%s1 + $0x8] sm:$0xf]
  %v143 = vld [vmem:[%s1 + $0xc] sm:$0xf]
  %v144 = vld [vmem:[%s1 + $0x10] sm:$0xf]
  %v145 = vld [vmem:[%s1 + $0x14] sm:$0xf]
  %v146 = vld [vmem:[%s1 + $0x18] sm:$0xf]
  %v147 = vld [vmem:[%s1 + $0x1c] sm:$0xf]
  %v148 = vld [vmem:[%s1 + $0x20] sm:$0xf]
  %v149 = vld [vmem:[%s1 + $0x24] sm:$0xf]
  %v150 = vld [vmem:[%s1 + $0x28] sm:$0xf]
  %v151 = vld [vmem:[%s1 + $0x2c] sm:$0xf]
  %v152 = vld [vmem:[%s1 + $0x30] sm:$0xf]
  %v153 = vld [vmem:[%s1 + $0x34] sm:$0xf]
  %v154 = vld [vmem:[%s1 + $0x38] sm:$0xf]
  %v155 = vld [vmem:[%s1 + $0x3c] sm:$0xf]
  %v156 = vld [vmem:[%s1 + $0x40] sm:$0xf]
  %v157 = vld [vmem:[%s1 + $0x44] sm:$0xf]
  %v158 = vld [vmem:[%s1 + $0x48] sm:$0xf]
  %v159 = vld [vmem:[%s1 + $0x4c] sm:$0xf]
  %v160 = vld [vmem:[%s1 + $0x50] sm:$0xf]
  %v161 = vld [vmem:[%s1 + $0x54] sm:$0xf]
  %v162 = vld [vmem:[%s1 + $0x58] sm:$0xf]
  %v163 = vld [vmem:[%s1 + $0x5c] sm:$0xf]
  %v164 = vld [vmem:[%s1 + $0x60] sm:$0xf]
  %v165 = vld [vmem:[%s1 + $0x64] sm:$0xf]
  %v166 = vld [vmem:[%s1 + $0x68] sm:$0xf]
  %v167 = vld [vmem:[%s1 + $0x6c] sm:$0xf]
  %v168 = vld [vmem:[%s1 + $0x70] sm:$0xf]
  %v169 = vld [vmem:[%s1 + $0x74] sm:$0xf]
  %v170 = vld [vmem:[%s1 + $0x78] sm:$0xf]
  %v171 = vld [vmem:[%s1 + $0x7c] sm:$0xf]
  %v172 = vld [vmem:[%s1 + $0x80] sm:$0xf]
  %v173 = vld [vmem:[%s1 + $0x84] sm:$0xf]
  %v174 = vld [vmem:[%s1 + $0x88] sm:$0xf]
  %v175 = vld [vmem:[%s1 + $0x8c] sm:$0xf]
  %v176 = vld [vmem:[%s1 + $0x90] sm:$0xf]
  %v177 = vld [vmem:[%s1 + $0x94] sm:$0xf]
  %v178 = vld [vmem:[%s1 + $0x98] sm:$0xf]
  %v179 = vld [vmem:[%s1 + $0x9c] sm:$0xf]
  %v180 = vld [vmem:[%s1 + $0xa0] sm:$0xf]
  %v181 = vld [vmem:[%s1 + $0xa4] sm:$0xf]
  %v182 = vld [vmem:[%s1 + $0xa8] sm:$0xf]
  %v183 = vld [vmem:[%s1 + $0xac] sm:$0xf]
  %v184 = vld [vmem:[%s1 + $0xb0] sm:$0xf]
  %v185 = vld [vmem:[%s1 + $0xb4] sm:$0xf]
  %v186 = vld [vmem:[%s1 + $0xb8] sm:$0xf]
  %v187 = vld [vmem:[%s1 + $0xbc] sm:$0xf]
  %v188 = vld [vmem:[%s1 + $0xc0] sm:$0xf]
  %v189 = vld [vmem:[%s1 + $0xc4] sm:$0xf]
  %v190 = vld [vmem:[%s1 + $0xc8] sm:$0xf]
  %v191 = vld [vmem:[%s1 + $0xcc] sm:$0xf]
  %v192 = vld [vmem:[%s1 + $0xd0] sm:$0xf]
  %v193 = vld [vmem:[%s1 + $0xd4] sm:$0xf]
  %v194 = vld [vmem:[%s1 + $0xd8] sm:$0xf]
  %v195 = vld [vmem:[%s1 + $0xdc] sm:$0xf]
  %v196 = vld [vmem:[%s1 + $0xe0] sm:$0xf]
  %v197 = vld [vmem:[%s1 + $0xe4] sm:$0xf]
  %v198 = vld [vmem:[%s1 + $0xe8] sm:$0xf]
  %v199 = vld [vmem:[%s1 + $0xec] sm:$0xf]
  %v200 = vld [vmem:[%s1 + $0xf0] sm:$0xf]
  %v201 = vld [vmem:[%s1 + $0xf4] sm:$0xf]
  %v202 = vld [vmem:[%s1 + $0xf8] sm:$0xf]
  %v203 = vld [vmem:[%s1 + $0xfc] sm:$0xf]
  %v204 = vld [vmem:[%s1 + $0x100] sm:$0xf]
  %v205 = vld [vmem:[%s1 + $0x104] sm:$0xf]
  %v206 = vld [vmem:[%s1 + $0x108] sm:$0xf]
  %v207 = vld [vmem:[%s1 + $0x10c] sm:$0xf]
  %v208 = vld [vmem:[%s1 + $0x110] sm:$0xf]
  %v209 = vld [vmem:[%s1 + $0x114] sm:$0xf]
  %v210 = vld [vmem:[%s1 + $0x118] sm:$0xf]
  %v211 = vld [vmem:[%s1 + $0x11c] sm:$0xf]
  %v212 = vld [vmem:[%s1 + $0x120] sm:$0xf]
  %v213 = vld [vmem:[%s1 + $0x124] sm:$0xf]
  %v214 = vld [vmem:[%s1 + $0x128] sm:$0xf]
  %v215 = vld [vmem:[%s1 + $0x12c] sm:$0xf]
  %v216 = vld [vmem:[%s1 + $0x130] sm:$0xf]
  %v217 = vld [vmem:[%s1 + $0x134] sm:$0xf]
  %v218 = vld [vmem:[%s1 + $0x138] sm:$0xf]
  %v219 = vld [vmem:[%s1 + $0x13c] sm:$0xf]
  %v220 = vld [vmem:[%s1 + $0x140] sm:$0xf]
  %v221 = vld [vmem:[%s1 + $0x144] sm:$0xf]
  %v222 = vld [vmem:[%s1 + $0x148] sm:$0xf]
  %v223 = vld [vmem:[%s1 + $0x14c] sm:$0xf]
  %v224 = vld [vmem:[%s1 + $0x150] sm:$0xf]
  %v225 = vld [vmem:[%s1 + $0x154] sm:$0xf]
  %v226 = vld [vmem:[%s1 + $0x158] sm:$0xf]
  %v227 = vld [vmem:[%s1 + $0x15c] sm:$0xf]
  %v228 = vld [vmem:[%s1 + $0x160] sm:$0xf]
  %v229 = vld [vmem:[%s1 + $0x164] sm:$0xf]
  %v230 = vld [vmem:[%s1 + $0x168] sm:$0xf]
  %v231 = vld [vmem:[%s1 + $0x16c] sm:$0xf]
  %v232 = vld [vmem:[%s1 + $0x170] sm:$0xf]
  %v233 = vld [vmem:[%s1 + $0x174] sm:$0xf]
  %v234 = vld [vmem:[%s1 + $0x178] sm:$0xf]
  %v235 = vld [vmem:[%s1 + $0x17c] sm:$0xf]
  %v236 = vld [vmem:[%s1 + $0x180] sm:$0xf]
  %v237 = vld [vmem:[%s1 + $0x184] sm:$0xf]
  %v238 = vld [vmem:[%s1 + $0x188] sm:$0xf]
  %v239 = vld [vmem:[%s1 + $0x18c] sm:$0xf]
  %v240 = vld [vmem:[%s1 + $0x190] sm:$0xf]
  %v241 = vld [vmem:[%s1 + $0x194] sm:$0xf]
  %v242 = vld [vmem:[%s1 + $0x198] sm:$0xf]
  %v243 = vld [vmem:[%s1 + $0x19c] sm:$0xf]
  %v244 = vld [vmem:[%s1 + $0x1a0] sm:$0xf]
  %v245 = vld [vmem:[%s1 + $0x1a4] sm:$0xf]
  %v246 = vld [vmem:[%s1 + $0x1a8] sm:$0xf]
  %v247 = vld [vmem:[%s1 + $0x1ac] sm:$0xf]
  %v248 = vld [vmem:[%s1 + $0x1b0] sm:$0xf]
  %v249 = vld [vmem:[%s1 + $0x1b4] sm:$0xf]
  %v250 = vld [vmem:[%s1 + $0x1b8] sm:$0xf]
  %v251 = vld [vmem:[%s1 + $0x1bc] sm:$0xf]
  %v252 = vld [vmem:[%s1 + $0x1c0] sm:$0xf]
  %v253 = vld [vmem:[%s1 + $0x1c4] sm:$0xf]
  %v254 = vld [vmem:[%s1 + $0x1c8] sm:$0xf]
  %v255 = vld [vmem:[%s1 + $0x1cc] sm:$0xf]
  %v256 = vld [vmem:[%s1 + $0x1d0] sm:$0xf]
  %v257 = vld [vmem:[%s1 + $0x1d4] sm:$0xf]
  %v258 = vld [vmem:[%s1 + $0x1d8] sm:$0xf]
  %v259 = vld [vmem:[%s1 + $0x1dc] sm:$0xf]
  %v260 = vld [vmem:[%s1 + $0x1e0] sm:$0xf]
  %v261 = vld [vmem:[%s1 + $0x1e4] sm:$0xf]
  %v262 = vld [vmem:[%s1 + $0x1e8] sm:$0xf]
  %v263 = vld [vmem:[%s1 + $0x1ec] sm:$0xf]
  %v264 = vld [vmem:[%s1 + $0x1f0] sm:$0xf]
  %v265 = vld [vmem:[%s1 + $0x1f4] sm:$0xf]
  %v266 = vld [vmem:[%s1 + $0x1f8] sm:$0xf]
  %v267 = vld [vmem:[%s1 + $0x1fc] sm:$0xf]
  %v268 = vld [vmem:[%s1 + $0x200] sm:$0xf]
  %v269 = vld [vmem:[%s1 + $0x204] sm:$0xf]
  %v270 = vld [vmem:[%s1 + $0x208] sm:$0xf]
  %v271 = vld [vmem:[%s1 + $0x20c] sm:$0xf]
  %v272 = vld [vmem:[%s1 + $0x210] sm:$0xf]
  %v273 = vld [vmem:[%s1 + $0x214] sm:$0xf]
  %v274 = vld [vmem:[%s1 + $0x218] sm:$0xf]
  %v275 = vld [vmem:[%s1 + $0x21c] sm:$0xf]
  %v276 = vld [vmem:[%s1 + $0x220] sm:$0xf]
  %v277 = vld [vmem:[%s1 + $0x224] sm:$0xf]
  %v278 = vld [vmem:[%s1 + $0x228] sm:$0xf]
  %v279 = vld [vmem:[%s1 + $0x22c] sm:$0xf]
  %v280 = vld [vmem:[%s1 + $0x230] sm:$0xf]
  %v281 = vld [vmem:[%s1 + $0x234] sm:$0xf]
  %v282 = vld [vmem:[%s1 + $0x238] sm:$0xf]
  %v283 = vld [vmem:[%s1 + $0x23c] sm:$0xf]
  %v284 = vld [vmem:[%s2] sm:$0x1]
  %v286 = vlaneseq
  %v287 = vshrl.u32 %v286, 7
  %v288 = vsub.s32 0, %v287
  %v289 = vrot.slane %v284, %v288
  %v416 = vunpack.c.l.b16 %v15
  %v417 = vunpack.c.h.b16 %v15
  %v418 = vunpack.c.l.b16 %v16
  %v419 = vunpack.c.h.b16 %v16
  %v420 = vunpack.c.l.b16 %v17
  %v421 = vunpack.c.h.b16 %v17
  %v422 = vunpack.c.l.b16 %v18
  %v423 = vunpack.c.h.b16 %v18
  %v424 = vunpack.c.l.b16 %v19
  %v425 = vunpack.c.l.b16 %v20
  %v426 = vunpack.c.h.b16 %v20
  %v427 = vunpack.c.l.b16 %v21
  %v428 = vunpack.c.h.b16 %v21
  %v429 = vunpack.c.l.b16 %v22
  %v430 = vunpack.c.h.b16 %v22
  %v431 = vunpack.c.l.b16 %v23
  %v432 = vunpack.c.h.b16 %v23
  %v433 = vunpack.c.l.b16 %v24
  %v434 = vunpack.c.l.b16 %v25
  %v435 = vunpack.c.h.b16 %v25
  %v436 = vunpack.c.l.b16 %v26
  %v437 = vunpack.c.h.b16 %v26
  %v438 = vunpack.c.l.b16 %v27
  %v439 = vunpack.c.h.b16 %v27
  %v440 = vunpack.c.l.b16 %v28
  %v441 = vunpack.c.h.b16 %v28
  %v442 = vunpack.c.l.b16 %v29
  %v443 = vunpack.c.l.b16 %v30
  %v444 = vunpack.c.h.b16 %v30
  %v445 = vunpack.c.l.b16 %v31
  %v446 = vunpack.c.h.b16 %v31
  %v447 = vunpack.c.l.b16 %v32
  %v448 = vunpack.c.h.b16 %v32
  %v449 = vunpack.c.l.b16 %v33
  %v450 = vunpack.c.h.b16 %v33
  %v451 = vunpack.c.l.b16 %v34
  %v452 = vunpack.c.l.b16 %v35
  %v453 = vunpack.c.h.b16 %v35
  %v454 = vunpack.c.l.b16 %v36
  %v455 = vunpack.c.h.b16 %v36
  %v456 = vunpack.c.l.b16 %v37
  %v457 = vunpack.c.h.b16 %v37
  %v458 = vunpack.c.l.b16 %v38
  %v459 = vunpack.c.h.b16 %v38
  %v460 = vunpack.c.l.b16 %v39
  %v461 = vunpack.c.l.b16 %v40
  %v462 = vunpack.c.h.b16 %v40
  %v463 = vunpack.c.l.b16 %v41
  %v464 = vunpack.c.h.b16 %v41
  %v465 = vunpack.c.l.b16 %v42
  %v466 = vunpack.c.h.b16 %v42
  %v467 = vunpack.c.l.b16 %v43
  %v468 = vunpack.c.h.b16 %v43
  %v469 = vunpack.c.l.b16 %v44
  %v470 = vunpack.c.l.b16 %v45
  %v471 = vunpack.c.h.b16 %v45
  %v472 = vunpack.c.l.b16 %v46
  %v473 = vunpack.c.h.b16 %v46
  %v474 = vunpack.c.l.b16 %v47
  %v475 = vunpack.c.h.b16 %v47
  %v476 = vunpack.c.l.b16 %v48
  %v477 = vunpack.c.h.b16 %v48
  %v478 = vunpack.c.l.b16 %v49
  %v479 = vunpack.c.l.b16 %v50
  %v480 = vunpack.c.h.b16 %v50
  %v481 = vunpack.c.l.b16 %v51
  %v482 = vunpack.c.h.b16 %v51
  %v483 = vunpack.c.l.b16 %v52
  %v484 = vunpack.c.h.b16 %v52
  %v485 = vunpack.c.l.b16 %v53
  %v486 = vunpack.c.h.b16 %v53
  %v487 = vunpack.c.l.b16 %v54
  %v488 = vunpack.c.l.b16 %v55
  %v489 = vunpack.c.h.b16 %v55
  %v490 = vunpack.c.l.b16 %v56
  %v491 = vunpack.c.h.b16 %v56
  %v492 = vunpack.c.l.b16 %v57
  %v493 = vunpack.c.h.b16 %v57
  %v494 = vunpack.c.l.b16 %v58
  %v495 = vunpack.c.h.b16 %v58
  %v496 = vunpack.c.l.b16 %v59
  %v497 = vunpack.c.l.b16 %v60
  %v498 = vunpack.c.h.b16 %v60
  %v499 = vunpack.c.l.b16 %v61
  %v500 = vunpack.c.h.b16 %v61
  %v501 = vunpack.c.l.b16 %v62
  %v502 = vunpack.c.h.b16 %v62
  %v503 = vunpack.c.l.b16 %v63
  %v504 = vunpack.c.h.b16 %v63
  %v505 = vunpack.c.l.b16 %v64
  %v506 = vunpack.c.l.b16 %v65
  %v507 = vunpack.c.h.b16 %v65
  %v508 = vunpack.c.l.b16 %v66
  %v509 = vunpack.c.h.b16 %v66
  %v510 = vunpack.c.l.b16 %v67
  %v511 = vunpack.c.h.b16 %v67
  %v512 = vunpack.c.l.b16 %v68
  %v513 = vunpack.c.h.b16 %v68
  %v514 = vunpack.c.l.b16 %v69
  %v515 = vunpack.c.l.b16 %v70
  %v516 = vunpack.c.h.b16 %v70
  %v517 = vunpack.c.l.b16 %v71
  %v518 = vunpack.c.h.b16 %v71
  %v519 = vunpack.c.l.b16 %v72
  %v520 = vunpack.c.h.b16 %v72
  %v521 = vunpack.c.l.b16 %v73
  %v522 = vunpack.c.h.b16 %v73
  %v523 = vunpack.c.l.b16 %v74
  %v524 = vunpack.c.l.b16 %v75
  %v525 = vunpack.c.h.b16 %v75
  %v526 = vunpack.c.l.b16 %v76
  %v527 = vunpack.c.h.b16 %v76
  %v528 = vunpack.c.l.b16 %v77
  %v529 = vunpack.c.h.b16 %v77
  %v530 = vunpack.c.l.b16 %v78
  %v531 = vunpack.c.h.b16 %v78
  %v532 = vunpack.c.l.b16 %v79
  %v533 = vunpack.c.l.b16 %v80
  %v534 = vunpack.c.h.b16 %v80
  %v535 = vunpack.c.l.b16 %v81
  %v536 = vunpack.c.h.b16 %v81
  %v537 = vunpack.c.l.b16 %v82
  %v538 = vunpack.c.h.b16 %v82
  %v539 = vunpack.c.l.b16 %v83
  %v540 = vunpack.c.h.b16 %v83
  %v541 = vunpack.c.l.b16 %v84
  %v542 = vunpack.c.l.b16 %v85
  %v543 = vunpack.c.h.b16 %v85
  %v544 = vunpack.c.l.b16 %v86
  %v545 = vunpack.c.h.b16 %v86
  %v546 = vunpack.c.l.b16 %v87
  %v547 = vunpack.c.h.b16 %v87
  %v548 = vunpack.c.l.b16 %v88
  %v549 = vunpack.c.h.b16 %v88
  %v550 = vunpack.c.l.b16 %v89
  %v551 = vunpack.c.l.b16 %v90
  %v552 = vunpack.c.h.b16 %v90
  %v553 = vunpack.c.l.b16 %v91
  %v554 = vunpack.c.h.b16 %v91
  %v555 = vunpack.c.l.b16 %v92
  %v556 = vunpack.c.h.b16 %v92
  %v557 = vunpack.c.l.b16 %v93
  %v558 = vunpack.c.h.b16 %v93
  %v559 = vunpack.c.l.b16 %v94
  %v560 = vunpack.c.l.b16 %v95
  %v561 = vunpack.c.h.b16 %v95
  %v562 = vunpack.c.l.b16 %v96
  %v563 = vunpack.c.h.b16 %v96
  %v564 = vunpack.c.l.b16 %v97
  %v565 = vunpack.c.h.b16 %v97
  %v566 = vunpack.c.l.b16 %v98
  %v567 = vunpack.c.h.b16 %v98
  %v568 = vunpack.c.l.b16 %v99
  %v569 = vunpack.c.l.b16 %v100
  %v570 = vunpack.c.h.b16 %v100
  %v571 = vunpack.c.l.b16 %v101
  %v572 = vunpack.c.h.b16 %v101
  %v573 = vunpack.c.l.b16 %v102
  %v574 = vunpack.c.h.b16 %v102
  %v575 = vunpack.c.l.b16 %v103
  %v576 = vunpack.c.h.b16 %v103
  %v577 = vunpack.c.l.b16 %v104
  %v578 = vunpack.c.l.b16 %v105
  %v579 = vunpack.c.h.b16 %v105
  %v580 = vunpack.c.l.b16 %v106
  %v581 = vunpack.c.h.b16 %v106
  %v582 = vunpack.c.l.b16 %v107
  %v583 = vunpack.c.h.b16 %v107
  %v584 = vunpack.c.l.b16 %v108
  %v585 = vunpack.c.h.b16 %v108
  %v586 = vunpack.c.l.b16 %v109
  %v587 = vunpack.c.l.b16 %v110
  %v588 = vunpack.c.h.b16 %v110
  %v589 = vunpack.c.l.b16 %v111
  %v590 = vunpack.c.h.b16 %v111
  %v591 = vunpack.c.l.b16 %v112
  %v592 = vunpack.c.h.b16 %v112
  %v593 = vunpack.c.l.b16 %v113
  %v594 = vunpack.c.h.b16 %v113
  %v595 = vunpack.c.l.b16 %v114
  %v596 = vunpack.c.l.b16 %v115
  %v597 = vunpack.c.h.b16 %v115
  %v598 = vunpack.c.l.b16 %v116
  %v599 = vunpack.c.h.b16 %v116
  %v600 = vunpack.c.l.b16 %v117
  %v601 = vunpack.c.h.b16 %v117
  %v602 = vunpack.c.l.b16 %v118
  %v603 = vunpack.c.h.b16 %v118
  %v604 = vunpack.c.l.b16 %v119
  %v605 = vunpack.c.l.b16 %v120
  %v606 = vunpack.c.h.b16 %v120
  %v607 = vunpack.c.l.b16 %v121
  %v608 = vunpack.c.h.b16 %v121
  %v609 = vunpack.c.l.b16 %v122
  %v610 = vunpack.c.h.b16 %v122
  %v611 = vunpack.c.l.b16 %v123
  %v612 = vunpack.c.h.b16 %v123
  %v613 = vunpack.c.l.b16 %v124
  %v614 = vunpack.c.l.b16 %v125
  %v615 = vunpack.c.h.b16 %v125
  %v616 = vunpack.c.l.b16 %v126
  %v617 = vunpack.c.h.b16 %v126
  %v618 = vunpack.c.l.b16 %v127
  %v619 = vunpack.c.h.b16 %v127
  %v620 = vunpack.c.l.b16 %v128
  %v621 = vunpack.c.h.b16 %v128
  %v622 = vunpack.c.l.b16 %v129
  %v623 = vunpack.c.l.b16 %v130
  %v624 = vunpack.c.h.b16 %v130
  %v625 = vunpack.c.l.b16 %v131
  %v626 = vunpack.c.h.b16 %v131
  %v627 = vunpack.c.l.b16 %v132
  %v628 = vunpack.c.h.b16 %v132
  %v629 = vunpack.c.l.b16 %v133
  %v630 = vunpack.c.h.b16 %v133
  %v631 = vunpack.c.l.b16 %v134
  %v632 = vunpack.c.l.b16 %v135
  %v633 = vunpack.c.h.b16 %v135
  %v634 = vunpack.c.l.b16 %v136
  %v635 = vunpack.c.h.b16 %v136
  %v636 = vunpack.c.l.b16 %v137
  %v637 = vunpack.c.h.b16 %v137
  %v638 = vunpack.c.l.b16 %v138
  %v639 = vunpack.c.h.b16 %v138
  %v640 = vunpack.c.l.b16 %v139
  %v641 = vpack.c.b16 %v425, %v416
  %v642 = vpack.c.b16 %v426, %v417
  %v643 = vpack.c.b16 %v427, %v418
  %v644 = vpack.c.b16 %v428, %v419
  %v645 = vpack.c.b16 %v429, %v420
  %v646 = vpack.c.b16 %v430, %v421
  %v647 = vpack.c.b16 %v431, %v422
  %v648 = vpack.c.b16 %v432, %v423
  %v649 = vpack.c.b16 %v433, %v424
  %v650 = vpack.c.b16 %v443, %v434
  %v651 = vpack.c.b16 %v444, %v435
  %v652 = vpack.c.b16 %v445, %v436
  %v653 = vpack.c.b16 %v446, %v437
  %v654 = vpack.c.b16 %v447, %v438
  %v655 = vpack.c.b16 %v448, %v439
  %v656 = vpack.c.b16 %v449, %v440
  %v657 = vpack.c.b16 %v450, %v441
  %v658 = vpack.c.b16 %v451, %v442
  %v659 = vpack.c.b16 %v461, %v452
  %v660 = vpack.c.b16 %v462, %v453
  %v661 = vpack.c.b16 %v463, %v454
  %v662 = vpack.c.b16 %v464, %v455
  %v663 = vpack.c.b16 %v465, %v456
  %v664 = vpack.c.b16 %v466, %v457
  %v665 = vpack.c.b16 %v467, %v458
  %v666 = vpack.c.b16 %v468, %v459
  %v667 = vpack.c.b16 %v469, %v460
  %v668 = vpack.c.b16 %v479, %v470
  %v669 = vpack.c.b16 %v480, %v471
  %v670 = vpack.c.b16 %v481, %v472
  %v671 = vpack.c.b16 %v482, %v473
  %v672 = vpack.c.b16 %v483, %v474
  %v673 = vpack.c.b16 %v484, %v475
  %v674 = vpack.c.b16 %v485, %v476
  %v675 = vpack.c.b16 %v486, %v477
  %v676 = vpack.c.b16 %v487, %v478
  %v677 = vpack.c.b16 %v497, %v488
  %v678 = vpack.c.b16 %v498, %v489
  %v679 = vpack.c.b16 %v499, %v490
  %v680 = vpack.c.b16 %v500, %v491
  %v681 = vpack.c.b16 %v501, %v492
  %v682 = vpack.c.b16 %v502, %v493
  %v683 = vpack.c.b16 %v503, %v494
  %v684 = vpack.c.b16 %v504, %v495
  %v685 = vpack.c.b16 %v505, %v496
  %v686 = vpack.c.b16 %v515, %v506
  %v687 = vpack.c.b16 %v516, %v507
  %v688 = vpack.c.b16 %v517, %v508
  %v689 = vpack.c.b16 %v518, %v509
  %v690 = vpack.c.b16 %v519, %v510
  %v691 = vpack.c.b16 %v520, %v511
  %v692 = vpack.c.b16 %v521, %v512
  %v693 = vpack.c.b16 %v522, %v513
  %v694 = vpack.c.b16 %v523, %v514
  %v695 = vpack.c.b16 %v533, %v524
  %v696 = vpack.c.b16 %v534, %v525
  %v697 = vpack.c.b16 %v535, %v526
  %v698 = vpack.c.b16 %v536, %v527
  %v699 = vpack.c.b16 %v537, %v528
  %v700 = vpack.c.b16 %v538, %v529
  %v701 = vpack.c.b16 %v539, %v530
  %v702 = vpack.c.b16 %v540, %v531
  %v703 = vpack.c.b16 %v541, %v532
  %v704 = vpack.c.b16 %v551, %v542
  %v705 = vpack.c.b16 %v552, %v543
  %v706 = vpack.c.b16 %v553, %v544
  %v707 = vpack.c.b16 %v554, %v545
  %v708 = vpack.c.b16 %v555, %v546
  %v709 = vpack.c.b16 %v556, %v547
  %v710 = vpack.c.b16 %v557, %v548
  %v711 = vpack.c.b16 %v558, %v549
  %v712 = vpack.c.b16 %v559, %v550
  %v713 = vpack.c.b16 %v569, %v560
  %v714 = vpack.c.b16 %v570, %v561
  %v715 = vpack.c.b16 %v571, %v562
  %v716 = vpack.c.b16 %v572, %v563
  %v717 = vpack.c.b16 %v573, %v564
  %v718 = vpack.c.b16 %v574, %v565
  %v719 = vpack.c.b16 %v575, %v566
  %v720 = vpack.c.b16 %v576, %v567
  %v721 = vpack.c.b16 %v577, %v568
  %v722 = vpack.c.b16 %v587, %v578
  %v723 = vpack.c.b16 %v588, %v579
  %v724 = vpack.c.b16 %v589, %v580
  %v725 = vpack.c.b16 %v590, %v581
  %v726 = vpack.c.b16 %v591, %v582
  %v727 = vpack.c.b16 %v592, %v583
  %v728 = vpack.c.b16 %v593, %v584
  %v729 = vpack.c.b16 %v594, %v585
  %v730 = vpack.c.b16 %v595, %v586
  %v731 = vpack.c.b16 %v605, %v596
  %v732 = vpack.c.b16 %v606, %v597
  %v733 = vpack.c.b16 %v607, %v598
  %v734 = vpack.c.b16 %v608, %v599
  %v735 = vpack.c.b16 %v609, %v600
  %v736 = vpack.c.b16 %v610, %v601
  %v737 = vpack.c.b16 %v611, %v602
  %v738 = vpack.c.b16 %v612, %v603
  %v739 = vpack.c.b16 %v613, %v604
  %v740 = vpack.c.b16 %v623, %v614
  %v741 = vpack.c.b16 %v624, %v615
  %v742 = vpack.c.b16 %v625, %v616
  %v743 = vpack.c.b16 %v626, %v617
  %v744 = vpack.c.b16 %v627, %v618
  %v745 = vpack.c.b16 %v628, %v619
  %v746 = vpack.c.b16 %v629, %v620
  %v747 = vpack.c.b16 %v630, %v621
  %v748 = vpack.c.b16 %v631, %v622
  %v749 = vpack.c.b16 %v632, %v632
  %v750 = vpack.c.b16 %v633, %v633
  %v751 = vpack.c.b16 %v634, %v634
  %v752 = vpack.c.b16 %v635, %v635
  %v753 = vpack.c.b16 %v636, %v636
  %v754 = vpack.c.b16 %v637, %v637
  %v755 = vpack.c.b16 %v638, %v638
  %v756 = vpack.c.b16 %v639, %v639
  %v757 = vpack.c.b16 %v640, %v640
  %v1019 = vunpack.c.l.b16 %v140
  %v1020 = vunpack.c.l.b16 %v141
  %v1021 = vunpack.c.l.b16 %v142
  %v1022 = vunpack.c.l.b16 %v143
  %v1023 = vunpack.c.l.b16 %v144
  %v1024 = vunpack.c.l.b16 %v145
  %v1025 = vunpack.c.l.b16 %v146
  %v1026 = vunpack.c.l.b16 %v147
  %v1027 = vunpack.c.l.b16 %v148
  %v1028 = vunpack.c.l.b16 %v149
  %v1029 = vunpack.c.l.b16 %v150
  %v1030 = vunpack.c.l.b16 %v151
  %v1031 = vunpack.c.l.b16 %v152
  %v1032 = vunpack.c.l.b16 %v153
  %v1033 = vunpack.c.l.b16 %v154
  %v1034 = vunpack.c.l.b16 %v155
  %v1035 = vunpack.c.l.b16 %v156
  %v1036 = vunpack.c.l.b16 %v157
  %v1037 = vunpack.c.l.b16 %v158
  %v1038 = vunpack.c.l.b16 %v159
  %v1039 = vunpack.c.l.b16 %v160
  %v1040 = vunpack.c.l.b16 %v161
  %v1041 = vunpack.c.l.b16 %v162
  %v1042 = vunpack.c.l.b16 %v163
  %v1043 = vunpack.c.l.b16 %v164
  %v1044 = vunpack.c.l.b16 %v165
  %v1045 = vunpack.c.l.b16 %v166
  %v1046 = vunpack.c.l.b16 %v167
  %v1047 = vunpack.c.l.b16 %v168
  %v1048 = vunpack.c.l.b16 %v169
  %v1049 = vunpack.c.l.b16 %v170
  %v1050 = vunpack.c.l.b16 %v171
  %v1051 = vunpack.c.l.b16 %v172
  %v1052 = vunpack.c.l.b16 %v173
  %v1053 = vunpack.c.l.b16 %v174
  %v1054 = vunpack.c.l.b16 %v175
  %v1055 = vunpack.c.l.b16 %v176
  %v1056 = vunpack.c.l.b16 %v177
  %v1057 = vunpack.c.l.b16 %v178
  %v1058 = vunpack.c.l.b16 %v179
  %v1059 = vunpack.c.l.b16 %v180
  %v1060 = vunpack.c.l.b16 %v181
  %v1061 = vunpack.c.l.b16 %v182
  %v1062 = vunpack.c.l.b16 %v183
  %v1063 = vunpack.c.l.b16 %v184
  %v1064 = vunpack.c.l.b16 %v185
  %v1065 = vunpack.c.l.b16 %v186
  %v1066 = vunpack.c.l.b16 %v187
  %v1067 = vunpack.c.l.b16 %v188
  %v1068 = vunpack.c.l.b16 %v189
  %v1069 = vunpack.c.l.b16 %v190
  %v1070 = vunpack.c.l.b16 %v191
  %v1071 = vunpack.c.l.b16 %v192
  %v1072 = vunpack.c.l.b16 %v193
  %v1073 = vunpack.c.l.b16 %v194
  %v1074 = vunpack.c.l.b16 %v195
  %v1075 = vunpack.c.l.b16 %v196
  %v1076 = vunpack.c.l.b16 %v197
  %v1077 = vunpack.c.l.b16 %v198
  %v1078 = vunpack.c.l.b16 %v199
  %v1079 = vunpack.c.l.b16 %v200
  %v1080 = vunpack.c.l.b16 %v201
  %v1081 = vunpack.c.l.b16 %v202
  %v1082 = vunpack.c.l.b16 %v203
  %v1083 = vunpack.c.l.b16 %v204
  %v1084 = vunpack.c.l.b16 %v205
  %v1085 = vunpack.c.l.b16 %v206
  %v1086 = vunpack.c.l.b16 %v207
  %v1087 = vunpack.c.l.b16 %v208
  %v1088 = vunpack.c.l.b16 %v209
  %v1089 = vunpack.c.l.b16 %v210
  %v1090 = vunpack.c.l.b16 %v211
  %v1091 = vunpack.c.l.b16 %v212
  %v1092 = vunpack.c.l.b16 %v213
  %v1093 = vunpack.c.l.b16 %v214
  %v1094 = vunpack.c.l.b16 %v215
  %v1095 = vunpack.c.l.b16 %v216
  %v1096 = vunpack.c.l.b16 %v217
  %v1097 = vunpack.c.l.b16 %v218
  %v1098 = vunpack.c.l.b16 %v219
  %v1099 = vunpack.c.l.b16 %v220
  %v1100 = vunpack.c.l.b16 %v221
  %v1101 = vunpack.c.l.b16 %v222
  %v1102 = vunpack.c.l.b16 %v223
  %v1103 = vunpack.c.l.b16 %v224
  %v1104 = vunpack.c.l.b16 %v225
  %v1105 = vunpack.c.l.b16 %v226
  %v1106 = vunpack.c.l.b16 %v227
  %v1107 = vunpack.c.l.b16 %v228
  %v1108 = vunpack.c.l.b16 %v229
  %v1109 = vunpack.c.l.b16 %v230
  %v1110 = vunpack.c.l.b16 %v231
  %v1111 = vunpack.c.l.b16 %v232
  %v1112 = vunpack.c.l.b16 %v233
  %v1113 = vunpack.c.l.b16 %v234
  %v1114 = vunpack.c.l.b16 %v235
  %v1115 = vunpack.c.l.b16 %v236
  %v1116 = vunpack.c.l.b16 %v237
  %v1117 = vunpack.c.l.b16 %v238
  %v1118 = vunpack.c.l.b16 %v239
  %v1119 = vunpack.c.l.b16 %v240
  %v1120 = vunpack.c.l.b16 %v241
  %v1121 = vunpack.c.l.b16 %v242
  %v1122 = vunpack.c.l.b16 %v243
  %v1123 = vunpack.c.l.b16 %v244
  %v1124 = vunpack.c.l.b16 %v245
  %v1125 = vunpack.c.l.b16 %v246
  %v1126 = vunpack.c.l.b16 %v247
  %v1127 = vunpack.c.l.b16 %v248
  %v1128 = vunpack.c.l.b16 %v249
  %v1129 = vunpack.c.l.b16 %v250
  %v1130 = vunpack.c.l.b16 %v251
  %v1131 = vunpack.c.l.b16 %v252
  %v1132 = vunpack.c.l.b16 %v253
  %v1133 = vunpack.c.l.b16 %v254
  %v1134 = vunpack.c.l.b16 %v255
  %v1135 = vunpack.c.l.b16 %v256
  %v1136 = vunpack.c.l.b16 %v257
  %v1137 = vunpack.c.l.b16 %v258
  %v1138 = vunpack.c.l.b16 %v259
  %v1139 = vunpack.c.l.b16 %v260
  %v1140 = vunpack.c.l.b16 %v261
  %v1141 = vunpack.c.l.b16 %v262
  %v1142 = vunpack.c.l.b16 %v263
  %v1143 = vunpack.c.l.b16 %v264
  %v1144 = vunpack.c.l.b16 %v265
  %v1145 = vunpack.c.l.b16 %v266
  %v1146 = vunpack.c.l.b16 %v267
  %v1147 = vunpack.c.l.b16 %v268
  %v1148 = vunpack.c.l.b16 %v269
  %v1149 = vunpack.c.l.b16 %v270
  %v1150 = vunpack.c.l.b16 %v271
  %v1151 = vunpack.c.l.b16 %v272
  %v1152 = vunpack.c.l.b16 %v273
  %v1153 = vunpack.c.l.b16 %v274
  %v1154 = vunpack.c.l.b16 %v275
  %v1155 = vunpack.c.l.b16 %v276
  %v1156 = vunpack.c.l.b16 %v277
  %v1157 = vunpack.c.l.b16 %v278
  %v1158 = vunpack.c.l.b16 %v279
  %v1159 = vunpack.c.l.b16 %v280
  %v1160 = vunpack.c.l.b16 %v281
  %v1161 = vunpack.c.l.b16 %v282
  %v1162 = vunpack.c.l.b16 %v283
  %v1163 = vpack.c.b16 %v1020, %v1019
  %v1164 = vpack.c.b16 %v1022, %v1021
  %v1165 = vpack.c.b16 %v1024, %v1023
  %v1166 = vpack.c.b16 %v1026, %v1025
  %v1167 = vpack.c.b16 %v1028, %v1027
  %v1168 = vpack.c.b16 %v1030, %v1029
  %v1169 = vpack.c.b16 %v1032, %v1031
  %v1170 = vpack.c.b16 %v1034, %v1033
  %v1171 = vpack.c.b16 %v1036, %v1035
  %v1172 = vpack.c.b16 %v1038, %v1037
  %v1173 = vpack.c.b16 %v1040, %v1039
  %v1174 = vpack.c.b16 %v1042, %v1041
  %v1175 = vpack.c.b16 %v1044, %v1043
  %v1176 = vpack.c.b16 %v1046, %v1045
  %v1177 = vpack.c.b16 %v1048, %v1047
  %v1178 = vpack.c.b16 %v1050, %v1049
  %v1179 = vpack.c.b16 %v1052, %v1051
  %v1180 = vpack.c.b16 %v1054, %v1053
  %v1181 = vpack.c.b16 %v1056, %v1055
  %v1182 = vpack.c.b16 %v1058, %v1057
  %v1183 = vpack.c.b16 %v1060, %v1059
  %v1184 = vpack.c.b16 %v1062, %v1061
  %v1185 = vpack.c.b16 %v1064, %v1063
  %v1186 = vpack.c.b16 %v1066, %v1065
  %v1187 = vpack.c.b16 %v1068, %v1067
  %v1188 = vpack.c.b16 %v1070, %v1069
  %v1189 = vpack.c.b16 %v1072, %v1071
  %v1190 = vpack.c.b16 %v1074, %v1073
  %v1191 = vpack.c.b16 %v1076, %v1075
  %v1192 = vpack.c.b16 %v1078, %v1077
  %v1193 = vpack.c.b16 %v1080, %v1079
  %v1194 = vpack.c.b16 %v1082, %v1081
  %v1195 = vpack.c.b16 %v1084, %v1083
  %v1196 = vpack.c.b16 %v1086, %v1085
  %v1197 = vpack.c.b16 %v1088, %v1087
  %v1198 = vpack.c.b16 %v1090, %v1089
  %v1199 = vpack.c.b16 %v1092, %v1091
  %v1200 = vpack.c.b16 %v1094, %v1093
  %v1201 = vpack.c.b16 %v1096, %v1095
  %v1202 = vpack.c.b16 %v1098, %v1097
  %v1203 = vpack.c.b16 %v1100, %v1099
  %v1204 = vpack.c.b16 %v1102, %v1101
  %v1205 = vpack.c.b16 %v1104, %v1103
  %v1206 = vpack.c.b16 %v1106, %v1105
  %v1207 = vpack.c.b16 %v1108, %v1107
  %v1208 = vpack.c.b16 %v1110, %v1109
  %v1209 = vpack.c.b16 %v1112, %v1111
  %v1210 = vpack.c.b16 %v1114, %v1113
  %v1211 = vpack.c.b16 %v1116, %v1115
  %v1212 = vpack.c.b16 %v1118, %v1117
  %v1213 = vpack.c.b16 %v1120, %v1119
  %v1214 = vpack.c.b16 %v1122, %v1121
  %v1215 = vpack.c.b16 %v1124, %v1123
  %v1216 = vpack.c.b16 %v1126, %v1125
  %v1217 = vpack.c.b16 %v1128, %v1127
  %v1218 = vpack.c.b16 %v1130, %v1129
  %v1219 = vpack.c.b16 %v1132, %v1131
  %v1220 = vpack.c.b16 %v1134, %v1133
  %v1221 = vpack.c.b16 %v1136, %v1135
  %v1222 = vpack.c.b16 %v1138, %v1137
  %v1223 = vpack.c.b16 %v1140, %v1139
  %v1224 = vpack.c.b16 %v1142, %v1141
  %v1225 = vpack.c.b16 %v1144, %v1143
  %v1226 = vpack.c.b16 %v1146, %v1145
  %v1227 = vpack.c.b16 %v1148, %v1147
  %v1228 = vpack.c.b16 %v1150, %v1149
  %v1229 = vpack.c.b16 %v1152, %v1151
  %v1230 = vpack.c.b16 %v1154, %v1153
  %v1231 = vpack.c.b16 %v1156, %v1155
  %v1232 = vpack.c.b16 %v1158, %v1157
  %v1233 = vpack.c.b16 %v1160, %v1159
  %v1234 = vpack.c.b16 %v1162, %v1161
  %1307 = vmatprep.subr.bf16.mxu0 0
  %1308 = vmatpush1.bf16.msra.mxu0 %v1163
  %1309 = vmatprep.subr.bf16.mxu0 0
  %1310 = vmatpush1.bf16.msra.mxu0 %v1164
  %1311 = vmatprep.subr.bf16.mxu0 0
  %1312 = vmatpush1.bf16.msra.mxu0 %v1165
  %1313 = vmatprep.subr.bf16.mxu0 0
  %1314 = vmatpush1.bf16.msra.mxu0 %v1166
  %1315 = vmatprep.subr.bf16.mxu0 0
  %1316 = vmatpush1.bf16.msra.mxu0 %v1167
  %1317 = vmatprep.subr.bf16.mxu0 0
  %1318 = vmatpush1.bf16.msra.mxu0 %v1168
  %1319 = vmatprep.subr.bf16.mxu0 0
  %1320 = vmatpush1.bf16.msra.mxu0 %v1169
  %1321 = vmatprep.subr.bf16.mxu0 0
  %1322 = vmatpush1.bf16.msra.mxu0 %v1170
  %1323 = vmatprep.subr.bf16.mxu0 0
  %1324 = vmatpush1.bf16.msra.mxu0 %v1171
  %1325 = vmatprep.subr.bf16.mxu0 0
  %1326 = vmatpush1.bf16.msra.mxu0 %v1172
  %1327 = vmatprep.subr.bf16.mxu0 0
  %1328 = vmatpush1.bf16.msra.mxu0 %v1173
  %1329 = vmatprep.subr.bf16.mxu0 0
  %1330 = vmatpush1.bf16.msra.mxu0 %v1174
  %1331 = vmatprep.subr.bf16.mxu0 0
  %1332 = vmatpush1.bf16.msra.mxu0 %v1175
  %1333 = vmatprep.subr.bf16.mxu0 0
  %1334 = vmatpush1.bf16.msra.mxu0 %v1176
  %1335 = vmatprep.subr.bf16.mxu0 0
  %1336 = vmatpush1.bf16.msra.mxu0 %v1177
  %1337 = vmatprep.subr.bf16.mxu0 0
  %1338 = vmatpush1.bf16.msra.mxu0 %v1178
  %1339 = vmatprep.mubr.bf16.mxu0 %v642
  %1340 = vmatmul.mubr.bf16.gmra.mrb[0].mxu0 %v641
  %v1341 = vpop.f32.mrb[0].mxu0
  %v1342 = vadd.f32 %v289, %v1341
  %v1343 = vpop.f32.mrb[0].mxu0
  %v1344 = vpop.f32.mrb[0].mxu0
  %v1345 = vadd.f32 %v289, %v1344
  %v1346 = vpop.f32.mrb[0].mxu0
  %1347 = vmatprep.mubr.bf16.mxu0 %v651
  %1348 = vmatmul.mubr.bf16.gmra.mrb[0].mxu0 %v650
  %v1349 = vpop.f32.mrb[0].mxu0
  %v1350 = vadd.f32 %v289, %v1349
  %v1351 = vpop.f32.mrb[0].mxu0
  %v1352 = vpop.f32.mrb[0].mxu0
  %v1353 = vadd.f32 %v289, %v1352
  %v1354 = vpop.f32.mrb[0].mxu0
  %1355 = vmatprep.mubr.bf16.mxu0 %v660
  %1356 = vmatmul.mubr.bf16.gmra.mrb[0].mxu0 %v659
  %v1357 = vpop.f32.mrb[0].mxu0
  %v1358 = vadd.f32 %v289, %v1357
  %v1359 = vpop.f32.mrb[0].mxu0
  %v1360 = vpop.f32.mrb[0].mxu0
  %v1361 = vadd.f32 %v289, %v1360
  %v1362 = vpop.f32.mrb[0].mxu0
  %1363 = vmatprep.mubr.bf16.mxu0 %v669
  %1364 = vmatmul.mubr.bf16.gmra.mrb[0].mxu0 %v668
  %v1365 = vpop.f32.mrb[0].mxu0
  %v1366 = vadd.f32 %v289, %v1365
  %v1367 = vpop.f32.mrb[0].mxu0
  %v1368 = vpop.f32.mrb[0].mxu0
  %v1369 = vadd.f32 %v289, %v1368
  %v1370 = vpop.f32.mrb[0].mxu0
  %1371 = vmatprep.mubr.bf16.mxu0 %v678
  %1372 = vmatmul.mubr.bf16.gmra.mrb[0].mxu0 %v677
  %v1373 = vpop.f32.mrb[0].mxu0
  %v1374 = vadd.f32 %v289, %v1373
  %v1375 = vpop.f32.mrb[0].mxu0
  %v1376 = vpop.f32.mrb[0].mxu0
  %v1377 = vadd.f32 %v289, %v1376
  %v1378 = vpop.f32.mrb[0].mxu0
  %1379 = vmatprep.mubr.bf16.mxu0 %v687
  %1380 = vmatmul.mubr.bf16.gmra.mrb[0].mxu0 %v686
  %v1381 = vpop.f32.mrb[0].mxu0
  %v1382 = vadd.f32 %v289, %v1381
  %v1383 = vpop.f32.mrb[0].mxu0
  %v1384 = vpop.f32.mrb[0].mxu0
  %v1385 = vadd.f32 %v289, %v1384
  %v1386 = vpop.f32.mrb[0].mxu0
  %1387 = vmatprep.mubr.bf16.mxu0 %v696
  %1388 = vmatmul.mubr.bf16.gmra.mrb[0].mxu0 %v695
  %v1389 = vpop.f32.mrb[0].mxu0
  %v1390 = vadd.f32 %v289, %v1389
  %v1391 = vpop.f32.mrb[0].mxu0
  %v1392 = vpop.f32.mrb[0].mxu0
  %v1393 = vadd.f32 %v289, %v1392
  %v1394 = vpop.f32.mrb[0].mxu0
  %1395 = vmatprep.mubr.bf16.mxu0 %v705
  %1396 = vmatmul.mubr.bf16.gmra.mrb[0].mxu0 %v704
  %v1397 = vpop.f32.mrb[0].mxu0
  %v1398 = vadd.f32 %v289, %v1397
  %v1399 = vpop.f32.mrb[0].mxu0
  %v1400 = vpop.f32.mrb[0].mxu0
  %v1401 = vadd.f32 %v289, %v1400
  %v1402 = vpop.f32.mrb[0].mxu0
  %1403 = vmatprep.mubr.bf16.mxu0 %v714
  %1404 = vmatmul.mubr.bf16.gmra.mrb[0].mxu0 %v713
  %v1405 = vpop.f32.mrb[0].mxu0
  %v1406 = vadd.f32 %v289, %v1405
  %v1407 = vpop.f32.mrb[0].mxu0
  %v1408 = vpop.f32.mrb[0].mxu0
  %v1409 = vadd.f32 %v289, %v1408
  %v1410 = vpop.f32.mrb[0].mxu0
  %1411 = vmatprep.mubr.bf16.mxu0 %v723
  %1412 = vmatmul.mubr.bf16.gmra.mrb[0].mxu0 %v722
  %v1413 = vpop.f32.mrb[0].mxu0
  %v1414 = vadd.f32 %v289, %v1413
  %v1415 = vpop.f32.mrb[0].mxu0
  %v1416 = vpop.f32.mrb[0].mxu0
  %v1417 = vadd.f32 %v289, %v1416
  %v1418 = vpop.f32.mrb[0].mxu0
  %1419 = vmatprep.mubr.bf16.mxu0 %v732
  %1420 = vmatmul.mubr.bf16.gmra.mrb[0].mxu0 %v731
  %v1421 = vpop.f32.mrb[0].mxu0
  %v1422 = vadd.f32 %v289, %v1421
  %v1423 = vpop.f32.mrb[0].mxu0
  %v1424 = vpop.f32.mrb[0].mxu0
  %v1425 = vadd.f32 %v289, %v1424
  %v1426 = vpop.f32.mrb[0].mxu0
  %1427 = vmatprep.mubr.bf16.mxu0 %v741
  %1428 = vmatmul.mubr.bf16.gmra.mrb[0].mxu0 %v740
  %v1429 = vpop.f32.mrb[0].mxu0
  %v1430 = vadd.f32 %v289, %v1429
  %v1431 = vpop.f32.mrb[0].mxu0
  %v1432 = vpop.f32.mrb[0].mxu0
  %v1433 = vadd.f32 %v289, %v1432
  %v1434 = vpop.f32.mrb[0].mxu0
  %1435 = vmatprep.mubr.bf16.mxu0 %v750
  %1436 = vmatmul.mubr.bf16.gmra.mrb[0].mxu0 %v749
  %v1437 = vpop.f32.mrb[0].mxu0
  %v1438 = vadd.f32 %v289, %v1437
  %v1439 = vpop.f32.mrb[0].mxu0
  %v1440 = vpop.f32.mrb[0].mxu0
  %v1441 = vpop.f32.mrb[0].mxu0
  %1442 = vdwg.mxu0
  %1443 = vmatprep.subr.bf16.mxu0 0
  %1444 = vmatpush1.bf16.msra.mxu0 %v1179
  %1445 = vmatprep.subr.bf16.mxu0 0
  %1446 = vmatpush1.bf16.msra.mxu0 %v1180
  %1447 = vmatprep.subr.bf16.mxu0 0
  %1448 = vmatpush1.bf16.msra.mxu0 %v1181
  %1449 = vmatprep.subr.bf16.mxu0 0
  %1450 = vmatpush1.bf16.msra.mxu0 %v1182
  %1451 = vmatprep.subr.bf16.mxu0 0
  %1452 = vmatpush1.bf16.msra.mxu0 %v1183
  %1453 = vmatprep.subr.bf16.mxu0 0
  %1454 = vmatpush1.bf16.msra.mxu0 %v1184
  %1455 = vmatprep.subr.bf16.mxu0 0
  %1456 = vmatpush1.bf16.msra.mxu0 %v1185
  %1457 = vmatprep.subr.bf16.mxu0 0
  %1458 = vmatpush1.bf16.msra.mxu0 %v1186
  %1459 = vmatprep.subr.bf16.mxu0 0
  %1460 = vmatpush1.bf16.msra.mxu0 %v1187
  %1461 = vmatprep.subr.bf16.mxu0 0
  %1462 = vmatpush1.bf16.msra.mxu0 %v1188
  %1463 = vmatprep.subr.bf16.mxu0 0
  %1464 = vmatpush1.bf16.msra.mxu0 %v1189
  %1465 = vmatprep.subr.bf16.mxu0 0
  %1466 = vmatpush1.bf16.msra.mxu0 %v1190
  %1467 = vmatprep.subr.bf16.mxu0 0
  %1468 = vmatpush1.bf16.msra.mxu0 %v1191
  %1469 = vmatprep.subr.bf16.mxu0 0
  %1470 = vmatpush1.bf16.msra.mxu0 %v1192
  %1471 = vmatprep.subr.bf16.mxu0 0
  %1472 = vmatpush1.bf16.msra.mxu0 %v1193
  %1473 = vmatprep.subr.bf16.mxu0 0
  %1474 = vmatpush1.bf16.msra.mxu0 %v1194
  %1475 = vmatprep.mubr.bf16.mxu0 %v644
  %1476 = vmatmul.mubr.bf16.gmra.mrb[0].mxu0 %v643
  %v1477 = vpop.f32.mrb[0].mxu0
  %v1478 = vadd.f32 %v1342, %v1477
  %v1479 = vpop.f32.mrb[0].mxu0
  %v1480 = vpop.f32.mrb[0].mxu0
  %v1481 = vadd.f32 %v1345, %v1480
  %v1482 = vpop.f32.mrb[0].mxu0
  %1483 = vmatprep.mubr.bf16.mxu0 %v653
  %1484 = vmatmul.mubr.bf16.gmra.mrb[0].mxu0 %v652
  %v1485 = vpop.f32.mrb[0].mxu0
  %v1486 = vadd.f32 %v1350, %v1485
  %v1487 = vpop.f32.mrb[0].mxu0
  %v1488 = vpop.f32.mrb[0].mxu0
  %v1489 = vadd.f32 %v1353, %v1488
  %v1490 = vpop.f32.mrb[0].mxu0
  %1491 = vmatprep.mubr.bf16.mxu0 %v662
  %1492 = vmatmul.mubr.bf16.gmra.mrb[0].mxu0 %v661
  %v1493 = vpop.f32.mrb[0].mxu0
  %v1494 = vadd.f32 %v1358, %v1493
  %v1495 = vpop.f32.mrb[0].mxu0
  %v1496 = vpop.f32.mrb[0].mxu0
  %v1497 = vadd.f32 %v1361, %v1496
  %v1498 = vpop.f32.mrb[0].mxu0
  %1499 = vmatprep.mubr.bf16.mxu0 %v671
  %1500 = vmatmul.mubr.bf16.gmra.mrb[0].mxu0 %v670
  %v1501 = vpop.f32.mrb[0].mxu0
  %v1502 = vadd.f32 %v1366, %v1501
  %v1503 = vpop.f32.mrb[0].mxu0
  %v1504 = vpop.f32.mrb[0].mxu0
  %v1505 = vadd.f32 %v1369, %v1504
  %v1506 = vpop.f32.mrb[0].mxu0
  %1507 = vmatprep.mubr.bf16.mxu0 %v680
  %1508 = vmatmul.mubr.bf16.gmra.mrb[0].mxu0 %v679
  %v1509 = vpop.f32.mrb[0].mxu0
  %v1510 = vadd.f32 %v1374, %v1509
  %v1511 = vpop.f32.mrb[0].mxu0
  %v1512 = vpop.f32.mrb[0].mxu0
  %v1513 = vadd.f32 %v1377, %v1512
  %v1514 = vpop.f32.mrb[0].mxu0
  %1515 = vmatprep.mubr.bf16.mxu0 %v689
  %1516 = vmatmul.mubr.bf16.gmra.mrb[0].mxu0 %v688
  %v1517 = vpop.f32.mrb[0].mxu0
  %v1518 = vadd.f32 %v1382, %v1517
  %v1519 = vpop.f32.mrb[0].mxu0
  %v1520 = vpop.f32.mrb[0].mxu0
  %v1521 = vadd.f32 %v1385, %v1520
  %v1522 = vpop.f32.mrb[0].mxu0
  %1523 = vmatprep.mubr.bf16.mxu0 %v698
  %1524 = vmatmul.mubr.bf16.gmra.mrb[0].mxu0 %v697
  %v1525 = vpop.f32.mrb[0].mxu0
  %v1526 = vadd.f32 %v1390, %v1525
  %v1527 = vpop.f32.mrb[0].mxu0
  %v1528 = vpop.f32.mrb[0].mxu0
  %v1529 = vadd.f32 %v1393, %v1528
  %v1530 = vpop.f32.mrb[0].mxu0
  %1531 = vmatprep.mubr.bf16.mxu0 %v707
  %1532 = vmatmul.mubr.bf16.gmra.mrb[0].mxu0 %v706
  %v1533 = vpop.f32.mrb[0].mxu0
  %v1534 = vadd.f32 %v1398, %v1533
  %v1535 = vpop.f32.mrb[0].mxu0
  %v1536 = vpop.f32.mrb[0].mxu0
  %v1537 = vadd.f32 %v1401, %v1536
  %v1538 = vpop.f32.mrb[0].mxu0
  %1539 = vmatprep.mubr.bf16.mxu0 %v716
  %1540 = vmatmul.mubr.bf16.gmra.mrb[0].mxu0 %v715
  %v1541 = vpop.f32.mrb[0].mxu0
  %v1542 = vadd.f32 %v1406, %v1541
  %v1543 = vpop.f32.mrb[0].mxu0
  %v1544 = vpop.f32.mrb[0].mxu0
  %v1545 = vadd.f32 %v1409, %v1544
  %v1546 = vpop.f32.mrb[0].mxu0
  %1547 = vmatprep.mubr.bf16.mxu0 %v725
  %1548 = vmatmul.mubr.bf16.gmra.mrb[0].mxu0 %v724
  %v1549 = vpop.f32.mrb[0].mxu0
  %v1550 = vadd.f32 %v1414, %v1549
  %v1551 = vpop.f32.mrb[0].mxu0
  %v1552 = vpop.f32.mrb[0].mxu0
  %v1553 = vadd.f32 %v1417, %v1552
  %v1554 = vpop.f32.mrb[0].mxu0
  %1555 = vmatprep.mubr.bf16.mxu0 %v734
  %1556 = vmatmul.mubr.bf16.gmra.mrb[0].mxu0 %v733
  %v1557 = vpop.f32.mrb[0].mxu0
  %v1558 = vadd.f32 %v1422, %v1557
  %v1559 = vpop.f32.mrb[0].mxu0
  %v1560 = vpop.f32.mrb[0].mxu0
  %v1561 = vadd.f32 %v1425, %v1560
  %v1562 = vpop.f32.mrb[0].mxu0
  %1563 = vmatprep.mubr.bf16.mxu0 %v743
  %1564 = vmatmul.mubr.bf16.gmra.mrb[0].mxu0 %v742
  %v1565 = vpop.f32.mrb[0].mxu0
  %v1566 = vadd.f32 %v1430, %v1565
  %v1567 = vpop.f32.mrb[0].mxu0
  %v1568 = vpop.f32.mrb[0].mxu0
  %v1569 = vadd.f32 %v1433, %v1568
  %v1570 = vpop.f32.mrb[0].mxu0
  %1571 = vmatprep.mubr.bf16.mxu0 %v752
  %1572 = vmatmul.mubr.bf16.gmra.mrb[0].mxu0 %v751
  %v1573 = vpop.f32.mrb[0].mxu0
  %v1574 = vadd.f32 %v1438, %v1573
  %v1575 = vpop.f32.mrb[0].mxu0
  %v1576 = vpop.f32.mrb[0].mxu0
  %v1577 = vpop.f32.mrb[0].mxu0
  %1578 = vdwg.mxu0
  %1579 = vmatprep.subr.bf16.mxu0 0
  %1580 = vmatpush1.bf16.msra.mxu0 %v1195
  %1581 = vmatprep.subr.bf16.mxu0 0
  %1582 = vmatpush1.bf16.msra.mxu0 %v1196
  %1583 = vmatprep.subr.bf16.mxu0 0
  %1584 = vmatpush1.bf16.msra.mxu0 %v1197
  %1585 = vmatprep.subr.bf16.mxu0 0
  %1586 = vmatpush1.bf16.msra.mxu0 %v1198
  %1587 = vmatprep.subr.bf16.mxu0 0
  %1588 = vmatpush1.bf16.msra.mxu0 %v1199
  %1589 = vmatprep.subr.bf16.mxu0 0
  %1590 = vmatpush1.bf16.msra.mxu0 %v1200
  %1591 = vmatprep.subr.bf16.mxu0 0
  %1592 = vmatpush1.bf16.msra.mxu0 %v1201
  %1593 = vmatprep.subr.bf16.mxu0 0
  %1594 = vmatpush1.bf16.msra.mxu0 %v1202
  %1595 = vmatprep.subr.bf16.mxu0 0
  %1596 = vmatpush1.bf16.msra.mxu0 %v1203
  %1597 = vmatprep.subr.bf16.mxu0 0
  %1598 = vmatpush1.bf16.msra.mxu0 %v1204
  %1599 = vmatprep.subr.bf16.mxu0 0
  %1600 = vmatpush1.bf16.msra.mxu0 %v1205
  %1601 = vmatprep.subr.bf16.mxu0 0
  %1602 = vmatpush1.bf16.msra.mxu0 %v1206
  %1603 = vmatprep.subr.bf16.mxu0 0
  %1604 = vmatpush1.bf16.msra.mxu0 %v1207
  %1605 = vmatprep.subr.bf16.mxu0 0
  %1606 = vmatpush1.bf16.msra.mxu0 %v1208
  %1607 = vmatprep.subr.bf16.mxu0 0
  %1608 = vmatpush1.bf16.msra.mxu0 %v1209
  %1609 = vmatprep.subr.bf16.mxu0 0
  %1610 = vmatpush1.bf16.msra.mxu0 %v1210
  %1611 = vmatprep.mubr.bf16.mxu0 %v646
  %1612 = vmatmul.mubr.bf16.gmra.mrb[0].mxu0 %v645
  %v1613 = vpop.f32.mrb[0].mxu0
  %v1614 = vadd.f32 %v1478, %v1613
  %v1615 = vpop.f32.mrb[0].mxu0
  %v1616 = vpop.f32.mrb[0].mxu0
  %v1617 = vadd.f32 %v1481, %v1616
  %v1618 = vpop.f32.mrb[0].mxu0
  %1619 = vmatprep.mubr.bf16.mxu0 %v655
  %1620 = vmatmul.mubr.bf16.gmra.mrb[0].mxu0 %v654
  %v1621 = vpop.f32.mrb[0].mxu0
  %v1622 = vadd.f32 %v1486, %v1621
  %v1623 = vpop.f32.mrb[0].mxu0
  %v1624 = vpop.f32.mrb[0].mxu0
  %v1625 = vadd.f32 %v1489, %v1624
  %v1626 = vpop.f32.mrb[0].mxu0
  %1627 = vmatprep.mubr.bf16.mxu0 %v664
  %1628 = vmatmul.mubr.bf16.gmra.mrb[0].mxu0 %v663
  %v1629 = vpop.f32.mrb[0].mxu0
  %v1630 = vadd.f32 %v1494, %v1629
  %v1631 = vpop.f32.mrb[0].mxu0
  %v1632 = vpop.f32.mrb[0].mxu0
  %v1633 = vadd.f32 %v1497, %v1632
  %v1634 = vpop.f32.mrb[0].mxu0
  %1635 = vmatprep.mubr.bf16.mxu0 %v673
  %1636 = vmatmul.mubr.bf16.gmra.mrb[0].mxu0 %v672
  %v1637 = vpop.f32.mrb[0].mxu0
  %v1638 = vadd.f32 %v1502, %v1637
  %v1639 = vpop.f32.mrb[0].mxu0
  %v1640 = vpop.f32.mrb[0].mxu0
  %v1641 = vadd.f32 %v1505, %v1640
  %v1642 = vpop.f32.mrb[0].mxu0
  %1643 = vmatprep.mubr.bf16.mxu0 %v682
  %1644 = vmatmul.mubr.bf16.gmra.mrb[0].mxu0 %v681
  %v1645 = vpop.f32.mrb[0].mxu0
  %v1646 = vadd.f32 %v1510, %v1645
  %v1647 = vpop.f32.mrb[0].mxu0
  %v1648 = vpop.f32.mrb[0].mxu0
  %v1649 = vadd.f32 %v1513, %v1648
  %v1650 = vpop.f32.mrb[0].mxu0
  %1651 = vmatprep.mubr.bf16.mxu0 %v691
  %1652 = vmatmul.mubr.bf16.gmra.mrb[0].mxu0 %v690
  %v1653 = vpop.f32.mrb[0].mxu0
  %v1654 = vadd.f32 %v1518, %v1653
  %v1655 = vpop.f32.mrb[0].mxu0
  %v1656 = vpop.f32.mrb[0].mxu0
  %v1657 = vadd.f32 %v1521, %v1656
  %v1658 = vpop.f32.mrb[0].mxu0
  %1659 = vmatprep.mubr.bf16.mxu0 %v700
  %1660 = vmatmul.mubr.bf16.gmra.mrb[0].mxu0 %v699
  %v1661 = vpop.f32.mrb[0].mxu0
  %v1662 = vadd.f32 %v1526, %v1661
  %v1663 = vpop.f32.mrb[0].mxu0
  %v1664 = vpop.f32.mrb[0].mxu0
  %v1665 = vadd.f32 %v1529, %v1664
  %v1666 = vpop.f32.mrb[0].mxu0
  %1667 = vmatprep.mubr.bf16.mxu0 %v709
  %1668 = vmatmul.mubr.bf16.gmra.mrb[0].mxu0 %v708
  %v1669 = vpop.f32.mrb[0].mxu0
  %v1670 = vadd.f32 %v1534, %v1669
  %v1671 = vpop.f32.mrb[0].mxu0
  %v1672 = vpop.f32.mrb[0].mxu0
  %v1673 = vadd.f32 %v1537, %v1672
  %v1674 = vpop.f32.mrb[0].mxu0
  %1675 = vmatprep.mubr.bf16.mxu0 %v718
  %1676 = vmatmul.mubr.bf16.gmra.mrb[0].mxu0 %v717
  %v1677 = vpop.f32.mrb[0].mxu0
  %v1678 = vadd.f32 %v1542, %v1677
  %v1679 = vpop.f32.mrb[0].mxu0
  %v1680 = vpop.f32.mrb[0].mxu0
  %v1681 = vadd.f32 %v1545, %v1680
  %v1682 = vpop.f32.mrb[0].mxu0
  %1683 = vmatprep.mubr.bf16.mxu0 %v727
  %1684 = vmatmul.mubr.bf16.gmra.mrb[0].mxu0 %v726
  %v1685 = vpop.f32.mrb[0].mxu0
  %v1686 = vadd.f32 %v1550, %v1685
  %v1687 = vpop.f32.mrb[0].mxu0
  %v1688 = vpop.f32.mrb[0].mxu0
  %v1689 = vadd.f32 %v1553, %v1688
  %v1690 = vpop.f32.mrb[0].mxu0
  %1691 = vmatprep.mubr.bf16.mxu0 %v736
  %1692 = vmatmul.mubr.bf16.gmra.mrb[0].mxu0 %v735
  %v1693 = vpop.f32.mrb[0].mxu0
  %v1694 = vadd.f32 %v1558, %v1693
  %v1695 = vpop.f32.mrb[0].mxu0
  %v1696 = vpop.f32.mrb[0].mxu0
  %v1697 = vadd.f32 %v1561, %v1696
  %v1698 = vpop.f32.mrb[0].mxu0
  %1699 = vmatprep.mubr.bf16.mxu0 %v745
  %1700 = vmatmul.mubr.bf16.gmra.mrb[0].mxu0 %v744
  %v1701 = vpop.f32.mrb[0].mxu0
  %v1702 = vadd.f32 %v1566, %v1701
  %v1703 = vpop.f32.mrb[0].mxu0
  %v1704 = vpop.f32.mrb[0].mxu0
  %v1705 = vadd.f32 %v1569, %v1704
  %v1706 = vpop.f32.mrb[0].mxu0
  %1707 = vmatprep.mubr.bf16.mxu0 %v754
  %1708 = vmatmul.mubr.bf16.gmra.mrb[0].mxu0 %v753
  %v1709 = vpop.f32.mrb[0].mxu0
  %v1710 = vadd.f32 %v1574, %v1709
  %v1711 = vpop.f32.mrb[0].mxu0
  %v1712 = vpop.f32.mrb[0].mxu0
  %v1713 = vpop.f32.mrb[0].mxu0
  %1714 = vdwg.mxu0
  %1715 = vmatprep.subr.bf16.mxu0 0
  %1716 = vmatpush1.bf16.msra.mxu0 %v1211
  %1717 = vmatprep.subr.bf16.mxu0 0
  %1718 = vmatpush1.bf16.msra.mxu0 %v1212
  %1719 = vmatprep.subr.bf16.mxu0 0
  %1720 = vmatpush1.bf16.msra.mxu0 %v1213
  %1721 = vmatprep.subr.bf16.mxu0 0
  %1722 = vmatpush1.bf16.msra.mxu0 %v1214
  %1723 = vmatprep.subr.bf16.mxu0 0
  %1724 = vmatpush1.bf16.msra.mxu0 %v1215
  %1725 = vmatprep.subr.bf16.mxu0 0
  %1726 = vmatpush1.bf16.msra.mxu0 %v1216
  %1727 = vmatprep.subr.bf16.mxu0 0
  %1728 = vmatpush1.bf16.msra.mxu0 %v1217
  %1729 = vmatprep.subr.bf16.mxu0 0
  %1730 = vmatpush1.bf16.msra.mxu0 %v1218
  %1731 = vmatprep.subr.bf16.mxu0 0
  %1732 = vmatpush1.bf16.msra.mxu0 %v1219
  %1733 = vmatprep.subr.bf16.mxu0 0
  %1734 = vmatpush1.bf16.msra.mxu0 %v1220
  %1735 = vmatprep.subr.bf16.mxu0 0
  %1736 = vmatpush1.bf16.msra.mxu0 %v1221
  %1737 = vmatprep.subr.bf16.mxu0 0
  %1738 = vmatpush1.bf16.msra.mxu0 %v1222
  %1739 = vmatprep.subr.bf16.mxu0 0
  %1740 = vmatpush1.bf16.msra.mxu0 %v1223
  %1741 = vmatprep.subr.bf16.mxu0 0
  %1742 = vmatpush1.bf16.msra.mxu0 %v1224
  %1743 = vmatprep.subr.bf16.mxu0 0
  %1744 = vmatpush1.bf16.msra.mxu0 %v1225
  %1745 = vmatprep.subr.bf16.mxu0 0
  %1746 = vmatpush1.bf16.msra.mxu0 %v1226
  %1747 = vmatprep.mubr.bf16.mxu0 %v648
  %1748 = vmatmul.mubr.bf16.gmra.mrb[0].mxu0 %v647
  %v1749 = vpop.f32.mrb[0].mxu0
  %v1750 = vadd.f32 %v1614, %v1749
  %v1751 = vpop.f32.mrb[0].mxu0
  %v1752 = vpop.f32.mrb[0].mxu0
  %v1753 = vadd.f32 %v1617, %v1752
  %v1754 = vpop.f32.mrb[0].mxu0
  %1755 = vmatprep.mubr.bf16.mxu0 %v657
  %1756 = vmatmul.mubr.bf16.gmra.mrb[0].mxu0 %v656
  %v1757 = vpop.f32.mrb[0].mxu0
  %v1758 = vadd.f32 %v1622, %v1757
  %v1759 = vpop.f32.mrb[0].mxu0
  %v1760 = vpop.f32.mrb[0].mxu0
  %v1761 = vadd.f32 %v1625, %v1760
  %v1762 = vpop.f32.mrb[0].mxu0
  %1763 = vmatprep.mubr.bf16.mxu0 %v666
  %1764 = vmatmul.mubr.bf16.gmra.mrb[0].mxu0 %v665
  %v1765 = vpop.f32.mrb[0].mxu0
  %v1766 = vadd.f32 %v1630, %v1765
  %v1767 = vpop.f32.mrb[0].mxu0
  %v1768 = vpop.f32.mrb[0].mxu0
  %v1769 = vadd.f32 %v1633, %v1768
  %v1770 = vpop.f32.mrb[0].mxu0
  %1771 = vmatprep.mubr.bf16.mxu0 %v675
  %1772 = vmatmul.mubr.bf16.gmra.mrb[0].mxu0 %v674
  %v1773 = vpop.f32.mrb[0].mxu0
  %v1774 = vadd.f32 %v1638, %v1773
  %v1775 = vpop.f32.mrb[0].mxu0
  %v1776 = vpop.f32.mrb[0].mxu0
  %v1777 = vadd.f32 %v1641, %v1776
  %v1778 = vpop.f32.mrb[0].mxu0
  %1779 = vmatprep.mubr.bf16.mxu0 %v684
  %1780 = vmatmul.mubr.bf16.gmra.mrb[0].mxu0 %v683
  %v1781 = vpop.f32.mrb[0].mxu0
  %v1782 = vadd.f32 %v1646, %v1781
  %v1783 = vpop.f32.mrb[0].mxu0
  %v1784 = vpop.f32.mrb[0].mxu0
  %v1785 = vadd.f32 %v1649, %v1784
  %v1786 = vpop.f32.mrb[0].mxu0
  %1787 = vmatprep.mubr.bf16.mxu0 %v693
  %1788 = vmatmul.mubr.bf16.gmra.mrb[0].mxu0 %v692
  %v1789 = vpop.f32.mrb[0].mxu0
  %v1790 = vadd.f32 %v1654, %v1789
  %v1791 = vpop.f32.mrb[0].mxu0
  %v1792 = vpop.f32.mrb[0].mxu0
  %v1793 = vadd.f32 %v1657, %v1792
  %v1794 = vpop.f32.mrb[0].mxu0
  %1795 = vmatprep.mubr.bf16.mxu0 %v702
  %1796 = vmatmul.mubr.bf16.gmra.mrb[0].mxu0 %v701
  %v1797 = vpop.f32.mrb[0].mxu0
  %v1798 = vadd.f32 %v1662, %v1797
  %v1799 = vpop.f32.mrb[0].mxu0
  %v1800 = vpop.f32.mrb[0].mxu0
  %v1801 = vadd.f32 %v1665, %v1800
  %v1802 = vpop.f32.mrb[0].mxu0
  %1803 = vmatprep.mubr.bf16.mxu0 %v711
  %1804 = vmatmul.mubr.bf16.gmra.mrb[0].mxu0 %v710
  %v1805 = vpop.f32.mrb[0].mxu0
  %v1806 = vadd.f32 %v1670, %v1805
  %v1807 = vpop.f32.mrb[0].mxu0
  %v1808 = vpop.f32.mrb[0].mxu0
  %v1809 = vadd.f32 %v1673, %v1808
  %v1810 = vpop.f32.mrb[0].mxu0
  %1811 = vmatprep.mubr.bf16.mxu0 %v720
  %1812 = vmatmul.mubr.bf16.gmra.mrb[0].mxu0 %v719
  %v1813 = vpop.f32.mrb[0].mxu0
  %v1814 = vadd.f32 %v1678, %v1813
  %v1815 = vpop.f32.mrb[0].mxu0
  %v1816 = vpop.f32.mrb[0].mxu0
  %v1817 = vadd.f32 %v1681, %v1816
  %v1818 = vpop.f32.mrb[0].mxu0
  %1819 = vmatprep.mubr.bf16.mxu0 %v729
  %1820 = vmatmul.mubr.bf16.gmra.mrb[0].mxu0 %v728
  %v1821 = vpop.f32.mrb[0].mxu0
  %v1822 = vadd.f32 %v1686, %v1821
  %v1823 = vpop.f32.mrb[0].mxu0
  %v1824 = vpop.f32.mrb[0].mxu0
  %v1825 = vadd.f32 %v1689, %v1824
  %v1826 = vpop.f32.mrb[0].mxu0
  %1827 = vmatprep.mubr.bf16.mxu0 %v738
  %1828 = vmatmul.mubr.bf16.gmra.mrb[0].mxu0 %v737
  %v1829 = vpop.f32.mrb[0].mxu0
  %v1830 = vadd.f32 %v1694, %v1829
  %v1831 = vpop.f32.mrb[0].mxu0
  %v1832 = vpop.f32.mrb[0].mxu0
  %v1833 = vadd.f32 %v1697, %v1832
  %v1834 = vpop.f32.mrb[0].mxu0
  %1835 = vmatprep.mubr.bf16.mxu0 %v747
  %1836 = vmatmul.mubr.bf16.gmra.mrb[0].mxu0 %v746
  %v1837 = vpop.f32.mrb[0].mxu0
  %v1838 = vadd.f32 %v1702, %v1837
  %v1839 = vpop.f32.mrb[0].mxu0
  %v1840 = vpop.f32.mrb[0].mxu0
  %v1841 = vadd.f32 %v1705, %v1840
  %v1842 = vpop.f32.mrb[0].mxu0
  %1843 = vmatprep.mubr.bf16.mxu0 %v756
  %1844 = vmatmul.mubr.bf16.gmra.mrb[0].mxu0 %v755
  %v1845 = vpop.f32.mrb[0].mxu0
  %v1846 = vadd.f32 %v1710, %v1845
  %v1847 = vpop.f32.mrb[0].mxu0
  %v1848 = vpop.f32.mrb[0].mxu0
  %v1849 = vpop.f32.mrb[0].mxu0
  %1850 = vdwg.mxu0
  %1851 = vmatprep.subr.bf16.mxu0 0
  %1852 = vmatpush1.bf16.msra.mxu0 %v1227
  %1853 = vmatprep.subr.bf16.mxu0 0
  %1854 = vmatpush1.bf16.msra.mxu0 %v1228
  %1855 = vmatprep.subr.bf16.mxu0 0
  %1856 = vmatpush1.bf16.msra.mxu0 %v1229
  %1857 = vmatprep.subr.bf16.mxu0 0
  %1858 = vmatpush1.bf16.msra.mxu0 %v1230
  %1859 = vmatprep.subr.bf16.mxu0 0
  %1860 = vmatpush1.bf16.msra.mxu0 %v1231
  %1861 = vmatprep.subr.bf16.mxu0 0
  %1862 = vmatpush1.bf16.msra.mxu0 %v1232
  %1863 = vmatprep.subr.bf16.mxu0 0
  %1864 = vmatpush1.bf16.msra.mxu0 %v1233
  %1865 = vmatprep.subr.bf16.mxu0 0
  %1866 = vmatpush1.bf16.msra.mxu0 %v1234
  %1867 = vmatprep.subr.bf16.mxu0 0
  %1868 = vmatpush1.bf16.msra.mxu0 0
  %1869 = vmatprep.subr.bf16.mxu0 0
  %1870 = vmatpush1.bf16.msra.mxu0 0
  %1871 = vmatprep.subr.bf16.mxu0 0
  %1872 = vmatpush1.bf16.msra.mxu0 0
  %1873 = vmatprep.subr.bf16.mxu0 0
  %1874 = vmatpush1.bf16.msra.mxu0 0
  %1875 = vmatprep.subr.bf16.mxu0 0
  %1876 = vmatpush1.bf16.msra.mxu0 0
  %1877 = vmatprep.subr.bf16.mxu0 0
  %1878 = vmatpush1.bf16.msra.mxu0 0
  %1879 = vmatprep.subr.bf16.mxu0 0
  %1880 = vmatpush1.bf16.msra.mxu0 0
  %1881 = vmatprep.subr.bf16.mxu0 0
  %1882 = vmatpush1.bf16.msra.mxu0 0
  %1883 = vmatprep.mubr.bf16.mxu0 0
  %1884 = vmatmul.mubr.bf16.gmra.mrb[0].mxu0 %v649
  %v1885 = vpop.f32.mrb[0].mxu0
  %v1886 = vadd.f32 %v1750, %v1885
  %v1887 = vpop.f32.mrb[0].mxu0
  %v1888 = vpop.f32.mrb[0].mxu0
  %v1889 = vadd.f32 %v1753, %v1888
  %v1890 = vpop.f32.mrb[0].mxu0
  %1891 = vmatprep.mubr.bf16.mxu0 0
  %1892 = vmatmul.mubr.bf16.gmra.mrb[0].mxu0 %v658
  %v1893 = vpop.f32.mrb[0].mxu0
  %v1894 = vadd.f32 %v1758, %v1893
  %v1895 = vpop.f32.mrb[0].mxu0
  %v1896 = vpop.f32.mrb[0].mxu0
  %v1897 = vadd.f32 %v1761, %v1896
  %v1898 = vpop.f32.mrb[0].mxu0
  %1899 = vmatprep.mubr.bf16.mxu0 0
  %1900 = vmatmul.mubr.bf16.gmra.mrb[0].mxu0 %v667
  %v1901 = vpop.f32.mrb[0].mxu0
  %v1902 = vadd.f32 %v1766, %v1901
  %v1903 = vpop.f32.mrb[0].mxu0
  %v1904 = vpop.f32.mrb[0].mxu0
  %v1905 = vadd.f32 %v1769, %v1904
  %v1906 = vpop.f32.mrb[0].mxu0
  %1907 = vmatprep.mubr.bf16.mxu0 0
  %1908 = vmatmul.mubr.bf16.gmra.mrb[0].mxu0 %v676
  %v1909 = vpop.f32.mrb[0].mxu0
  %v1910 = vadd.f32 %v1774, %v1909
  %v1911 = vpop.f32.mrb[0].mxu0
  %v1912 = vpop.f32.mrb[0].mxu0
  %v1913 = vadd.f32 %v1777, %v1912
  %v1914 = vpop.f32.mrb[0].mxu0
  %1915 = vmatprep.mubr.bf16.mxu0 0
  %1916 = vmatmul.mubr.bf16.gmra.mrb[0].mxu0 %v685
  %v1917 = vpop.f32.mrb[0].mxu0
  %v1918 = vadd.f32 %v1782, %v1917
  %v1919 = vpop.f32.mrb[0].mxu0
  %v1920 = vpop.f32.mrb[0].mxu0
  %v1921 = vadd.f32 %v1785, %v1920
  %v1922 = vpop.f32.mrb[0].mxu0
  %1923 = vmatprep.mubr.bf16.mxu0 0
  %1924 = vmatmul.mubr.bf16.gmra.mrb[0].mxu0 %v694
  %v1925 = vpop.f32.mrb[0].mxu0
  %v1926 = vadd.f32 %v1790, %v1925
  %v1927 = vpop.f32.mrb[0].mxu0
  %v1928 = vpop.f32.mrb[0].mxu0
  %v1929 = vadd.f32 %v1793, %v1928
  %v1930 = vpop.f32.mrb[0].mxu0
  %1931 = vmatprep.mubr.bf16.mxu0 0
  %1932 = vmatmul.mubr.bf16.gmra.mrb[0].mxu0 %v703
  %v1933 = vpop.f32.mrb[0].mxu0
  %v1934 = vadd.f32 %v1798, %v1933
  %v1935 = vpop.f32.mrb[0].mxu0
  %v1936 = vpop.f32.mrb[0].mxu0
  %v1937 = vadd.f32 %v1801, %v1936
  %v1938 = vpop.f32.mrb[0].mxu0
  %1939 = vmatprep.mubr.bf16.mxu0 0
  %1940 = vmatmul.mubr.bf16.gmra.mrb[0].mxu0 %v712
  %v1941 = vpop.f32.mrb[0].mxu0
  %v1942 = vadd.f32 %v1806, %v1941
  %v1943 = vpop.f32.mrb[0].mxu0
  %v1944 = vpop.f32.mrb[0].mxu0
  %v1945 = vadd.f32 %v1809, %v1944
  %v1946 = vpop.f32.mrb[0].mxu0
  %1947 = vmatprep.mubr.bf16.mxu0 0
  %1948 = vmatmul.mubr.bf16.gmra.mrb[0].mxu0 %v721
  %v1949 = vpop.f32.mrb[0].mxu0
  %v1950 = vadd.f32 %v1814, %v1949
  %v1951 = vpop.f32.mrb[0].mxu0
  %v1952 = vpop.f32.mrb[0].mxu0
  %v1953 = vadd.f32 %v1817, %v1952
  %v1954 = vpop.f32.mrb[0].mxu0
  %1955 = vmatprep.mubr.bf16.mxu0 0
  %1956 = vmatmul.mubr.bf16.gmra.mrb[0].mxu0 %v730
  %v1957 = vpop.f32.mrb[0].mxu0
  %v1958 = vadd.f32 %v1822, %v1957
  %v1959 = vpop.f32.mrb[0].mxu0
  %v1960 = vpop.f32.mrb[0].mxu0
  %v1961 = vadd.f32 %v1825, %v1960
  %v1962 = vpop.f32.mrb[0].mxu0
  %1963 = vmatprep.mubr.bf16.mxu0 0
  %1964 = vmatmul.mubr.bf16.gmra.mrb[0].mxu0 %v739
  %v1965 = vpop.f32.mrb[0].mxu0
  %v1966 = vadd.f32 %v1830, %v1965
  %v1967 = vpop.f32.mrb[0].mxu0
  %v1968 = vpop.f32.mrb[0].mxu0
  %v1969 = vadd.f32 %v1833, %v1968
  %v1970 = vpop.f32.mrb[0].mxu0
  %1971 = vmatprep.mubr.bf16.mxu0 0
  %1972 = vmatmul.mubr.bf16.gmra.mrb[0].mxu0 %v748
  %v1973 = vpop.f32.mrb[0].mxu0
  %v1974 = vadd.f32 %v1838, %v1973
  %v1975 = vpop.f32.mrb[0].mxu0
  %v1976 = vpop.f32.mrb[0].mxu0
  %v1977 = vadd.f32 %v1841, %v1976
  %v1978 = vpop.f32.mrb[0].mxu0
  %1979 = vmatprep.mubr.bf16.mxu0 0
  %1980 = vmatmul.mubr.bf16.gmra.mrb[0].mxu0 %v757
  %v1981 = vpop.f32.mrb[0].mxu0
  %v1982 = vadd.f32 %v1846, %v1981
  %v1983 = vpop.f32.mrb[0].mxu0
  %v1984 = vpop.f32.mrb[0].mxu0
  %v1985 = vpop.f32.mrb[0].mxu0
  %1986 = vdwg.mxu0
  %v1987 = vmax.f32 %v1886, 0.0
  %v1988 = vmax.f32 %v1889, 0.0
  %v1989 = vmax.f32 %v1894, 0.0
  %v1990 = vmax.f32 %v1897, 0.0
  %v1991 = vmax.f32 %v1902, 0.0
  %v1992 = vmax.f32 %v1905, 0.0
  %v1993 = vmax.f32 %v1910, 0.0
  %v1994 = vmax.f32 %v1913, 0.0
  %v1995 = vmax.f32 %v1918, 0.0
  %v1996 = vmax.f32 %v1921, 0.0
  %v1997 = vmax.f32 %v1926, 0.0
  %v1998 = vmax.f32 %v1929, 0.0
  %v1999 = vmax.f32 %v1934, 0.0
  %v2000 = vmax.f32 %v1937, 0.0
  %v2001 = vmax.f32 %v1942, 0.0
  %v2002 = vmax.f32 %v1945, 0.0
  %v2003 = vmax.f32 %v1950, 0.0
  %v2004 = vmax.f32 %v1953, 0.0
  %v2005 = vmax.f32 %v1958, 0.0
  %v2006 = vmax.f32 %v1961, 0.0
  %v2007 = vmax.f32 %v1966, 0.0
  %v2008 = vmax.f32 %v1969, 0.0
  %v2009 = vmax.f32 %v1974, 0.0
  %v2010 = vmax.f32 %v1977, 0.0
  %v2011 = vmax.f32 %v1982, 0.0
  %v2012 = vpack.c.bf16 %v1988, %v1987
  %v2013 = vpack.c.bf16 %v1990, %v1989
  %v2014 = vpack.c.bf16 %v1992, %v1991
  %v2015 = vpack.c.bf16 %v1994, %v1993
  %v2016 = vpack.c.bf16 %v1996, %v1995
  %v2017 = vpack.c.bf16 %v1998, %v1997
  %v2018 = vpack.c.bf16 %v2000, %v1999
  %v2019 = vpack.c.bf16 %v2002, %v2001
  %v2020 = vpack.c.bf16 %v2004, %v2003
  %v2021 = vpack.c.bf16 %v2006, %v2005
  %v2022 = vpack.c.bf16 %v2008, %v2007
  %v2023 = vpack.c.bf16 %v2010, %v2009
  %v2024 = vpack.c.bf16 %v2011, %v2011
  %v2038 = vunpack.c.l.b16 %v2012
  %v2039 = vunpack.c.h.b16 %v2012
  %v2040 = vunpack.c.l.b16 %v2013
  %v2041 = vunpack.c.h.b16 %v2013
  %v2042 = vunpack.c.l.b16 %v2014
  %v2043 = vunpack.c.h.b16 %v2014
  %v2044 = vunpack.c.l.b16 %v2015
  %v2045 = vunpack.c.h.b16 %v2015
  %v2046 = vunpack.c.l.b16 %v2016
  %v2047 = vunpack.c.h.b16 %v2016
  %v2048 = vunpack.c.l.b16 %v2017
  %v2049 = vunpack.c.h.b16 %v2017
  %v2050 = vunpack.c.l.b16 %v2018
  %v2051 = vunpack.c.h.b16 %v2018
  %v2052 = vunpack.c.l.b16 %v2019
  %v2053 = vunpack.c.h.b16 %v2019
  %v2054 = vunpack.c.l.b16 %v2020
  %v2055 = vunpack.c.h.b16 %v2020
  %v2056 = vunpack.c.l.b16 %v2021
  %v2057 = vunpack.c.h.b16 %v2021
  %v2058 = vunpack.c.l.b16 %v2022
  %v2059 = vunpack.c.h.b16 %v2022
  %v2060 = vunpack.c.l.b16 %v2023
  %v2061 = vunpack.c.h.b16 %v2023
  %v2062 = vunpack.c.l.b16 %v2024
  %v2063 = vpack.c.b16 %v2038, %v2038
  %v2064 = vpack.c.b16 %v2039, %v2039
  %v2065 = vpack.c.b16 %v2040, %v2040
  %v2066 = vpack.c.b16 %v2041, %v2041
  %v2067 = vpack.c.b16 %v2042, %v2042
  %v2068 = vpack.c.b16 %v2043, %v2043
  %v2069 = vpack.c.b16 %v2044, %v2044
  %v2070 = vpack.c.b16 %v2045, %v2045
  %v2071 = vpack.c.b16 %v2046, %v2046
  %v2072 = vpack.c.b16 %v2047, %v2047
  %v2073 = vpack.c.b16 %v2048, %v2048
  %v2074 = vpack.c.b16 %v2049, %v2049
  %v2075 = vpack.c.b16 %v2050, %v2050
  %v2076 = vpack.c.b16 %v2051, %v2051
  %v2077 = vpack.c.b16 %v2052, %v2052
  %v2078 = vpack.c.b16 %v2053, %v2053
  %v2079 = vpack.c.b16 %v2054, %v2054
  %v2080 = vpack.c.b16 %v2055, %v2055
  %v2081 = vpack.c.b16 %v2056, %v2056
  %v2082 = vpack.c.b16 %v2057, %v2057
  %v2083 = vpack.c.b16 %v2058, %v2058
  %v2084 = vpack.c.b16 %v2059, %v2059
  %v2085 = vpack.c.b16 %v2060, %v2060
  %v2086 = vpack.c.b16 %v2061, %v2061
  %v2087 = vpack.c.b16 %v2062, %v2062
  %2113 = vst [vmem:[%s3] sm:$0xf] %v2063
  %2114 = vst [vmem:[%s3 + $0x4] sm:$0xf] %v2064
  %2115 = vst [vmem:[%s3 + $0x8] sm:$0xf] %v2065
  %2116 = vst [vmem:[%s3 + $0xc] sm:$0xf] %v2066
  %2117 = vst [vmem:[%s3 + $0x10] sm:$0xf] %v2067
  %2118 = vst [vmem:[%s3 + $0x14] sm:$0xf] %v2068
  %2119 = vst [vmem:[%s3 + $0x18] sm:$0xf] %v2069
  %2120 = vst [vmem:[%s3 + $0x1c] sm:$0xf] %v2070
  %2121 = vst [vmem:[%s3 + $0x20] sm:$0xf] %v2071
  %2122 = vst [vmem:[%s3 + $0x24] sm:$0xf] %v2072
  %2123 = vst [vmem:[%s3 + $0x28] sm:$0xf] %v2073
  %2124 = vst [vmem:[%s3 + $0x2c] sm:$0xf] %v2074
  %2125 = vst [vmem:[%s3 + $0x30] sm:$0xf] %v2075
  %2126 = vst [vmem:[%s3 + $0x34] sm:$0xf] %v2076
  %2127 = vst [vmem:[%s3 + $0x38] sm:$0xf] %v2077
  %2128 = vst [vmem:[%s3 + $0x3c] sm:$0xf] %v2078
  %2129 = vst [vmem:[%s3 + $0x40] sm:$0xf] %v2079
  %2130 = vst [vmem:[%s3 + $0x44] sm:$0xf] %v2080
  %2131 = vst [vmem:[%s3 + $0x48] sm:$0xf] %v2081
  %2132 = vst [vmem:[%s3 + $0x4c] sm:$0xf] %v2082
  %2133 = vst [vmem:[%s3 + $0x50] sm:$0xf] %v2083
  %2134 = vst [vmem:[%s3 + $0x54] sm:$0xf] %v2084
  %2135 = vst [vmem:[%s3 + $0x58] sm:$0xf] %v2085
  %2136 = vst [vmem:[%s3 + $0x5c] sm:$0xf] %v2086
  %2137 = vst [vmem:[%s3 + $0x60] sm:$0xf] %v2087
  // Predicated region
  $region14: #{qnetwork_forward.6} parent=0 // pred_check
    _
  $region15: #{qnetwork_forward.6} parent=0 // pred_check_branch
    %2139 = sbr.rel (0) target = $region17
  $region16: #{qnetwork_forward.6} parent=0 // pred_region
    _
  $region17: #{qnetwork_forward.6} parent=0 // pred_fallthru
    _
  // Predicated region
  $region18: #{qnetwork_forward.6} parent=0 // pred_check
    _
  $region19: #{qnetwork_forward.6} parent=0 // pred_check_branch
    %2141 = sbr.rel (0) target = $region21
  $region20: #{qnetwork_forward.6} parent=0 // pred_region
    _
  $region21: #{qnetwork_forward.6} parent=0 // pred_fallthru
    _

// kernel: qnetwork_forward.7
$region0: #{qnetwork_forward.7}
  #allocation0 [shape = 'u32[]', space=smem, size = 0x4, offset = 0x4, fixed_abs, tag = 'smem constant byte address 0x4 - core index']
  #allocation1 [shape = 'u32[144,128]{1,0:T(1,128)}', space=vmem, size = 0x12000, scoped, tag = 'internal scratch']
  #allocation2 [shape = 'f32[2,256]{1,0:T(2,128)}', space=vmem, size = 0x800, scoped, tag = 'scratch operand']
  %s0 = inlined_call_operand.vmem [shape: bf16[2,12800], index: 0, kind: input, shape index: {}]
  %s1 = inlined_call_operand.vmem [shape: bf16[12800,256], index: 1, kind: input, shape index: {}]
  %s2 = inlined_call_operand.vmem [shape: f32[1,256], index: 2, kind: input, shape index: {}]
  %s3 = inlined_call_operand.vmem [shape: f32[256,128], index: 3, kind: input, shape index: {}]
  %s4 = inlined_call_operand.vmem [shape: f32[1,128], index: 4, kind: input, shape index: {}]
  %s5 = inlined_call_operand.hbm [shape: f32[2,128], index: 5, kind: output, shape index: {}]
  %s6 = sld [smem:[#allocation0]]
  $region61: #{qnetwork_forward.7} parent=0
    _
  %s8 = ssub.s32 1, %s6
  %s9 = scalar_select 0, %s8, %s6
  $region1: #{qnetwork_forward.7} parent=0
    #allocation3 [shape = 'u8[1024]{0}', space=vmem, size = 0x400, scoped, tag = 'output window, operand 0, single buffered']
    #allocation4 [shape = 's32[2]{0}', space=sflag, size = 0x8, scoped, tag = 'scoped memory for qnetwork_forward.7']
    %10 = vsyncpa [#allocation4], 0
    loop: start=0, step=1, limit=7
    $region2: #{qnetwork_forward.7} parent=1 // loop_pre_header
      _
    $region3: #{qnetwork_forward.7} parent=1 // loop_header
      %s12 = sphi 0, %s16
      %p13 = scmp.ge.s32.totalorder %s12, 7
      %s22 = sphi 0, %s24
      %s25 = sphi 0, %s22
      %s26 = sphi 0, %s25
      %s42 = sphi 0, %s26
      %s48 = sphi 0, %s50
      %s51 = sphi 0, %s48
      %s52 = sphi 0, %s51
      %s68 = sphi 0, %s52
      %s72 = sphi 0, %s72
      %s74 = sphi 0, %s72
      %s75 = sphi 0, %s74
      %s89 = sphi 0, %s75
      %s93 = sphi 0, %s93
      %s95 = sphi 0, %s93
      %s96 = sphi 0, %s95
      %s110 = sphi 0, %s96
      %s114 = sphi 0, %s114
      %s116 = sphi 0, %s114
      %s117 = sphi 0, %s116
      %s131 = sphi 0, %s117
      %s135 = sphi 0, %s135
      %s137 = sphi 0, %s135
      %s138 = sphi 0, %s137
      %s152 = sphi 0, %s138
    $region4: #{qnetwork_forward.7} parent=1 // loop_header_branch
      %15 = sbr.rel (%p13) target = $region8
    $region5: #{qnetwork_forward.7} parent=1 // loop_body
      %s17 = ssub.s32 %s12, 1
      %s18 = ssub.s32 %s12, 2
      %s19 = sadd.s32 %s12, 1
      %s20 = ssub.s32 %s12, %s19
      %p21 = scmp.eq.s32.totalorder %s20, 0
      %s23 = sadd.s32 %s22, 1
      %s24 = scalar_select %p21, %s22, %s23
      %p27 = pneg %p21
      %p28 = scmp.eq.s32.totalorder %s12, 4
      %p29 = por %p27, %p28
      %p30 = scmp.ne.s32.totalorder %s22, %s25
      %p31 = scmp.eq.s32.totalorder %s12, 0
      %p32 = por %p30, %p31
      %p33 = scmp.ne.s32.totalorder %s22, %s25
      %p34 = scmp.eq.s32.totalorder %s17, 4
      %p35 = por %p33, %p34
      %p36 = scmp.ne.s32.totalorder %s25, %s26
      %p37 = scmp.eq.s32.totalorder %s17, 0
      %p38 = por %p36, %p37
      %p39 = scmp.ne.s32.totalorder %s25, %s26
      %p40 = scmp.eq.s32.totalorder %s18, 4
      %p41 = por %p39, %p40
      %p43 = scmp.ne.s32.totalorder %s26, %s42
      %p44 = scmp.eq.s32.totalorder %s18, 0
      %p45 = por %p43, %p44
      %s46 = ssub.s32 %s12, %s19
      %p47 = scmp.eq.s32.totalorder %s46, 0
      %s49 = sadd.s32 %s48, 1
      %s50 = scalar_select %p47, %s48, %s49
      %p53 = pneg %p47
      %p54 = scmp.eq.s32.totalorder %s12, 4
      %p55 = por %p53, %p54
      %p56 = scmp.ne.s32.totalorder %s48, %s51
      %p57 = scmp.eq.s32.totalorder %s12, 0
      %p58 = por %p56, %p57
      %p59 = scmp.ne.s32.totalorder %s48, %s51
      %p60 = scmp.eq.s32.totalorder %s17, 4
      %p61 = por %p59, %p60
      %p62 = scmp.ne.s32.totalorder %s51, %s52
      %p63 = scmp.eq.s32.totalorder %s17, 0
      %p64 = por %p62, %p63
      %p65 = scmp.ne.s32.totalorder %s51, %s52
      %p66 = scmp.eq.s32.totalorder %s18, 4
      %p67 = por %p65, %p66
      %p69 = scmp.ne.s32.totalorder %s52, %s68
      %p70 = scmp.eq.s32.totalorder %s18, 0
      %p71 = por %p69, %p70
      %s73 = sadd.s32 %s72, 1
      %p76 = scmp.eq.s32.totalorder %s12, 4
      %p77 = scmp.ne.s32.totalorder %s72, %s74
      %p78 = scmp.eq.s32.totalorder %s12, 0
      %p79 = por %p77, %p78
      %p80 = scmp.ne.s32.totalorder %s72, %s74
      %p81 = scmp.eq.s32.totalorder %s17, 4
      %p82 = por %p80, %p81
      %p83 = scmp.ne.s32.totalorder %s74, %s75
      %p84 = scmp.eq.s32.totalorder %s17, 0
      %p85 = por %p83, %p84
      %p86 = scmp.ne.s32.totalorder %s74, %s75
      %p87 = scmp.eq.s32.totalorder %s18, 4
      %p88 = por %p86, %p87
      %p90 = scmp.ne.s32.totalorder %s75, %s89
      %p91 = scmp.eq.s32.totalorder %s18, 0
      %p92 = por %p90, %p91
      %s94 = sadd.s32 %s93, 1
      %p97 = scmp.eq.s32.totalorder %s12, 4
      %p98 = scmp.ne.s32.totalorder %s93, %s95
      %p99 = scmp.eq.s32.totalorder %s12, 0
      %p100 = por %p98, %p99
      %p101 = scmp.ne.s32.totalorder %s93, %s95
      %p102 = scmp.eq.s32.totalorder %s17, 4
      %p103 = por %p101, %p102
      %p104 = scmp.ne.s32.totalorder %s95, %s96
      %p105 = scmp.eq.s32.totalorder %s17, 0
      %p106 = por %p104, %p105
      %p107 = scmp.ne.s32.totalorder %s95, %s96
      %p108 = scmp.eq.s32.totalorder %s18, 4
      %p109 = por %p107, %p108
      %p111 = scmp.ne.s32.totalorder %s96, %s110
      %p112 = scmp.eq.s32.totalorder %s18, 0
      %p113 = por %p111, %p112
      %s115 = sadd.s32 %s114, 1
      %p118 = scmp.eq.s32.totalorder %s12, 4
      %p119 = scmp.ne.s32.totalorder %s114, %s116
      %p120 = scmp.eq.s32.totalorder %s12, 0
      %p121 = por %p119, %p120
      %p122 = scmp.ne.s32.totalorder %s114, %s116
      %p123 = scmp.eq.s32.totalorder %s17, 4
      %p124 = por %p122, %p123
      %p125 = scmp.ne.s32.totalorder %s116, %s117
      %p126 = scmp.eq.s32.totalorder %s17, 0
      %p127 = por %p125, %p126
      %p128 = scmp.ne.s32.totalorder %s116, %s117
      %p129 = scmp.eq.s32.totalorder %s18, 4
      %p130 = por %p128, %p129
      %p132 = scmp.ne.s32.totalorder %s117, %s131
      %p133 = scmp.eq.s32.totalorder %s18, 0
      %p134 = por %p132, %p133
      %s136 = sadd.s32 %s135, 1
      %p139 = scmp.eq.s32.totalorder %s12, 4
      %p140 = scmp.ne.s32.totalorder %s135, %s137
      %p141 = scmp.eq.s32.totalorder %s12, 0
      %p142 = por %p140, %p141
      %p143 = scmp.ne.s32.totalorder %s135, %s137
      %p144 = scmp.eq.s32.totalorder %s17, 4
      %p145 = por %p143, %p144
      %p146 = scmp.ne.s32.totalorder %s137, %s138
      %p147 = scmp.eq.s32.totalorder %s17, 0
      %p148 = por %p146, %p147
      %p149 = scmp.ne.s32.totalorder %s137, %s138
      %p150 = scmp.eq.s32.totalorder %s18, 4
      %p151 = por %p149, %p150
      %p153 = scmp.ne.s32.totalorder %s138, %s152
      %p154 = scmp.eq.s32.totalorder %s18, 0
      %p155 = por %p153, %p154
      %p156 = scmp.le.s32.totalorder 1, %s12
      %p157 = scmp.lt.s32.totalorder %s12, 6
      %p158 = pnand %p156, %p157
      %p159 = pneg %p158
      // Predicated region
      $region9: #{qnetwork_forward.7} parent=5 // pred_check
        _
      $region10: #{qnetwork_forward.7} parent=5 // pred_check_branch
        %161 = sbr.rel (%p158) target = $region12
      $region11: #{qnetwork_forward.7} parent=5 // pred_region
        %s162 = ssub.s32 %s12, 1
        // Predicated region
        $region13: #{qnetwork_forward.7} parent=11 // pred_check
          %p163 = pneg %p85
        $region14: #{qnetwork_forward.7} parent=11 // pred_check_branch
          %165 = sbr.rel (%p163) target = $region16
        $region15: #{qnetwork_forward.7} parent=11 // pred_region
          _
        $region16: #{qnetwork_forward.7} parent=11 // pred_fallthru
          _
        // Predicated region
        $region17: #{qnetwork_forward.7} parent=11 // pred_check
          %p166 = pneg %p106
        $region18: #{qnetwork_forward.7} parent=11 // pred_check_branch
          %168 = sbr.rel (%p166) target = $region20
        $region19: #{qnetwork_forward.7} parent=11 // pred_region
          _
        $region20: #{qnetwork_forward.7} parent=11 // pred_fallthru
          _
        // Predicated region
        $region21: #{qnetwork_forward.7} parent=11 // pred_check
          %p169 = pneg %p127
        $region22: #{qnetwork_forward.7} parent=11 // pred_check_branch
          %171 = sbr.rel (%p169) target = $region24
        $region23: #{qnetwork_forward.7} parent=11 // pred_region
          _
        $region24: #{qnetwork_forward.7} parent=11 // pred_fallthru
          _
      $region12: #{qnetwork_forward.7} parent=5 // pred_fallthru
        _
      %p172 = scmp.lt.s32.totalorder %s12, 5
      // Predicated region
      $region25: #{qnetwork_forward.7} parent=5 // pred_check
        %p173 = pneg %p172
      $region26: #{qnetwork_forward.7} parent=5 // pred_check_branch
        %175 = sbr.rel (%p173) target = $region28
      $region27: #{qnetwork_forward.7} parent=5 // pred_region
        // Predicated region
        $region29: #{qnetwork_forward.7} parent=27 // pred_check
          %p176 = pneg %p32
        $region30: #{qnetwork_forward.7} parent=27 // pred_check_branch
          %178 = sbr.rel (%p176) target = $region32
        $region31: #{qnetwork_forward.7} parent=27 // pred_region
          %s179 = smul.u32 20, %s12
          %p180 = scmp.lt.s32.totalorder %s179, 99
          %s181 = scalar_select %p180, %s179, 99
          %s182 = scalar_lea.vmem %s0, %s181
          %s183 = smul.u32 20, %s12
        $region32: #{qnetwork_forward.7} parent=27 // pred_fallthru
          _
        // Predicated region
        $region33: #{qnetwork_forward.7} parent=27 // pred_check
          %p184 = pneg %p58
        $region34: #{qnetwork_forward.7} parent=27 // pred_check_branch
          %186 = sbr.rel (%p184) target = $region36
        $region35: #{qnetwork_forward.7} parent=27 // pred_region
          %s187 = smul.u32 320, %s12
          %p188 = scmp.lt.s32.totalorder %s187, 1599
          %s189 = scalar_select %p188, %s187, 1599
          %s190 = smul.addr %s189, 2
          %s191 = smul.addr %s190, 4
          %s192 = scalar_lea.vmem %s1, %s191
          %s193 = smul.u32 320, %s12
        $region36: #{qnetwork_forward.7} parent=27 // pred_fallthru
          _
      $region28: #{qnetwork_forward.7} parent=5 // pred_fallthru
        _
      %p194 = scmp.le.s32.totalorder 1, %s12
      %p195 = scmp.lt.s32.totalorder %s12, 6
      %p196 = pnand %p194, %p195
      %p197 = pneg %p196
      // Predicated region
      $region37: #{qnetwork_forward.7} parent=5 // pred_check
        _
      $region38: #{qnetwork_forward.7} parent=5 // pred_check_branch
        %199 = sbr.rel (%p196) target = $region40
      $region39: #{qnetwork_forward.7} parent=5 // pred_region
        %s200 = ssub.s32 %s12, 1
        %s201 = smul.u32 20, %s17
        %p202 = scmp.lt.s32.totalorder %s201, 99
        %s203 = scalar_select %p202, %s201, 99
        %s204 = scalar_lea.vmem %s0, %s203
        %p205 = pneg %p38
        %p206 = pneg %p35
        %s207 = smul.u32 320, %s17
        %p208 = scmp.lt.s32.totalorder %s207, 1599
        %s209 = scalar_select %p208, %s207, 1599
        %s210 = smul.addr %s209, 2
        %s211 = smul.addr %s210, 4
        %s212 = scalar_lea.vmem %s1, %s211
        %p213 = pneg %p64
        %p214 = pneg %p61
        %p215 = pneg %p85
        %p216 = pneg %p82
        %p217 = pneg %p106
        %p218 = pneg %p103
        %p219 = pneg %p127
        %p220 = pneg %p124
        %p221 = pneg %p148
        %p222 = pneg %p145
        %s223 = smul.u32 20, %s17
        %p224 = scmp.lt.s32.totalorder %s223, 99
        %s225 = scalar_select %p224, %s223, 99
        %s226 = scalar_lea.vmem %s0, %s225
        %s227 = smul.u32 20, %s17
        %s228 = smul.u32 320, %s17
        %p229 = scmp.lt.s32.totalorder %s228, 1599
        %s230 = scalar_select %p229, %s228, 1599
        %s231 = smul.addr %s230, 2
        %s232 = smul.addr %s231, 4
        %s233 = scalar_lea.vmem %s1, %s232
        %s234 = smul.u32 320, %s17
        %p235 = scmp.eq.s32.totalorder %s17, 0
        // Predicated region
        $region41: #{qnetwork_forward.7} parent=39 // pred_check
          %p236 = pneg %p235
        $region42: #{qnetwork_forward.7} parent=39 // pred_check_branch
          %238 = sbr.rel (%p236) target = $region44
        $region43: #{qnetwork_forward.7} parent=39 // pred_region
          %239 = vst [vmem:[#allocation2] sm:$0xf] 0.0
        $region44: #{qnetwork_forward.7} parent=39 // pred_fallthru
          _
        %v240 = vld [vmem:[#allocation2] sm:$0xf]
        %v241 = vld [vmem:[%s226] sm:$0xff]
        %v242 = vld [vmem:[%s226 + $0x8] sm:$0xff]
        %v243 = vld [vmem:[%s226 + $0x10] sm:$0xf]
        %v244 = vld [vmem:[%s233] sm:$0xff]
        %v245 = vld [vmem:[%s233 + $0x8] sm:$0xff]
        %v246 = vld [vmem:[%s233 + $0x10] sm:$0xff]
        %v247 = vld [vmem:[%s233 + $0x18] sm:$0xff]
        %v248 = vld [vmem:[%s233 + $0x20] sm:$0xff]
        %v249 = vld [vmem:[%s233 + $0x28] sm:$0xff]
        %v250 = vld [vmem:[%s233 + $0x30] sm:$0xff]
        %v251 = vld [vmem:[%s233 + $0x38] sm:$0xff]
        %v252 = vld [vmem:[%s233 + $0x40] sm:$0xff]
        %v253 = vld [vmem:[%s233 + $0x48] sm:$0xff]
        %v254 = vld [vmem:[%s233 + $0x50] sm:$0xff]
        %v255 = vld [vmem:[%s233 + $0x58] sm:$0xff]
        %v256 = vld [vmem:[%s233 + $0x60] sm:$0xff]
        %v257 = vld [vmem:[%s233 + $0x68] sm:$0xff]
        %v258 = vld [vmem:[%s233 + $0x70] sm:$0xff]
        %v259 = vld [vmem:[%s233 + $0x78] sm:$0xff]
        %v260 = vld [vmem:[%s233 + $0x80] sm:$0xff]
        %v261 = vld [vmem:[%s233 + $0x88] sm:$0xff]
        %v262 = vld [vmem:[%s233 + $0x90] sm:$0xff]
        %v263 = vld [vmem:[%s233 + $0x98] sm:$0xff]
        %v264 = vld [vmem:[%s233 + $0xa0] sm:$0xff]
        %v265 = vld [vmem:[%s233 + $0xa8] sm:$0xff]
        %v266 = vld [vmem:[%s233 + $0xb0] sm:$0xff]
        %v267 = vld [vmem:[%s233 + $0xb8] sm:$0xff]
        %v268 = vld [vmem:[%s233 + $0xc0] sm:$0xff]
        %v269 = vld [vmem:[%s233 + $0xc8] sm:$0xff]
        %v270 = vld [vmem:[%s233 + $0xd0] sm:$0xff]
        %v271 = vld [vmem:[%s233 + $0xd8] sm:$0xff]
        %v272 = vld [vmem:[%s233 + $0xe0] sm:$0xff]
        %v273 = vld [vmem:[%s233 + $0xe8] sm:$0xff]
        %v274 = vld [vmem:[%s233 + $0xf0] sm:$0xff]
        %v275 = vld [vmem:[%s233 + $0xf8] sm:$0xff]
        %v276 = vld [vmem:[%s233 + $0x100] sm:$0xff]
        %v277 = vld [vmem:[%s233 + $0x108] sm:$0xff]
        %v278 = vld [vmem:[%s233 + $0x110] sm:$0xff]
        %v279 = vld [vmem:[%s233 + $0x118] sm:$0xff]
        %v280 = vld [vmem:[%s233 + $0x120] sm:$0xff]
        %v281 = vld [vmem:[%s233 + $0x128] sm:$0xff]
        %v282 = vld [vmem:[%s233 + $0x130] sm:$0xff]
        %v283 = vld [vmem:[%s233 + $0x138] sm:$0xff]
        %v284 = vld [vmem:[%s233 + $0x140] sm:$0xff]
        %v285 = vld [vmem:[%s233 + $0x148] sm:$0xff]
        %v286 = vld [vmem:[%s233 + $0x150] sm:$0xff]
        %v287 = vld [vmem:[%s233 + $0x158] sm:$0xff]
        %v288 = vld [vmem:[%s233 + $0x160] sm:$0xff]
        %v289 = vld [vmem:[%s233 + $0x168] sm:$0xff]
        %v290 = vld [vmem:[%s233 + $0x170] sm:$0xff]
        %v291 = vld [vmem:[%s233 + $0x178] sm:$0xff]
        %v292 = vld [vmem:[%s233 + $0x180] sm:$0xff]
        %v293 = vld [vmem:[%s233 + $0x188] sm:$0xff]
        %v294 = vld [vmem:[%s233 + $0x190] sm:$0xff]
        %v295 = vld [vmem:[%s233 + $0x198] sm:$0xff]
        %v296 = vld [vmem:[%s233 + $0x1a0] sm:$0xff]
        %v297 = vld [vmem:[%s233 + $0x1a8] sm:$0xff]
        %v298 = vld [vmem:[%s233 + $0x1b0] sm:$0xff]
        %v299 = vld [vmem:[%s233 + $0x1b8] sm:$0xff]
        %v300 = vld [vmem:[%s233 + $0x1c0] sm:$0xff]
        %v301 = vld [vmem:[%s233 + $0x1c8] sm:$0xff]
        %v302 = vld [vmem:[%s233 + $0x1d0] sm:$0xff]
        %v303 = vld [vmem:[%s233 + $0x1d8] sm:$0xff]
        %v304 = vld [vmem:[%s233 + $0x1e0] sm:$0xff]
        %v305 = vld [vmem:[%s233 + $0x1e8] sm:$0xff]
        %v306 = vld [vmem:[%s233 + $0x1f0] sm:$0xff]
        %v307 = vld [vmem:[%s233 + $0x1f8] sm:$0xff]
        %v308 = vld [vmem:[%s233 + $0x200] sm:$0xff]
        %v309 = vld [vmem:[%s233 + $0x208] sm:$0xff]
        %v310 = vld [vmem:[%s233 + $0x210] sm:$0xff]
        %v311 = vld [vmem:[%s233 + $0x218] sm:$0xff]
        %v312 = vld [vmem:[%s233 + $0x220] sm:$0xff]
        %v313 = vld [vmem:[%s233 + $0x228] sm:$0xff]
        %v314 = vld [vmem:[%s233 + $0x230] sm:$0xff]
        %v315 = vld [vmem:[%s233 + $0x238] sm:$0xff]
        %v316 = vld [vmem:[%s233 + $0x240] sm:$0xff]
        %v317 = vld [vmem:[%s233 + $0x248] sm:$0xff]
        %v318 = vld [vmem:[%s233 + $0x250] sm:$0xff]
        %v319 = vld [vmem:[%s233 + $0x258] sm:$0xff]
        %v320 = vld [vmem:[%s233 + $0x260] sm:$0xff]
        %v321 = vld [vmem:[%s233 + $0x268] sm:$0xff]
        %v322 = vld [vmem:[%s233 + $0x270] sm:$0xff]
        %v323 = vld [vmem:[%s233 + $0x278] sm:$0xff]
        %v324 = vld [vmem:[%s233 + $0x280] sm:$0xff]
        %v325 = vld [vmem:[%s233 + $0x288] sm:$0xff]
        %v326 = vld [vmem:[%s233 + $0x290] sm:$0xff]
        %v327 = vld [vmem:[%s233 + $0x298] sm:$0xff]
        %v328 = vld [vmem:[%s233 + $0x2a0] sm:$0xff]
        %v329 = vld [vmem:[%s233 + $0x2a8] sm:$0xff]
        %v330 = vld [vmem:[%s233 + $0x2b0] sm:$0xff]
        %v331 = vld [vmem:[%s233 + $0x2b8] sm:$0xff]
        %v332 = vld [vmem:[%s233 + $0x2c0] sm:$0xff]
        %v333 = vld [vmem:[%s233 + $0x2c8] sm:$0xff]
        %v334 = vld [vmem:[%s233 + $0x2d0] sm:$0xff]
        %v335 = vld [vmem:[%s233 + $0x2d8] sm:$0xff]
        %v336 = vld [vmem:[%s233 + $0x2e0] sm:$0xff]
        %v337 = vld [vmem:[%s233 + $0x2e8] sm:$0xff]
        %v338 = vld [vmem:[%s233 + $0x2f0] sm:$0xff]
        %v339 = vld [vmem:[%s233 + $0x2f8] sm:$0xff]
        %v340 = vld [vmem:[%s233 + $0x300] sm:$0xff]
        %v341 = vld [vmem:[%s233 + $0x308] sm:$0xff]
        %v342 = vld [vmem:[%s233 + $0x310] sm:$0xff]
        %v343 = vld [vmem:[%s233 + $0x318] sm:$0xff]
        %v344 = vld [vmem:[%s233 + $0x320] sm:$0xff]
        %v345 = vld [vmem:[%s233 + $0x328] sm:$0xff]
        %v346 = vld [vmem:[%s233 + $0x330] sm:$0xff]
        %v347 = vld [vmem:[%s233 + $0x338] sm:$0xff]
        %v348 = vld [vmem:[%s233 + $0x340] sm:$0xff]
        %v349 = vld [vmem:[%s233 + $0x348] sm:$0xff]
        %v350 = vld [vmem:[%s233 + $0x350] sm:$0xff]
        %v351 = vld [vmem:[%s233 + $0x358] sm:$0xff]
        %v352 = vld [vmem:[%s233 + $0x360] sm:$0xff]
        %v353 = vld [vmem:[%s233 + $0x368] sm:$0xff]
        %v354 = vld [vmem:[%s233 + $0x370] sm:$0xff]
        %v355 = vld [vmem:[%s233 + $0x378] sm:$0xff]
        %v356 = vld [vmem:[%s233 + $0x380] sm:$0xff]
        %v357 = vld [vmem:[%s233 + $0x388] sm:$0xff]
        %v358 = vld [vmem:[%s233 + $0x390] sm:$0xff]
        %v359 = vld [vmem:[%s233 + $0x398] sm:$0xff]
        %v360 = vld [vmem:[%s233 + $0x3a0] sm:$0xff]
        %v361 = vld [vmem:[%s233 + $0x3a8] sm:$0xff]
        %v362 = vld [vmem:[%s233 + $0x3b0] sm:$0xff]
        %v363 = vld [vmem:[%s233 + $0x3b8] sm:$0xff]
        %v364 = vld [vmem:[%s233 + $0x3c0] sm:$0xff]
        %v365 = vld [vmem:[%s233 + $0x3c8] sm:$0xff]
        %v366 = vld [vmem:[%s233 + $0x3d0] sm:$0xff]
        %v367 = vld [vmem:[%s233 + $0x3d8] sm:$0xff]
        %v368 = vld [vmem:[%s233 + $0x3e0] sm:$0xff]
        %v369 = vld [vmem:[%s233 + $0x3e8] sm:$0xff]
        %v370 = vld [vmem:[%s233 + $0x3f0] sm:$0xff]
        %v371 = vld [vmem:[%s233 + $0x3f8] sm:$0xff]
        %v372 = vld [vmem:[%s233 + $0x400] sm:$0xff]
        %v373 = vld [vmem:[%s233 + $0x408] sm:$0xff]
        %v374 = vld [vmem:[%s233 + $0x410] sm:$0xff]
        %v375 = vld [vmem:[%s233 + $0x418] sm:$0xff]
        %v376 = vld [vmem:[%s233 + $0x420] sm:$0xff]
        %v377 = vld [vmem:[%s233 + $0x428] sm:$0xff]
        %v378 = vld [vmem:[%s233 + $0x430] sm:$0xff]
        %v379 = vld [vmem:[%s233 + $0x438] sm:$0xff]
        %v380 = vld [vmem:[%s233 + $0x440] sm:$0xff]
        %v381 = vld [vmem:[%s233 + $0x448] sm:$0xff]
        %v382 = vld [vmem:[%s233 + $0x450] sm:$0xff]
        %v383 = vld [vmem:[%s233 + $0x458] sm:$0xff]
        %v384 = vld [vmem:[%s233 + $0x460] sm:$0xff]
        %v385 = vld [vmem:[%s233 + $0x468] sm:$0xff]
        %v386 = vld [vmem:[%s233 + $0x470] sm:$0xff]
        %v387 = vld [vmem:[%s233 + $0x478] sm:$0xff]
        %v388 = vld [vmem:[%s233 + $0x480] sm:$0xff]
        %v389 = vld [vmem:[%s233 + $0x488] sm:$0xff]
        %v390 = vld [vmem:[%s233 + $0x490] sm:$0xff]
        %v391 = vld [vmem:[%s233 + $0x498] sm:$0xff]
        %v392 = vld [vmem:[%s233 + $0x4a0] sm:$0xff]
        %v393 = vld [vmem:[%s233 + $0x4a8] sm:$0xff]
        %v394 = vld [vmem:[%s233 + $0x4b0] sm:$0xff]
        %v395 = vld [vmem:[%s233 + $0x4b8] sm:$0xff]
        %v396 = vld [vmem:[%s233 + $0x4c0] sm:$0xff]
        %v397 = vld [vmem:[%s233 + $0x4c8] sm:$0xff]
        %v398 = vld [vmem:[%s233 + $0x4d0] sm:$0xff]
        %v399 = vld [vmem:[%s233 + $0x4d8] sm:$0xff]
        %v400 = vld [vmem:[%s233 + $0x4e0] sm:$0xff]
        %v401 = vld [vmem:[%s233 + $0x4e8] sm:$0xff]
        %v402 = vld [vmem:[%s233 + $0x4f0] sm:$0xff]
        %v403 = vld [vmem:[%s233 + $0x4f8] sm:$0xff]
        %v404 = vld [vmem:[%s233 + $0x500] sm:$0xff]
        %v405 = vld [vmem:[%s233 + $0x508] sm:$0xff]
        %v406 = vld [vmem:[%s233 + $0x510] sm:$0xff]
        %v407 = vld [vmem:[%s233 + $0x518] sm:$0xff]
        %v408 = vld [vmem:[%s233 + $0x520] sm:$0xff]
        %v409 = vld [vmem:[%s233 + $0x528] sm:$0xff]
        %v410 = vld [vmem:[%s233 + $0x530] sm:$0xff]
        %v411 = vld [vmem:[%s233 + $0x538] sm:$0xff]
        %v412 = vld [vmem:[%s233 + $0x540] sm:$0xff]
        %v413 = vld [vmem:[%s233 + $0x548] sm:$0xff]
        %v414 = vld [vmem:[%s233 + $0x550] sm:$0xff]
        %v415 = vld [vmem:[%s233 + $0x558] sm:$0xff]
        %v416 = vld [vmem:[%s233 + $0x560] sm:$0xff]
        %v417 = vld [vmem:[%s233 + $0x568] sm:$0xff]
        %v418 = vld [vmem:[%s233 + $0x570] sm:$0xff]
        %v419 = vld [vmem:[%s233 + $0x578] sm:$0xff]
        %v420 = vld [vmem:[%s233 + $0x580] sm:$0xff]
        %v421 = vld [vmem:[%s233 + $0x588] sm:$0xff]
        %v422 = vld [vmem:[%s233 + $0x590] sm:$0xff]
        %v423 = vld [vmem:[%s233 + $0x598] sm:$0xff]
        %v424 = vld [vmem:[%s233 + $0x5a0] sm:$0xff]
        %v425 = vld [vmem:[%s233 + $0x5a8] sm:$0xff]
        %v426 = vld [vmem:[%s233 + $0x5b0] sm:$0xff]
        %v427 = vld [vmem:[%s233 + $0x5b8] sm:$0xff]
        %v428 = vld [vmem:[%s233 + $0x5c0] sm:$0xff]
        %v429 = vld [vmem:[%s233 + $0x5c8] sm:$0xff]
        %v430 = vld [vmem:[%s233 + $0x5d0] sm:$0xff]
        %v431 = vld [vmem:[%s233 + $0x5d8] sm:$0xff]
        %v432 = vld [vmem:[%s233 + $0x5e0] sm:$0xff]
        %v433 = vld [vmem:[%s233 + $0x5e8] sm:$0xff]
        %v434 = vld [vmem:[%s233 + $0x5f0] sm:$0xff]
        %v435 = vld [vmem:[%s233 + $0x5f8] sm:$0xff]
        %v436 = vld [vmem:[%s233 + $0x600] sm:$0xff]
        %v437 = vld [vmem:[%s233 + $0x608] sm:$0xff]
        %v438 = vld [vmem:[%s233 + $0x610] sm:$0xff]
        %v439 = vld [vmem:[%s233 + $0x618] sm:$0xff]
        %v440 = vld [vmem:[%s233 + $0x620] sm:$0xff]
        %v441 = vld [vmem:[%s233 + $0x628] sm:$0xff]
        %v442 = vld [vmem:[%s233 + $0x630] sm:$0xff]
        %v443 = vld [vmem:[%s233 + $0x638] sm:$0xff]
        %v444 = vld [vmem:[%s233 + $0x640] sm:$0xff]
        %v445 = vld [vmem:[%s233 + $0x648] sm:$0xff]
        %v446 = vld [vmem:[%s233 + $0x650] sm:$0xff]
        %v447 = vld [vmem:[%s233 + $0x658] sm:$0xff]
        %v448 = vld [vmem:[%s233 + $0x660] sm:$0xff]
        %v449 = vld [vmem:[%s233 + $0x668] sm:$0xff]
        %v450 = vld [vmem:[%s233 + $0x670] sm:$0xff]
        %v451 = vld [vmem:[%s233 + $0x678] sm:$0xff]
        %v452 = vld [vmem:[%s233 + $0x680] sm:$0xff]
        %v453 = vld [vmem:[%s233 + $0x688] sm:$0xff]
        %v454 = vld [vmem:[%s233 + $0x690] sm:$0xff]
        %v455 = vld [vmem:[%s233 + $0x698] sm:$0xff]
        %v456 = vld [vmem:[%s233 + $0x6a0] sm:$0xff]
        %v457 = vld [vmem:[%s233 + $0x6a8] sm:$0xff]
        %v458 = vld [vmem:[%s233 + $0x6b0] sm:$0xff]
        %v459 = vld [vmem:[%s233 + $0x6b8] sm:$0xff]
        %v460 = vld [vmem:[%s233 + $0x6c0] sm:$0xff]
        %v461 = vld [vmem:[%s233 + $0x6c8] sm:$0xff]
        %v462 = vld [vmem:[%s233 + $0x6d0] sm:$0xff]
        %v463 = vld [vmem:[%s233 + $0x6d8] sm:$0xff]
        %v464 = vld [vmem:[%s233 + $0x6e0] sm:$0xff]
        %v465 = vld [vmem:[%s233 + $0x6e8] sm:$0xff]
        %v466 = vld [vmem:[%s233 + $0x6f0] sm:$0xff]
        %v467 = vld [vmem:[%s233 + $0x6f8] sm:$0xff]
        %v468 = vld [vmem:[%s233 + $0x700] sm:$0xff]
        %v469 = vld [vmem:[%s233 + $0x708] sm:$0xff]
        %v470 = vld [vmem:[%s233 + $0x710] sm:$0xff]
        %v471 = vld [vmem:[%s233 + $0x718] sm:$0xff]
        %v472 = vld [vmem:[%s233 + $0x720] sm:$0xff]
        %v473 = vld [vmem:[%s233 + $0x728] sm:$0xff]
        %v474 = vld [vmem:[%s233 + $0x730] sm:$0xff]
        %v475 = vld [vmem:[%s233 + $0x738] sm:$0xff]
        %v476 = vld [vmem:[%s233 + $0x740] sm:$0xff]
        %v477 = vld [vmem:[%s233 + $0x748] sm:$0xff]
        %v478 = vld [vmem:[%s233 + $0x750] sm:$0xff]
        %v479 = vld [vmem:[%s233 + $0x758] sm:$0xff]
        %v480 = vld [vmem:[%s233 + $0x760] sm:$0xff]
        %v481 = vld [vmem:[%s233 + $0x768] sm:$0xff]
        %v482 = vld [vmem:[%s233 + $0x770] sm:$0xff]
        %v483 = vld [vmem:[%s233 + $0x778] sm:$0xff]
        %v484 = vld [vmem:[%s233 + $0x780] sm:$0xff]
        %v485 = vld [vmem:[%s233 + $0x788] sm:$0xff]
        %v486 = vld [vmem:[%s233 + $0x790] sm:$0xff]
        %v487 = vld [vmem:[%s233 + $0x798] sm:$0xff]
        %v488 = vld [vmem:[%s233 + $0x7a0] sm:$0xff]
        %v489 = vld [vmem:[%s233 + $0x7a8] sm:$0xff]
        %v490 = vld [vmem:[%s233 + $0x7b0] sm:$0xff]
        %v491 = vld [vmem:[%s233 + $0x7b8] sm:$0xff]
        %v492 = vld [vmem:[%s233 + $0x7c0] sm:$0xff]
        %v493 = vld [vmem:[%s233 + $0x7c8] sm:$0xff]
        %v494 = vld [vmem:[%s233 + $0x7d0] sm:$0xff]
        %v495 = vld [vmem:[%s233 + $0x7d8] sm:$0xff]
        %v496 = vld [vmem:[%s233 + $0x7e0] sm:$0xff]
        %v497 = vld [vmem:[%s233 + $0x7e8] sm:$0xff]
        %v498 = vld [vmem:[%s233 + $0x7f0] sm:$0xff]
        %v499 = vld [vmem:[%s233 + $0x7f8] sm:$0xff]
        %v500 = vld [vmem:[%s233 + $0x800] sm:$0xff]
        %v501 = vld [vmem:[%s233 + $0x808] sm:$0xff]
        %v502 = vld [vmem:[%s233 + $0x810] sm:$0xff]
        %v503 = vld [vmem:[%s233 + $0x818] sm:$0xff]
        %v504 = vld [vmem:[%s233 + $0x820] sm:$0xff]
        %v505 = vld [vmem:[%s233 + $0x828] sm:$0xff]
        %v506 = vld [vmem:[%s233 + $0x830] sm:$0xff]
        %v507 = vld [vmem:[%s233 + $0x838] sm:$0xff]
        %v508 = vld [vmem:[%s233 + $0x840] sm:$0xff]
        %v509 = vld [vmem:[%s233 + $0x848] sm:$0xff]
        %v510 = vld [vmem:[%s233 + $0x850] sm:$0xff]
        %v511 = vld [vmem:[%s233 + $0x858] sm:$0xff]
        %v512 = vld [vmem:[%s233 + $0x860] sm:$0xff]
        %v513 = vld [vmem:[%s233 + $0x868] sm:$0xff]
        %v514 = vld [vmem:[%s233 + $0x870] sm:$0xff]
        %v515 = vld [vmem:[%s233 + $0x878] sm:$0xff]
        %v516 = vld [vmem:[%s233 + $0x880] sm:$0xff]
        %v517 = vld [vmem:[%s233 + $0x888] sm:$0xff]
        %v518 = vld [vmem:[%s233 + $0x890] sm:$0xff]
        %v519 = vld [vmem:[%s233 + $0x898] sm:$0xff]
        %v520 = vld [vmem:[%s233 + $0x8a0] sm:$0xff]
        %v521 = vld [vmem:[%s233 + $0x8a8] sm:$0xff]
        %v522 = vld [vmem:[%s233 + $0x8b0] sm:$0xff]
        %v523 = vld [vmem:[%s233 + $0x8b8] sm:$0xff]
        %v524 = vld [vmem:[%s233 + $0x8c0] sm:$0xff]
        %v525 = vld [vmem:[%s233 + $0x8c8] sm:$0xff]
        %v526 = vld [vmem:[%s233 + $0x8d0] sm:$0xff]
        %v527 = vld [vmem:[%s233 + $0x8d8] sm:$0xff]
        %v528 = vld [vmem:[%s233 + $0x8e0] sm:$0xff]
        %v529 = vld [vmem:[%s233 + $0x8e8] sm:$0xff]
        %v530 = vld [vmem:[%s233 + $0x8f0] sm:$0xff]
        %v531 = vld [vmem:[%s233 + $0x8f8] sm:$0xff]
        %v532 = vld [vmem:[%s233 + $0x900] sm:$0xff]
        %v533 = vld [vmem:[%s233 + $0x908] sm:$0xff]
        %v534 = vld [vmem:[%s233 + $0x910] sm:$0xff]
        %v535 = vld [vmem:[%s233 + $0x918] sm:$0xff]
        %v536 = vld [vmem:[%s233 + $0x920] sm:$0xff]
        %v537 = vld [vmem:[%s233 + $0x928] sm:$0xff]
        %v538 = vld [vmem:[%s233 + $0x930] sm:$0xff]
        %v539 = vld [vmem:[%s233 + $0x938] sm:$0xff]
        %v540 = vld [vmem:[%s233 + $0x940] sm:$0xff]
        %v541 = vld [vmem:[%s233 + $0x948] sm:$0xff]
        %v542 = vld [vmem:[%s233 + $0x950] sm:$0xff]
        %v543 = vld [vmem:[%s233 + $0x958] sm:$0xff]
        %v544 = vld [vmem:[%s233 + $0x960] sm:$0xff]
        %v545 = vld [vmem:[%s233 + $0x968] sm:$0xff]
        %v546 = vld [vmem:[%s233 + $0x970] sm:$0xff]
        %v547 = vld [vmem:[%s233 + $0x978] sm:$0xff]
        %v548 = vld [vmem:[%s233 + $0x980] sm:$0xff]
        %v549 = vld [vmem:[%s233 + $0x988] sm:$0xff]
        %v550 = vld [vmem:[%s233 + $0x990] sm:$0xff]
        %v551 = vld [vmem:[%s233 + $0x998] sm:$0xff]
        %v552 = vld [vmem:[%s233 + $0x9a0] sm:$0xff]
        %v553 = vld [vmem:[%s233 + $0x9a8] sm:$0xff]
        %v554 = vld [vmem:[%s233 + $0x9b0] sm:$0xff]
        %v555 = vld [vmem:[%s233 + $0x9b8] sm:$0xff]
        %v556 = vld [vmem:[%s233 + $0x9c0] sm:$0xff]
        %v557 = vld [vmem:[%s233 + $0x9c8] sm:$0xff]
        %v558 = vld [vmem:[%s233 + $0x9d0] sm:$0xff]
        %v559 = vld [vmem:[%s233 + $0x9d8] sm:$0xff]
        %v560 = vld [vmem:[%s233 + $0x9e0] sm:$0xff]
        %v561 = vld [vmem:[%s233 + $0x9e8] sm:$0xff]
        %v562 = vld [vmem:[%s233 + $0x9f0] sm:$0xff]
        %v563 = vld [vmem:[%s233 + $0x9f8] sm:$0xff]
        %v567 = vcombine.high %v241, %v241
        %v569 = vunpack.c.l.s4 1966171168
        %v570 = vunpack.c.0.s8 %v569
        %v571 = vlaneseq
        %v572 = vshrl.u32 %v571, 7
        %v573 = vsub.s32 %v570, %v572
        %v574 = vrot.slane %v241, %v573
        %v576 = vunpack.c.l.s4 1966171168
        %v577 = vunpack.c.0.s8 %v576
        %v578 = vlaneseq
        %v579 = vshrl.u32 %v578, 7
        %v580 = vsub.s32 %v577, %v579
        %v581 = vrot.slane %v567, %v580
        %v582 = vcombine.high %v574, %v574
        %v583 = vcombine.high %v581, %v581
        %v585 = vunpack.c.l.s4 1966171168
        %v586 = vunpack.c.0.s8 %v585
        %v587 = vlaneseq
        %v588 = vshrl.u32 %v587, 7
        %v589 = vsub.s32 %v586, %v588
        %v590 = vrot.slane %v574, %v589
        %v592 = vunpack.c.l.s4 1966171168
        %v593 = vunpack.c.0.s8 %v592
        %v594 = vlaneseq
        %v595 = vshrl.u32 %v594, 7
        %v596 = vsub.s32 %v593, %v595
        %v597 = vrot.slane %v581, %v596
        %v599 = vunpack.c.l.s4 1966171168
        %v600 = vunpack.c.0.s8 %v599
        %v601 = vlaneseq
        %v602 = vshrl.u32 %v601, 7
        %v603 = vsub.s32 %v600, %v602
        %v604 = vrot.slane %v582, %v603
        %v606 = vunpack.c.l.s4 1966171168
        %v607 = vunpack.c.0.s8 %v606
        %v608 = vlaneseq
        %v609 = vshrl.u32 %v608, 7
        %v610 = vsub.s32 %v607, %v609
        %v611 = vrot.slane %v583, %v610
        %v612 = vcombine.high %v590, %v590
        %v613 = vcombine.high %v597, %v597
        %v614 = vcombine.high %v604, %v604
        %v615 = vcombine.high %v611, %v611
        %v616 = vcombine.high %v242, %v242
        %v618 = vunpack.c.l.s4 1966171168
        %v619 = vunpack.c.0.s8 %v618
        %v620 = vlaneseq
        %v621 = vshrl.u32 %v620, 7
        %v622 = vsub.s32 %v619, %v621
        %v623 = vrot.slane %v242, %v622
        %v625 = vunpack.c.l.s4 1966171168
        %v626 = vunpack.c.0.s8 %v625
        %v627 = vlaneseq
        %v628 = vshrl.u32 %v627, 7
        %v629 = vsub.s32 %v626, %v628
        %v630 = vrot.slane %v616, %v629
        %v631 = vcombine.high %v623, %v623
        %v632 = vcombine.high %v630, %v630
        %v634 = vunpack.c.l.s4 1966171168
        %v635 = vunpack.c.0.s8 %v634
        %v636 = vlaneseq
        %v637 = vshrl.u32 %v636, 7
        %v638 = vsub.s32 %v635, %v637
        %v639 = vrot.slane %v623, %v638
        %v641 = vunpack.c.l.s4 1966171168
        %v642 = vunpack.c.0.s8 %v641
        %v643 = vlaneseq
        %v644 = vshrl.u32 %v643, 7
        %v645 = vsub.s32 %v642, %v644
        %v646 = vrot.slane %v630, %v645
        %v648 = vunpack.c.l.s4 1966171168
        %v649 = vunpack.c.0.s8 %v648
        %v650 = vlaneseq
        %v651 = vshrl.u32 %v650, 7
        %v652 = vsub.s32 %v649, %v651
        %v653 = vrot.slane %v631, %v652
        %v655 = vunpack.c.l.s4 1966171168
        %v656 = vunpack.c.0.s8 %v655
        %v657 = vlaneseq
        %v658 = vshrl.u32 %v657, 7
        %v659 = vsub.s32 %v656, %v658
        %v660 = vrot.slane %v632, %v659
        %v661 = vcombine.high %v639, %v639
        %v662 = vcombine.high %v646, %v646
        %v663 = vcombine.high %v653, %v653
        %v664 = vcombine.high %v660, %v660
        %v666 = vunpack.c.l.s4 1966171168
        %v667 = vunpack.c.0.s8 %v666
        %v668 = vlaneseq
        %v669 = vshrl.u32 %v668, 7
        %v670 = vsub.s32 %v667, %v669
        %v671 = vrot.slane %v243, %v670
        %v672 = vcombine.high %v671, %v671
        %v674 = vunpack.c.l.s4 1966171168
        %v675 = vunpack.c.0.s8 %v674
        %v676 = vlaneseq
        %v677 = vshrl.u32 %v676, 7
        %v678 = vsub.s32 %v675, %v677
        %v679 = vrot.slane %v671, %v678
        %v681 = vunpack.c.l.s4 1966171168
        %v682 = vunpack.c.0.s8 %v681
        %v683 = vlaneseq
        %v684 = vshrl.u32 %v683, 7
        %v685 = vsub.s32 %v682, %v684
        %v686 = vrot.slane %v672, %v685
        %v687 = vcombine.high %v679, %v679
        %v688 = vcombine.high %v686, %v686
        %v1029 = vunpack.c.l.b16 %v244
        %v1030 = vunpack.c.h.b16 %v244
        %v1031 = vunpack.c.l.b16 %v245
        %v1032 = vunpack.c.h.b16 %v245
        %v1033 = vunpack.c.l.b16 %v246
        %v1034 = vunpack.c.h.b16 %v246
        %v1035 = vunpack.c.l.b16 %v247
        %v1036 = vunpack.c.h.b16 %v247
        %v1037 = vunpack.c.l.b16 %v248
        %v1038 = vunpack.c.h.b16 %v248
        %v1039 = vunpack.c.l.b16 %v249
        %v1040 = vunpack.c.h.b16 %v249
        %v1041 = vunpack.c.l.b16 %v250
        %v1042 = vunpack.c.h.b16 %v250
        %v1043 = vunpack.c.l.b16 %v251
        %v1044 = vunpack.c.h.b16 %v251
        %v1045 = vunpack.c.l.b16 %v252
        %v1046 = vunpack.c.h.b16 %v252
        %v1047 = vunpack.c.l.b16 %v253
        %v1048 = vunpack.c.h.b16 %v253
        %v1049 = vunpack.c.l.b16 %v254
        %v1050 = vunpack.c.h.b16 %v254
        %v1051 = vunpack.c.l.b16 %v255
        %v1052 = vunpack.c.h.b16 %v255
        %v1053 = vunpack.c.l.b16 %v256
        %v1054 = vunpack.c.h.b16 %v256
        %v1055 = vunpack.c.l.b16 %v257
        %v1056 = vunpack.c.h.b16 %v257
        %v1057 = vunpack.c.l.b16 %v258
        %v1058 = vunpack.c.h.b16 %v258
        %v1059 = vunpack.c.l.b16 %v259
        %v1060 = vunpack.c.h.b16 %v259
        %v1061 = vunpack.c.l.b16 %v260
        %v1062 = vunpack.c.h.b16 %v260
        %v1063 = vunpack.c.l.b16 %v261
        %v1064 = vunpack.c.h.b16 %v261
        %v1065 = vunpack.c.l.b16 %v262
        %v1066 = vunpack.c.h.b16 %v262
        %v1067 = vunpack.c.l.b16 %v263
        %v1068 = vunpack.c.h.b16 %v263
        %v1069 = vunpack.c.l.b16 %v264
        %v1070 = vunpack.c.h.b16 %v264
        %v1071 = vunpack.c.l.b16 %v265
        %v1072 = vunpack.c.h.b16 %v265
        %v1073 = vunpack.c.l.b16 %v266
        %v1074 = vunpack.c.h.b16 %v266
        %v1075 = vunpack.c.l.b16 %v267
        %v1076 = vunpack.c.h.b16 %v267
        %v1077 = vunpack.c.l.b16 %v268
        %v1078 = vunpack.c.h.b16 %v268
        %v1079 = vunpack.c.l.b16 %v269
        %v1080 = vunpack.c.h.b16 %v269
        %v1081 = vunpack.c.l.b16 %v270
        %v1082 = vunpack.c.h.b16 %v270
        %v1083 = vunpack.c.l.b16 %v271
        %v1084 = vunpack.c.h.b16 %v271
        %v1085 = vunpack.c.l.b16 %v272
        %v1086 = vunpack.c.h.b16 %v272
        %v1087 = vunpack.c.l.b16 %v273
        %v1088 = vunpack.c.h.b16 %v273
        %v1089 = vunpack.c.l.b16 %v274
        %v1090 = vunpack.c.h.b16 %v274
        %v1091 = vunpack.c.l.b16 %v275
        %v1092 = vunpack.c.h.b16 %v275
        %v1093 = vunpack.c.l.b16 %v276
        %v1094 = vunpack.c.h.b16 %v276
        %v1095 = vunpack.c.l.b16 %v277
        %v1096 = vunpack.c.h.b16 %v277
        %v1097 = vunpack.c.l.b16 %v278
        %v1098 = vunpack.c.h.b16 %v278
        %v1099 = vunpack.c.l.b16 %v279
        %v1100 = vunpack.c.h.b16 %v279
        %v1101 = vunpack.c.l.b16 %v280
        %v1102 = vunpack.c.h.b16 %v280
        %v1103 = vunpack.c.l.b16 %v281
        %v1104 = vunpack.c.h.b16 %v281
        %v1105 = vunpack.c.l.b16 %v282
        %v1106 = vunpack.c.h.b16 %v282
        %v1107 = vunpack.c.l.b16 %v283
        %v1108 = vunpack.c.h.b16 %v283
        %v1109 = vunpack.c.l.b16 %v284
        %v1110 = vunpack.c.h.b16 %v284
        %v1111 = vunpack.c.l.b16 %v285
        %v1112 = vunpack.c.h.b16 %v285
        %v1113 = vunpack.c.l.b16 %v286
        %v1114 = vunpack.c.h.b16 %v286
        %v1115 = vunpack.c.l.b16 %v287
        %v1116 = vunpack.c.h.b16 %v287
        %v1117 = vunpack.c.l.b16 %v288
        %v1118 = vunpack.c.h.b16 %v288
        %v1119 = vunpack.c.l.b16 %v289
        %v1120 = vunpack.c.h.b16 %v289
        %v1121 = vunpack.c.l.b16 %v290
        %v1122 = vunpack.c.h.b16 %v290
        %v1123 = vunpack.c.l.b16 %v291
        %v1124 = vunpack.c.h.b16 %v291
        %v1125 = vunpack.c.l.b16 %v292
        %v1126 = vunpack.c.h.b16 %v292
        %v1127 = vunpack.c.l.b16 %v293
        %v1128 = vunpack.c.h.b16 %v293
        %v1129 = vunpack.c.l.b16 %v294
        %v1130 = vunpack.c.h.b16 %v294
        %v1131 = vunpack.c.l.b16 %v295
        %v1132 = vunpack.c.h.b16 %v295
        %v1133 = vunpack.c.l.b16 %v296
        %v1134 = vunpack.c.h.b16 %v296
        %v1135 = vunpack.c.l.b16 %v297
        %v1136 = vunpack.c.h.b16 %v297
        %v1137 = vunpack.c.l.b16 %v298
        %v1138 = vunpack.c.h.b16 %v298
        %v1139 = vunpack.c.l.b16 %v299
        %v1140 = vunpack.c.h.b16 %v299
        %v1141 = vunpack.c.l.b16 %v300
        %v1142 = vunpack.c.h.b16 %v300
        %v1143 = vunpack.c.l.b16 %v301
        %v1144 = vunpack.c.h.b16 %v301
        %v1145 = vunpack.c.l.b16 %v302
        %v1146 = vunpack.c.h.b16 %v302
        %v1147 = vunpack.c.l.b16 %v303
        %v1148 = vunpack.c.h.b16 %v303
        %v1149 = vunpack.c.l.b16 %v304
        %v1150 = vunpack.c.h.b16 %v304
        %v1151 = vunpack.c.l.b16 %v305
        %v1152 = vunpack.c.h.b16 %v305
        %v1153 = vunpack.c.l.b16 %v306
        %v1154 = vunpack.c.h.b16 %v306
        %v1155 = vunpack.c.l.b16 %v307
        %v1156 = vunpack.c.h.b16 %v307
        %v1157 = vunpack.c.l.b16 %v308
        %v1158 = vunpack.c.h.b16 %v308
        %v1159 = vunpack.c.l.b16 %v309
        %v1160 = vunpack.c.h.b16 %v309
        %v1161 = vunpack.c.l.b16 %v310
        %v1162 = vunpack.c.h.b16 %v310
        %v1163 = vunpack.c.l.b16 %v311
        %v1164 = vunpack.c.h.b16 %v311
        %v1165 = vunpack.c.l.b16 %v312
        %v1166 = vunpack.c.h.b16 %v312
        %v1167 = vunpack.c.l.b16 %v313
        %v1168 = vunpack.c.h.b16 %v313
        %v1169 = vunpack.c.l.b16 %v314
        %v1170 = vunpack.c.h.b16 %v314
        %v1171 = vunpack.c.l.b16 %v315
        %v1172 = vunpack.c.h.b16 %v315
        %v1173 = vunpack.c.l.b16 %v316
        %v1174 = vunpack.c.h.b16 %v316
        %v1175 = vunpack.c.l.b16 %v317
        %v1176 = vunpack.c.h.b16 %v317
        %v1177 = vunpack.c.l.b16 %v318
        %v1178 = vunpack.c.h.b16 %v318
        %v1179 = vunpack.c.l.b16 %v319
        %v1180 = vunpack.c.h.b16 %v319
        %v1181 = vunpack.c.l.b16 %v320
        %v1182 = vunpack.c.h.b16 %v320
        %v1183 = vunpack.c.l.b16 %v321
        %v1184 = vunpack.c.h.b16 %v321
        %v1185 = vunpack.c.l.b16 %v322
        %v1186 = vunpack.c.h.b16 %v322
        %v1187 = vunpack.c.l.b16 %v323
        %v1188 = vunpack.c.h.b16 %v323
        %v1189 = vunpack.c.l.b16 %v324
        %v1190 = vunpack.c.h.b16 %v324
        %v1191 = vunpack.c.l.b16 %v325
        %v1192 = vunpack.c.h.b16 %v325
        %v1193 = vunpack.c.l.b16 %v326
        %v1194 = vunpack.c.h.b16 %v326
        %v1195 = vunpack.c.l.b16 %v327
        %v1196 = vunpack.c.h.b16 %v327
        %v1197 = vunpack.c.l.b16 %v328
        %v1198 = vunpack.c.h.b16 %v328
        %v1199 = vunpack.c.l.b16 %v329
        %v1200 = vunpack.c.h.b16 %v329
        %v1201 = vunpack.c.l.b16 %v330
        %v1202 = vunpack.c.h.b16 %v330
        %v1203 = vunpack.c.l.b16 %v331
        %v1204 = vunpack.c.h.b16 %v331
        %v1205 = vunpack.c.l.b16 %v332
        %v1206 = vunpack.c.h.b16 %v332
        %v1207 = vunpack.c.l.b16 %v333
        %v1208 = vunpack.c.h.b16 %v333
        %v1209 = vunpack.c.l.b16 %v334
        %v1210 = vunpack.c.h.b16 %v334
        %v1211 = vunpack.c.l.b16 %v335
        %v1212 = vunpack.c.h.b16 %v335
        %v1213 = vunpack.c.l.b16 %v336
        %v1214 = vunpack.c.h.b16 %v336
        %v1215 = vunpack.c.l.b16 %v337
        %v1216 = vunpack.c.h.b16 %v337
        %v1217 = vunpack.c.l.b16 %v338
        %v1218 = vunpack.c.h.b16 %v338
        %v1219 = vunpack.c.l.b16 %v339
        %v1220 = vunpack.c.h.b16 %v339
        %v1221 = vunpack.c.l.b16 %v340
        %v1222 = vunpack.c.h.b16 %v340
        %v1223 = vunpack.c.l.b16 %v341
        %v1224 = vunpack.c.h.b16 %v341
        %v1225 = vunpack.c.l.b16 %v342
        %v1226 = vunpack.c.h.b16 %v342
        %v1227 = vunpack.c.l.b16 %v343
        %v1228 = vunpack.c.h.b16 %v343
        %v1229 = vunpack.c.l.b16 %v344
        %v1230 = vunpack.c.h.b16 %v344
        %v1231 = vunpack.c.l.b16 %v345
        %v1232 = vunpack.c.h.b16 %v345
        %v1233 = vunpack.c.l.b16 %v346
        %v1234 = vunpack.c.h.b16 %v346
        %v1235 = vunpack.c.l.b16 %v347
        %v1236 = vunpack.c.h.b16 %v347
        %v1237 = vunpack.c.l.b16 %v348
        %v1238 = vunpack.c.h.b16 %v348
        %v1239 = vunpack.c.l.b16 %v349
        %v1240 = vunpack.c.h.b16 %v349
        %v1241 = vunpack.c.l.b16 %v350
        %v1242 = vunpack.c.h.b16 %v350
        %v1243 = vunpack.c.l.b16 %v351
        %v1244 = vunpack.c.h.b16 %v351
        %v1245 = vunpack.c.l.b16 %v352
        %v1246 = vunpack.c.h.b16 %v352
        %v1247 = vunpack.c.l.b16 %v353
        %v1248 = vunpack.c.h.b16 %v353
        %v1249 = vunpack.c.l.b16 %v354
        %v1250 = vunpack.c.h.b16 %v354
        %v1251 = vunpack.c.l.b16 %v355
        %v1252 = vunpack.c.h.b16 %v355
        %v1253 = vunpack.c.l.b16 %v356
        %v1254 = vunpack.c.h.b16 %v356
        %v1255 = vunpack.c.l.b16 %v357
        %v1256 = vunpack.c.h.b16 %v357
        %v1257 = vunpack.c.l.b16 %v358
        %v1258 = vunpack.c.h.b16 %v358
        %v1259 = vunpack.c.l.b16 %v359
        %v1260 = vunpack.c.h.b16 %v359
        %v1261 = vunpack.c.l.b16 %v360
        %v1262 = vunpack.c.h.b16 %v360
        %v1263 = vunpack.c.l.b16 %v361
        %v1264 = vunpack.c.h.b16 %v361
        %v1265 = vunpack.c.l.b16 %v362
        %v1266 = vunpack.c.h.b16 %v362
        %v1267 = vunpack.c.l.b16 %v363
        %v1268 = vunpack.c.h.b16 %v363
        %v1269 = vunpack.c.l.b16 %v364
        %v1270 = vunpack.c.h.b16 %v364
        %v1271 = vunpack.c.l.b16 %v365
        %v1272 = vunpack.c.h.b16 %v365
        %v1273 = vunpack.c.l.b16 %v366
        %v1274 = vunpack.c.h.b16 %v366
        %v1275 = vunpack.c.l.b16 %v367
        %v1276 = vunpack.c.h.b16 %v367
        %v1277 = vunpack.c.l.b16 %v368
        %v1278 = vunpack.c.h.b16 %v368
        %v1279 = vunpack.c.l.b16 %v369
        %v1280 = vunpack.c.h.b16 %v369
        %v1281 = vunpack.c.l.b16 %v370
        %v1282 = vunpack.c.h.b16 %v370
        %v1283 = vunpack.c.l.b16 %v371
        %v1284 = vunpack.c.h.b16 %v371
        %v1285 = vunpack.c.l.b16 %v372
        %v1286 = vunpack.c.h.b16 %v372
        %v1287 = vunpack.c.l.b16 %v373
        %v1288 = vunpack.c.h.b16 %v373
        %v1289 = vunpack.c.l.b16 %v374
        %v1290 = vunpack.c.h.b16 %v374
        %v1291 = vunpack.c.l.b16 %v375
        %v1292 = vunpack.c.h.b16 %v375
        %v1293 = vunpack.c.l.b16 %v376
        %v1294 = vunpack.c.h.b16 %v376
        %v1295 = vunpack.c.l.b16 %v377
        %v1296 = vunpack.c.h.b16 %v377
        %v1297 = vunpack.c.l.b16 %v378
        %v1298 = vunpack.c.h.b16 %v378
        %v1299 = vunpack.c.l.b16 %v379
        %v1300 = vunpack.c.h.b16 %v379
        %v1301 = vunpack.c.l.b16 %v380
        %v1302 = vunpack.c.h.b16 %v380
        %v1303 = vunpack.c.l.b16 %v381
        %v1304 = vunpack.c.h.b16 %v381
        %v1305 = vunpack.c.l.b16 %v382
        %v1306 = vunpack.c.h.b16 %v382
        %v1307 = vunpack.c.l.b16 %v383
        %v1308 = vunpack.c.h.b16 %v383
        %v1309 = vunpack.c.l.b16 %v384
        %v1310 = vunpack.c.h.b16 %v384
        %v1311 = vunpack.c.l.b16 %v385
        %v1312 = vunpack.c.h.b16 %v385
        %v1313 = vunpack.c.l.b16 %v386
        %v1314 = vunpack.c.h.b16 %v386
        %v1315 = vunpack.c.l.b16 %v387
        %v1316 = vunpack.c.h.b16 %v387
        %v1317 = vunpack.c.l.b16 %v388
        %v1318 = vunpack.c.h.b16 %v388
        %v1319 = vunpack.c.l.b16 %v389
        %v1320 = vunpack.c.h.b16 %v389
        %v1321 = vunpack.c.l.b16 %v390
        %v1322 = vunpack.c.h.b16 %v390
        %v1323 = vunpack.c.l.b16 %v391
        %v1324 = vunpack.c.h.b16 %v391
        %v1325 = vunpack.c.l.b16 %v392
        %v1326 = vunpack.c.h.b16 %v392
        %v1327 = vunpack.c.l.b16 %v393
        %v1328 = vunpack.c.h.b16 %v393
        %v1329 = vunpack.c.l.b16 %v394
        %v1330 = vunpack.c.h.b16 %v394
        %v1331 = vunpack.c.l.b16 %v395
        %v1332 = vunpack.c.h.b16 %v395
        %v1333 = vunpack.c.l.b16 %v396
        %v1334 = vunpack.c.h.b16 %v396
        %v1335 = vunpack.c.l.b16 %v397
        %v1336 = vunpack.c.h.b16 %v397
        %v1337 = vunpack.c.l.b16 %v398
        %v1338 = vunpack.c.h.b16 %v398
        %v1339 = vunpack.c.l.b16 %v399
        %v1340 = vunpack.c.h.b16 %v399
        %v1341 = vunpack.c.l.b16 %v400
        %v1342 = vunpack.c.h.b16 %v400
        %v1343 = vunpack.c.l.b16 %v401
        %v1344 = vunpack.c.h.b16 %v401
        %v1345 = vunpack.c.l.b16 %v402
        %v1346 = vunpack.c.h.b16 %v402
        %v1347 = vunpack.c.l.b16 %v403
        %v1348 = vunpack.c.h.b16 %v403
        %v1349 = vunpack.c.l.b16 %v404
        %v1350 = vunpack.c.h.b16 %v404
        %v1351 = vunpack.c.l.b16 %v405
        %v1352 = vunpack.c.h.b16 %v405
        %v1353 = vunpack.c.l.b16 %v406
        %v1354 = vunpack.c.h.b16 %v406
        %v1355 = vunpack.c.l.b16 %v407
        %v1356 = vunpack.c.h.b16 %v407
        %v1357 = vunpack.c.l.b16 %v408
        %v1358 = vunpack.c.h.b16 %v408
        %v1359 = vunpack.c.l.b16 %v409
        %v1360 = vunpack.c.h.b16 %v409
        %v1361 = vunpack.c.l.b16 %v410
        %v1362 = vunpack.c.h.b16 %v410
        %v1363 = vunpack.c.l.b16 %v411
        %v1364 = vunpack.c.h.b16 %v411
        %v1365 = vunpack.c.l.b16 %v412
        %v1366 = vunpack.c.h.b16 %v412
        %v1367 = vunpack.c.l.b16 %v413
        %v1368 = vunpack.c.h.b16 %v413
        %v1369 = vunpack.c.l.b16 %v414
        %v1370 = vunpack.c.h.b16 %v414
        %v1371 = vunpack.c.l.b16 %v415
        %v1372 = vunpack.c.h.b16 %v415
        %v1373 = vunpack.c.l.b16 %v416
        %v1374 = vunpack.c.h.b16 %v416
        %v1375 = vunpack.c.l.b16 %v417
        %v1376 = vunpack.c.h.b16 %v417
        %v1377 = vunpack.c.l.b16 %v418
        %v1378 = vunpack.c.h.b16 %v418
        %v1379 = vunpack.c.l.b16 %v419
        %v1380 = vunpack.c.h.b16 %v419
        %v1381 = vunpack.c.l.b16 %v420
        %v1382 = vunpack.c.h.b16 %v420
        %v1383 = vunpack.c.l.b16 %v421
        %v1384 = vunpack.c.h.b16 %v421
        %v1385 = vunpack.c.l.b16 %v422
        %v1386 = vunpack.c.h.b16 %v422
        %v1387 = vunpack.c.l.b16 %v423
        %v1388 = vunpack.c.h.b16 %v423
        %v1389 = vunpack.c.l.b16 %v424
        %v1390 = vunpack.c.h.b16 %v424
        %v1391 = vunpack.c.l.b16 %v425
        %v1392 = vunpack.c.h.b16 %v425
        %v1393 = vunpack.c.l.b16 %v426
        %v1394 = vunpack.c.h.b16 %v426
        %v1395 = vunpack.c.l.b16 %v427
        %v1396 = vunpack.c.h.b16 %v427
        %v1397 = vunpack.c.l.b16 %v428
        %v1398 = vunpack.c.h.b16 %v428
        %v1399 = vunpack.c.l.b16 %v429
        %v1400 = vunpack.c.h.b16 %v429
        %v1401 = vunpack.c.l.b16 %v430
        %v1402 = vunpack.c.h.b16 %v430
        %v1403 = vunpack.c.l.b16 %v431
        %v1404 = vunpack.c.h.b16 %v431
        %v1405 = vunpack.c.l.b16 %v432
        %v1406 = vunpack.c.h.b16 %v432
        %v1407 = vunpack.c.l.b16 %v433
        %v1408 = vunpack.c.h.b16 %v433
        %v1409 = vunpack.c.l.b16 %v434
        %v1410 = vunpack.c.h.b16 %v434
        %v1411 = vunpack.c.l.b16 %v435
        %v1412 = vunpack.c.h.b16 %v435
        %v1413 = vunpack.c.l.b16 %v436
        %v1414 = vunpack.c.h.b16 %v436
        %v1415 = vunpack.c.l.b16 %v437
        %v1416 = vunpack.c.h.b16 %v437
        %v1417 = vunpack.c.l.b16 %v438
        %v1418 = vunpack.c.h.b16 %v438
        %v1419 = vunpack.c.l.b16 %v439
        %v1420 = vunpack.c.h.b16 %v439
        %v1421 = vunpack.c.l.b16 %v440
        %v1422 = vunpack.c.h.b16 %v440
        %v1423 = vunpack.c.l.b16 %v441
        %v1424 = vunpack.c.h.b16 %v441
        %v1425 = vunpack.c.l.b16 %v442
        %v1426 = vunpack.c.h.b16 %v442
        %v1427 = vunpack.c.l.b16 %v443
        %v1428 = vunpack.c.h.b16 %v443
        %v1429 = vunpack.c.l.b16 %v444
        %v1430 = vunpack.c.h.b16 %v444
        %v1431 = vunpack.c.l.b16 %v445
        %v1432 = vunpack.c.h.b16 %v445
        %v1433 = vunpack.c.l.b16 %v446
        %v1434 = vunpack.c.h.b16 %v446
        %v1435 = vunpack.c.l.b16 %v447
        %v1436 = vunpack.c.h.b16 %v447
        %v1437 = vunpack.c.l.b16 %v448
        %v1438 = vunpack.c.h.b16 %v448
        %v1439 = vunpack.c.l.b16 %v449
        %v1440 = vunpack.c.h.b16 %v449
        %v1441 = vunpack.c.l.b16 %v450
        %v1442 = vunpack.c.h.b16 %v450
        %v1443 = vunpack.c.l.b16 %v451
        %v1444 = vunpack.c.h.b16 %v451
        %v1445 = vunpack.c.l.b16 %v452
        %v1446 = vunpack.c.h.b16 %v452
        %v1447 = vunpack.c.l.b16 %v453
        %v1448 = vunpack.c.h.b16 %v453
        %v1449 = vunpack.c.l.b16 %v454
        %v1450 = vunpack.c.h.b16 %v454
        %v1451 = vunpack.c.l.b16 %v455
        %v1452 = vunpack.c.h.b16 %v455
        %v1453 = vunpack.c.l.b16 %v456
        %v1454 = vunpack.c.h.b16 %v456
        %v1455 = vunpack.c.l.b16 %v457
        %v1456 = vunpack.c.h.b16 %v457
        %v1457 = vunpack.c.l.b16 %v458
        %v1458 = vunpack.c.h.b16 %v458
        %v1459 = vunpack.c.l.b16 %v459
        %v1460 = vunpack.c.h.b16 %v459
        %v1461 = vunpack.c.l.b16 %v460
        %v1462 = vunpack.c.h.b16 %v460
        %v1463 = vunpack.c.l.b16 %v461
        %v1464 = vunpack.c.h.b16 %v461
        %v1465 = vunpack.c.l.b16 %v462
        %v1466 = vunpack.c.h.b16 %v462
        %v1467 = vunpack.c.l.b16 %v463
        %v1468 = vunpack.c.h.b16 %v463
        %v1469 = vunpack.c.l.b16 %v464
        %v1470 = vunpack.c.h.b16 %v464
        %v1471 = vunpack.c.l.b16 %v465
        %v1472 = vunpack.c.h.b16 %v465
        %v1473 = vunpack.c.l.b16 %v466
        %v1474 = vunpack.c.h.b16 %v466
        %v1475 = vunpack.c.l.b16 %v467
        %v1476 = vunpack.c.h.b16 %v467
        %v1477 = vunpack.c.l.b16 %v468
        %v1478 = vunpack.c.h.b16 %v468
        %v1479 = vunpack.c.l.b16 %v469
        %v1480 = vunpack.c.h.b16 %v469
        %v1481 = vunpack.c.l.b16 %v470
        %v1482 = vunpack.c.h.b16 %v470
        %v1483 = vunpack.c.l.b16 %v471
        %v1484 = vunpack.c.h.b16 %v471
        %v1485 = vunpack.c.l.b16 %v472
        %v1486 = vunpack.c.h.b16 %v472
        %v1487 = vunpack.c.l.b16 %v473
        %v1488 = vunpack.c.h.b16 %v473
        %v1489 = vunpack.c.l.b16 %v474
        %v1490 = vunpack.c.h.b16 %v474
        %v1491 = vunpack.c.l.b16 %v475
        %v1492 = vunpack.c.h.b16 %v475
        %v1493 = vunpack.c.l.b16 %v476
        %v1494 = vunpack.c.h.b16 %v476
        %v1495 = vunpack.c.l.b16 %v477
        %v1496 = vunpack.c.h.b16 %v477
        %v1497 = vunpack.c.l.b16 %v478
        %v1498 = vunpack.c.h.b16 %v478
        %v1499 = vunpack.c.l.b16 %v479
        %v1500 = vunpack.c.h.b16 %v479
        %v1501 = vunpack.c.l.b16 %v480
        %v1502 = vunpack.c.h.b16 %v480
        %v1503 = vunpack.c.l.b16 %v481
        %v1504 = vunpack.c.h.b16 %v481
        %v1505 = vunpack.c.l.b16 %v482
        %v1506 = vunpack.c.h.b16 %v482
        %v1507 = vunpack.c.l.b16 %v483
        %v1508 = vunpack.c.h.b16 %v483
        %v1509 = vunpack.c.l.b16 %v484
        %v1510 = vunpack.c.h.b16 %v484
        %v1511 = vunpack.c.l.b16 %v485
        %v1512 = vunpack.c.h.b16 %v485
        %v1513 = vunpack.c.l.b16 %v486
        %v1514 = vunpack.c.h.b16 %v486
        %v1515 = vunpack.c.l.b16 %v487
        %v1516 = vunpack.c.h.b16 %v487
        %v1517 = vunpack.c.l.b16 %v488
        %v1518 = vunpack.c.h.b16 %v488
        %v1519 = vunpack.c.l.b16 %v489
        %v1520 = vunpack.c.h.b16 %v489
        %v1521 = vunpack.c.l.b16 %v490
        %v1522 = vunpack.c.h.b16 %v490
        %v1523 = vunpack.c.l.b16 %v491
        %v1524 = vunpack.c.h.b16 %v491
        %v1525 = vunpack.c.l.b16 %v492
        %v1526 = vunpack.c.h.b16 %v492
        %v1527 = vunpack.c.l.b16 %v493
        %v1528 = vunpack.c.h.b16 %v493
        %v1529 = vunpack.c.l.b16 %v494
        %v1530 = vunpack.c.h.b16 %v494
        %v1531 = vunpack.c.l.b16 %v495
        %v1532 = vunpack.c.h.b16 %v495
        %v1533 = vunpack.c.l.b16 %v496
        %v1534 = vunpack.c.h.b16 %v496
        %v1535 = vunpack.c.l.b16 %v497
        %v1536 = vunpack.c.h.b16 %v497
        %v1537 = vunpack.c.l.b16 %v498
        %v1538 = vunpack.c.h.b16 %v498
        %v1539 = vunpack.c.l.b16 %v499
        %v1540 = vunpack.c.h.b16 %v499
        %v1541 = vunpack.c.l.b16 %v500
        %v1542 = vunpack.c.h.b16 %v500
        %v1543 = vunpack.c.l.b16 %v501
        %v1544 = vunpack.c.h.b16 %v501
        %v1545 = vunpack.c.l.b16 %v502
        %v1546 = vunpack.c.h.b16 %v502
        %v1547 = vunpack.c.l.b16 %v503
        %v1548 = vunpack.c.h.b16 %v503
        %v1549 = vunpack.c.l.b16 %v504
        %v1550 = vunpack.c.h.b16 %v504
        %v1551 = vunpack.c.l.b16 %v505
        %v1552 = vunpack.c.h.b16 %v505
        %v1553 = vunpack.c.l.b16 %v506
        %v1554 = vunpack.c.h.b16 %v506
        %v1555 = vunpack.c.l.b16 %v507
        %v1556 = vunpack.c.h.b16 %v507
        %v1557 = vunpack.c.l.b16 %v508
        %v1558 = vunpack.c.h.b16 %v508
        %v1559 = vunpack.c.l.b16 %v509
        %v1560 = vunpack.c.h.b16 %v509
        %v1561 = vunpack.c.l.b16 %v510
        %v1562 = vunpack.c.h.b16 %v510
        %v1563 = vunpack.c.l.b16 %v511
        %v1564 = vunpack.c.h.b16 %v511
        %v1565 = vunpack.c.l.b16 %v512
        %v1566 = vunpack.c.h.b16 %v512
        %v1567 = vunpack.c.l.b16 %v513
        %v1568 = vunpack.c.h.b16 %v513
        %v1569 = vunpack.c.l.b16 %v514
        %v1570 = vunpack.c.h.b16 %v514
        %v1571 = vunpack.c.l.b16 %v515
        %v1572 = vunpack.c.h.b16 %v515
        %v1573 = vunpack.c.l.b16 %v516
        %v1574 = vunpack.c.h.b16 %v516
        %v1575 = vunpack.c.l.b16 %v517
        %v1576 = vunpack.c.h.b16 %v517
        %v1577 = vunpack.c.l.b16 %v518
        %v1578 = vunpack.c.h.b16 %v518
        %v1579 = vunpack.c.l.b16 %v519
        %v1580 = vunpack.c.h.b16 %v519
        %v1581 = vunpack.c.l.b16 %v520
        %v1582 = vunpack.c.h.b16 %v520
        %v1583 = vunpack.c.l.b16 %v521
        %v1584 = vunpack.c.h.b16 %v521
        %v1585 = vunpack.c.l.b16 %v522
        %v1586 = vunpack.c.h.b16 %v522
        %v1587 = vunpack.c.l.b16 %v523
        %v1588 = vunpack.c.h.b16 %v523
        %v1589 = vunpack.c.l.b16 %v524
        %v1590 = vunpack.c.h.b16 %v524
        %v1591 = vunpack.c.l.b16 %v525
        %v1592 = vunpack.c.h.b16 %v525
        %v1593 = vunpack.c.l.b16 %v526
        %v1594 = vunpack.c.h.b16 %v526
        %v1595 = vunpack.c.l.b16 %v527
        %v1596 = vunpack.c.h.b16 %v527
        %v1597 = vunpack.c.l.b16 %v528
        %v1598 = vunpack.c.h.b16 %v528
        %v1599 = vunpack.c.l.b16 %v529
        %v1600 = vunpack.c.h.b16 %v529
        %v1601 = vunpack.c.l.b16 %v530
        %v1602 = vunpack.c.h.b16 %v530
        %v1603 = vunpack.c.l.b16 %v531
        %v1604 = vunpack.c.h.b16 %v531
        %v1605 = vunpack.c.l.b16 %v532
        %v1606 = vunpack.c.h.b16 %v532
        %v1607 = vunpack.c.l.b16 %v533
        %v1608 = vunpack.c.h.b16 %v533
        %v1609 = vunpack.c.l.b16 %v534
        %v1610 = vunpack.c.h.b16 %v534
        %v1611 = vunpack.c.l.b16 %v535
        %v1612 = vunpack.c.h.b16 %v535
        %v1613 = vunpack.c.l.b16 %v536
        %v1614 = vunpack.c.h.b16 %v536
        %v1615 = vunpack.c.l.b16 %v537
        %v1616 = vunpack.c.h.b16 %v537
        %v1617 = vunpack.c.l.b16 %v538
        %v1618 = vunpack.c.h.b16 %v538
        %v1619 = vunpack.c.l.b16 %v539
        %v1620 = vunpack.c.h.b16 %v539
        %v1621 = vunpack.c.l.b16 %v540
        %v1622 = vunpack.c.h.b16 %v540
        %v1623 = vunpack.c.l.b16 %v541
        %v1624 = vunpack.c.h.b16 %v541
        %v1625 = vunpack.c.l.b16 %v542
        %v1626 = vunpack.c.h.b16 %v542
        %v1627 = vunpack.c.l.b16 %v543
        %v1628 = vunpack.c.h.b16 %v543
        %v1629 = vunpack.c.l.b16 %v544
        %v1630 = vunpack.c.h.b16 %v544
        %v1631 = vunpack.c.l.b16 %v545
        %v1632 = vunpack.c.h.b16 %v545
        %v1633 = vunpack.c.l.b16 %v546
        %v1634 = vunpack.c.h.b16 %v546
        %v1635 = vunpack.c.l.b16 %v547
        %v1636 = vunpack.c.h.b16 %v547
        %v1637 = vunpack.c.l.b16 %v548
        %v1638 = vunpack.c.h.b16 %v548
        %v1639 = vunpack.c.l.b16 %v549
        %v1640 = vunpack.c.h.b16 %v549
        %v1641 = vunpack.c.l.b16 %v550
        %v1642 = vunpack.c.h.b16 %v550
        %v1643 = vunpack.c.l.b16 %v551
        %v1644 = vunpack.c.h.b16 %v551
        %v1645 = vunpack.c.l.b16 %v552
        %v1646 = vunpack.c.h.b16 %v552
        %v1647 = vunpack.c.l.b16 %v553
        %v1648 = vunpack.c.h.b16 %v553
        %v1649 = vunpack.c.l.b16 %v554
        %v1650 = vunpack.c.h.b16 %v554
        %v1651 = vunpack.c.l.b16 %v555
        %v1652 = vunpack.c.h.b16 %v555
        %v1653 = vunpack.c.l.b16 %v556
        %v1654 = vunpack.c.h.b16 %v556
        %v1655 = vunpack.c.l.b16 %v557
        %v1656 = vunpack.c.h.b16 %v557
        %v1657 = vunpack.c.l.b16 %v558
        %v1658 = vunpack.c.h.b16 %v558
        %v1659 = vunpack.c.l.b16 %v559
        %v1660 = vunpack.c.h.b16 %v559
        %v1661 = vunpack.c.l.b16 %v560
        %v1662 = vunpack.c.h.b16 %v560
        %v1663 = vunpack.c.l.b16 %v561
        %v1664 = vunpack.c.h.b16 %v561
        %v1665 = vunpack.c.l.b16 %v562
        %v1666 = vunpack.c.h.b16 %v562
        %v1667 = vunpack.c.l.b16 %v563
        %v1668 = vunpack.c.h.b16 %v563
        %v1669 = vpack.c.b16 %v1031, %v1029
        %v1670 = vpack.c.b16 %v1032, %v1030
        %v1671 = vpack.c.b16 %v1035, %v1033
        %v1672 = vpack.c.b16 %v1036, %v1034
        %v1673 = vpack.c.b16 %v1039, %v1037
        %v1674 = vpack.c.b16 %v1040, %v1038
        %v1675 = vpack.c.b16 %v1043, %v1041
        %v1676 = vpack.c.b16 %v1044, %v1042
        %v1677 = vpack.c.b16 %v1047, %v1045
        %v1678 = vpack.c.b16 %v1048, %v1046
        %v1679 = vpack.c.b16 %v1051, %v1049
        %v1680 = vpack.c.b16 %v1052, %v1050
        %v1681 = vpack.c.b16 %v1055, %v1053
        %v1682 = vpack.c.b16 %v1056, %v1054
        %v1683 = vpack.c.b16 %v1059, %v1057
        %v1684 = vpack.c.b16 %v1060, %v1058
        %v1685 = vpack.c.b16 %v1063, %v1061
        %v1686 = vpack.c.b16 %v1064, %v1062
        %v1687 = vpack.c.b16 %v1067, %v1065
        %v1688 = vpack.c.b16 %v1068, %v1066
        %v1689 = vpack.c.b16 %v1071, %v1069
        %v1690 = vpack.c.b16 %v1072, %v1070
        %v1691 = vpack.c.b16 %v1075, %v1073
        %v1692 = vpack.c.b16 %v1076, %v1074
        %v1693 = vpack.c.b16 %v1079, %v1077
        %v1694 = vpack.c.b16 %v1080, %v1078
        %v1695 = vpack.c.b16 %v1083, %v1081
        %v1696 = vpack.c.b16 %v1084, %v1082
        %v1697 = vpack.c.b16 %v1087, %v1085
        %v1698 = vpack.c.b16 %v1088, %v1086
        %v1699 = vpack.c.b16 %v1091, %v1089
        %v1700 = vpack.c.b16 %v1092, %v1090
        %v1701 = vpack.c.b16 %v1095, %v1093
        %v1702 = vpack.c.b16 %v1096, %v1094
        %v1703 = vpack.c.b16 %v1099, %v1097
        %v1704 = vpack.c.b16 %v1100, %v1098
        %v1705 = vpack.c.b16 %v1103, %v1101
        %v1706 = vpack.c.b16 %v1104, %v1102
        %v1707 = vpack.c.b16 %v1107, %v1105
        %v1708 = vpack.c.b16 %v1108, %v1106
        %v1709 = vpack.c.b16 %v1111, %v1109
        %v1710 = vpack.c.b16 %v1112, %v1110
        %v1711 = vpack.c.b16 %v1115, %v1113
        %v1712 = vpack.c.b16 %v1116, %v1114
        %v1713 = vpack.c.b16 %v1119, %v1117
        %v1714 = vpack.c.b16 %v1120, %v1118
        %v1715 = vpack.c.b16 %v1123, %v1121
        %v1716 = vpack.c.b16 %v1124, %v1122
        %v1717 = vpack.c.b16 %v1127, %v1125
        %v1718 = vpack.c.b16 %v1128, %v1126
        %v1719 = vpack.c.b16 %v1131, %v1129
        %v1720 = vpack.c.b16 %v1132, %v1130
        %v1721 = vpack.c.b16 %v1135, %v1133
        %v1722 = vpack.c.b16 %v1136, %v1134
        %v1723 = vpack.c.b16 %v1139, %v1137
        %v1724 = vpack.c.b16 %v1140, %v1138
        %v1725 = vpack.c.b16 %v1143, %v1141
        %v1726 = vpack.c.b16 %v1144, %v1142
        %v1727 = vpack.c.b16 %v1147, %v1145
        %v1728 = vpack.c.b16 %v1148, %v1146
        %v1729 = vpack.c.b16 %v1151, %v1149
        %v1730 = vpack.c.b16 %v1152, %v1150
        %v1731 = vpack.c.b16 %v1155, %v1153
        %v1732 = vpack.c.b16 %v1156, %v1154
        %v1733 = vpack.c.b16 %v1159, %v1157
        %v1734 = vpack.c.b16 %v1160, %v1158
        %v1735 = vpack.c.b16 %v1163, %v1161
        %v1736 = vpack.c.b16 %v1164, %v1162
        %v1737 = vpack.c.b16 %v1167, %v1165
        %v1738 = vpack.c.b16 %v1168, %v1166
        %v1739 = vpack.c.b16 %v1171, %v1169
        %v1740 = vpack.c.b16 %v1172, %v1170
        %v1741 = vpack.c.b16 %v1175, %v1173
        %v1742 = vpack.c.b16 %v1176, %v1174
        %v1743 = vpack.c.b16 %v1179, %v1177
        %v1744 = vpack.c.b16 %v1180, %v1178
        %v1745 = vpack.c.b16 %v1183, %v1181
        %v1746 = vpack.c.b16 %v1184, %v1182
        %v1747 = vpack.c.b16 %v1187, %v1185
        %v1748 = vpack.c.b16 %v1188, %v1186
        %v1749 = vpack.c.b16 %v1191, %v1189
        %v1750 = vpack.c.b16 %v1192, %v1190
        %v1751 = vpack.c.b16 %v1195, %v1193
        %v1752 = vpack.c.b16 %v1196, %v1194
        %v1753 = vpack.c.b16 %v1199, %v1197
        %v1754 = vpack.c.b16 %v1200, %v1198
        %v1755 = vpack.c.b16 %v1203, %v1201
        %v1756 = vpack.c.b16 %v1204, %v1202
        %v1757 = vpack.c.b16 %v1207, %v1205
        %v1758 = vpack.c.b16 %v1208, %v1206
        %v1759 = vpack.c.b16 %v1211, %v1209
        %v1760 = vpack.c.b16 %v1212, %v1210
        %v1761 = vpack.c.b16 %v1215, %v1213
        %v1762 = vpack.c.b16 %v1216, %v1214
        %v1763 = vpack.c.b16 %v1219, %v1217
        %v1764 = vpack.c.b16 %v1220, %v1218
        %v1765 = vpack.c.b16 %v1223, %v1221
        %v1766 = vpack.c.b16 %v1224, %v1222
        %v1767 = vpack.c.b16 %v1227, %v1225
        %v1768 = vpack.c.b16 %v1228, %v1226
        %v1769 = vpack.c.b16 %v1231, %v1229
        %v1770 = vpack.c.b16 %v1232, %v1230
        %v1771 = vpack.c.b16 %v1235, %v1233
        %v1772 = vpack.c.b16 %v1236, %v1234
        %v1773 = vpack.c.b16 %v1239, %v1237
        %v1774 = vpack.c.b16 %v1240, %v1238
        %v1775 = vpack.c.b16 %v1243, %v1241
        %v1776 = vpack.c.b16 %v1244, %v1242
        %v1777 = vpack.c.b16 %v1247, %v1245
        %v1778 = vpack.c.b16 %v1248, %v1246
        %v1779 = vpack.c.b16 %v1251, %v1249
        %v1780 = vpack.c.b16 %v1252, %v1250
        %v1781 = vpack.c.b16 %v1255, %v1253
        %v1782 = vpack.c.b16 %v1256, %v1254
        %v1783 = vpack.c.b16 %v1259, %v1257
        %v1784 = vpack.c.b16 %v1260, %v1258
        %v1785 = vpack.c.b16 %v1263, %v1261
        %v1786 = vpack.c.b16 %v1264, %v1262
        %v1787 = vpack.c.b16 %v1267, %v1265
        %v1788 = vpack.c.b16 %v1268, %v1266
        %v1789 = vpack.c.b16 %v1271, %v1269
        %v1790 = vpack.c.b16 %v1272, %v1270
        %v1791 = vpack.c.b16 %v1275, %v1273
        %v1792 = vpack.c.b16 %v1276, %v1274
        %v1793 = vpack.c.b16 %v1279, %v1277
        %v1794 = vpack.c.b16 %v1280, %v1278
        %v1795 = vpack.c.b16 %v1283, %v1281
        %v1796 = vpack.c.b16 %v1284, %v1282
        %v1797 = vpack.c.b16 %v1287, %v1285
        %v1798 = vpack.c.b16 %v1288, %v1286
        %v1799 = vpack.c.b16 %v1291, %v1289
        %v1800 = vpack.c.b16 %v1292, %v1290
        %v1801 = vpack.c.b16 %v1295, %v1293
        %v1802 = vpack.c.b16 %v1296, %v1294
        %v1803 = vpack.c.b16 %v1299, %v1297
        %v1804 = vpack.c.b16 %v1300, %v1298
        %v1805 = vpack.c.b16 %v1303, %v1301
        %v1806 = vpack.c.b16 %v1304, %v1302
        %v1807 = vpack.c.b16 %v1307, %v1305
        %v1808 = vpack.c.b16 %v1308, %v1306
        %v1809 = vpack.c.b16 %v1311, %v1309
        %v1810 = vpack.c.b16 %v1312, %v1310
        %v1811 = vpack.c.b16 %v1315, %v1313
        %v1812 = vpack.c.b16 %v1316, %v1314
        %v1813 = vpack.c.b16 %v1319, %v1317
        %v1814 = vpack.c.b16 %v1320, %v1318
        %v1815 = vpack.c.b16 %v1323, %v1321
        %v1816 = vpack.c.b16 %v1324, %v1322
        %v1817 = vpack.c.b16 %v1327, %v1325
        %v1818 = vpack.c.b16 %v1328, %v1326
        %v1819 = vpack.c.b16 %v1331, %v1329
        %v1820 = vpack.c.b16 %v1332, %v1330
        %v1821 = vpack.c.b16 %v1335, %v1333
        %v1822 = vpack.c.b16 %v1336, %v1334
        %v1823 = vpack.c.b16 %v1339, %v1337
        %v1824 = vpack.c.b16 %v1340, %v1338
        %v1825 = vpack.c.b16 %v1343, %v1341
        %v1826 = vpack.c.b16 %v1344, %v1342
        %v1827 = vpack.c.b16 %v1347, %v1345
        %v1828 = vpack.c.b16 %v1348, %v1346
        %v1829 = vpack.c.b16 %v1351, %v1349
        %v1830 = vpack.c.b16 %v1352, %v1350
        %v1831 = vpack.c.b16 %v1355, %v1353
        %v1832 = vpack.c.b16 %v1356, %v1354
        %v1833 = vpack.c.b16 %v1359, %v1357
        %v1834 = vpack.c.b16 %v1360, %v1358
        %v1835 = vpack.c.b16 %v1363, %v1361
        %v1836 = vpack.c.b16 %v1364, %v1362
        %v1837 = vpack.c.b16 %v1367, %v1365
        %v1838 = vpack.c.b16 %v1368, %v1366
        %v1839 = vpack.c.b16 %v1371, %v1369
        %v1840 = vpack.c.b16 %v1372, %v1370
        %v1841 = vpack.c.b16 %v1375, %v1373
        %v1842 = vpack.c.b16 %v1376, %v1374
        %v1843 = vpack.c.b16 %v1379, %v1377
        %v1844 = vpack.c.b16 %v1380, %v1378
        %v1845 = vpack.c.b16 %v1383, %v1381
        %v1846 = vpack.c.b16 %v1384, %v1382
        %v1847 = vpack.c.b16 %v1387, %v1385
        %v1848 = vpack.c.b16 %v1388, %v1386
        %v1849 = vpack.c.b16 %v1391, %v1389
        %v1850 = vpack.c.b16 %v1392, %v1390
        %v1851 = vpack.c.b16 %v1395, %v1393
        %v1852 = vpack.c.b16 %v1396, %v1394
        %v1853 = vpack.c.b16 %v1399, %v1397
        %v1854 = vpack.c.b16 %v1400, %v1398
        %v1855 = vpack.c.b16 %v1403, %v1401
        %v1856 = vpack.c.b16 %v1404, %v1402
        %v1857 = vpack.c.b16 %v1407, %v1405
        %v1858 = vpack.c.b16 %v1408, %v1406
        %v1859 = vpack.c.b16 %v1411, %v1409
        %v1860 = vpack.c.b16 %v1412, %v1410
        %v1861 = vpack.c.b16 %v1415, %v1413
        %v1862 = vpack.c.b16 %v1416, %v1414
        %v1863 = vpack.c.b16 %v1419, %v1417
        %v1864 = vpack.c.b16 %v1420, %v1418
        %v1865 = vpack.c.b16 %v1423, %v1421
        %v1866 = vpack.c.b16 %v1424, %v1422
        %v1867 = vpack.c.b16 %v1427, %v1425
        %v1868 = vpack.c.b16 %v1428, %v1426
        %v1869 = vpack.c.b16 %v1431, %v1429
        %v1870 = vpack.c.b16 %v1432, %v1430
        %v1871 = vpack.c.b16 %v1435, %v1433
        %v1872 = vpack.c.b16 %v1436, %v1434
        %v1873 = vpack.c.b16 %v1439, %v1437
        %v1874 = vpack.c.b16 %v1440, %v1438
        %v1875 = vpack.c.b16 %v1443, %v1441
        %v1876 = vpack.c.b16 %v1444, %v1442
        %v1877 = vpack.c.b16 %v1447, %v1445
        %v1878 = vpack.c.b16 %v1448, %v1446
        %v1879 = vpack.c.b16 %v1451, %v1449
        %v1880 = vpack.c.b16 %v1452, %v1450
        %v1881 = vpack.c.b16 %v1455, %v1453
        %v1882 = vpack.c.b16 %v1456, %v1454
        %v1883 = vpack.c.b16 %v1459, %v1457
        %v1884 = vpack.c.b16 %v1460, %v1458
        %v1885 = vpack.c.b16 %v1463, %v1461
        %v1886 = vpack.c.b16 %v1464, %v1462
        %v1887 = vpack.c.b16 %v1467, %v1465
        %v1888 = vpack.c.b16 %v1468, %v1466
        %v1889 = vpack.c.b16 %v1471, %v1469
        %v1890 = vpack.c.b16 %v1472, %v1470
        %v1891 = vpack.c.b16 %v1475, %v1473
        %v1892 = vpack.c.b16 %v1476, %v1474
        %v1893 = vpack.c.b16 %v1479, %v1477
        %v1894 = vpack.c.b16 %v1480, %v1478
        %v1895 = vpack.c.b16 %v1483, %v1481
        %v1896 = vpack.c.b16 %v1484, %v1482
        %v1897 = vpack.c.b16 %v1487, %v1485
        %v1898 = vpack.c.b16 %v1488, %v1486
        %v1899 = vpack.c.b16 %v1491, %v1489
        %v1900 = vpack.c.b16 %v1492, %v1490
        %v1901 = vpack.c.b16 %v1495, %v1493
        %v1902 = vpack.c.b16 %v1496, %v1494
        %v1903 = vpack.c.b16 %v1499, %v1497
        %v1904 = vpack.c.b16 %v1500, %v1498
        %v1905 = vpack.c.b16 %v1503, %v1501
        %v1906 = vpack.c.b16 %v1504, %v1502
        %v1907 = vpack.c.b16 %v1507, %v1505
        %v1908 = vpack.c.b16 %v1508, %v1506
        %v1909 = vpack.c.b16 %v1511, %v1509
        %v1910 = vpack.c.b16 %v1512, %v1510
        %v1911 = vpack.c.b16 %v1515, %v1513
        %v1912 = vpack.c.b16 %v1516, %v1514
        %v1913 = vpack.c.b16 %v1519, %v1517
        %v1914 = vpack.c.b16 %v1520, %v1518
        %v1915 = vpack.c.b16 %v1523, %v1521
        %v1916 = vpack.c.b16 %v1524, %v1522
        %v1917 = vpack.c.b16 %v1527, %v1525
        %v1918 = vpack.c.b16 %v1528, %v1526
        %v1919 = vpack.c.b16 %v1531, %v1529
        %v1920 = vpack.c.b16 %v1532, %v1530
        %v1921 = vpack.c.b16 %v1535, %v1533
        %v1922 = vpack.c.b16 %v1536, %v1534
        %v1923 = vpack.c.b16 %v1539, %v1537
        %v1924 = vpack.c.b16 %v1540, %v1538
        %v1925 = vpack.c.b16 %v1543, %v1541
        %v1926 = vpack.c.b16 %v1544, %v1542
        %v1927 = vpack.c.b16 %v1547, %v1545
        %v1928 = vpack.c.b16 %v1548, %v1546
        %v1929 = vpack.c.b16 %v1551, %v1549
        %v1930 = vpack.c.b16 %v1552, %v1550
        %v1931 = vpack.c.b16 %v1555, %v1553
        %v1932 = vpack.c.b16 %v1556, %v1554
        %v1933 = vpack.c.b16 %v1559, %v1557
        %v1934 = vpack.c.b16 %v1560, %v1558
        %v1935 = vpack.c.b16 %v1563, %v1561
        %v1936 = vpack.c.b16 %v1564, %v1562
        %v1937 = vpack.c.b16 %v1567, %v1565
        %v1938 = vpack.c.b16 %v1568, %v1566
        %v1939 = vpack.c.b16 %v1571, %v1569
        %v1940 = vpack.c.b16 %v1572, %v1570
        %v1941 = vpack.c.b16 %v1575, %v1573
        %v1942 = vpack.c.b16 %v1576, %v1574
        %v1943 = vpack.c.b16 %v1579, %v1577
        %v1944 = vpack.c.b16 %v1580, %v1578
        %v1945 = vpack.c.b16 %v1583, %v1581
        %v1946 = vpack.c.b16 %v1584, %v1582
        %v1947 = vpack.c.b16 %v1587, %v1585
        %v1948 = vpack.c.b16 %v1588, %v1586
        %v1949 = vpack.c.b16 %v1591, %v1589
        %v1950 = vpack.c.b16 %v1592, %v1590
        %v1951 = vpack.c.b16 %v1595, %v1593
        %v1952 = vpack.c.b16 %v1596, %v1594
        %v1953 = vpack.c.b16 %v1599, %v1597
        %v1954 = vpack.c.b16 %v1600, %v1598
        %v1955 = vpack.c.b16 %v1603, %v1601
        %v1956 = vpack.c.b16 %v1604, %v1602
        %v1957 = vpack.c.b16 %v1607, %v1605
        %v1958 = vpack.c.b16 %v1608, %v1606
        %v1959 = vpack.c.b16 %v1611, %v1609
        %v1960 = vpack.c.b16 %v1612, %v1610
        %v1961 = vpack.c.b16 %v1615, %v1613
        %v1962 = vpack.c.b16 %v1616, %v1614
        %v1963 = vpack.c.b16 %v1619, %v1617
        %v1964 = vpack.c.b16 %v1620, %v1618
        %v1965 = vpack.c.b16 %v1623, %v1621
        %v1966 = vpack.c.b16 %v1624, %v1622
        %v1967 = vpack.c.b16 %v1627, %v1625
        %v1968 = vpack.c.b16 %v1628, %v1626
        %v1969 = vpack.c.b16 %v1631, %v1629
        %v1970 = vpack.c.b16 %v1632, %v1630
        %v1971 = vpack.c.b16 %v1635, %v1633
        %v1972 = vpack.c.b16 %v1636, %v1634
        %v1973 = vpack.c.b16 %v1639, %v1637
        %v1974 = vpack.c.b16 %v1640, %v1638
        %v1975 = vpack.c.b16 %v1643, %v1641
        %v1976 = vpack.c.b16 %v1644, %v1642
        %v1977 = vpack.c.b16 %v1647, %v1645
        %v1978 = vpack.c.b16 %v1648, %v1646
        %v1979 = vpack.c.b16 %v1651, %v1649
        %v1980 = vpack.c.b16 %v1652, %v1650
        %v1981 = vpack.c.b16 %v1655, %v1653
        %v1982 = vpack.c.b16 %v1656, %v1654
        %v1983 = vpack.c.b16 %v1659, %v1657
        %v1984 = vpack.c.b16 %v1660, %v1658
        %v1985 = vpack.c.b16 %v1663, %v1661
        %v1986 = vpack.c.b16 %v1664, %v1662
        %v1987 = vpack.c.b16 %v1667, %v1665
        %v1988 = vpack.c.b16 %v1668, %v1666
        %2309 = vmatprep.subr.bf16.mxu0 %v1670
        %2310 = vmatpush1.bf16.msra.mxu0 %v1669
        %2311 = vmatprep.subr.bf16.mxu0 %v1672
        %2312 = vmatpush1.bf16.msra.mxu0 %v1671
        %2313 = vmatprep.subr.bf16.mxu0 %v1674
        %2314 = vmatpush1.bf16.msra.mxu0 %v1673
        %2315 = vmatprep.subr.bf16.mxu0 %v1676
        %2316 = vmatpush1.bf16.msra.mxu0 %v1675
        %2317 = vmatprep.subr.bf16.mxu0 %v1678
        %2318 = vmatpush1.bf16.msra.mxu0 %v1677
        %2319 = vmatprep.subr.bf16.mxu0 %v1680
        %2320 = vmatpush1.bf16.msra.mxu0 %v1679
        %2321 = vmatprep.subr.bf16.mxu0 %v1682
        %2322 = vmatpush1.bf16.msra.mxu0 %v1681
        %2323 = vmatprep.subr.bf16.mxu0 %v1684
        %2324 = vmatpush1.bf16.msra.mxu0 %v1683
        %2325 = vmatprep.subr.bf16.mxu0 %v1686
        %2326 = vmatpush1.bf16.msra.mxu0 %v1685
        %2327 = vmatprep.subr.bf16.mxu0 %v1688
        %2328 = vmatpush1.bf16.msra.mxu0 %v1687
        %2329 = vmatprep.subr.bf16.mxu0 %v1690
        %2330 = vmatpush1.bf16.msra.mxu0 %v1689
        %2331 = vmatprep.subr.bf16.mxu0 %v1692
        %2332 = vmatpush1.bf16.msra.mxu0 %v1691
        %2333 = vmatprep.subr.bf16.mxu0 %v1694
        %2334 = vmatpush1.bf16.msra.mxu0 %v1693
        %2335 = vmatprep.subr.bf16.mxu0 %v1696
        %2336 = vmatpush1.bf16.msra.mxu0 %v1695
        %2337 = vmatprep.subr.bf16.mxu0 %v1698
        %2338 = vmatpush1.bf16.msra.mxu0 %v1697
        %2339 = vmatprep.subr.bf16.mxu0 %v1700
        %2340 = vmatpush1.bf16.msra.mxu0 %v1699
        %2341 = vmatprep.mubr.bf16.mxu0 %v604
        %2342 = vmatmul.mubr.bf16.gmra.mrb[0].mxu0 %v590
        %v2343 = vpop.f32.mrb[0].mxu0
        %v2344 = vadd.f32 0.0, %v2343
        %v2345 = vpop.f32.mrb[0].mxu0
        %v2346 = vadd.f32 0.0, %v2345
        %v2347 = vpop.f32.mrb[0].mxu0
        %v2348 = vpop.f32.mrb[0].mxu0
        %2349 = vdwg.mxu0
        %2350 = vmatprep.subr.bf16.mxu0 %v1702
        %2351 = vmatpush1.bf16.msra.mxu0 %v1701
        %2352 = vmatprep.subr.bf16.mxu0 %v1704
        %2353 = vmatpush1.bf16.msra.mxu0 %v1703
        %2354 = vmatprep.subr.bf16.mxu0 %v1706
        %2355 = vmatpush1.bf16.msra.mxu0 %v1705
        %2356 = vmatprep.subr.bf16.mxu0 %v1708
        %2357 = vmatpush1.bf16.msra.mxu0 %v1707
        %2358 = vmatprep.subr.bf16.mxu0 %v1710
        %2359 = vmatpush1.bf16.msra.mxu0 %v1709
        %2360 = vmatprep.subr.bf16.mxu0 %v1712
        %2361 = vmatpush1.bf16.msra.mxu0 %v1711
        %2362 = vmatprep.subr.bf16.mxu0 %v1714
        %2363 = vmatpush1.bf16.msra.mxu0 %v1713
        %2364 = vmatprep.subr.bf16.mxu0 %v1716
        %2365 = vmatpush1.bf16.msra.mxu0 %v1715
        %2366 = vmatprep.subr.bf16.mxu0 %v1718
        %2367 = vmatpush1.bf16.msra.mxu0 %v1717
        %2368 = vmatprep.subr.bf16.mxu0 %v1720
        %2369 = vmatpush1.bf16.msra.mxu0 %v1719
        %2370 = vmatprep.subr.bf16.mxu0 %v1722
        %2371 = vmatpush1.bf16.msra.mxu0 %v1721
        %2372 = vmatprep.subr.bf16.mxu0 %v1724
        %2373 = vmatpush1.bf16.msra.mxu0 %v1723
        %2374 = vmatprep.subr.bf16.mxu0 %v1726
        %2375 = vmatpush1.bf16.msra.mxu0 %v1725
        %2376 = vmatprep.subr.bf16.mxu0 %v1728
        %2377 = vmatpush1.bf16.msra.mxu0 %v1727
        %2378 = vmatprep.subr.bf16.mxu0 %v1730
        %2379 = vmatpush1.bf16.msra.mxu0 %v1729
        %2380 = vmatprep.subr.bf16.mxu0 %v1732
        %2381 = vmatpush1.bf16.msra.mxu0 %v1731
        %2382 = vmatprep.mubr.bf16.mxu0 %v614
        %2383 = vmatmul.mubr.bf16.gmra.mrb[0].mxu0 %v612
        %v2384 = vpop.f32.mrb[0].mxu0
        %v2385 = vadd.f32 %v2344, %v2384
        %v2386 = vpop.f32.mrb[0].mxu0
        %v2387 = vadd.f32 %v2346, %v2386
        %v2388 = vpop.f32.mrb[0].mxu0
        %v2389 = vpop.f32.mrb[0].mxu0
        %2390 = vdwg.mxu0
        %2391 = vmatprep.subr.bf16.mxu0 %v1734
        %2392 = vmatpush1.bf16.msra.mxu0 %v1733
        %2393 = vmatprep.subr.bf16.mxu0 %v1736
        %2394 = vmatpush1.bf16.msra.mxu0 %v1735
        %2395 = vmatprep.subr.bf16.mxu0 %v1738
        %2396 = vmatpush1.bf16.msra.mxu0 %v1737
        %2397 = vmatprep.subr.bf16.mxu0 %v1740
        %2398 = vmatpush1.bf16.msra.mxu0 %v1739
        %2399 = vmatprep.subr.bf16.mxu0 %v1742
        %2400 = vmatpush1.bf16.msra.mxu0 %v1741
        %2401 = vmatprep.subr.bf16.mxu0 %v1744
        %2402 = vmatpush1.bf16.msra.mxu0 %v1743
        %2403 = vmatprep.subr.bf16.mxu0 %v1746
        %2404 = vmatpush1.bf16.msra.mxu0 %v1745
        %2405 = vmatprep.subr.bf16.mxu0 %v1748
        %2406 = vmatpush1.bf16.msra.mxu0 %v1747
        %2407 = vmatprep.subr.bf16.mxu0 %v1750
        %2408 = vmatpush1.bf16.msra.mxu0 %v1749
        %2409 = vmatprep.subr.bf16.mxu0 %v1752
        %2410 = vmatpush1.bf16.msra.mxu0 %v1751
        %2411 = vmatprep.subr.bf16.mxu0 %v1754
        %2412 = vmatpush1.bf16.msra.mxu0 %v1753
        %2413 = vmatprep.subr.bf16.mxu0 %v1756
        %2414 = vmatpush1.bf16.msra.mxu0 %v1755
        %2415 = vmatprep.subr.bf16.mxu0 %v1758
        %2416 = vmatpush1.bf16.msra.mxu0 %v1757
        %2417 = vmatprep.subr.bf16.mxu0 %v1760
        %2418 = vmatpush1.bf16.msra.mxu0 %v1759
        %2419 = vmatprep.subr.bf16.mxu0 %v1762
        %2420 = vmatpush1.bf16.msra.mxu0 %v1761
        %2421 = vmatprep.subr.bf16.mxu0 %v1764
        %2422 = vmatpush1.bf16.msra.mxu0 %v1763
        %2423 = vmatprep.mubr.bf16.mxu0 %v611
        %2424 = vmatmul.mubr.bf16.gmra.mrb[0].mxu0 %v597
        %v2425 = vpop.f32.mrb[0].mxu0
        %v2426 = vadd.f32 %v2385, %v2425
        %v2427 = vpop.f32.mrb[0].mxu0
        %v2428 = vadd.f32 %v2387, %v2427
        %v2429 = vpop.f32.mrb[0].mxu0
        %v2430 = vpop.f32.mrb[0].mxu0
        %2431 = vdwg.mxu0
        %2432 = vmatprep.subr.bf16.mxu0 %v1766
        %2433 = vmatpush1.bf16.msra.mxu0 %v1765
        %2434 = vmatprep.subr.bf16.mxu0 %v1768
        %2435 = vmatpush1.bf16.msra.mxu0 %v1767
        %2436 = vmatprep.subr.bf16.mxu0 %v1770
        %2437 = vmatpush1.bf16.msra.mxu0 %v1769
        %2438 = vmatprep.subr.bf16.mxu0 %v1772
        %2439 = vmatpush1.bf16.msra.mxu0 %v1771
        %2440 = vmatprep.subr.bf16.mxu0 %v1774
        %2441 = vmatpush1.bf16.msra.mxu0 %v1773
        %2442 = vmatprep.subr.bf16.mxu0 %v1776
        %2443 = vmatpush1.bf16.msra.mxu0 %v1775
        %2444 = vmatprep.subr.bf16.mxu0 %v1778
        %2445 = vmatpush1.bf16.msra.mxu0 %v1777
        %2446 = vmatprep.subr.bf16.mxu0 %v1780
        %2447 = vmatpush1.bf16.msra.mxu0 %v1779
        %2448 = vmatprep.subr.bf16.mxu0 %v1782
        %2449 = vmatpush1.bf16.msra.mxu0 %v1781
        %2450 = vmatprep.subr.bf16.mxu0 %v1784
        %2451 = vmatpush1.bf16.msra.mxu0 %v1783
        %2452 = vmatprep.subr.bf16.mxu0 %v1786
        %2453 = vmatpush1.bf16.msra.mxu0 %v1785
        %2454 = vmatprep.subr.bf16.mxu0 %v1788
        %2455 = vmatpush1.bf16.msra.mxu0 %v1787
        %2456 = vmatprep.subr.bf16.mxu0 %v1790
        %2457 = vmatpush1.bf16.msra.mxu0 %v1789
        %2458 = vmatprep.subr.bf16.mxu0 %v1792
        %2459 = vmatpush1.bf16.msra.mxu0 %v1791
        %2460 = vmatprep.subr.bf16.mxu0 %v1794
        %2461 = vmatpush1.bf16.msra.mxu0 %v1793
        %2462 = vmatprep.subr.bf16.mxu0 %v1796
        %2463 = vmatpush1.bf16.msra.mxu0 %v1795
        %2464 = vmatprep.mubr.bf16.mxu0 %v615
        %2465 = vmatmul.mubr.bf16.gmra.mrb[0].mxu0 %v613
        %v2466 = vpop.f32.mrb[0].mxu0
        %v2467 = vadd.f32 %v2426, %v2466
        %v2468 = vpop.f32.mrb[0].mxu0
        %v2469 = vadd.f32 %v2428, %v2468
        %v2470 = vpop.f32.mrb[0].mxu0
        %v2471 = vpop.f32.mrb[0].mxu0
        %2472 = vdwg.mxu0
        %2473 = vmatprep.subr.bf16.mxu0 %v1798
        %2474 = vmatpush1.bf16.msra.mxu0 %v1797
        %2475 = vmatprep.subr.bf16.mxu0 %v1800
        %2476 = vmatpush1.bf16.msra.mxu0 %v1799
        %2477 = vmatprep.subr.bf16.mxu0 %v1802
        %2478 = vmatpush1.bf16.msra.mxu0 %v1801
        %2479 = vmatprep.subr.bf16.mxu0 %v1804
        %2480 = vmatpush1.bf16.msra.mxu0 %v1803
        %2481 = vmatprep.subr.bf16.mxu0 %v1806
        %2482 = vmatpush1.bf16.msra.mxu0 %v1805
        %2483 = vmatprep.subr.bf16.mxu0 %v1808
        %2484 = vmatpush1.bf16.msra.mxu0 %v1807
        %2485 = vmatprep.subr.bf16.mxu0 %v1810
        %2486 = vmatpush1.bf16.msra.mxu0 %v1809
        %2487 = vmatprep.subr.bf16.mxu0 %v1812
        %2488 = vmatpush1.bf16.msra.mxu0 %v1811
        %2489 = vmatprep.subr.bf16.mxu0 %v1814
        %2490 = vmatpush1.bf16.msra.mxu0 %v1813
        %2491 = vmatprep.subr.bf16.mxu0 %v1816
        %2492 = vmatpush1.bf16.msra.mxu0 %v1815
        %2493 = vmatprep.subr.bf16.mxu0 %v1818
        %2494 = vmatpush1.bf16.msra.mxu0 %v1817
        %2495 = vmatprep.subr.bf16.mxu0 %v1820
        %2496 = vmatpush1.bf16.msra.mxu0 %v1819
        %2497 = vmatprep.subr.bf16.mxu0 %v1822
        %2498 = vmatpush1.bf16.msra.mxu0 %v1821
        %2499 = vmatprep.subr.bf16.mxu0 %v1824
        %2500 = vmatpush1.bf16.msra.mxu0 %v1823
        %2501 = vmatprep.subr.bf16.mxu0 %v1826
        %2502 = vmatpush1.bf16.msra.mxu0 %v1825
        %2503 = vmatprep.subr.bf16.mxu0 %v1828
        %2504 = vmatpush1.bf16.msra.mxu0 %v1827
        %2505 = vmatprep.mubr.bf16.mxu0 %v653
        %2506 = vmatmul.mubr.bf16.gmra.mrb[0].mxu0 %v639
        %v2507 = vpop.f32.mrb[0].mxu0
        %v2508 = vadd.f32 %v2467, %v2507
        %v2509 = vpop.f32.mrb[0].mxu0
        %v2510 = vadd.f32 %v2469, %v2509
        %v2511 = vpop.f32.mrb[0].mxu0
        %v2512 = vpop.f32.mrb[0].mxu0
        %2513 = vdwg.mxu0
        %2514 = vmatprep.subr.bf16.mxu0 %v1830
        %2515 = vmatpush1.bf16.msra.mxu0 %v1829
        %2516 = vmatprep.subr.bf16.mxu0 %v1832
        %2517 = vmatpush1.bf16.msra.mxu0 %v1831
        %2518 = vmatprep.subr.bf16.mxu0 %v1834
        %2519 = vmatpush1.bf16.msra.mxu0 %v1833
        %2520 = vmatprep.subr.bf16.mxu0 %v1836
        %2521 = vmatpush1.bf16.msra.mxu0 %v1835
        %2522 = vmatprep.subr.bf16.mxu0 %v1838
        %2523 = vmatpush1.bf16.msra.mxu0 %v1837
        %2524 = vmatprep.subr.bf16.mxu0 %v1840
        %2525 = vmatpush1.bf16.msra.mxu0 %v1839
        %2526 = vmatprep.subr.bf16.mxu0 %v1842
        %2527 = vmatpush1.bf16.msra.mxu0 %v1841
        %2528 = vmatprep.subr.bf16.mxu0 %v1844
        %2529 = vmatpush1.bf16.msra.mxu0 %v1843
        %2530 = vmatprep.subr.bf16.mxu0 %v1846
        %2531 = vmatpush1.bf16.msra.mxu0 %v1845
        %2532 = vmatprep.subr.bf16.mxu0 %v1848
        %2533 = vmatpush1.bf16.msra.mxu0 %v1847
        %2534 = vmatprep.subr.bf16.mxu0 %v1850
        %2535 = vmatpush1.bf16.msra.mxu0 %v1849
        %2536 = vmatprep.subr.bf16.mxu0 %v1852
        %2537 = vmatpush1.bf16.msra.mxu0 %v1851
        %2538 = vmatprep.subr.bf16.mxu0 %v1854
        %2539 = vmatpush1.bf16.msra.mxu0 %v1853
        %2540 = vmatprep.subr.bf16.mxu0 %v1856
        %2541 = vmatpush1.bf16.msra.mxu0 %v1855
        %2542 = vmatprep.subr.bf16.mxu0 %v1858
        %2543 = vmatpush1.bf16.msra.mxu0 %v1857
        %2544 = vmatprep.subr.bf16.mxu0 %v1860
        %2545 = vmatpush1.bf16.msra.mxu0 %v1859
        %2546 = vmatprep.mubr.bf16.mxu0 %v663
        %2547 = vmatmul.mubr.bf16.gmra.mrb[0].mxu0 %v661
        %v2548 = vpop.f32.mrb[0].mxu0
        %v2549 = vadd.f32 %v2508, %v2548
        %v2550 = vpop.f32.mrb[0].mxu0
        %v2551 = vadd.f32 %v2510, %v2550
        %v2552 = vpop.f32.mrb[0].mxu0
        %v2553 = vpop.f32.mrb[0].mxu0
        %2554 = vdwg.mxu0
        %2555 = vmatprep.subr.bf16.mxu0 %v1862
        %2556 = vmatpush1.bf16.msra.mxu0 %v1861
        %2557 = vmatprep.subr.bf16.mxu0 %v1864
        %2558 = vmatpush1.bf16.msra.mxu0 %v1863
        %2559 = vmatprep.subr.bf16.mxu0 %v1866
        %2560 = vmatpush1.bf16.msra.mxu0 %v1865
        %2561 = vmatprep.subr.bf16.mxu0 %v1868
        %2562 = vmatpush1.bf16.msra.mxu0 %v1867
        %2563 = vmatprep.subr.bf16.mxu0 %v1870
        %2564 = vmatpush1.bf16.msra.mxu0 %v1869
        %2565 = vmatprep.subr.bf16.mxu0 %v1872
        %2566 = vmatpush1.bf16.msra.mxu0 %v1871
        %2567 = vmatprep.subr.bf16.mxu0 %v1874
        %2568 = vmatpush1.bf16.msra.mxu0 %v1873
        %2569 = vmatprep.subr.bf16.mxu0 %v1876
        %2570 = vmatpush1.bf16.msra.mxu0 %v1875
        %2571 = vmatprep.subr.bf16.mxu0 %v1878
        %2572 = vmatpush1.bf16.msra.mxu0 %v1877
        %2573 = vmatprep.subr.bf16.mxu0 %v1880
        %2574 = vmatpush1.bf16.msra.mxu0 %v1879
        %2575 = vmatprep.subr.bf16.mxu0 %v1882
        %2576 = vmatpush1.bf16.msra.mxu0 %v1881
        %2577 = vmatprep.subr.bf16.mxu0 %v1884
        %2578 = vmatpush1.bf16.msra.mxu0 %v1883
        %2579 = vmatprep.subr.bf16.mxu0 %v1886
        %2580 = vmatpush1.bf16.msra.mxu0 %v1885
        %2581 = vmatprep.subr.bf16.mxu0 %v1888
        %2582 = vmatpush1.bf16.msra.mxu0 %v1887
        %2583 = vmatprep.subr.bf16.mxu0 %v1890
        %2584 = vmatpush1.bf16.msra.mxu0 %v1889
        %2585 = vmatprep.subr.bf16.mxu0 %v1892
        %2586 = vmatpush1.bf16.msra.mxu0 %v1891
        %2587 = vmatprep.mubr.bf16.mxu0 %v660
        %2588 = vmatmul.mubr.bf16.gmra.mrb[0].mxu0 %v646
        %v2589 = vpop.f32.mrb[0].mxu0
        %v2590 = vadd.f32 %v2549, %v2589
        %v2591 = vpop.f32.mrb[0].mxu0
        %v2592 = vadd.f32 %v2551, %v2591
        %v2593 = vpop.f32.mrb[0].mxu0
        %v2594 = vpop.f32.mrb[0].mxu0
        %2595 = vdwg.mxu0
        %2596 = vmatprep.subr.bf16.mxu0 %v1894
        %2597 = vmatpush1.bf16.msra.mxu0 %v1893
        %2598 = vmatprep.subr.bf16.mxu0 %v1896
        %2599 = vmatpush1.bf16.msra.mxu0 %v1895
        %2600 = vmatprep.subr.bf16.mxu0 %v1898
        %2601 = vmatpush1.bf16.msra.mxu0 %v1897
        %2602 = vmatprep.subr.bf16.mxu0 %v1900
        %2603 = vmatpush1.bf16.msra.mxu0 %v1899
        %2604 = vmatprep.subr.bf16.mxu0 %v1902
        %2605 = vmatpush1.bf16.msra.mxu0 %v1901
        %2606 = vmatprep.subr.bf16.mxu0 %v1904
        %2607 = vmatpush1.bf16.msra.mxu0 %v1903
        %2608 = vmatprep.subr.bf16.mxu0 %v1906
        %2609 = vmatpush1.bf16.msra.mxu0 %v1905
        %2610 = vmatprep.subr.bf16.mxu0 %v1908
        %2611 = vmatpush1.bf16.msra.mxu0 %v1907
        %2612 = vmatprep.subr.bf16.mxu0 %v1910
        %2613 = vmatpush1.bf16.msra.mxu0 %v1909
        %2614 = vmatprep.subr.bf16.mxu0 %v1912
        %2615 = vmatpush1.bf16.msra.mxu0 %v1911
        %2616 = vmatprep.subr.bf16.mxu0 %v1914
        %2617 = vmatpush1.bf16.msra.mxu0 %v1913
        %2618 = vmatprep.subr.bf16.mxu0 %v1916
        %2619 = vmatpush1.bf16.msra.mxu0 %v1915
        %2620 = vmatprep.subr.bf16.mxu0 %v1918
        %2621 = vmatpush1.bf16.msra.mxu0 %v1917
        %2622 = vmatprep.subr.bf16.mxu0 %v1920
        %2623 = vmatpush1.bf16.msra.mxu0 %v1919
        %2624 = vmatprep.subr.bf16.mxu0 %v1922
        %2625 = vmatpush1.bf16.msra.mxu0 %v1921
        %2626 = vmatprep.subr.bf16.mxu0 %v1924
        %2627 = vmatpush1.bf16.msra.mxu0 %v1923
        %2628 = vmatprep.mubr.bf16.mxu0 %v664
        %2629 = vmatmul.mubr.bf16.gmra.mrb[0].mxu0 %v662
        %v2630 = vpop.f32.mrb[0].mxu0
        %v2631 = vadd.f32 %v2590, %v2630
        %v2632 = vpop.f32.mrb[0].mxu0
        %v2633 = vadd.f32 %v2592, %v2632
        %v2634 = vpop.f32.mrb[0].mxu0
        %v2635 = vpop.f32.mrb[0].mxu0
        %2636 = vdwg.mxu0
        %2637 = vmatprep.subr.bf16.mxu0 %v1926
        %2638 = vmatpush1.bf16.msra.mxu0 %v1925
        %2639 = vmatprep.subr.bf16.mxu0 %v1928
        %2640 = vmatpush1.bf16.msra.mxu0 %v1927
        %2641 = vmatprep.subr.bf16.mxu0 %v1930
        %2642 = vmatpush1.bf16.msra.mxu0 %v1929
        %2643 = vmatprep.subr.bf16.mxu0 %v1932
        %2644 = vmatpush1.bf16.msra.mxu0 %v1931
        %2645 = vmatprep.subr.bf16.mxu0 %v1934
        %2646 = vmatpush1.bf16.msra.mxu0 %v1933
        %2647 = vmatprep.subr.bf16.mxu0 %v1936
        %2648 = vmatpush1.bf16.msra.mxu0 %v1935
        %2649 = vmatprep.subr.bf16.mxu0 %v1938
        %2650 = vmatpush1.bf16.msra.mxu0 %v1937
        %2651 = vmatprep.subr.bf16.mxu0 %v1940
        %2652 = vmatpush1.bf16.msra.mxu0 %v1939
        %2653 = vmatprep.subr.bf16.mxu0 %v1942
        %2654 = vmatpush1.bf16.msra.mxu0 %v1941
        %2655 = vmatprep.subr.bf16.mxu0 %v1944
        %2656 = vmatpush1.bf16.msra.mxu0 %v1943
        %2657 = vmatprep.subr.bf16.mxu0 %v1946
        %2658 = vmatpush1.bf16.msra.mxu0 %v1945
        %2659 = vmatprep.subr.bf16.mxu0 %v1948
        %2660 = vmatpush1.bf16.msra.mxu0 %v1947
        %2661 = vmatprep.subr.bf16.mxu0 %v1950
        %2662 = vmatpush1.bf16.msra.mxu0 %v1949
        %2663 = vmatprep.subr.bf16.mxu0 %v1952
        %2664 = vmatpush1.bf16.msra.mxu0 %v1951
        %2665 = vmatprep.subr.bf16.mxu0 %v1954
        %2666 = vmatpush1.bf16.msra.mxu0 %v1953
        %2667 = vmatprep.subr.bf16.mxu0 %v1956
        %2668 = vmatpush1.bf16.msra.mxu0 %v1955
        %2669 = vmatprep.mubr.bf16.mxu0 %v686
        %2670 = vmatmul.mubr.bf16.gmra.mrb[0].mxu0 %v679
        %v2671 = vpop.f32.mrb[0].mxu0
        %v2672 = vadd.f32 %v2631, %v2671
        %v2673 = vpop.f32.mrb[0].mxu0
        %v2674 = vadd.f32 %v2633, %v2673
        %v2675 = vpop.f32.mrb[0].mxu0
        %v2676 = vpop.f32.mrb[0].mxu0
        %2677 = vdwg.mxu0
        %2678 = vmatprep.subr.bf16.mxu0 %v1958
        %2679 = vmatpush1.bf16.msra.mxu0 %v1957
        %2680 = vmatprep.subr.bf16.mxu0 %v1960
        %2681 = vmatpush1.bf16.msra.mxu0 %v1959
        %2682 = vmatprep.subr.bf16.mxu0 %v1962
        %2683 = vmatpush1.bf16.msra.mxu0 %v1961
        %2684 = vmatprep.subr.bf16.mxu0 %v1964
        %2685 = vmatpush1.bf16.msra.mxu0 %v1963
        %2686 = vmatprep.subr.bf16.mxu0 %v1966
        %2687 = vmatpush1.bf16.msra.mxu0 %v1965
        %2688 = vmatprep.subr.bf16.mxu0 %v1968
        %2689 = vmatpush1.bf16.msra.mxu0 %v1967
        %2690 = vmatprep.subr.bf16.mxu0 %v1970
        %2691 = vmatpush1.bf16.msra.mxu0 %v1969
        %2692 = vmatprep.subr.bf16.mxu0 %v1972
        %2693 = vmatpush1.bf16.msra.mxu0 %v1971
        %2694 = vmatprep.subr.bf16.mxu0 %v1974
        %2695 = vmatpush1.bf16.msra.mxu0 %v1973
        %2696 = vmatprep.subr.bf16.mxu0 %v1976
        %2697 = vmatpush1.bf16.msra.mxu0 %v1975
        %2698 = vmatprep.subr.bf16.mxu0 %v1978
        %2699 = vmatpush1.bf16.msra.mxu0 %v1977
        %2700 = vmatprep.subr.bf16.mxu0 %v1980
        %2701 = vmatpush1.bf16.msra.mxu0 %v1979
        %2702 = vmatprep.subr.bf16.mxu0 %v1982
        %2703 = vmatpush1.bf16.msra.mxu0 %v1981
        %2704 = vmatprep.subr.bf16.mxu0 %v1984
        %2705 = vmatpush1.bf16.msra.mxu0 %v1983
        %2706 = vmatprep.subr.bf16.mxu0 %v1986
        %2707 = vmatpush1.bf16.msra.mxu0 %v1985
        %2708 = vmatprep.subr.bf16.mxu0 %v1988
        %2709 = vmatpush1.bf16.msra.mxu0 %v1987
        %2710 = vmatprep.mubr.bf16.mxu0 %v688
        %2711 = vmatmul.mubr.bf16.gmra.mrb[0].mxu0 %v687
        %v2712 = vpop.f32.mrb[0].mxu0
        %v2713 = vadd.f32 %v2672, %v2712
        %v2714 = vpop.f32.mrb[0].mxu0
        %v2715 = vadd.f32 %v2674, %v2714
        %v2716 = vpop.f32.mrb[0].mxu0
        %v2717 = vpop.f32.mrb[0].mxu0
        %2718 = vdwg.mxu0
        %v2721 = vcombine.low %v2713, %v2715
        %v2723 = vunpack.c.l.s4 1983009808
        %v2724 = vunpack.c.0.s8 %v2723
        %v2725 = vlaneseq
        %v2726 = vshrl.u32 %v2725, 7
        %v2727 = vsub.s32 %v2724, %v2726
        %v2728 = vrot.slane %v2721, %v2727
        %v2730 = vadd.f32 %v240, %v2728
        %2731 = vst [vmem:[#allocation2] sm:$0xf] %v2730
        %p2732 = scmp.eq.s32.totalorder %s17, 4
        // Predicated region
        $region45: #{qnetwork_forward.7} parent=39 // pred_check
          %p2733 = pneg %p2732
        $region46: #{qnetwork_forward.7} parent=39 // pred_check_branch
          %2735 = sbr.rel (%p2733) target = $region48
        $region47: #{qnetwork_forward.7} parent=39 // pred_region
          %v2736 = vld [vmem:[#allocation2] sm:$0xf]
          %v2737 = vld [vmem:[%s2] sm:$0x3]
          %v2739 = vlaneseq
          %v2740 = vshrl.u32 %v2739, 7
          %v2741 = vsub.s32 0, %v2740
          %v2742 = vrot.slane %v2737, %v2741
          %v2743 = vlaneseq
          %v2744 = vshrl.u32 %v2743, 7
          %v2745 = vsub.s32 1, %v2744
          %v2746 = vrot.slane %v2737, %v2745
          %v2747 = vcombine.low %v2742, %v2746
          %v2749 = vunpack.c.l.s4 1983009808
          %v2750 = vunpack.c.0.s8 %v2749
          %v2751 = vlaneseq
          %v2752 = vshrl.u32 %v2751, 7
          %v2753 = vsub.s32 %v2750, %v2752
          %v2754 = vrot.slane %v2747, %v2753
          %v2756 = vadd.f32 %v2736, %v2754
          %v2757 = vmax.f32 %v2756, 0.0
          %v2758 = vld [vmem:[%s3] sm:$0xff]
          %v2759 = vld [vmem:[%s3 + $0x8] sm:$0xff]
          %v2760 = vld [vmem:[%s3 + $0x10] sm:$0xff]
          %v2761 = vld [vmem:[%s3 + $0x18] sm:$0xff]
          %v2762 = vld [vmem:[%s3 + $0x20] sm:$0xff]
          %v2763 = vld [vmem:[%s3 + $0x28] sm:$0xff]
          %v2764 = vld [vmem:[%s3 + $0x30] sm:$0xff]
          %v2765 = vld [vmem:[%s3 + $0x38] sm:$0xff]
          %v2766 = vld [vmem:[%s3 + $0x40] sm:$0xff]
          %v2767 = vld [vmem:[%s3 + $0x48] sm:$0xff]
          %v2768 = vld [vmem:[%s3 + $0x50] sm:$0xff]
          %v2769 = vld [vmem:[%s3 + $0x58] sm:$0xff]
          %v2770 = vld [vmem:[%s3 + $0x60] sm:$0xff]
          %v2771 = vld [vmem:[%s3 + $0x68] sm:$0xff]
          %v2772 = vld [vmem:[%s3 + $0x70] sm:$0xff]
          %v2773 = vld [vmem:[%s3 + $0x78] sm:$0xff]
          %v2774 = vld [vmem:[%s3 + $0x80] sm:$0xff]
          %v2775 = vld [vmem:[%s3 + $0x88] sm:$0xff]
          %v2776 = vld [vmem:[%s3 + $0x90] sm:$0xff]
          %v2777 = vld [vmem:[%s3 + $0x98] sm:$0xff]
          %v2778 = vld [vmem:[%s3 + $0xa0] sm:$0xff]
          %v2779 = vld [vmem:[%s3 + $0xa8] sm:$0xff]
          %v2780 = vld [vmem:[%s3 + $0xb0] sm:$0xff]
          %v2781 = vld [vmem:[%s3 + $0xb8] sm:$0xff]
          %v2782 = vld [vmem:[%s3 + $0xc0] sm:$0xff]
          %v2783 = vld [vmem:[%s3 + $0xc8] sm:$0xff]
          %v2784 = vld [vmem:[%s3 + $0xd0] sm:$0xff]
          %v2785 = vld [vmem:[%s3 + $0xd8] sm:$0xff]
          %v2786 = vld [vmem:[%s3 + $0xe0] sm:$0xff]
          %v2787 = vld [vmem:[%s3 + $0xe8] sm:$0xff]
          %v2788 = vld [vmem:[%s3 + $0xf0] sm:$0xff]
          %v2789 = vld [vmem:[%s3 + $0xf8] sm:$0xff]
          %v2790 = vld [vmem:[%s4] sm:$0x1]
          %v2792 = vlaneseq
          %v2793 = vshrl.u32 %v2792, 7
          %v2794 = vsub.s32 0, %v2793
          %v2795 = vrot.slane %v2790, %v2794
          %v2799 = vunpack.c.l.s4 1983009808
          %v2800 = vunpack.c.0.s8 %v2799
          %v2801 = vlaneseq
          %v2802 = vshrl.u32 %v2801, 7
          %v2803 = vsub.s32 %v2800, %v2802
          %v2804 = vrot.slane %v2757, %v2803
          %v2805 = vcombine.high %v2804, %v2804
          %2808 = vmatprep.subr.mxu0 0.0
          %2809 = vmatpush1.msra.mxu0 %v2758
          %2810 = vmatprep.subr.mxu0 0.0
          %2811 = vmatpush1.msra.mxu0 %v2759
          %2812 = vmatprep.subr.mxu0 0.0
          %2813 = vmatpush1.msra.mxu0 %v2760
          %2814 = vmatprep.subr.mxu0 0.0
          %2815 = vmatpush1.msra.mxu0 %v2761
          %2816 = vmatprep.subr.mxu0 0.0
          %2817 = vmatpush1.msra.mxu0 %v2762
          %2818 = vmatprep.subr.mxu0 0.0
          %2819 = vmatpush1.msra.mxu0 %v2763
          %2820 = vmatprep.subr.mxu0 0.0
          %2821 = vmatpush1.msra.mxu0 %v2764
          %2822 = vmatprep.subr.mxu0 0.0
          %2823 = vmatpush1.msra.mxu0 %v2765
          %2824 = vmatprep.subr.mxu0 0.0
          %2825 = vmatpush1.msra.mxu0 %v2766
          %2826 = vmatprep.subr.mxu0 0.0
          %2827 = vmatpush1.msra.mxu0 %v2767
          %2828 = vmatprep.subr.mxu0 0.0
          %2829 = vmatpush1.msra.mxu0 %v2768
          %2830 = vmatprep.subr.mxu0 0.0
          %2831 = vmatpush1.msra.mxu0 %v2769
          %2832 = vmatprep.subr.mxu0 0.0
          %2833 = vmatpush1.msra.mxu0 %v2770
          %2834 = vmatprep.subr.mxu0 0.0
          %2835 = vmatpush1.msra.mxu0 %v2771
          %2836 = vmatprep.subr.mxu0 0.0
          %2837 = vmatpush1.msra.mxu0 %v2772
          %2838 = vmatprep.subr.mxu0 0.0
          %2839 = vmatpush1.msra.mxu0 %v2773
          %2840 = vmatprep.subr.mxu0 0.0
          %2841 = vmatpush1.msra.mxu0 %v2774
          %2842 = vmatprep.subr.mxu0 0.0
          %2843 = vmatpush1.msra.mxu0 %v2775
          %2844 = vmatprep.subr.mxu0 0.0
          %2845 = vmatpush1.msra.mxu0 %v2776
          %2846 = vmatprep.subr.mxu0 0.0
          %2847 = vmatpush1.msra.mxu0 %v2777
          %2848 = vmatprep.subr.mxu0 0.0
          %2849 = vmatpush1.msra.mxu0 %v2778
          %2850 = vmatprep.subr.mxu0 0.0
          %2851 = vmatpush1.msra.mxu0 %v2779
          %2852 = vmatprep.subr.mxu0 0.0
          %2853 = vmatpush1.msra.mxu0 %v2780
          %2854 = vmatprep.subr.mxu0 0.0
          %2855 = vmatpush1.msra.mxu0 %v2781
          %2856 = vmatprep.subr.mxu0 0.0
          %2857 = vmatpush1.msra.mxu0 %v2782
          %2858 = vmatprep.subr.mxu0 0.0
          %2859 = vmatpush1.msra.mxu0 %v2783
          %2860 = vmatprep.subr.mxu0 0.0
          %2861 = vmatpush1.msra.mxu0 %v2784
          %2862 = vmatprep.subr.mxu0 0.0
          %2863 = vmatpush1.msra.mxu0 %v2785
          %2864 = vmatprep.subr.mxu0 0.0
          %2865 = vmatpush1.msra.mxu0 %v2786
          %2866 = vmatprep.subr.mxu0 0.0
          %2867 = vmatpush1.msra.mxu0 %v2787
          %2868 = vmatprep.subr.mxu0 0.0
          %2869 = vmatpush1.msra.mxu0 %v2788
          %2870 = vmatprep.subr.mxu0 0.0
          %2871 = vmatpush1.msra.mxu0 %v2789
          %2872 = vmatprep.mubr.f32.mxu0 %v2805
          %2873 = vmatmul.mubr.f32.gmra.mrb[0].mxu0 %v2804
          %v2874 = vpop.f32.mrb[0].mxu0
          %v2875 = vadd.f32 %v2795, %v2874
          %v2876 = vpop.f32.mrb[0].mxu0
          %2877 = vdwg.mxu0
          %2878 = vst [vmem:[#allocation3] sm:$0x3] %v2875
        $region48: #{qnetwork_forward.7} parent=39 // pred_fallthru
          _
        // Predicated region
        $region49: #{qnetwork_forward.7} parent=39 // pred_check
          %p2879 = pneg %p145
        $region50: #{qnetwork_forward.7} parent=39 // pred_check_branch
          %2881 = sbr.rel (%p2879) target = $region52
        $region51: #{qnetwork_forward.7} parent=39 // pred_region
          %s2883 = ssub.s32 32, 32
          %2884 = vsyncadd [#allocation4], %s2883
          %s2886 = sshll.u32 [#allocation3], 4
          %s2887 = int_to_ptr.vmem [resolvable:$true] %s2886
          %2889 = dma.vmem_to_hbm [thread:$0]  %s2887, 32, %s5, [#allocation4]
        $region52: #{qnetwork_forward.7} parent=39 // pred_fallthru
          _
        // Predicated region
        $region53: #{qnetwork_forward.7} parent=39 // pred_check
          %p2890 = pneg %p145
        $region54: #{qnetwork_forward.7} parent=39 // pred_check_branch
          %2892 = sbr.rel (%p2890) target = $region56
        $region55: #{qnetwork_forward.7} parent=39 // pred_region
          %2893 = dma.done [#allocation4], 32
        $region56: #{qnetwork_forward.7} parent=39 // pred_fallthru
          _
      $region40: #{qnetwork_forward.7} parent=5 // pred_fallthru
        _
      %p2894 = scmp.le.s32.totalorder 2, %s12
      // Predicated region
      $region57: #{qnetwork_forward.7} parent=5 // pred_check
        %p2895 = pneg %p2894
      $region58: #{qnetwork_forward.7} parent=5 // pred_check_branch
        %2897 = sbr.rel (%p2895) target = $region60
      $region59: #{qnetwork_forward.7} parent=5 // pred_region
        %s2898 = ssub.s32 %s12, 2
      $region60: #{qnetwork_forward.7} parent=5 // pred_fallthru
        _
    $region6: #{qnetwork_forward.7} parent=1 // loop_footer
      %s16 = sadd.s32 1, %s12
    $region7: #{qnetwork_forward.7} parent=1 // loop_footer_branch
      %11 = sbr.rel target = $region3
    $region8: #{qnetwork_forward.7} parent=1 // loop_exit
      _
    %2899 = vsyncpa [#allocation4], 1
    %s2900 = scalar_lea.sflag [#allocation4], 1
    %2901 = vsyncpa %s2900, 1

</llo_original>
